<compile_context>
chip_gen: v5e
topology: v5e:2x2
jax: 0.10.0
libtpu: 0.0.40
codegen_flags: <defaults>
</compile_context>

<pallas_src>
import functools

import jax
import jax.numpy as jnp
from jax.experimental import pallas as pl
from jax.experimental.pallas import tpu as pltpu

NUM_UNITS = 128      # GRU hidden size
OUTPUT_SIZE = 40     # CTC vocab size (output_size arg of the module)
OUT_PAD = 128        # lane-dense padded output width for the folded Linear
BN_EPS = 1e-5


def _ceil_to(x, m):
    return ((x + m - 1) // m) * m


# ---------------------------------------------------------------------------
# Pallas kernel 1: fused matmul + per-column affine (+ optional ReLU).
# Used for every conv (via im2col) and for the GRU input projection.
# bf16 operands on the MXU, f32 accumulation / affine / output.
# ---------------------------------------------------------------------------
def _matmul_affine_kernel(x_ref, w_ref, scale_ref, shift_ref, o_ref, *, relu):
    y = jnp.dot(x_ref[...], w_ref[...], preferred_element_type=jnp.float32)
    y = y * scale_ref[...] + shift_ref[...]
    if relu:
        y = jnp.maximum(y, 0.0)
    o_ref[...] = y


def matmul_affine(x, w, scale, shift, *, relu, block_m=512):
    """out = relu?((x @ w) * scale + shift); x:(M,K) w:(K,N) scale/shift:(N,)."""
    M, K = x.shape
    _, N = w.shape
    # M tile: multiple of 16 (bf16 sublane packing); pad M up to a tile multiple.
    tm = min(block_m, _ceil_to(M, 16))
    Mp = _ceil_to(M, tm)
    if Mp != M:
        x = jnp.pad(x, ((0, Mp - M), (0, 0)))
    out = pl.pallas_call(
        functools.partial(_matmul_affine_kernel, relu=relu),
        out_shape=jax.ShapeDtypeStruct((Mp, N), jnp.float32),
        grid=(Mp // tm,),
        in_specs=[
            pl.BlockSpec((tm, K), lambda i: (i, 0)),
            pl.BlockSpec((K, N), lambda i: (0, 0)),
            pl.BlockSpec((1, N), lambda i: (0, 0)),
            pl.BlockSpec((1, N), lambda i: (0, 0)),
        ],
        out_specs=pl.BlockSpec((tm, N), lambda i: (i, 0)),
        compiler_params=pltpu.CompilerParams(
            dimension_semantics=("parallel",)),
    )(
        x.astype(jnp.bfloat16),
        w.astype(jnp.bfloat16),
        scale.reshape(1, N).astype(jnp.float32),
        shift.reshape(1, N).astype(jnp.float32),
    )
    if Mp != M:
        out = out[:M]
    return out


# ---------------------------------------------------------------------------
# im2col glue (pure data movement; the matmul hot path is in the kernel).
# ---------------------------------------------------------------------------
def im2col(x, kh, kw, sh, sw, ph, pw):
    """x: (N,H,W,C) -> (N*Ho*Wo, kh*kw*C) with feature order (kh, kw, c)."""
    x = jnp.pad(x, ((0, 0), (ph, ph), (pw, pw), (0, 0)))
    n, h, w, c = x.shape
    ho = (h - kh) // sh + 1
    wo = (w - kw) // sw + 1
    patches = []
    for i in range(kh):
        for j in range(kw):
            patches.append(x[:, i:i + sh * ho:sh, j:j + sw * wo:sw, :])
    cols = jnp.stack(patches, axis=3)                 # (N, Ho, Wo, kh*kw, C)
    return cols.reshape(n * ho * wo, kh * kw * c), (n, ho, wo)


def conv_affine_relu(x, w_flat, scale, shift, kh, kw, sh, sw, ph, pw):
    """Conv2d (+ folded BN affine) + ReLU, computed as a Pallas matmul."""
    cols, (n, ho, wo) = im2col(x, kh, kw, sh, sw, ph, pw)
    out = matmul_affine(cols, w_flat, scale, shift, relu=True)
    return out.reshape(n, ho, wo, w_flat.shape[1])


def fold_bn(conv_bias, gamma, beta, mean, var):
    scale = gamma / jnp.sqrt(var + BN_EPS)
    shift = (conv_bias - mean) * scale + beta
    return scale, shift


# ---------------------------------------------------------------------------
# Pallas kernel 2: bidirectional GRU recurrence + folded output Linear.
# Grid iterates sequentially over time; hidden state lives in VMEM scratch and
# the (T, B, OUT_PAD) output block stays resident (constant out index_map).
#
# Per step s:
#   forward  direction consumes original time s      (gx read at block (s,0,0))
#   backward direction consumes original time T-1-s  (gx read at block (T-1-s,0,1))
#   gh = [hf|hb] @ block_diag(Whf, Whb) + [bhf|bhb]   -- one K=256 MXU op
#   out[s]     += hf_new @ Wl[:NU] + bl               (forward contribution)
#   out[T-1-s] += hb_new @ Wl[NU:]                    (backward contribution)
# ---------------------------------------------------------------------------
def _gru_linear_kernel(h0_ref, gxf_ref, gxb_ref, wh_ref, bh_ref, wl_ref,
                       bl_ref, out_ref, h_cat):
    s = pl.program_id(0)
    t_total = pl.num_programs(0)
    nu = NUM_UNITS

    @pl.when(s == 0)
    def _():
        h_cat[:, :nu] = h0_ref[0]
        h_cat[:, nu:] = h0_ref[1]
        out_ref[...] = jnp.zeros_like(out_ref)

    h = h_cat[...]                                            # (B, 2*NU) f32
    gh = jnp.dot(h.astype(jnp.bfloat16), wh_ref[...],
                 preferred_element_type=jnp.float32) + bh_ref[...]   # (B, 6*NU)

    gxf = gxf_ref[0]                                          # (B, 3*NU)
    gxb = gxb_ref[0]                                          # (B, 3*NU)

    def cell(gx, gh_d, h_d):
        # torch gate order (r, z, n); gh already includes b_h so that
        # r * gh_n == r * (W_hn h + b_hn) matches nn.GRU semantics.
        r = jax.nn.sigmoid(gx[:, :nu] + gh_d[:, :nu])
        z = jax.nn.sigmoid(gx[:, nu:2 * nu] + gh_d[:, nu:2 * nu])
        n = jnp.tanh(gx[:, 2 * nu:] + r * gh_d[:, 2 * nu:])
        return (1.0 - z) * n + z * h_d

    hf_new = cell(gxf, gh[:, :3 * nu], h[:, :nu])
    hb_new = cell(gxb, gh[:, 3 * nu:], h[:, nu:])

    h_cat[:, :nu] = hf_new
    h_cat[:, nu:] = hb_new

    # Folded Linear: out[t] = bl + hf(t) @ Wl[:NU] + hb(t) @ Wl[NU:]
    wl = wl_ref[...]
    yf = jnp.dot(hf_new.astype(jnp.bfloat16), wl[:nu, :],
                 preferred_element_type=jnp.float32)
    yb = jnp.dot(hb_new.astype(jnp.bfloat16), wl[nu:, :],
                 preferred_element_type=jnp.float32)

    out_ref[s] = out_ref[s] + yf + bl_ref[...]   # bias added once per slot
    rev = t_total - 1 - s
    out_ref[rev] = out_ref[rev] + yb


def gru_linear(x_tbc, h0, p):
    """x_tbc: (T,B,C).  Returns (T,B,OUT_PAD) padded logits (Linear folded)."""
    t, b, c = x_tbc.shape
    nu = NUM_UNITS
    op = OUT_PAD

    # --- time-parallel input projection for BOTH directions: one big matmul ---
    wi_cat = jnp.concatenate([p["wif"], p["wib"]], axis=1)          # (C, 6*NU)
    bi_cat = jnp.concatenate([p["bif"], p["bib"]], axis=0)          # (6*NU,)
    gx = matmul_affine(x_tbc.reshape(t * b, c), wi_cat,
                       jnp.ones((6 * nu,), jnp.float32), bi_cat, relu=False)
    gx = gx.reshape(t, b, 6 * nu)       # [:, :, :3NU] forward, [:, :, 3NU:] backward

    # --- block-diagonal hidden weights: [hf|hb] @ Wh_blk -> [ghf | ghb] ---
    zpad = jnp.zeros((nu, 3 * nu), jnp.float32)
    wh_blk = jnp.concatenate([
        jnp.concatenate([p["whf"], zpad], axis=1),
        jnp.concatenate([zpad, p["whb"]], axis=1)], axis=0)          # (2NU, 6NU)
    bh_cat = jnp.concatenate([p["bhf"], p["bhb"]]).reshape(1, 6 * nu)

    # --- output Linear, padded to 128 lanes for lane-dense stores ---
    wl_pad = jnp.pad(p["wl"], ((0, 0), (0, op - OUTPUT_SIZE)))       # (2NU, 128)
    bl_pad = jnp.pad(p["bl"], (0, op - OUTPUT_SIZE)).reshape(1, op)

    def const_spec(shape):
        nd = len(shape)
        return pl.BlockSpec(shape, lambda s, nd=nd: (0,) * nd)

    out = pl.pallas_call(
        _gru_linear_kernel,
        out_shape=jax.ShapeDtypeStruct((t, b, op), jnp.float32),
        grid=(t,),
        in_specs=[
            const_spec((2, b, nu)),                                    # h0
            pl.BlockSpec((1, b, 3 * nu), lambda s: (s, 0, 0)),         # gx fwd
            pl.BlockSpec((1, b, 3 * nu),
                         lambda s, T=t: (T - 1 - s, 0, 1)),            # gx bwd (reversed time)
            const_spec((2 * nu, 6 * nu)),                              # Wh block-diag
            const_spec((1, 6 * nu)),                                   # bh
            const_spec((2 * nu, op)),                                  # Wl (padded)
            const_spec((1, op)),                                       # bl (padded)
        ],
        out_specs=pl.BlockSpec((t, b, op), lambda s: (0, 0, 0)),
        scratch_shapes=[pltpu.VMEM((b, 2 * nu), jnp.float32)],
        compiler_params=pltpu.CompilerParams(
            dimension_semantics=("arbitrary",)),
    )(h0.astype(jnp.float32),
      gx, gx,                                # same slab, two index_maps (no flip)
      wh_blk.astype(jnp.bfloat16),
      bh_cat.astype(jnp.float32),
      wl_pad.astype(jnp.bfloat16),
      bl_pad.astype(jnp.float32))
    return out


# ---------------------------------------------------------------------------
# Parameter init (deterministic, synthetic).
# Conv weights are stored directly in (kh*kw*Cin, Cout) im2col layout.
# ---------------------------------------------------------------------------
def init_params(key):
    keys = iter(jax.random.split(key, 64))

    def nrm(shape, scale=0.05):
        return jax.random.normal(next(keys), shape, jnp.float32) * scale

    def uni(shape, lo, hi):
        return jax.random.uniform(next(keys), shape, jnp.float32, lo, hi)

    def conv_w(kh, kw, cin, cout):
        return nrm((kh * kw * cin, cout))

    def bn(c):
        return dict(gamma=uni((c,), 0.9, 1.1), beta=nrm((c,)),
                    mean=nrm((c,)), var=uni((c,), 0.5, 1.5))

    p = {}
    # layer1
    p["c11_w"], p["c11_b"] = conv_w(3, 3, 3, 32), nrm((32,))
    p["c12_w"], p["c12_b"] = conv_w(3, 4, 32, 32), nrm((32,))
    p["bn1"] = bn(32)
    # layer2
    p["c21_w"], p["c21_b"] = conv_w(3, 3, 32, 32), nrm((32,))
    p["c22_w"], p["c22_b"] = conv_w(4, 3, 32, 32), nrm((32,))
    p["bn2"] = bn(32)
    # layer3
    p["c31_w"], p["c31_b"] = conv_w(3, 3, 32, 32), nrm((32,))
    p["c32_w"], p["c32_b"] = conv_w(4, 2, 32, 32), nrm((32,))
    p["bn3"] = bn(32)
    # bidirectional GRU (input 32, hidden 128); gate order (r, z, n) like torch
    p["wif"], p["whf"] = nrm((32, 3 * NUM_UNITS), 0.1), nrm((NUM_UNITS, 3 * NUM_UNITS), 0.1)
    p["bif"], p["bhf"] = nrm((3 * NUM_UNITS,)), nrm((3 * NUM_UNITS,))
    p["wib"], p["whb"] = nrm((32, 3 * NUM_UNITS), 0.1), nrm((NUM_UNITS, 3 * NUM_UNITS), 0.1)
    p["bib"], p["bhb"] = nrm((3 * NUM_UNITS,)), nrm((3 * NUM_UNITS,))
    # linear
    p["wl"], p["bl"] = nrm((2 * NUM_UNITS, OUTPUT_SIZE)), nrm((OUTPUT_SIZE,))
    return p


# ---------------------------------------------------------------------------
# Forward pass (mirrors CTCModel.forward).
# ---------------------------------------------------------------------------
def ctc_model_forward(x_nchw, h0, p):
    x = jnp.transpose(x_nchw, (0, 2, 3, 1)).astype(jnp.float32)   # NCHW -> NHWC
    ones32 = jnp.ones((32,), jnp.float32)

    # layer1: conv(3,3,p=1) + ReLU; conv(3,4,s=(3,2)) + BN + ReLU
    x = conv_affine_relu(x, p["c11_w"], ones32, p["c11_b"], 3, 3, 1, 1, 1, 1)
    s, b = fold_bn(p["c12_b"], **p["bn1"])
    x = conv_affine_relu(x, p["c12_w"], s, b, 3, 4, 3, 2, 0, 0)

    # layer2: conv(3,3,p=1) + ReLU; conv(4,3,s=(4,2)) + BN + ReLU
    x = conv_affine_relu(x, p["c21_w"], ones32, p["c21_b"], 3, 3, 1, 1, 1, 1)
    s, b = fold_bn(p["c22_b"], **p["bn2"])
    x = conv_affine_relu(x, p["c22_w"], s, b, 4, 3, 4, 2, 0, 0)

    # layer3: conv(3,3,p=1) + ReLU; conv(4,2,s=1) + BN + ReLU
    x = conv_affine_relu(x, p["c31_w"], ones32, p["c31_b"], 3, 3, 1, 1, 1, 1)
    s, b = fold_bn(p["c32_b"], **p["bn3"])
    x = conv_affine_relu(x, p["c32_w"], s, b, 4, 2, 1, 1, 0, 0)

    # (N, 1, W', 32) -> sequence (T=W', B=N, C=32) — matches view+transpose
    n, hgt, wf, c = x.shape
    assert hgt == 1, "height must collapse to 1 before the GRU"
    seq = jnp.transpose(x.reshape(n, wf, c), (1, 0, 2))            # (T, B, C)

    # GRU recurrence with folded output Linear (lane-padded to 128)
    out_pad = gru_linear(seq, h0, p)                               # (T, B, 128)
    out = jnp.transpose(out_pad[..., :OUTPUT_SIZE], (1, 0, 2))     # (B, T, 40)
    return out


def init_hidden(batch_size):
    return jnp.zeros((2, batch_size, NUM_UNITS), jnp.float32)      # num_layers*2


if __name__ == "__main__":
    key = jax.random.PRNGKey(0)
    k_param, k_x = jax.random.split(key)

    params = init_params(k_param)
    # Input: NCHW with C=3; H=48 collapses to 1 through the three layers,
    # W=32 becomes T=6 time steps.
    x = jax.random.normal(k_x, (2, 3, 48, 32), jnp.float32)
    h0 = init_hidden(2)

    fwd = jax.jit(lambda xx, hh: ctc_model_forward(xx, hh, params))
    out = fwd(x, h0)
    jax.block_until_ready(out)

    assert out.shape == (2, 6, OUTPUT_SIZE), out.shape
    assert bool(jnp.all(jnp.isfinite(out)))
    print("KERNEL_OK")
</pallas_src>

<mosaic_0001>
module attributes {stable_mosaic.version = 11 : i64} {
  func.func @_matmul_affine_kernel(%arg0: i32, %arg1: memref<512x27xbf16, #tpu.memory_space<vmem>>, %arg2: memref<27x32xbf16, #tpu.memory_space<vmem>>, %arg3: memref<1x32xf32, #tpu.memory_space<vmem>>, %arg4: memref<1x32xf32, #tpu.memory_space<vmem>>, %arg5: memref<512x32xf32, #tpu.memory_space<vmem>>) attributes {dimension_semantics = [#tpu.dimension_semantics<parallel>], iteration_bounds = array<i64: 6>, scalar_prefetch = 0 : i64, scratch_operands = 0 : i64, tpu.core_type = #tpu.core_type<tc>, window_params = [{transform_indices = @transform_0, window_bounds = array<i64: 512, 27>}, {pipeline_mode = #tpu.pipeline_mode<synchronous>, transform_indices = @transform_1, window_bounds = array<i64: 27, 32>}, {pipeline_mode = #tpu.pipeline_mode<synchronous>, transform_indices = @transform_2, window_bounds = array<i64: 1, 32>}, {pipeline_mode = #tpu.pipeline_mode<synchronous>, transform_indices = @transform_3, window_bounds = array<i64: 1, 32>}, {transform_indices = @transform_4, window_bounds = array<i64: 512, 32>}]} {
    %c0 = arith.constant 0 : index
    %c0_0 = arith.constant 0 : index
    %0 = vector.load %arg1[%c0, %c0_0] : memref<512x27xbf16, #tpu.memory_space<vmem>>, vector<512x27xbf16>
    %c0_1 = arith.constant 0 : index
    %c0_2 = arith.constant 0 : index
    %1 = vector.load %arg2[%c0_1, %c0_2] : memref<27x32xbf16, #tpu.memory_space<vmem>>, vector<27x32xbf16>
    %cst = arith.constant dense<0.000000e+00> : vector<512x32xf32>
    %2 = tpu.matmul %0, %1, %cst {dimension_numbers = #tpu.dot_dimension_numbers<[1], [0], [0], [1], [0, 0, 1, 1], [], []>} : vector<512x27xbf16>, vector<27x32xbf16>, vector<512x32xf32> -> vector<512x32xf32>
    %c0_3 = arith.constant 0 : index
    %c0_4 = arith.constant 0 : index
    %3 = vector.load %arg3[%c0_3, %c0_4] : memref<1x32xf32, #tpu.memory_space<vmem>>, vector<1x32xf32>
    %4 = vector.broadcast %3 : vector<1x32xf32> to vector<512x32xf32>
    %5 = arith.mulf %2, %4 : vector<512x32xf32>
    %c0_5 = arith.constant 0 : index
    %c0_6 = arith.constant 0 : index
    %6 = vector.load %arg4[%c0_5, %c0_6] : memref<1x32xf32, #tpu.memory_space<vmem>>, vector<1x32xf32>
    %7 = vector.broadcast %6 : vector<1x32xf32> to vector<512x32xf32>
    %8 = arith.addf %5, %7 : vector<512x32xf32>
    %cst_7 = arith.constant 0.000000e+00 : f32
    %9 = vector.broadcast %cst_7 : f32 to vector<512x32xf32>
    %10 = arith.maximumf %8, %9 : vector<512x32xf32>
    %c0_8 = arith.constant 0 : index
    %c0_9 = arith.constant 0 : index
    %11 = vector.load %arg5[%c0_8, %c0_9] : memref<512x32xf32, #tpu.memory_space<vmem>>, vector<512x32xf32>
    tpu.vector_store %arg5[%c0_8, %c0_9], %10 {strides = array<i32>} : memref<512x32xf32, #tpu.memory_space<vmem>>, vector<512x32xf32>,
    return
  }
  func.func @transform_0(%arg0: i32) -> (i32, i32) {
    %c0_i32 = arith.constant 0 : i32
    %c0_i32_0 = arith.constant 0 : i32
    return %arg0, %c0_i32 : i32, i32
  }
  func.func @transform_1(%arg0: i32) -> (i32, i32) {
    %c0_i32 = arith.constant 0 : i32
    %c0_i32_0 = arith.constant 0 : i32
    %c0_i32_1 = arith.constant 0 : i32
    return %c0_i32, %c0_i32_0 : i32, i32
  }
  func.func @transform_2(%arg0: i32) -> (i32, i32) {
    %c0_i32 = arith.constant 0 : i32
    %c0_i32_0 = arith.constant 0 : i32
    %c0_i32_1 = arith.constant 0 : i32
    return %c0_i32, %c0_i32_0 : i32, i32
  }
  func.func @transform_3(%arg0: i32) -> (i32, i32) {
    %c0_i32 = arith.constant 0 : i32
    %c0_i32_0 = arith.constant 0 : i32
    %c0_i32_1 = arith.constant 0 : i32
    return %c0_i32, %c0_i32_0 : i32, i32
  }
  func.func @transform_4(%arg0: i32) -> (i32, i32) {
    %c0_i32 = arith.constant 0 : i32
    %c0_i32_0 = arith.constant 0 : i32
    return %arg0, %c0_i32 : i32, i32
  }
}

module attributes {stable_mosaic.version = 11 : i64} {
  func.func @_matmul_affine_kernel(%arg0: i32, %arg1: memref<480x384xbf16, #tpu.memory_space<vmem>>, %arg2: memref<384x32xbf16, #tpu.memory_space<vmem>>, %arg3: memref<1x32xf32, #tpu.memory_space<vmem>>, %arg4: memref<1x32xf32, #tpu.memory_space<vmem>>, %arg5: memref<480x32xf32, #tpu.memory_space<vmem>>) attributes {dimension_semantics = [#tpu.dimension_semantics<parallel>], iteration_bounds = array<i64: 1>, scalar_prefetch = 0 : i64, scratch_operands = 0 : i64, tpu.core_type = #tpu.core_type<tc>, window_params = [{transform_indices = @transform_0, window_bounds = array<i64: 480, 384>}, {pipeline_mode = #tpu.pipeline_mode<synchronous>, transform_indices = @transform_1, window_bounds = array<i64: 384, 32>}, {pipeline_mode = #tpu.pipeline_mode<synchronous>, transform_indices = @transform_2, window_bounds = array<i64: 1, 32>}, {pipeline_mode = #tpu.pipeline_mode<synchronous>, transform_indices = @transform_3, window_bounds = array<i64: 1, 32>}, {transform_indices = @transform_4, window_bounds = array<i64: 480, 32>}]} {
    %c0 = arith.constant 0 : index
    %c0_0 = arith.constant 0 : index
    %0 = vector.load %arg1[%c0, %c0_0] : memref<480x384xbf16, #tpu.memory_space<vmem>>, vector<480x384xbf16>
    %c0_1 = arith.constant 0 : index
    %c0_2 = arith.constant 0 : index
    %1 = vector.load %arg2[%c0_1, %c0_2] : memref<384x32xbf16, #tpu.memory_space<vmem>>, vector<384x32xbf16>
    %cst = arith.constant dense<0.000000e+00> : vector<480x32xf32>
    %2 = tpu.matmul %0, %1, %cst {dimension_numbers = #tpu.dot_dimension_numbers<[1], [0], [0], [1], [0, 0, 1, 1], [], []>} : vector<480x384xbf16>, vector<384x32xbf16>, vector<480x32xf32> -> vector<480x32xf32>
    %c0_3 = arith.constant 0 : index
    %c0_4 = arith.constant 0 : index
    %3 = vector.load %arg3[%c0_3, %c0_4] : memref<1x32xf32, #tpu.memory_space<vmem>>, vector<1x32xf32>
    %4 = vector.broadcast %3 : vector<1x32xf32> to vector<480x32xf32>
    %5 = arith.mulf %2, %4 : vector<480x32xf32>
    %c0_5 = arith.constant 0 : index
    %c0_6 = arith.constant 0 : index
    %6 = vector.load %arg4[%c0_5, %c0_6] : memref<1x32xf32, #tpu.memory_space<vmem>>, vector<1x32xf32>
    %7 = vector.broadcast %6 : vector<1x32xf32> to vector<480x32xf32>
    %8 = arith.addf %5, %7 : vector<480x32xf32>
    %cst_7 = arith.constant 0.000000e+00 : f32
    %9 = vector.broadcast %cst_7 : f32 to vector<480x32xf32>
    %10 = arith.maximumf %8, %9 : vector<480x32xf32>
    %c0_8 = arith.constant 0 : index
    %c0_9 = arith.constant 0 : index
    %11 = vector.load %arg5[%c0_8, %c0_9] : memref<480x32xf32, #tpu.memory_space<vmem>>, vector<480x32xf32>
    tpu.vector_store %arg5[%c0_8, %c0_9], %10 {strides = array<i32>} : memref<480x32xf32, #tpu.memory_space<vmem>>, vector<480x32xf32>,
    return
  }
  func.func @transform_0(%arg0: i32) -> (i32, i32) {
    %c0_i32 = arith.constant 0 : i32
    %c0_i32_0 = arith.constant 0 : i32
    return %arg0, %c0_i32 : i32, i32
  }
  func.func @transform_1(%arg0: i32) -> (i32, i32) {
    %c0_i32 = arith.constant 0 : i32
    %c0_i32_0 = arith.constant 0 : i32
    %c0_i32_1 = arith.constant 0 : i32
    return %c0_i32, %c0_i32_0 : i32, i32
  }
  func.func @transform_2(%arg0: i32) -> (i32, i32) {
    %c0_i32 = arith.constant 0 : i32
    %c0_i32_0 = arith.constant 0 : i32
    %c0_i32_1 = arith.constant 0 : i32
    return %c0_i32, %c0_i32_0 : i32, i32
  }
  func.func @transform_3(%arg0: i32) -> (i32, i32) {
    %c0_i32 = arith.constant 0 : i32
    %c0_i32_0 = arith.constant 0 : i32
    %c0_i32_1 = arith.constant 0 : i32
    return %c0_i32, %c0_i32_0 : i32, i32
  }
  func.func @transform_4(%arg0: i32) -> (i32, i32) {
    %c0_i32 = arith.constant 0 : i32
    %c0_i32_0 = arith.constant 0 : i32
    return %arg0, %c0_i32 : i32, i32
  }
}

module attributes {stable_mosaic.version = 11 : i64} {
  func.func @_matmul_affine_kernel(%arg0: i32, %arg1: memref<480x288xbf16, #tpu.memory_space<vmem>>, %arg2: memref<288x32xbf16, #tpu.memory_space<vmem>>, %arg3: memref<1x32xf32, #tpu.memory_space<vmem>>, %arg4: memref<1x32xf32, #tpu.memory_space<vmem>>, %arg5: memref<480x32xf32, #tpu.memory_space<vmem>>) attributes {dimension_semantics = [#tpu.dimension_semantics<parallel>], iteration_bounds = array<i64: 1>, scalar_prefetch = 0 : i64, scratch_operands = 0 : i64, tpu.core_type = #tpu.core_type<tc>, window_params = [{transform_indices = @transform_0, window_bounds = array<i64: 480, 288>}, {pipeline_mode = #tpu.pipeline_mode<synchronous>, transform_indices = @transform_1, window_bounds = array<i64: 288, 32>}, {pipeline_mode = #tpu.pipeline_mode<synchronous>, transform_indices = @transform_2, window_bounds = array<i64: 1, 32>}, {pipeline_mode = #tpu.pipeline_mode<synchronous>, transform_indices = @transform_3, window_bounds = array<i64: 1, 32>}, {transform_indices = @transform_4, window_bounds = array<i64: 480, 32>}]} {
    %c0 = arith.constant 0 : index
    %c0_0 = arith.constant 0 : index
    %0 = vector.load %arg1[%c0, %c0_0] : memref<480x288xbf16, #tpu.memory_space<vmem>>, vector<480x288xbf16>
    %c0_1 = arith.constant 0 : index
    %c0_2 = arith.constant 0 : index
    %1 = vector.load %arg2[%c0_1, %c0_2] : memref<288x32xbf16, #tpu.memory_space<vmem>>, vector<288x32xbf16>
    %cst = arith.constant dense<0.000000e+00> : vector<480x32xf32>
    %2 = tpu.matmul %0, %1, %cst {dimension_numbers = #tpu.dot_dimension_numbers<[1], [0], [0], [1], [0, 0, 1, 1], [], []>} : vector<480x288xbf16>, vector<288x32xbf16>, vector<480x32xf32> -> vector<480x32xf32>
    %c0_3 = arith.constant 0 : index
    %c0_4 = arith.constant 0 : index
    %3 = vector.load %arg3[%c0_3, %c0_4] : memref<1x32xf32, #tpu.memory_space<vmem>>, vector<1x32xf32>
    %4 = vector.broadcast %3 : vector<1x32xf32> to vector<480x32xf32>
    %5 = arith.mulf %2, %4 : vector<480x32xf32>
    %c0_5 = arith.constant 0 : index
    %c0_6 = arith.constant 0 : index
    %6 = vector.load %arg4[%c0_5, %c0_6] : memref<1x32xf32, #tpu.memory_space<vmem>>, vector<1x32xf32>
    %7 = vector.broadcast %6 : vector<1x32xf32> to vector<480x32xf32>
    %8 = arith.addf %5, %7 : vector<480x32xf32>
    %cst_7 = arith.constant 0.000000e+00 : f32
    %9 = vector.broadcast %cst_7 : f32 to vector<480x32xf32>
    %10 = arith.maximumf %8, %9 : vector<480x32xf32>
    %c0_8 = arith.constant 0 : index
    %c0_9 = arith.constant 0 : index
    %11 = vector.load %arg5[%c0_8, %c0_9] : memref<480x32xf32, #tpu.memory_space<vmem>>, vector<480x32xf32>
    tpu.vector_store %arg5[%c0_8, %c0_9], %10 {strides = array<i32>} : memref<480x32xf32, #tpu.memory_space<vmem>>, vector<480x32xf32>,
    return
  }
  func.func @transform_0(%arg0: i32) -> (i32, i32) {
    %c0_i32 = arith.constant 0 : i32
    %c0_i32_0 = arith.constant 0 : i32
    return %arg0, %c0_i32 : i32, i32
  }
  func.func @transform_1(%arg0: i32) -> (i32, i32) {
    %c0_i32 = arith.constant 0 : i32
    %c0_i32_0 = arith.constant 0 : i32
    %c0_i32_1 = arith.constant 0 : i32
    return %c0_i32, %c0_i32_0 : i32, i32
  }
  func.func @transform_2(%arg0: i32) -> (i32, i32) {
    %c0_i32 = arith.constant 0 : i32
    %c0_i32_0 = arith.constant 0 : i32
    %c0_i32_1 = arith.constant 0 : i32
    return %c0_i32, %c0_i32_0 : i32, i32
  }
  func.func @transform_3(%arg0: i32) -> (i32, i32) {
    %c0_i32 = arith.constant 0 : i32
    %c0_i32_0 = arith.constant 0 : i32
    %c0_i32_1 = arith.constant 0 : i32
    return %c0_i32, %c0_i32_0 : i32, i32
  }
  func.func @transform_4(%arg0: i32) -> (i32, i32) {
    %c0_i32 = arith.constant 0 : i32
    %c0_i32_0 = arith.constant 0 : i32
    return %arg0, %c0_i32 : i32, i32
  }
}

module attributes {stable_mosaic.version = 11 : i64} {
  func.func @_matmul_affine_kernel(%arg0: i32, %arg1: memref<64x384xbf16, #tpu.memory_space<vmem>>, %arg2: memref<384x32xbf16, #tpu.memory_space<vmem>>, %arg3: memref<1x32xf32, #tpu.memory_space<vmem>>, %arg4: memref<1x32xf32, #tpu.memory_space<vmem>>, %arg5: memref<64x32xf32, #tpu.memory_space<vmem>>) attributes {dimension_semantics = [#tpu.dimension_semantics<parallel>], iteration_bounds = array<i64: 1>, scalar_prefetch = 0 : i64, scratch_operands = 0 : i64, tpu.core_type = #tpu.core_type<tc>, window_params = [{transform_indices = @transform_0, window_bounds = array<i64: 64, 384>}, {pipeline_mode = #tpu.pipeline_mode<synchronous>, transform_indices = @transform_1, window_bounds = array<i64: 384, 32>}, {pipeline_mode = #tpu.pipeline_mode<synchronous>, transform_indices = @transform_2, window_bounds = array<i64: 1, 32>}, {pipeline_mode = #tpu.pipeline_mode<synchronous>, transform_indices = @transform_3, window_bounds = array<i64: 1, 32>}, {transform_indices = @transform_4, window_bounds = array<i64: 64, 32>}]} {
    %c0 = arith.constant 0 : index
    %c0_0 = arith.constant 0 : index
    %0 = vector.load %arg1[%c0, %c0_0] : memref<64x384xbf16, #tpu.memory_space<vmem>>, vector<64x384xbf16>
    %c0_1 = arith.constant 0 : index
    %c0_2 = arith.constant 0 : index
    %1 = vector.load %arg2[%c0_1, %c0_2] : memref<384x32xbf16, #tpu.memory_space<vmem>>, vector<384x32xbf16>
    %cst = arith.constant dense<0.000000e+00> : vector<64x32xf32>
    %2 = tpu.matmul %0, %1, %cst {dimension_numbers = #tpu.dot_dimension_numbers<[1], [0], [0], [1], [0, 0, 1, 1], [], []>} : vector<64x384xbf16>, vector<384x32xbf16>, vector<64x32xf32> -> vector<64x32xf32>
    %c0_3 = arith.constant 0 : index
    %c0_4 = arith.constant 0 : index
    %3 = vector.load %arg3[%c0_3, %c0_4] : memref<1x32xf32, #tpu.memory_space<vmem>>, vector<1x32xf32>
    %4 = vector.broadcast %3 : vector<1x32xf32> to vector<64x32xf32>
    %5 = arith.mulf %2, %4 : vector<64x32xf32>
    %c0_5 = arith.constant 0 : index
    %c0_6 = arith.constant 0 : index
    %6 = vector.load %arg4[%c0_5, %c0_6] : memref<1x32xf32, #tpu.memory_space<vmem>>, vector<1x32xf32>
    %7 = vector.broadcast %6 : vector<1x32xf32> to vector<64x32xf32>
    %8 = arith.addf %5, %7 : vector<64x32xf32>
    %cst_7 = arith.constant 0.000000e+00 : f32
    %9 = vector.broadcast %cst_7 : f32 to vector<64x32xf32>
    %10 = arith.maximumf %8, %9 : vector<64x32xf32>
    %c0_8 = arith.constant 0 : index
    %c0_9 = arith.constant 0 : index
    %11 = vector.load %arg5[%c0_8, %c0_9] : memref<64x32xf32, #tpu.memory_space<vmem>>, vector<64x32xf32>
    tpu.vector_store %arg5[%c0_8, %c0_9], %10 {strides = array<i32>} : memref<64x32xf32, #tpu.memory_space<vmem>>, vector<64x32xf32>,
    return
  }
  func.func @transform_0(%arg0: i32) -> (i32, i32) {
    %c0_i32 = arith.constant 0 : i32
    %c0_i32_0 = arith.constant 0 : i32
    return %arg0, %c0_i32 : i32, i32
  }
  func.func @transform_1(%arg0: i32) -> (i32, i32) {
    %c0_i32 = arith.constant 0 : i32
    %c0_i32_0 = arith.constant 0 : i32
    %c0_i32_1 = arith.constant 0 : i32
    return %c0_i32, %c0_i32_0 : i32, i32
  }
  func.func @transform_2(%arg0: i32) -> (i32, i32) {
    %c0_i32 = arith.constant 0 : i32
    %c0_i32_0 = arith.constant 0 : i32
    %c0_i32_1 = arith.constant 0 : i32
    return %c0_i32, %c0_i32_0 : i32, i32
  }
  func.func @transform_3(%arg0: i32) -> (i32, i32) {
    %c0_i32 = arith.constant 0 : i32
    %c0_i32_0 = arith.constant 0 : i32
    %c0_i32_1 = arith.constant 0 : i32
    return %c0_i32, %c0_i32_0 : i32, i32
  }
  func.func @transform_4(%arg0: i32) -> (i32, i32) {
    %c0_i32 = arith.constant 0 : i32
    %c0_i32_0 = arith.constant 0 : i32
    return %arg0, %c0_i32 : i32, i32
  }
}

module attributes {stable_mosaic.version = 11 : i64} {
  func.func @_matmul_affine_kernel(%arg0: i32, %arg1: memref<64x288xbf16, #tpu.memory_space<vmem>>, %arg2: memref<288x32xbf16, #tpu.memory_space<vmem>>, %arg3: memref<1x32xf32, #tpu.memory_space<vmem>>, %arg4: memref<1x32xf32, #tpu.memory_space<vmem>>, %arg5: memref<64x32xf32, #tpu.memory_space<vmem>>) attributes {dimension_semantics = [#tpu.dimension_semantics<parallel>], iteration_bounds = array<i64: 1>, scalar_prefetch = 0 : i64, scratch_operands = 0 : i64, tpu.core_type = #tpu.core_type<tc>, window_params = [{transform_indices = @transform_0, window_bounds = array<i64: 64, 288>}, {pipeline_mode = #tpu.pipeline_mode<synchronous>, transform_indices = @transform_1, window_bounds = array<i64: 288, 32>}, {pipeline_mode = #tpu.pipeline_mode<synchronous>, transform_indices = @transform_2, window_bounds = array<i64: 1, 32>}, {pipeline_mode = #tpu.pipeline_mode<synchronous>, transform_indices = @transform_3, window_bounds = array<i64: 1, 32>}, {transform_indices = @transform_4, window_bounds = array<i64: 64, 32>}]} {
    %c0 = arith.constant 0 : index
    %c0_0 = arith.constant 0 : index
    %0 = vector.load %arg1[%c0, %c0_0] : memref<64x288xbf16, #tpu.memory_space<vmem>>, vector<64x288xbf16>
    %c0_1 = arith.constant 0 : index
    %c0_2 = arith.constant 0 : index
    %1 = vector.load %arg2[%c0_1, %c0_2] : memref<288x32xbf16, #tpu.memory_space<vmem>>, vector<288x32xbf16>
    %cst = arith.constant dense<0.000000e+00> : vector<64x32xf32>
    %2 = tpu.matmul %0, %1, %cst {dimension_numbers = #tpu.dot_dimension_numbers<[1], [0], [0], [1], [0, 0, 1, 1], [], []>} : vector<64x288xbf16>, vector<288x32xbf16>, vector<64x32xf32> -> vector<64x32xf32>
    %c0_3 = arith.constant 0 : index
    %c0_4 = arith.constant 0 : index
    %3 = vector.load %arg3[%c0_3, %c0_4] : memref<1x32xf32, #tpu.memory_space<vmem>>, vector<1x32xf32>
    %4 = vector.broadcast %3 : vector<1x32xf32> to vector<64x32xf32>
    %5 = arith.mulf %2, %4 : vector<64x32xf32>
    %c0_5 = arith.constant 0 : index
    %c0_6 = arith.constant 0 : index
    %6 = vector.load %arg4[%c0_5, %c0_6] : memref<1x32xf32, #tpu.memory_space<vmem>>, vector<1x32xf32>
    %7 = vector.broadcast %6 : vector<1x32xf32> to vector<64x32xf32>
    %8 = arith.addf %5, %7 : vector<64x32xf32>
    %cst_7 = arith.constant 0.000000e+00 : f32
    %9 = vector.broadcast %cst_7 : f32 to vector<64x32xf32>
    %10 = arith.maximumf %8, %9 : vector<64x32xf32>
    %c0_8 = arith.constant 0 : index
    %c0_9 = arith.constant 0 : index
    %11 = vector.load %arg5[%c0_8, %c0_9] : memref<64x32xf32, #tpu.memory_space<vmem>>, vector<64x32xf32>
    tpu.vector_store %arg5[%c0_8, %c0_9], %10 {strides = array<i32>} : memref<64x32xf32, #tpu.memory_space<vmem>>, vector<64x32xf32>,
    return
  }
  func.func @transform_0(%arg0: i32) -> (i32, i32) {
    %c0_i32 = arith.constant 0 : i32
    %c0_i32_0 = arith.constant 0 : i32
    return %arg0, %c0_i32 : i32, i32
  }
  func.func @transform_1(%arg0: i32) -> (i32, i32) {
    %c0_i32 = arith.constant 0 : i32
    %c0_i32_0 = arith.constant 0 : i32
    %c0_i32_1 = arith.constant 0 : i32
    return %c0_i32, %c0_i32_0 : i32, i32
  }
  func.func @transform_2(%arg0: i32) -> (i32, i32) {
    %c0_i32 = arith.constant 0 : i32
    %c0_i32_0 = arith.constant 0 : i32
    %c0_i32_1 = arith.constant 0 : i32
    return %c0_i32, %c0_i32_0 : i32, i32
  }
  func.func @transform_3(%arg0: i32) -> (i32, i32) {
    %c0_i32 = arith.constant 0 : i32
    %c0_i32_0 = arith.constant 0 : i32
    %c0_i32_1 = arith.constant 0 : i32
    return %c0_i32, %c0_i32_0 : i32, i32
  }
  func.func @transform_4(%arg0: i32) -> (i32, i32) {
    %c0_i32 = arith.constant 0 : i32
    %c0_i32_0 = arith.constant 0 : i32
    return %arg0, %c0_i32 : i32, i32
  }
}

module attributes {stable_mosaic.version = 11 : i64} {
  func.func @_matmul_affine_kernel(%arg0: i32, %arg1: memref<16x256xbf16, #tpu.memory_space<vmem>>, %arg2: memref<256x32xbf16, #tpu.memory_space<vmem>>, %arg3: memref<1x32xf32, #tpu.memory_space<vmem>>, %arg4: memref<1x32xf32, #tpu.memory_space<vmem>>, %arg5: memref<16x32xf32, #tpu.memory_space<vmem>>) attributes {dimension_semantics = [#tpu.dimension_semantics<parallel>], iteration_bounds = array<i64: 1>, scalar_prefetch = 0 : i64, scratch_operands = 0 : i64, tpu.core_type = #tpu.core_type<tc>, window_params = [{transform_indices = @transform_0, window_bounds = array<i64: 16, 256>}, {pipeline_mode = #tpu.pipeline_mode<synchronous>, transform_indices = @transform_1, window_bounds = array<i64: 256, 32>}, {pipeline_mode = #tpu.pipeline_mode<synchronous>, transform_indices = @transform_2, window_bounds = array<i64: 1, 32>}, {pipeline_mode = #tpu.pipeline_mode<synchronous>, transform_indices = @transform_3, window_bounds = array<i64: 1, 32>}, {transform_indices = @transform_4, window_bounds = array<i64: 16, 32>}]} {
    %c0 = arith.constant 0 : index
    %c0_0 = arith.constant 0 : index
    %0 = vector.load %arg1[%c0, %c0_0] : memref<16x256xbf16, #tpu.memory_space<vmem>>, vector<16x256xbf16>
    %c0_1 = arith.constant 0 : index
    %c0_2 = arith.constant 0 : index
    %1 = vector.load %arg2[%c0_1, %c0_2] : memref<256x32xbf16, #tpu.memory_space<vmem>>, vector<256x32xbf16>
    %cst = arith.constant dense<0.000000e+00> : vector<16x32xf32>
    %2 = tpu.matmul %0, %1, %cst {dimension_numbers = #tpu.dot_dimension_numbers<[1], [0], [0], [1], [0, 0, 1, 1], [], []>} : vector<16x256xbf16>, vector<256x32xbf16>, vector<16x32xf32> -> vector<16x32xf32>
    %c0_3 = arith.constant 0 : index
    %c0_4 = arith.constant 0 : index
    %3 = vector.load %arg3[%c0_3, %c0_4] : memref<1x32xf32, #tpu.memory_space<vmem>>, vector<1x32xf32>
    %4 = vector.broadcast %3 : vector<1x32xf32> to vector<16x32xf32>
    %5 = arith.mulf %2, %4 : vector<16x32xf32>
    %c0_5 = arith.constant 0 : index
    %c0_6 = arith.constant 0 : index
    %6 = vector.load %arg4[%c0_5, %c0_6] : memref<1x32xf32, #tpu.memory_space<vmem>>, vector<1x32xf32>
    %7 = vector.broadcast %6 : vector<1x32xf32> to vector<16x32xf32>
    %8 = arith.addf %5, %7 : vector<16x32xf32>
    %cst_7 = arith.constant 0.000000e+00 : f32
    %9 = vector.broadcast %cst_7 : f32 to vector<16x32xf32>
    %10 = arith.maximumf %8, %9 : vector<16x32xf32>
    %c0_8 = arith.constant 0 : index
    %c0_9 = arith.constant 0 : index
    %11 = vector.load %arg5[%c0_8, %c0_9] : memref<16x32xf32, #tpu.memory_space<vmem>>, vector<16x32xf32>
    tpu.vector_store %arg5[%c0_8, %c0_9], %10 {strides = array<i32>} : memref<16x32xf32, #tpu.memory_space<vmem>>, vector<16x32xf32>,
    return
  }
  func.func @transform_0(%arg0: i32) -> (i32, i32) {
    %c0_i32 = arith.constant 0 : i32
    %c0_i32_0 = arith.constant 0 : i32
    return %arg0, %c0_i32 : i32, i32
  }
  func.func @transform_1(%arg0: i32) -> (i32, i32) {
    %c0_i32 = arith.constant 0 : i32
    %c0_i32_0 = arith.constant 0 : i32
    %c0_i32_1 = arith.constant 0 : i32
    return %c0_i32, %c0_i32_0 : i32, i32
  }
  func.func @transform_2(%arg0: i32) -> (i32, i32) {
    %c0_i32 = arith.constant 0 : i32
    %c0_i32_0 = arith.constant 0 : i32
    %c0_i32_1 = arith.constant 0 : i32
    return %c0_i32, %c0_i32_0 : i32, i32
  }
  func.func @transform_3(%arg0: i32) -> (i32, i32) {
    %c0_i32 = arith.constant 0 : i32
    %c0_i32_0 = arith.constant 0 : i32
    %c0_i32_1 = arith.constant 0 : i32
    return %c0_i32, %c0_i32_0 : i32, i32
  }
  func.func @transform_4(%arg0: i32) -> (i32, i32) {
    %c0_i32 = arith.constant 0 : i32
    %c0_i32_0 = arith.constant 0 : i32
    return %arg0, %c0_i32 : i32, i32
  }
}

module attributes {stable_mosaic.version = 11 : i64} {
  func.func @_matmul_affine_kernel(%arg0: i32, %arg1: memref<16x32xbf16, #tpu.memory_space<vmem>>, %arg2: memref<32x768xbf16, #tpu.memory_space<vmem>>, %arg3: memref<1x768xf32, #tpu.memory_space<vmem>>, %arg4: memref<1x768xf32, #tpu.memory_space<vmem>>, %arg5: memref<16x768xf32, #tpu.memory_space<vmem>>) attributes {dimension_semantics = [#tpu.dimension_semantics<parallel>], iteration_bounds = array<i64: 1>, scalar_prefetch = 0 : i64, scratch_operands = 0 : i64, tpu.core_type = #tpu.core_type<tc>, window_params = [{transform_indices = @transform_0, window_bounds = array<i64: 16, 32>}, {pipeline_mode = #tpu.pipeline_mode<synchronous>, transform_indices = @transform_1, window_bounds = array<i64: 32, 768>}, {pipeline_mode = #tpu.pipeline_mode<synchronous>, transform_indices = @transform_2, window_bounds = array<i64: 1, 768>}, {pipeline_mode = #tpu.pipeline_mode<synchronous>, transform_indices = @transform_3, window_bounds = array<i64: 1, 768>}, {transform_indices = @transform_4, window_bounds = array<i64: 16, 768>}]} {
    %c0 = arith.constant 0 : index
    %c0_0 = arith.constant 0 : index
    %0 = vector.load %arg1[%c0, %c0_0] : memref<16x32xbf16, #tpu.memory_space<vmem>>, vector<16x32xbf16>
    %c0_1 = arith.constant 0 : index
    %c0_2 = arith.constant 0 : index
    %1 = vector.load %arg2[%c0_1, %c0_2] : memref<32x768xbf16, #tpu.memory_space<vmem>>, vector<32x768xbf16>
    %cst = arith.constant dense<0.000000e+00> : vector<16x768xf32>
    %2 = tpu.matmul %0, %1, %cst {dimension_numbers = #tpu.dot_dimension_numbers<[1], [0], [0], [1], [0, 0, 1, 1], [], []>} : vector<16x32xbf16>, vector<32x768xbf16>, vector<16x768xf32> -> vector<16x768xf32>
    %c0_3 = arith.constant 0 : index
    %c0_4 = arith.constant 0 : index
    %3 = vector.load %arg3[%c0_3, %c0_4] : memref<1x768xf32, #tpu.memory_space<vmem>>, vector<1x768xf32>
    %4 = vector.broadcast %3 : vector<1x768xf32> to vector<16x768xf32>
    %5 = arith.mulf %2, %4 : vector<16x768xf32>
    %c0_5 = arith.constant 0 : index
    %c0_6 = arith.constant 0 : index
    %6 = vector.load %arg4[%c0_5, %c0_6] : memref<1x768xf32, #tpu.memory_space<vmem>>, vector<1x768xf32>
    %7 = vector.broadcast %6 : vector<1x768xf32> to vector<16x768xf32>
    %8 = arith.addf %5, %7 : vector<16x768xf32>
    %c0_7 = arith.constant 0 : index
    %c0_8 = arith.constant 0 : index
    %9 = vector.load %arg5[%c0_7, %c0_8] : memref<16x768xf32, #tpu.memory_space<vmem>>, vector<16x768xf32>
    tpu.vector_store %arg5[%c0_7, %c0_8], %8 {strides = array<i32>} : memref<16x768xf32, #tpu.memory_space<vmem>>, vector<16x768xf32>,
    return
  }
  func.func @transform_0(%arg0: i32) -> (i32, i32) {
    %c0_i32 = arith.constant 0 : i32
    %c0_i32_0 = arith.constant 0 : i32
    return %arg0, %c0_i32 : i32, i32
  }
  func.func @transform_1(%arg0: i32) -> (i32, i32) {
    %c0_i32 = arith.constant 0 : i32
    %c0_i32_0 = arith.constant 0 : i32
    %c0_i32_1 = arith.constant 0 : i32
    return %c0_i32, %c0_i32_0 : i32, i32
  }
  func.func @transform_2(%arg0: i32) -> (i32, i32) {
    %c0_i32 = arith.constant 0 : i32
    %c0_i32_0 = arith.constant 0 : i32
    %c0_i32_1 = arith.constant 0 : i32
    return %c0_i32, %c0_i32_0 : i32, i32
  }
  func.func @transform_3(%arg0: i32) -> (i32, i32) {
    %c0_i32 = arith.constant 0 : i32
    %c0_i32_0 = arith.constant 0 : i32
    %c0_i32_1 = arith.constant 0 : i32
    return %c0_i32, %c0_i32_0 : i32, i32
  }
  func.func @transform_4(%arg0: i32) -> (i32, i32) {
    %c0_i32 = arith.constant 0 : i32
    %c0_i32_0 = arith.constant 0 : i32
    return %arg0, %c0_i32 : i32, i32
  }
}

module attributes {stable_mosaic.version = 11 : i64} {
  func.func @_gru_linear_kernel(%arg0: i32, %arg1: memref<2x2x128xf32, #tpu.memory_space<vmem>>, %arg2: memref<1x2x384xf32, #tpu.memory_space<vmem>>, %arg3: memref<1x2x384xf32, #tpu.memory_space<vmem>>, %arg4: memref<256x768xbf16, #tpu.memory_space<vmem>>, %arg5: memref<1x768xf32, #tpu.memory_space<vmem>>, %arg6: memref<256x128xbf16, #tpu.memory_space<vmem>>, %arg7: memref<1x128xf32, #tpu.memory_space<vmem>>, %arg8: memref<6x2x128xf32, #tpu.memory_space<vmem>>, %arg9: memref<2x256xf32, #tpu.memory_space<vmem>>) attributes {dimension_semantics = [#tpu.dimension_semantics<arbitrary>], iteration_bounds = array<i64: 6>, scalar_prefetch = 0 : i64, scratch_operands = 1 : i64, tpu.core_type = #tpu.core_type<tc>, window_params = [{pipeline_mode = #tpu.pipeline_mode<synchronous>, transform_indices = @transform_0, window_bounds = array<i64: 2, 2, 128>}, {transform_indices = @transform_1, window_bounds = array<i64: 1, 2, 384>}, {transform_indices = @transform_2, window_bounds = array<i64: 1, 2, 384>}, {pipeline_mode = #tpu.pipeline_mode<synchronous>, transform_indices = @transform_3, window_bounds = array<i64: 256, 768>}, {pipeline_mode = #tpu.pipeline_mode<synchronous>, transform_indices = @transform_4, window_bounds = array<i64: 1, 768>}, {pipeline_mode = #tpu.pipeline_mode<synchronous>, transform_indices = @transform_5, window_bounds = array<i64: 256, 128>}, {pipeline_mode = #tpu.pipeline_mode<synchronous>, transform_indices = @transform_6, window_bounds = array<i64: 1, 128>}, {pipeline_mode = #tpu.pipeline_mode<synchronous>, transform_indices = @transform_7, window_bounds = array<i64: 6, 2, 128>}]} {
    %c0_i32 = arith.constant 0 : i32
    %0 = arith.cmpi eq, %arg0, %c0_i32 : i32
    %1 = arith.extui %0 : i1 to i32
    %c0_i32_0 = arith.constant 0 : i32
    %2 = arith.cmpi ne, %1, %c0_i32_0 : i32
    scf.if %2 {
      %c0_35 = arith.constant 0 : index
      %c0_36 = arith.constant 0 : index
      %c0_37 = arith.constant 0 : index
      %99 = vector.load %arg1[%c0_35, %c0_36, %c0_37] : memref<2x2x128xf32, #tpu.memory_space<vmem>>, vector<1x2x128xf32>
      %100 = vector.shape_cast %99 : vector<1x2x128xf32> to vector<2x128xf32>
      %c0_38 = arith.constant 0 : index
      %c0_39 = arith.constant 0 : index
      %101 = vector.load %arg9[%c0_38, %c0_39] : memref<2x256xf32, #tpu.memory_space<vmem>>, vector<2x128xf32>
      tpu.vector_store %arg9[%c0_38, %c0_39], %100 {strides = array<i32>} : memref<2x256xf32, #tpu.memory_space<vmem>>, vector<2x128xf32>,
      %c1 = arith.constant 1 : index
      %c0_40 = arith.constant 0 : index
      %c0_41 = arith.constant 0 : index
      %102 = vector.load %arg1[%c1, %c0_40, %c0_41] : memref<2x2x128xf32, #tpu.memory_space<vmem>>, vector<1x2x128xf32>
      %103 = vector.shape_cast %102 : vector<1x2x128xf32> to vector<2x128xf32>
      %c0_42 = arith.constant 0 : index
      %c128_43 = arith.constant 128 : index
      %104 = vector.load %arg9[%c0_42, %c128_43] : memref<2x256xf32, #tpu.memory_space<vmem>>, vector<2x128xf32>
      tpu.vector_store %arg9[%c0_42, %c128_43], %103 {strides = array<i32>} : memref<2x256xf32, #tpu.memory_space<vmem>>, vector<2x128xf32>,
      %cst_44 = arith.constant 0.000000e+00 : f32
      %105 = vector.broadcast %cst_44 : f32 to vector<6x2x128xf32>
      %c0_45 = arith.constant 0 : index
      %c0_46 = arith.constant 0 : index
      %c0_47 = arith.constant 0 : index
      %106 = vector.load %arg8[%c0_45, %c0_46, %c0_47] : memref<6x2x128xf32, #tpu.memory_space<vmem>>, vector<6x2x128xf32>
      tpu.vector_store %arg8[%c0_45, %c0_46, %c0_47], %105 {strides = array<i32>} : memref<6x2x128xf32, #tpu.memory_space<vmem>>, vector<6x2x128xf32>,
    } else {
    }
    %c0 = arith.constant 0 : index
    %c0_1 = arith.constant 0 : index
    %3 = vector.load %arg9[%c0, %c0_1] : memref<2x256xf32, #tpu.memory_space<vmem>>, vector<2x256xf32>
    %4 = arith.truncf %3 : vector<2x256xf32> to vector<2x256xbf16>
    %c0_2 = arith.constant 0 : index
    %c0_3 = arith.constant 0 : index
    %5 = vector.load %arg4[%c0_2, %c0_3] : memref<256x768xbf16, #tpu.memory_space<vmem>>, vector<256x768xbf16>
    %cst = arith.constant dense<0.000000e+00> : vector<2x768xf32>
    %6 = tpu.matmul %4, %5, %cst {dimension_numbers = #tpu.dot_dimension_numbers<[1], [0], [0], [1], [0, 0, 1, 1], [], []>} : vector<2x256xbf16>, vector<256x768xbf16>, vector<2x768xf32> -> vector<2x768xf32>
    %c0_4 = arith.constant 0 : index
    %c0_5 = arith.constant 0 : index
    %7 = vector.load %arg5[%c0_4, %c0_5] : memref<1x768xf32, #tpu.memory_space<vmem>>, vector<1x768xf32>
    %8 = vector.broadcast %7 : vector<1x768xf32> to vector<2x768xf32>
    %9 = arith.addf %6, %8 : vector<2x768xf32>
    %c0_6 = arith.constant 0 : index
    %c0_7 = arith.constant 0 : index
    %c0_8 = arith.constant 0 : index
    %10 = vector.load %arg2[%c0_6, %c0_7, %c0_8] : memref<1x2x384xf32, #tpu.memory_space<vmem>>, vector<1x2x384xf32>
    %11 = vector.shape_cast %10 : vector<1x2x384xf32> to vector<2x384xf32>
    %c0_9 = arith.constant 0 : index
    %c0_10 = arith.constant 0 : index
    %c0_11 = arith.constant 0 : index
    %12 = vector.load %arg3[%c0_9, %c0_10, %c0_11] : memref<1x2x384xf32, #tpu.memory_space<vmem>>, vector<1x2x384xf32>
    %13 = vector.shape_cast %12 : vector<1x2x384xf32> to vector<2x384xf32>
    %14 = vector.extract_strided_slice %9 {offsets = [0, 0], sizes = [2, 384], strides = [1, 1]} : vector<2x768xf32> to vector<2x384xf32>
    %15 = vector.extract_strided_slice %3 {offsets = [0, 0], sizes = [2, 128], strides = [1, 1]} : vector<2x256xf32> to vector<2x128xf32>
    %16 = vector.extract_strided_slice %11 {offsets = [0, 0], sizes = [2, 128], strides = [1, 1]} : vector<2x384xf32> to vector<2x128xf32>
    %17 = vector.extract_strided_slice %14 {offsets = [0, 0], sizes = [2, 128], strides = [1, 1]} : vector<2x384xf32> to vector<2x128xf32>
    %18 = arith.addf %16, %17 : vector<2x128xf32>
    %19 = arith.negf %18 : vector<2x128xf32>
    %20 = math.exp %19 : vector<2x128xf32>
    %cst_12 = arith.constant 1.000000e+00 : f32
    %21 = vector.broadcast %cst_12 : f32 to vector<2x128xf32>
    %22 = arith.addf %21, %20 : vector<2x128xf32>
    %23 = arith.divf %21, %22 : vector<2x128xf32>
    %24 = vector.extract_strided_slice %11 {offsets = [0, 128], sizes = [2, 128], strides = [1, 1]} : vector<2x384xf32> to vector<2x128xf32>
    %25 = vector.extract_strided_slice %14 {offsets = [0, 128], sizes = [2, 128], strides = [1, 1]} : vector<2x384xf32> to vector<2x128xf32>
    %26 = arith.addf %24, %25 : vector<2x128xf32>
    %27 = arith.negf %26 : vector<2x128xf32>
    %28 = math.exp %27 : vector<2x128xf32>
    %cst_13 = arith.constant 1.000000e+00 : f32
    %29 = vector.broadcast %cst_13 : f32 to vector<2x128xf32>
    %30 = arith.addf %29, %28 : vector<2x128xf32>
    %31 = arith.divf %29, %30 : vector<2x128xf32>
    %32 = vector.extract_strided_slice %11 {offsets = [0, 256], sizes = [2, 128], strides = [1, 1]} : vector<2x384xf32> to vector<2x128xf32>
    %33 = vector.extract_strided_slice %14 {offsets = [0, 256], sizes = [2, 128], strides = [1, 1]} : vector<2x384xf32> to vector<2x128xf32>
    %34 = arith.mulf %23, %33 : vector<2x128xf32>
    %35 = arith.addf %32, %34 : vector<2x128xf32>
    %36 = math.tanh %35 : vector<2x128xf32>
    %cst_14 = arith.constant 1.000000e+00 : f32
    %37 = vector.broadcast %cst_14 : f32 to vector<2x128xf32>
    %38 = arith.subf %37, %31 : vector<2x128xf32>
    %39 = arith.mulf %38, %36 : vector<2x128xf32>
    %40 = arith.mulf %31, %15 : vector<2x128xf32>
    %41 = arith.addf %39, %40 : vector<2x128xf32>
    %42 = vector.extract_strided_slice %9 {offsets = [0, 384], sizes = [2, 384], strides = [1, 1]} : vector<2x768xf32> to vector<2x384xf32>
    %43 = vector.extract_strided_slice %3 {offsets = [0, 128], sizes = [2, 128], strides = [1, 1]} : vector<2x256xf32> to vector<2x128xf32>
    %44 = vector.extract_strided_slice %13 {offsets = [0, 0], sizes = [2, 128], strides = [1, 1]} : vector<2x384xf32> to vector<2x128xf32>
    %45 = vector.extract_strided_slice %42 {offsets = [0, 0], sizes = [2, 128], strides = [1, 1]} : vector<2x384xf32> to vector<2x128xf32>
    %46 = arith.addf %44, %45 : vector<2x128xf32>
    %47 = arith.negf %46 : vector<2x128xf32>
    %48 = math.exp %47 : vector<2x128xf32>
    %cst_15 = arith.constant 1.000000e+00 : f32
    %49 = vector.broadcast %cst_15 : f32 to vector<2x128xf32>
    %50 = arith.addf %49, %48 : vector<2x128xf32>
    %51 = arith.divf %49, %50 : vector<2x128xf32>
    %52 = vector.extract_strided_slice %13 {offsets = [0, 128], sizes = [2, 128], strides = [1, 1]} : vector<2x384xf32> to vector<2x128xf32>
    %53 = vector.extract_strided_slice %42 {offsets = [0, 128], sizes = [2, 128], strides = [1, 1]} : vector<2x384xf32> to vector<2x128xf32>
    %54 = arith.addf %52, %53 : vector<2x128xf32>
    %55 = arith.negf %54 : vector<2x128xf32>
    %56 = math.exp %55 : vector<2x128xf32>
    %cst_16 = arith.constant 1.000000e+00 : f32
    %57 = vector.broadcast %cst_16 : f32 to vector<2x128xf32>
    %58 = arith.addf %57, %56 : vector<2x128xf32>
    %59 = arith.divf %57, %58 : vector<2x128xf32>
    %60 = vector.extract_strided_slice %13 {offsets = [0, 256], sizes = [2, 128], strides = [1, 1]} : vector<2x384xf32> to vector<2x128xf32>
    %61 = vector.extract_strided_slice %42 {offsets = [0, 256], sizes = [2, 128], strides = [1, 1]} : vector<2x384xf32> to vector<2x128xf32>
    %62 = arith.mulf %51, %61 : vector<2x128xf32>
    %63 = arith.addf %60, %62 : vector<2x128xf32>
    %64 = math.tanh %63 : vector<2x128xf32>
    %cst_17 = arith.constant 1.000000e+00 : f32
    %65 = vector.broadcast %cst_17 : f32 to vector<2x128xf32>
    %66 = arith.subf %65, %59 : vector<2x128xf32>
    %67 = arith.mulf %66, %64 : vector<2x128xf32>
    %68 = arith.mulf %59, %43 : vector<2x128xf32>
    %69 = arith.addf %67, %68 : vector<2x128xf32>
    %c0_18 = arith.constant 0 : index
    %c0_19 = arith.constant 0 : index
    %70 = vector.load %arg9[%c0_18, %c0_19] : memref<2x256xf32, #tpu.memory_space<vmem>>, vector<2x128xf32>
    tpu.vector_store %arg9[%c0_18, %c0_19], %41 {strides = array<i32>} : memref<2x256xf32, #tpu.memory_space<vmem>>, vector<2x128xf32>,
    %c0_20 = arith.constant 0 : index
    %c128 = arith.constant 128 : index
    %71 = vector.load %arg9[%c0_20, %c128] : memref<2x256xf32, #tpu.memory_space<vmem>>, vector<2x128xf32>
    tpu.vector_store %arg9[%c0_20, %c128], %69 {strides = array<i32>} : memref<2x256xf32, #tpu.memory_space<vmem>>, vector<2x128xf32>,
    %c0_21 = arith.constant 0 : index
    %c0_22 = arith.constant 0 : index
    %72 = vector.load %arg6[%c0_21, %c0_22] : memref<256x128xbf16, #tpu.memory_space<vmem>>, vector<256x128xbf16>
    %73 = arith.truncf %41 : vector<2x128xf32> to vector<2x128xbf16>
    %74 = vector.extract_strided_slice %72 {offsets = [0, 0], sizes = [128, 128], strides = [1, 1]} : vector<256x128xbf16> to vector<128x128xbf16>
    %cst_23 = arith.constant dense<0.000000e+00> : vector<2x128xf32>
    %75 = tpu.matmul %73, %74, %cst_23 {dimension_numbers = #tpu.dot_dimension_numbers<[1], [0], [0], [1], [0, 0, 1, 1], [], []>} : vector<2x128xbf16>, vector<128x128xbf16>, vector<2x128xf32> -> vector<2x128xf32>
    %76 = arith.truncf %69 : vector<2x128xf32> to vector<2x128xbf16>
    %77 = vector.extract_strided_slice %72 {offsets = [128, 0], sizes = [128, 128], strides = [1, 1]} : vector<256x128xbf16> to vector<128x128xbf16>
    %cst_24 = arith.constant dense<0.000000e+00> : vector<2x128xf32>
    %78 = tpu.matmul %76, %77, %cst_24 {dimension_numbers = #tpu.dot_dimension_numbers<[1], [0], [0], [1], [0, 0, 1, 1], [], []>} : vector<2x128xbf16>, vector<128x128xbf16>, vector<2x128xf32> -> vector<2x128xf32>
    %79 = arith.index_cast %arg0 : i32 to index
    %c0_25 = arith.constant 0 : index
    %c0_26 = arith.constant 0 : index
    %80 = vector.load %arg8[%79, %c0_25, %c0_26] : memref<6x2x128xf32, #tpu.memory_space<vmem>>, vector<1x2x128xf32>
    %81 = vector.shape_cast %80 : vector<1x2x128xf32> to vector<2x128xf32>
    %82 = arith.addf %81, %75 : vector<2x128xf32>
    %c0_27 = arith.constant 0 : index
    %c0_28 = arith.constant 0 : index
    %83 = vector.load %arg7[%c0_27, %c0_28] : memref<1x128xf32, #tpu.memory_space<vmem>>, vector<1x128xf32>
    %84 = vector.broadcast %83 : vector<1x128xf32> to vector<2x128xf32>
    %85 = arith.addf %82, %84 : vector<2x128xf32>
    %86 = arith.index_cast %arg0 : i32 to index
    %c0_29 = arith.constant 0 : index
    %c0_30 = arith.constant 0 : index
    %87 = vector.load %arg8[%86, %c0_29, %c0_30] : memref<6x2x128xf32, #tpu.memory_space<vmem>>, vector<1x2x128xf32>
    %88 = vector.shape_cast %87 : vector<1x2x128xf32> to vector<2x128xf32>
    %89 = vector.shape_cast %85 : vector<2x128xf32> to vector<1x2x128xf32>
    tpu.vector_store %arg8[%86, %c0_29, %c0_30], %89 {strides = array<i32>} : memref<6x2x128xf32, #tpu.memory_space<vmem>>, vector<1x2x128xf32>,
    %c5_i32 = arith.constant 5 : i32
    %90 = arith.subi %c5_i32, %arg0 : i32
    %91 = arith.index_cast %90 : i32 to index
    %c0_31 = arith.constant 0 : index
    %c0_32 = arith.constant 0 : index
    %92 = vector.load %arg8[%91, %c0_31, %c0_32] : memref<6x2x128xf32, #tpu.memory_space<vmem>>, vector<1x2x128xf32>
    %93 = vector.shape_cast %92 : vector<1x2x128xf32> to vector<2x128xf32>
    %94 = arith.addf %93, %78 : vector<2x128xf32>
    %95 = arith.index_cast %90 : i32 to index
    %c0_33 = arith.constant 0 : index
    %c0_34 = arith.constant 0 : index
    %96 = vector.load %arg8[%95, %c0_33, %c0_34] : memref<6x2x128xf32, #tpu.memory_space<vmem>>, vector<1x2x128xf32>
    %97 = vector.shape_cast %96 : vector<1x2x128xf32> to vector<2x128xf32>
    %98 = vector.shape_cast %94 : vector<2x128xf32> to vector<1x2x128xf32>
    tpu.vector_store %arg8[%95, %c0_33, %c0_34], %98 {strides = array<i32>} : memref<6x2x128xf32, #tpu.memory_space<vmem>>, vector<1x2x128xf32>,
    return
  }
  func.func @transform_0(%arg0: i32) -> (i32, i32, i32) {
    %c0_i32 = arith.constant 0 : i32
    %c0_i32_0 = arith.constant 0 : i32
    %c0_i32_1 = arith.constant 0 : i32
    %c0_i32_2 = arith.constant 0 : i32
    return %c0_i32, %c0_i32_0, %c0_i32_1 : i32, i32, i32
  }
  func.func @transform_1(%arg0: i32) -> (i32, i32, i32) {
    %c0_i32 = arith.constant 0 : i32
    %c0_i32_0 = arith.constant 0 : i32
    %c0_i32_1 = arith.constant 0 : i32
    return %arg0, %c0_i32, %c0_i32_0 : i32, i32, i32
  }
  func.func @transform_2(%arg0: i32) -> (i32, i32, i32) {
    %c5_i32 = arith.constant 5 : i32
    %0 = arith.subi %c5_i32, %arg0 : i32
    %c0_i32 = arith.constant 0 : i32
    %c1_i32 = arith.constant 1 : i32
    %c0_i32_0 = arith.constant 0 : i32
    return %0, %c0_i32, %c1_i32 : i32, i32, i32
  }
  func.func @transform_3(%arg0: i32) -> (i32, i32) {
    %c0_i32 = arith.constant 0 : i32
    %c0_i32_0 = arith.constant 0 : i32
    %c0_i32_1 = arith.constant 0 : i32
    return %c0_i32, %c0_i32_0 : i32, i32
  }
  func.func @transform_4(%arg0: i32) -> (i32, i32) {
    %c0_i32 = arith.constant 0 : i32
    %c0_i32_0 = arith.constant 0 : i32
    %c0_i32_1 = arith.constant 0 : i32
    return %c0_i32, %c0_i32_0 : i32, i32
  }
  func.func @transform_5(%arg0: i32) -> (i32, i32) {
    %c0_i32 = arith.constant 0 : i32
    %c0_i32_0 = arith.constant 0 : i32
    %c0_i32_1 = arith.constant 0 : i32
    return %c0_i32, %c0_i32_0 : i32, i32
  }
  func.func @transform_6(%arg0: i32) -> (i32, i32) {
    %c0_i32 = arith.constant 0 : i32
    %c0_i32_0 = arith.constant 0 : i32
    %c0_i32_1 = arith.constant 0 : i32
    return %c0_i32, %c0_i32_0 : i32, i32
  }
  func.func @transform_7(%arg0: i32) -> (i32, i32, i32) {
    %c0_i32 = arith.constant 0 : i32
    %c0_i32_0 = arith.constant 0 : i32
    %c0_i32_1 = arith.constant 0 : i32
    %c0_i32_2 = arith.constant 0 : i32
    return %c0_i32, %c0_i32_0, %c0_i32_1 : i32, i32, i32
  }
}

</mosaic_0001>

<llo_original>
// kernel: _lambda_.8
$region0: #{_lambda_.8}
  #allocation0 [shape = 'u32[]', space=smem, size = 0x4, offset = 0x4, fixed_abs, tag = 'smem constant byte address 0x4 - core index']
  #allocation1 [shape = 'u32[72,128]{1,0:T(1,128)}', space=vmem, size = 0x9000, scoped, tag = 'internal scratch']
  %s0 = inlined_call_operand.vmem [shape: bf16[3072,27], index: 0, kind: input, shape index: {}]
  %s1 = inlined_call_operand.vmem [shape: bf16[27,32], index: 1, kind: input, shape index: {}]
  %s2 = inlined_call_operand.vmem [shape: f32[1,32], index: 2, kind: input, shape index: {}]
  %s3 = inlined_call_operand.vmem [shape: f32[1,32], index: 3, kind: input, shape index: {}]
  %s4 = inlined_call_operand.vmem [shape: f32[3072,32], index: 4, kind: output, shape index: {}]
  %s5 = sld [smem:[#allocation0]]
  $region49: #{_lambda_.8} parent=0
    _
  %s7 = ssub.s32 1, %s5
  %s8 = scalar_select 0, %s7, %s5
  loop: start=0, step=1, limit=8
  $region2: #{_lambda_.8} parent=0 // loop_pre_header
    _
  $region3: #{_lambda_.8} parent=0 // loop_header
    %s10 = sphi 0, %s14
    %p11 = scmp.ge.s32.totalorder %s10, 8
    %s20 = sphi 0, %s22
    %s23 = sphi 0, %s20
    %s24 = sphi 0, %s23
    %s40 = sphi 0, %s24
    %s44 = sphi 0, %s44
    %s46 = sphi 0, %s44
    %s47 = sphi 0, %s46
    %s61 = sphi 0, %s47
    %s65 = sphi 0, %s65
    %s67 = sphi 0, %s65
    %s68 = sphi 0, %s67
    %s82 = sphi 0, %s68
    %s86 = sphi 0, %s86
    %s88 = sphi 0, %s86
    %s89 = sphi 0, %s88
    %s103 = sphi 0, %s89
    %s109 = sphi 0, %s111
    %s112 = sphi 0, %s109
    %s113 = sphi 0, %s112
    %s129 = sphi 0, %s113
  $region4: #{_lambda_.8} parent=0 // loop_header_branch
    %13 = sbr.rel (%p11) target = $region8
  $region5: #{_lambda_.8} parent=0 // loop_body
    %s15 = ssub.s32 %s10, 1
    %s16 = ssub.s32 %s10, 2
    %s17 = sadd.s32 %s10, 1
    %s18 = ssub.s32 %s10, %s17
    %p19 = scmp.eq.s32.totalorder %s18, 0
    %s21 = sadd.s32 %s20, 1
    %s22 = scalar_select %p19, %s20, %s21
    %p25 = pneg %p19
    %p26 = scmp.eq.s32.totalorder %s10, 5
    %p27 = por %p25, %p26
    %p28 = scmp.ne.s32.totalorder %s20, %s23
    %p29 = scmp.eq.s32.totalorder %s10, 0
    %p30 = por %p28, %p29
    %p31 = scmp.ne.s32.totalorder %s20, %s23
    %p32 = scmp.eq.s32.totalorder %s15, 5
    %p33 = por %p31, %p32
    %p34 = scmp.ne.s32.totalorder %s23, %s24
    %p35 = scmp.eq.s32.totalorder %s15, 0
    %p36 = por %p34, %p35
    %p37 = scmp.ne.s32.totalorder %s23, %s24
    %p38 = scmp.eq.s32.totalorder %s16, 5
    %p39 = por %p37, %p38
    %p41 = scmp.ne.s32.totalorder %s24, %s40
    %p42 = scmp.eq.s32.totalorder %s16, 0
    %p43 = por %p41, %p42
    %s45 = sadd.s32 %s44, 1
    %p48 = scmp.eq.s32.totalorder %s10, 5
    %p49 = scmp.ne.s32.totalorder %s44, %s46
    %p50 = scmp.eq.s32.totalorder %s10, 0
    %p51 = por %p49, %p50
    %p52 = scmp.ne.s32.totalorder %s44, %s46
    %p53 = scmp.eq.s32.totalorder %s15, 5
    %p54 = por %p52, %p53
    %p55 = scmp.ne.s32.totalorder %s46, %s47
    %p56 = scmp.eq.s32.totalorder %s15, 0
    %p57 = por %p55, %p56
    %p58 = scmp.ne.s32.totalorder %s46, %s47
    %p59 = scmp.eq.s32.totalorder %s16, 5
    %p60 = por %p58, %p59
    %p62 = scmp.ne.s32.totalorder %s47, %s61
    %p63 = scmp.eq.s32.totalorder %s16, 0
    %p64 = por %p62, %p63
    %s66 = sadd.s32 %s65, 1
    %p69 = scmp.eq.s32.totalorder %s10, 5
    %p70 = scmp.ne.s32.totalorder %s65, %s67
    %p71 = scmp.eq.s32.totalorder %s10, 0
    %p72 = por %p70, %p71
    %p73 = scmp.ne.s32.totalorder %s65, %s67
    %p74 = scmp.eq.s32.totalorder %s15, 5
    %p75 = por %p73, %p74
    %p76 = scmp.ne.s32.totalorder %s67, %s68
    %p77 = scmp.eq.s32.totalorder %s15, 0
    %p78 = por %p76, %p77
    %p79 = scmp.ne.s32.totalorder %s67, %s68
    %p80 = scmp.eq.s32.totalorder %s16, 5
    %p81 = por %p79, %p80
    %p83 = scmp.ne.s32.totalorder %s68, %s82
    %p84 = scmp.eq.s32.totalorder %s16, 0
    %p85 = por %p83, %p84
    %s87 = sadd.s32 %s86, 1
    %p90 = scmp.eq.s32.totalorder %s10, 5
    %p91 = scmp.ne.s32.totalorder %s86, %s88
    %p92 = scmp.eq.s32.totalorder %s10, 0
    %p93 = por %p91, %p92
    %p94 = scmp.ne.s32.totalorder %s86, %s88
    %p95 = scmp.eq.s32.totalorder %s15, 5
    %p96 = por %p94, %p95
    %p97 = scmp.ne.s32.totalorder %s88, %s89
    %p98 = scmp.eq.s32.totalorder %s15, 0
    %p99 = por %p97, %p98
    %p100 = scmp.ne.s32.totalorder %s88, %s89
    %p101 = scmp.eq.s32.totalorder %s16, 5
    %p102 = por %p100, %p101
    %p104 = scmp.ne.s32.totalorder %s89, %s103
    %p105 = scmp.eq.s32.totalorder %s16, 0
    %p106 = por %p104, %p105
    %s107 = ssub.s32 %s10, %s17
    %p108 = scmp.eq.s32.totalorder %s107, 0
    %s110 = sadd.s32 %s109, 1
    %s111 = scalar_select %p108, %s109, %s110
    %p114 = pneg %p108
    %p115 = scmp.eq.s32.totalorder %s10, 5
    %p116 = por %p114, %p115
    %p117 = scmp.ne.s32.totalorder %s109, %s112
    %p118 = scmp.eq.s32.totalorder %s10, 0
    %p119 = por %p117, %p118
    %p120 = scmp.ne.s32.totalorder %s109, %s112
    %p121 = scmp.eq.s32.totalorder %s15, 5
    %p122 = por %p120, %p121
    %p123 = scmp.ne.s32.totalorder %s112, %s113
    %p124 = scmp.eq.s32.totalorder %s15, 0
    %p125 = por %p123, %p124
    %p126 = scmp.ne.s32.totalorder %s112, %s113
    %p127 = scmp.eq.s32.totalorder %s16, 5
    %p128 = por %p126, %p127
    %p130 = scmp.ne.s32.totalorder %s113, %s129
    %p131 = scmp.eq.s32.totalorder %s16, 0
    %p132 = por %p130, %p131
    %p133 = scmp.le.s32.totalorder 1, %s10
    %p134 = scmp.lt.s32.totalorder %s10, 7
    %p135 = pnand %p133, %p134
    %p136 = pneg %p135
    // Predicated region
    $region9: #{_lambda_.8} parent=5 // pred_check
      _
    $region10: #{_lambda_.8} parent=5 // pred_check_branch
      %138 = sbr.rel (%p135) target = $region12
    $region11: #{_lambda_.8} parent=5 // pred_region
      %s139 = ssub.s32 %s10, 1
      // Predicated region
      $region13: #{_lambda_.8} parent=11 // pred_check
        %p140 = pneg %p57
      $region14: #{_lambda_.8} parent=11 // pred_check_branch
        %142 = sbr.rel (%p140) target = $region16
      $region15: #{_lambda_.8} parent=11 // pred_region
        _
      $region16: #{_lambda_.8} parent=11 // pred_fallthru
        _
      // Predicated region
      $region17: #{_lambda_.8} parent=11 // pred_check
        %p143 = pneg %p78
      $region18: #{_lambda_.8} parent=11 // pred_check_branch
        %145 = sbr.rel (%p143) target = $region20
      $region19: #{_lambda_.8} parent=11 // pred_region
        _
      $region20: #{_lambda_.8} parent=11 // pred_fallthru
        _
      // Predicated region
      $region21: #{_lambda_.8} parent=11 // pred_check
        %p146 = pneg %p99
      $region22: #{_lambda_.8} parent=11 // pred_check_branch
        %148 = sbr.rel (%p146) target = $region24
      $region23: #{_lambda_.8} parent=11 // pred_region
        _
      $region24: #{_lambda_.8} parent=11 // pred_fallthru
        _
    $region12: #{_lambda_.8} parent=5 // pred_fallthru
      _
    %p149 = scmp.lt.s32.totalorder %s10, 6
    // Predicated region
    $region25: #{_lambda_.8} parent=5 // pred_check
      %p150 = pneg %p149
    $region26: #{_lambda_.8} parent=5 // pred_check_branch
      %152 = sbr.rel (%p150) target = $region28
    $region27: #{_lambda_.8} parent=5 // pred_region
      // Predicated region
      $region29: #{_lambda_.8} parent=27 // pred_check
        %p153 = pneg %p30
      $region30: #{_lambda_.8} parent=27 // pred_check_branch
        %155 = sbr.rel (%p153) target = $region32
      $region31: #{_lambda_.8} parent=27 // pred_region
        %s156 = smul.u32 64, %s10
        %p157 = scmp.lt.s32.totalorder %s156, 383
        %s158 = scalar_select %p157, %s156, 383
        %s159 = smul.addr %s158, 4
        %s160 = scalar_lea.vmem %s0, %s159
        %s161 = smul.u32 64, %s10
      $region32: #{_lambda_.8} parent=27 // pred_fallthru
        _
    $region28: #{_lambda_.8} parent=5 // pred_fallthru
      _
    %p162 = scmp.le.s32.totalorder 1, %s10
    %p163 = scmp.lt.s32.totalorder %s10, 7
    %p164 = pnand %p162, %p163
    %p165 = pneg %p164
    // Predicated region
    $region33: #{_lambda_.8} parent=5 // pred_check
      _
    $region34: #{_lambda_.8} parent=5 // pred_check_branch
      %167 = sbr.rel (%p164) target = $region36
    $region35: #{_lambda_.8} parent=5 // pred_region
      %s168 = ssub.s32 %s10, 1
      %s169 = smul.u32 64, %s15
      %p170 = scmp.lt.s32.totalorder %s169, 383
      %s171 = scalar_select %p170, %s169, 383
      %s172 = smul.addr %s171, 4
      %s173 = scalar_lea.vmem %s0, %s172
      %p174 = pneg %p36
      %p175 = pneg %p33
      %p176 = pneg %p57
      %p177 = pneg %p54
      %p178 = pneg %p78
      %p179 = pneg %p75
      %p180 = pneg %p99
      %p181 = pneg %p96
      %p182 = pneg %p125
      %p183 = pneg %p122
      %s184 = smul.u32 64, %s15
      %p185 = scmp.lt.s32.totalorder %s184, 383
      %s186 = scalar_select %p185, %s184, 383
      %s187 = smul.addr %s186, 8
      %s188 = scalar_lea.vmem %s4, %s187
      %s189 = smul.u32 64, %s15
      %p190 = scmp.lt.s32.totalorder %s189, 383
      %s191 = scalar_select %p190, %s189, 383
      %s192 = smul.addr %s191, 4
      %s193 = scalar_lea.vmem %s0, %s192
      %s194 = smul.u32 64, %s15
      %s195 = smul.u32 64, %s15
      %p196 = scmp.lt.s32.totalorder %s195, 383
      %s197 = scalar_select %p196, %s195, 383
      %s198 = smul.addr %s197, 8
      %s199 = scalar_lea.vmem %s4, %s198
      %s200 = smul.u32 64, %s15
      %v202 = vld [vmem:[%s193] sm:$0xf]
      %v203 = vld [vmem:[%s193 + $0x4] sm:$0xf]
      %v204 = vld [vmem:[%s193 + $0x8] sm:$0xf]
      %v205 = vld [vmem:[%s193 + $0xc] sm:$0xf]
      %v206 = vld [vmem:[%s193 + $0x10] sm:$0xf]
      %v207 = vld [vmem:[%s193 + $0x14] sm:$0xf]
      %v208 = vld [vmem:[%s193 + $0x18] sm:$0xf]
      %v209 = vld [vmem:[%s193 + $0x1c] sm:$0xf]
      %v210 = vld [vmem:[%s193 + $0x20] sm:$0xf]
      %v211 = vld [vmem:[%s193 + $0x24] sm:$0xf]
      %v212 = vld [vmem:[%s193 + $0x28] sm:$0xf]
      %v213 = vld [vmem:[%s193 + $0x2c] sm:$0xf]
      %v214 = vld [vmem:[%s193 + $0x30] sm:$0xf]
      %v215 = vld [vmem:[%s193 + $0x34] sm:$0xf]
      %v216 = vld [vmem:[%s193 + $0x38] sm:$0xf]
      %v217 = vld [vmem:[%s193 + $0x3c] sm:$0xf]
      %v218 = vld [vmem:[%s193 + $0x40] sm:$0xf]
      %v219 = vld [vmem:[%s193 + $0x44] sm:$0xf]
      %v220 = vld [vmem:[%s193 + $0x48] sm:$0xf]
      %v221 = vld [vmem:[%s193 + $0x4c] sm:$0xf]
      %v222 = vld [vmem:[%s193 + $0x50] sm:$0xf]
      %v223 = vld [vmem:[%s193 + $0x54] sm:$0xf]
      %v224 = vld [vmem:[%s193 + $0x58] sm:$0xf]
      %v225 = vld [vmem:[%s193 + $0x5c] sm:$0xf]
      %v226 = vld [vmem:[%s193 + $0x60] sm:$0xf]
      %v227 = vld [vmem:[%s193 + $0x64] sm:$0xf]
      %v228 = vld [vmem:[%s193 + $0x68] sm:$0xf]
      %v229 = vld [vmem:[%s193 + $0x6c] sm:$0xf]
      %v230 = vld [vmem:[%s193 + $0x70] sm:$0xf]
      %v231 = vld [vmem:[%s193 + $0x74] sm:$0xf]
      %v232 = vld [vmem:[%s193 + $0x78] sm:$0xf]
      %v233 = vld [vmem:[%s193 + $0x7c] sm:$0xf]
      %v234 = vld [vmem:[%s193 + $0x80] sm:$0xf]
      %v235 = vld [vmem:[%s193 + $0x84] sm:$0xf]
      %v236 = vld [vmem:[%s193 + $0x88] sm:$0xf]
      %v237 = vld [vmem:[%s193 + $0x8c] sm:$0xf]
      %v238 = vld [vmem:[%s193 + $0x90] sm:$0xf]
      %v239 = vld [vmem:[%s193 + $0x94] sm:$0xf]
      %v240 = vld [vmem:[%s193 + $0x98] sm:$0xf]
      %v241 = vld [vmem:[%s193 + $0x9c] sm:$0xf]
      %v242 = vld [vmem:[%s193 + $0xa0] sm:$0xf]
      %v243 = vld [vmem:[%s193 + $0xa4] sm:$0xf]
      %v244 = vld [vmem:[%s193 + $0xa8] sm:$0xf]
      %v245 = vld [vmem:[%s193 + $0xac] sm:$0xf]
      %v246 = vld [vmem:[%s193 + $0xb0] sm:$0xf]
      %v247 = vld [vmem:[%s193 + $0xb4] sm:$0xf]
      %v248 = vld [vmem:[%s193 + $0xb8] sm:$0xf]
      %v249 = vld [vmem:[%s193 + $0xbc] sm:$0xf]
      %v250 = vld [vmem:[%s193 + $0xc0] sm:$0xf]
      %v251 = vld [vmem:[%s193 + $0xc4] sm:$0xf]
      %v252 = vld [vmem:[%s193 + $0xc8] sm:$0xf]
      %v253 = vld [vmem:[%s193 + $0xcc] sm:$0xf]
      %v254 = vld [vmem:[%s193 + $0xd0] sm:$0xf]
      %v255 = vld [vmem:[%s193 + $0xd4] sm:$0xf]
      %v256 = vld [vmem:[%s193 + $0xd8] sm:$0xf]
      %v257 = vld [vmem:[%s193 + $0xdc] sm:$0xf]
      %v258 = vld [vmem:[%s193 + $0xe0] sm:$0xf]
      %v259 = vld [vmem:[%s193 + $0xe4] sm:$0xf]
      %v260 = vld [vmem:[%s193 + $0xe8] sm:$0xf]
      %v261 = vld [vmem:[%s193 + $0xec] sm:$0xf]
      %v262 = vld [vmem:[%s193 + $0xf0] sm:$0xf]
      %v263 = vld [vmem:[%s193 + $0xf4] sm:$0xf]
      %v264 = vld [vmem:[%s193 + $0xf8] sm:$0xf]
      %v265 = vld [vmem:[%s193 + $0xfc] sm:$0xf]
      %v266 = vld [vmem:[%s1] sm:$0xf]
      %v267 = vld [vmem:[%s1 + $0x4] sm:$0xf]
      %v268 = vld [vmem:[%s1 + $0x8] sm:$0xf]
      %v269 = vld [vmem:[%s1 + $0xc] sm:$0x3]
      %v334 = vunpack.c.l.b16 %v202
      %v335 = vunpack.c.l.b16 %v203
      %v336 = vunpack.c.l.b16 %v204
      %v337 = vunpack.c.l.b16 %v205
      %v338 = vunpack.c.l.b16 %v206
      %v339 = vunpack.c.l.b16 %v207
      %v340 = vunpack.c.l.b16 %v208
      %v341 = vunpack.c.l.b16 %v209
      %v342 = vunpack.c.l.b16 %v210
      %v343 = vunpack.c.l.b16 %v211
      %v344 = vunpack.c.l.b16 %v212
      %v345 = vunpack.c.l.b16 %v213
      %v346 = vunpack.c.l.b16 %v214
      %v347 = vunpack.c.l.b16 %v215
      %v348 = vunpack.c.l.b16 %v216
      %v349 = vunpack.c.l.b16 %v217
      %v350 = vunpack.c.l.b16 %v218
      %v351 = vunpack.c.l.b16 %v219
      %v352 = vunpack.c.l.b16 %v220
      %v353 = vunpack.c.l.b16 %v221
      %v354 = vunpack.c.l.b16 %v222
      %v355 = vunpack.c.l.b16 %v223
      %v356 = vunpack.c.l.b16 %v224
      %v357 = vunpack.c.l.b16 %v225
      %v358 = vunpack.c.l.b16 %v226
      %v359 = vunpack.c.l.b16 %v227
      %v360 = vunpack.c.l.b16 %v228
      %v361 = vunpack.c.l.b16 %v229
      %v362 = vunpack.c.l.b16 %v230
      %v363 = vunpack.c.l.b16 %v231
      %v364 = vunpack.c.l.b16 %v232
      %v365 = vunpack.c.l.b16 %v233
      %v366 = vunpack.c.l.b16 %v234
      %v367 = vunpack.c.l.b16 %v235
      %v368 = vunpack.c.l.b16 %v236
      %v369 = vunpack.c.l.b16 %v237
      %v370 = vunpack.c.l.b16 %v238
      %v371 = vunpack.c.l.b16 %v239
      %v372 = vunpack.c.l.b16 %v240
      %v373 = vunpack.c.l.b16 %v241
      %v374 = vunpack.c.l.b16 %v242
      %v375 = vunpack.c.l.b16 %v243
      %v376 = vunpack.c.l.b16 %v244
      %v377 = vunpack.c.l.b16 %v245
      %v378 = vunpack.c.l.b16 %v246
      %v379 = vunpack.c.l.b16 %v247
      %v380 = vunpack.c.l.b16 %v248
      %v381 = vunpack.c.l.b16 %v249
      %v382 = vunpack.c.l.b16 %v250
      %v383 = vunpack.c.l.b16 %v251
      %v384 = vunpack.c.l.b16 %v252
      %v385 = vunpack.c.l.b16 %v253
      %v386 = vunpack.c.l.b16 %v254
      %v387 = vunpack.c.l.b16 %v255
      %v388 = vunpack.c.l.b16 %v256
      %v389 = vunpack.c.l.b16 %v257
      %v390 = vunpack.c.l.b16 %v258
      %v391 = vunpack.c.l.b16 %v259
      %v392 = vunpack.c.l.b16 %v260
      %v393 = vunpack.c.l.b16 %v261
      %v394 = vunpack.c.l.b16 %v262
      %v395 = vunpack.c.l.b16 %v263
      %v396 = vunpack.c.l.b16 %v264
      %v397 = vunpack.c.l.b16 %v265
      %v398 = vpack.c.b16 %v335, %v334
      %v399 = vpack.c.b16 %v337, %v336
      %v400 = vpack.c.b16 %v339, %v338
      %v401 = vpack.c.b16 %v341, %v340
      %v402 = vpack.c.b16 %v343, %v342
      %v403 = vpack.c.b16 %v345, %v344
      %v404 = vpack.c.b16 %v347, %v346
      %v405 = vpack.c.b16 %v349, %v348
      %v406 = vpack.c.b16 %v351, %v350
      %v407 = vpack.c.b16 %v353, %v352
      %v408 = vpack.c.b16 %v355, %v354
      %v409 = vpack.c.b16 %v357, %v356
      %v410 = vpack.c.b16 %v359, %v358
      %v411 = vpack.c.b16 %v361, %v360
      %v412 = vpack.c.b16 %v363, %v362
      %v413 = vpack.c.b16 %v365, %v364
      %v414 = vpack.c.b16 %v367, %v366
      %v415 = vpack.c.b16 %v369, %v368
      %v416 = vpack.c.b16 %v371, %v370
      %v417 = vpack.c.b16 %v373, %v372
      %v418 = vpack.c.b16 %v375, %v374
      %v419 = vpack.c.b16 %v377, %v376
      %v420 = vpack.c.b16 %v379, %v378
      %v421 = vpack.c.b16 %v381, %v380
      %v422 = vpack.c.b16 %v383, %v382
      %v423 = vpack.c.b16 %v385, %v384
      %v424 = vpack.c.b16 %v387, %v386
      %v425 = vpack.c.b16 %v389, %v388
      %v426 = vpack.c.b16 %v391, %v390
      %v427 = vpack.c.b16 %v393, %v392
      %v428 = vpack.c.b16 %v395, %v394
      %v429 = vpack.c.b16 %v397, %v396
      %v434 = vunpack.c.l.b16 %v266
      %v435 = vunpack.c.l.b16 %v267
      %v436 = vunpack.c.l.b16 %v268
      %v437 = vunpack.c.l.b16 %v269
      %v438 = vpack.c.b16 %v435, %v434
      %v439 = vpack.c.b16 %v437, %v436
      %vm441 = vcmask 220160
      %v443 = vsel %vm441, %v398, 0
      %v446 = vsel %vm441, %v399, 0
      %v449 = vsel %vm441, %v400, 0
      %v452 = vsel %vm441, %v401, 0
      %v455 = vsel %vm441, %v402, 0
      %v458 = vsel %vm441, %v403, 0
      %v461 = vsel %vm441, %v404, 0
      %v464 = vsel %vm441, %v405, 0
      %v467 = vsel %vm441, %v406, 0
      %v470 = vsel %vm441, %v407, 0
      %v473 = vsel %vm441, %v408, 0
      %v476 = vsel %vm441, %v409, 0
      %v479 = vsel %vm441, %v410, 0
      %v482 = vsel %vm441, %v411, 0
      %v485 = vsel %vm441, %v412, 0
      %v488 = vsel %vm441, %v413, 0
      %v491 = vsel %vm441, %v414, 0
      %v494 = vsel %vm441, %v415, 0
      %v497 = vsel %vm441, %v416, 0
      %v500 = vsel %vm441, %v417, 0
      %v503 = vsel %vm441, %v418, 0
      %v506 = vsel %vm441, %v419, 0
      %v509 = vsel %vm441, %v420, 0
      %v512 = vsel %vm441, %v421, 0
      %v515 = vsel %vm441, %v422, 0
      %v518 = vsel %vm441, %v423, 0
      %v521 = vsel %vm441, %v424, 0
      %v524 = vsel %vm441, %v425, 0
      %v527 = vsel %vm441, %v426, 0
      %v530 = vsel %vm441, %v427, 0
      %v533 = vsel %vm441, %v428, 0
      %v536 = vsel %vm441, %v429, 0
      %vm538 = vcmask 1044480
      %vm539 = vcmask 1045504
      %v540 = vsel %vm538, 4294967295, 65535
      %v541 = vsel %vm539, %v540, 0
      %v543 = vand.u32 %v439, %v541
      %545 = vmatpush.bf16.msra.mxu0 0
      %546 = vmatpush.bf16.msra.mxu0 0
      %547 = vmatpush.bf16.msra.mxu0 0
      %548 = vmatpush.bf16.msra.mxu0 0
      %549 = vmatpush.bf16.msra.mxu0 0
      %550 = vmatpush.bf16.msra.mxu0 0
      %551 = vmatpush.bf16.msra.mxu0 %v543
      %552 = vmatpush.bf16.msra.mxu0 %v438
      %553 = vmatmul.bf16.gmra.mxu0 %v443
      %v554 = vpop.f32.mrf.mxu0
      %v555 = vadd.f32 0.0, %v554
      %v556 = vpop.f32.mrf.mxu0
      %v557 = vadd.f32 0.0, %v556
      %558 = vmatmul.bf16.gmra.mxu0 %v446
      %v559 = vpop.f32.mrf.mxu0
      %v560 = vadd.f32 0.0, %v559
      %v561 = vpop.f32.mrf.mxu0
      %v562 = vadd.f32 0.0, %v561
      %563 = vmatmul.bf16.gmra.mxu0 %v449
      %v564 = vpop.f32.mrf.mxu0
      %v565 = vadd.f32 0.0, %v564
      %v566 = vpop.f32.mrf.mxu0
      %v567 = vadd.f32 0.0, %v566
      %568 = vmatmul.bf16.gmra.mxu0 %v452
      %v569 = vpop.f32.mrf.mxu0
      %v570 = vadd.f32 0.0, %v569
      %v571 = vpop.f32.mrf.mxu0
      %v572 = vadd.f32 0.0, %v571
      %573 = vmatmul.bf16.gmra.mxu0 %v455
      %v574 = vpop.f32.mrf.mxu0
      %v575 = vadd.f32 0.0, %v574
      %v576 = vpop.f32.mrf.mxu0
      %v577 = vadd.f32 0.0, %v576
      %578 = vmatmul.bf16.gmra.mxu0 %v458
      %v579 = vpop.f32.mrf.mxu0
      %v580 = vadd.f32 0.0, %v579
      %v581 = vpop.f32.mrf.mxu0
      %v582 = vadd.f32 0.0, %v581
      %583 = vmatmul.bf16.gmra.mxu0 %v461
      %v584 = vpop.f32.mrf.mxu0
      %v585 = vadd.f32 0.0, %v584
      %v586 = vpop.f32.mrf.mxu0
      %v587 = vadd.f32 0.0, %v586
      %588 = vmatmul.bf16.gmra.mxu0 %v464
      %v589 = vpop.f32.mrf.mxu0
      %v590 = vadd.f32 0.0, %v589
      %v591 = vpop.f32.mrf.mxu0
      %v592 = vadd.f32 0.0, %v591
      %593 = vmatmul.bf16.gmra.mxu0 %v467
      %v594 = vpop.f32.mrf.mxu0
      %v595 = vadd.f32 0.0, %v594
      %v596 = vpop.f32.mrf.mxu0
      %v597 = vadd.f32 0.0, %v596
      %598 = vmatmul.bf16.gmra.mxu0 %v470
      %v599 = vpop.f32.mrf.mxu0
      %v600 = vadd.f32 0.0, %v599
      %v601 = vpop.f32.mrf.mxu0
      %v602 = vadd.f32 0.0, %v601
      %603 = vmatmul.bf16.gmra.mxu0 %v473
      %v604 = vpop.f32.mrf.mxu0
      %v605 = vadd.f32 0.0, %v604
      %v606 = vpop.f32.mrf.mxu0
      %v607 = vadd.f32 0.0, %v606
      %608 = vmatmul.bf16.gmra.mxu0 %v476
      %v609 = vpop.f32.mrf.mxu0
      %v610 = vadd.f32 0.0, %v609
      %v611 = vpop.f32.mrf.mxu0
      %v612 = vadd.f32 0.0, %v611
      %613 = vmatmul.bf16.gmra.mxu0 %v479
      %v614 = vpop.f32.mrf.mxu0
      %v615 = vadd.f32 0.0, %v614
      %v616 = vpop.f32.mrf.mxu0
      %v617 = vadd.f32 0.0, %v616
      %618 = vmatmul.bf16.gmra.mxu0 %v482
      %v619 = vpop.f32.mrf.mxu0
      %v620 = vadd.f32 0.0, %v619
      %v621 = vpop.f32.mrf.mxu0
      %v622 = vadd.f32 0.0, %v621
      %623 = vmatmul.bf16.gmra.mxu0 %v485
      %v624 = vpop.f32.mrf.mxu0
      %v625 = vadd.f32 0.0, %v624
      %v626 = vpop.f32.mrf.mxu0
      %v627 = vadd.f32 0.0, %v626
      %628 = vmatmul.bf16.gmra.mxu0 %v488
      %v629 = vpop.f32.mrf.mxu0
      %v630 = vadd.f32 0.0, %v629
      %v631 = vpop.f32.mrf.mxu0
      %v632 = vadd.f32 0.0, %v631
      %633 = vmatmul.bf16.gmra.mxu0 %v491
      %v634 = vpop.f32.mrf.mxu0
      %v635 = vadd.f32 0.0, %v634
      %v636 = vpop.f32.mrf.mxu0
      %v637 = vadd.f32 0.0, %v636
      %638 = vmatmul.bf16.gmra.mxu0 %v494
      %v639 = vpop.f32.mrf.mxu0
      %v640 = vadd.f32 0.0, %v639
      %v641 = vpop.f32.mrf.mxu0
      %v642 = vadd.f32 0.0, %v641
      %643 = vmatmul.bf16.gmra.mxu0 %v497
      %v644 = vpop.f32.mrf.mxu0
      %v645 = vadd.f32 0.0, %v644
      %v646 = vpop.f32.mrf.mxu0
      %v647 = vadd.f32 0.0, %v646
      %648 = vmatmul.bf16.gmra.mxu0 %v500
      %v649 = vpop.f32.mrf.mxu0
      %v650 = vadd.f32 0.0, %v649
      %v651 = vpop.f32.mrf.mxu0
      %v652 = vadd.f32 0.0, %v651
      %653 = vmatmul.bf16.gmra.mxu0 %v503
      %v654 = vpop.f32.mrf.mxu0
      %v655 = vadd.f32 0.0, %v654
      %v656 = vpop.f32.mrf.mxu0
      %v657 = vadd.f32 0.0, %v656
      %658 = vmatmul.bf16.gmra.mxu0 %v506
      %v659 = vpop.f32.mrf.mxu0
      %v660 = vadd.f32 0.0, %v659
      %v661 = vpop.f32.mrf.mxu0
      %v662 = vadd.f32 0.0, %v661
      %663 = vmatmul.bf16.gmra.mxu0 %v509
      %v664 = vpop.f32.mrf.mxu0
      %v665 = vadd.f32 0.0, %v664
      %v666 = vpop.f32.mrf.mxu0
      %v667 = vadd.f32 0.0, %v666
      %668 = vmatmul.bf16.gmra.mxu0 %v512
      %v669 = vpop.f32.mrf.mxu0
      %v670 = vadd.f32 0.0, %v669
      %v671 = vpop.f32.mrf.mxu0
      %v672 = vadd.f32 0.0, %v671
      %673 = vmatmul.bf16.gmra.mxu0 %v515
      %v674 = vpop.f32.mrf.mxu0
      %v675 = vadd.f32 0.0, %v674
      %v676 = vpop.f32.mrf.mxu0
      %v677 = vadd.f32 0.0, %v676
      %678 = vmatmul.bf16.gmra.mxu0 %v518
      %v679 = vpop.f32.mrf.mxu0
      %v680 = vadd.f32 0.0, %v679
      %v681 = vpop.f32.mrf.mxu0
      %v682 = vadd.f32 0.0, %v681
      %683 = vmatmul.bf16.gmra.mxu0 %v521
      %v684 = vpop.f32.mrf.mxu0
      %v685 = vadd.f32 0.0, %v684
      %v686 = vpop.f32.mrf.mxu0
      %v687 = vadd.f32 0.0, %v686
      %688 = vmatmul.bf16.gmra.mxu0 %v524
      %v689 = vpop.f32.mrf.mxu0
      %v690 = vadd.f32 0.0, %v689
      %v691 = vpop.f32.mrf.mxu0
      %v692 = vadd.f32 0.0, %v691
      %693 = vmatmul.bf16.gmra.mxu0 %v527
      %v694 = vpop.f32.mrf.mxu0
      %v695 = vadd.f32 0.0, %v694
      %v696 = vpop.f32.mrf.mxu0
      %v697 = vadd.f32 0.0, %v696
      %698 = vmatmul.bf16.gmra.mxu0 %v530
      %v699 = vpop.f32.mrf.mxu0
      %v700 = vadd.f32 0.0, %v699
      %v701 = vpop.f32.mrf.mxu0
      %v702 = vadd.f32 0.0, %v701
      %703 = vmatmul.bf16.gmra.mxu0 %v533
      %v704 = vpop.f32.mrf.mxu0
      %v705 = vadd.f32 0.0, %v704
      %v706 = vpop.f32.mrf.mxu0
      %v707 = vadd.f32 0.0, %v706
      %708 = vmatmul.bf16.gmra.mxu0 %v536
      %v709 = vpop.f32.mrf.mxu0
      %v710 = vadd.f32 0.0, %v709
      %v711 = vpop.f32.mrf.mxu0
      %v712 = vadd.f32 0.0, %v711
      %713 = vdwg.mxu0
      %v714 = vld [vmem:[%s2] sm:$0x1]
      %v716 = vperm.slane %v714, 0
      %v718 = vmul.f32 %v555, %v716
      %v719 = vmul.f32 %v557, %v716
      %v720 = vmul.f32 %v560, %v716
      %v721 = vmul.f32 %v562, %v716
      %v722 = vmul.f32 %v565, %v716
      %v723 = vmul.f32 %v567, %v716
      %v724 = vmul.f32 %v570, %v716
      %v725 = vmul.f32 %v572, %v716
      %v726 = vmul.f32 %v575, %v716
      %v727 = vmul.f32 %v577, %v716
      %v728 = vmul.f32 %v580, %v716
      %v729 = vmul.f32 %v582, %v716
      %v730 = vmul.f32 %v585, %v716
      %v731 = vmul.f32 %v587, %v716
      %v732 = vmul.f32 %v590, %v716
      %v733 = vmul.f32 %v592, %v716
      %v734 = vmul.f32 %v595, %v716
      %v735 = vmul.f32 %v597, %v716
      %v736 = vmul.f32 %v600, %v716
      %v737 = vmul.f32 %v602, %v716
      %v738 = vmul.f32 %v605, %v716
      %v739 = vmul.f32 %v607, %v716
      %v740 = vmul.f32 %v610, %v716
      %v741 = vmul.f32 %v612, %v716
      %v742 = vmul.f32 %v615, %v716
      %v743 = vmul.f32 %v617, %v716
      %v744 = vmul.f32 %v620, %v716
      %v745 = vmul.f32 %v622, %v716
      %v746 = vmul.f32 %v625, %v716
      %v747 = vmul.f32 %v627, %v716
      %v748 = vmul.f32 %v630, %v716
      %v749 = vmul.f32 %v632, %v716
      %v750 = vmul.f32 %v635, %v716
      %v751 = vmul.f32 %v637, %v716
      %v752 = vmul.f32 %v640, %v716
      %v753 = vmul.f32 %v642, %v716
      %v754 = vmul.f32 %v645, %v716
      %v755 = vmul.f32 %v647, %v716
      %v756 = vmul.f32 %v650, %v716
      %v757 = vmul.f32 %v652, %v716
      %v758 = vmul.f32 %v655, %v716
      %v759 = vmul.f32 %v657, %v716
      %v760 = vmul.f32 %v660, %v716
      %v761 = vmul.f32 %v662, %v716
      %v762 = vmul.f32 %v665, %v716
      %v763 = vmul.f32 %v667, %v716
      %v764 = vmul.f32 %v670, %v716
      %v765 = vmul.f32 %v672, %v716
      %v766 = vmul.f32 %v675, %v716
      %v767 = vmul.f32 %v677, %v716
      %v768 = vmul.f32 %v680, %v716
      %v769 = vmul.f32 %v682, %v716
      %v770 = vmul.f32 %v685, %v716
      %v771 = vmul.f32 %v687, %v716
      %v772 = vmul.f32 %v690, %v716
      %v773 = vmul.f32 %v692, %v716
      %v774 = vmul.f32 %v695, %v716
      %v775 = vmul.f32 %v697, %v716
      %v776 = vmul.f32 %v700, %v716
      %v777 = vmul.f32 %v702, %v716
      %v778 = vmul.f32 %v705, %v716
      %v779 = vmul.f32 %v707, %v716
      %v780 = vmul.f32 %v710, %v716
      %v781 = vmul.f32 %v712, %v716
      %v782 = vld [vmem:[%s3] sm:$0x1]
      %v784 = vperm.slane %v782, 0
      %v786 = vadd.f32 %v718, %v784
      %v787 = vadd.f32 %v719, %v784
      %v788 = vadd.f32 %v720, %v784
      %v789 = vadd.f32 %v721, %v784
      %v790 = vadd.f32 %v722, %v784
      %v791 = vadd.f32 %v723, %v784
      %v792 = vadd.f32 %v724, %v784
      %v793 = vadd.f32 %v725, %v784
      %v794 = vadd.f32 %v726, %v784
      %v795 = vadd.f32 %v727, %v784
      %v796 = vadd.f32 %v728, %v784
      %v797 = vadd.f32 %v729, %v784
      %v798 = vadd.f32 %v730, %v784
      %v799 = vadd.f32 %v731, %v784
      %v800 = vadd.f32 %v732, %v784
      %v801 = vadd.f32 %v733, %v784
      %v802 = vadd.f32 %v734, %v784
      %v803 = vadd.f32 %v735, %v784
      %v804 = vadd.f32 %v736, %v784
      %v805 = vadd.f32 %v737, %v784
      %v806 = vadd.f32 %v738, %v784
      %v807 = vadd.f32 %v739, %v784
      %v808 = vadd.f32 %v740, %v784
      %v809 = vadd.f32 %v741, %v784
      %v810 = vadd.f32 %v742, %v784
      %v811 = vadd.f32 %v743, %v784
      %v812 = vadd.f32 %v744, %v784
      %v813 = vadd.f32 %v745, %v784
      %v814 = vadd.f32 %v746, %v784
      %v815 = vadd.f32 %v747, %v784
      %v816 = vadd.f32 %v748, %v784
      %v817 = vadd.f32 %v749, %v784
      %v818 = vadd.f32 %v750, %v784
      %v819 = vadd.f32 %v751, %v784
      %v820 = vadd.f32 %v752, %v784
      %v821 = vadd.f32 %v753, %v784
      %v822 = vadd.f32 %v754, %v784
      %v823 = vadd.f32 %v755, %v784
      %v824 = vadd.f32 %v756, %v784
      %v825 = vadd.f32 %v757, %v784
      %v826 = vadd.f32 %v758, %v784
      %v827 = vadd.f32 %v759, %v784
      %v828 = vadd.f32 %v760, %v784
      %v829 = vadd.f32 %v761, %v784
      %v830 = vadd.f32 %v762, %v784
      %v831 = vadd.f32 %v763, %v784
      %v832 = vadd.f32 %v764, %v784
      %v833 = vadd.f32 %v765, %v784
      %v834 = vadd.f32 %v766, %v784
      %v835 = vadd.f32 %v767, %v784
      %v836 = vadd.f32 %v768, %v784
      %v837 = vadd.f32 %v769, %v784
      %v838 = vadd.f32 %v770, %v784
      %v839 = vadd.f32 %v771, %v784
      %v840 = vadd.f32 %v772, %v784
      %v841 = vadd.f32 %v773, %v784
      %v842 = vadd.f32 %v774, %v784
      %v843 = vadd.f32 %v775, %v784
      %v844 = vadd.f32 %v776, %v784
      %v845 = vadd.f32 %v777, %v784
      %v846 = vadd.f32 %v778, %v784
      %v847 = vadd.f32 %v779, %v784
      %v848 = vadd.f32 %v780, %v784
      %v849 = vadd.f32 %v781, %v784
      %v850 = vmax.f32 %v786, 0.0
      %v851 = vmax.f32 %v787, 0.0
      %v852 = vmax.f32 %v788, 0.0
      %v853 = vmax.f32 %v789, 0.0
      %v854 = vmax.f32 %v790, 0.0
      %v855 = vmax.f32 %v791, 0.0
      %v856 = vmax.f32 %v792, 0.0
      %v857 = vmax.f32 %v793, 0.0
      %v858 = vmax.f32 %v794, 0.0
      %v859 = vmax.f32 %v795, 0.0
      %v860 = vmax.f32 %v796, 0.0
      %v861 = vmax.f32 %v797, 0.0
      %v862 = vmax.f32 %v798, 0.0
      %v863 = vmax.f32 %v799, 0.0
      %v864 = vmax.f32 %v800, 0.0
      %v865 = vmax.f32 %v801, 0.0
      %v866 = vmax.f32 %v802, 0.0
      %v867 = vmax.f32 %v803, 0.0
      %v868 = vmax.f32 %v804, 0.0
      %v869 = vmax.f32 %v805, 0.0
      %v870 = vmax.f32 %v806, 0.0
      %v871 = vmax.f32 %v807, 0.0
      %v872 = vmax.f32 %v808, 0.0
      %v873 = vmax.f32 %v809, 0.0
      %v874 = vmax.f32 %v810, 0.0
      %v875 = vmax.f32 %v811, 0.0
      %v876 = vmax.f32 %v812, 0.0
      %v877 = vmax.f32 %v813, 0.0
      %v878 = vmax.f32 %v814, 0.0
      %v879 = vmax.f32 %v815, 0.0
      %v880 = vmax.f32 %v816, 0.0
      %v881 = vmax.f32 %v817, 0.0
      %v882 = vmax.f32 %v818, 0.0
      %v883 = vmax.f32 %v819, 0.0
      %v884 = vmax.f32 %v820, 0.0
      %v885 = vmax.f32 %v821, 0.0
      %v886 = vmax.f32 %v822, 0.0
      %v887 = vmax.f32 %v823, 0.0
      %v888 = vmax.f32 %v824, 0.0
      %v889 = vmax.f32 %v825, 0.0
      %v890 = vmax.f32 %v826, 0.0
      %v891 = vmax.f32 %v827, 0.0
      %v892 = vmax.f32 %v828, 0.0
      %v893 = vmax.f32 %v829, 0.0
      %v894 = vmax.f32 %v830, 0.0
      %v895 = vmax.f32 %v831, 0.0
      %v896 = vmax.f32 %v832, 0.0
      %v897 = vmax.f32 %v833, 0.0
      %v898 = vmax.f32 %v834, 0.0
      %v899 = vmax.f32 %v835, 0.0
      %v900 = vmax.f32 %v836, 0.0
      %v901 = vmax.f32 %v837, 0.0
      %v902 = vmax.f32 %v838, 0.0
      %v903 = vmax.f32 %v839, 0.0
      %v904 = vmax.f32 %v840, 0.0
      %v905 = vmax.f32 %v841, 0.0
      %v906 = vmax.f32 %v842, 0.0
      %v907 = vmax.f32 %v843, 0.0
      %v908 = vmax.f32 %v844, 0.0
      %v909 = vmax.f32 %v845, 0.0
      %v910 = vmax.f32 %v846, 0.0
      %v911 = vmax.f32 %v847, 0.0
      %v912 = vmax.f32 %v848, 0.0
      %v913 = vmax.f32 %v849, 0.0
      %vm914 = vcmask 261120
      %915 = vst.msk [vmem:[%s199] sm:$0xff] %vm914, %v850
      %916 = vst.msk [vmem:[%s199 + $0x8] sm:$0xff] %vm914, %v851
      %917 = vst.msk [vmem:[%s199 + $0x10] sm:$0xff] %vm914, %v852
      %918 = vst.msk [vmem:[%s199 + $0x18] sm:$0xff] %vm914, %v853
      %919 = vst.msk [vmem:[%s199 + $0x20] sm:$0xff] %vm914, %v854
      %920 = vst.msk [vmem:[%s199 + $0x28] sm:$0xff] %vm914, %v855
      %921 = vst.msk [vmem:[%s199 + $0x30] sm:$0xff] %vm914, %v856
      %922 = vst.msk [vmem:[%s199 + $0x38] sm:$0xff] %vm914, %v857
      %923 = vst.msk [vmem:[%s199 + $0x40] sm:$0xff] %vm914, %v858
      %924 = vst.msk [vmem:[%s199 + $0x48] sm:$0xff] %vm914, %v859
      %925 = vst.msk [vmem:[%s199 + $0x50] sm:$0xff] %vm914, %v860
      %926 = vst.msk [vmem:[%s199 + $0x58] sm:$0xff] %vm914, %v861
      %927 = vst.msk [vmem:[%s199 + $0x60] sm:$0xff] %vm914, %v862
      %928 = vst.msk [vmem:[%s199 + $0x68] sm:$0xff] %vm914, %v863
      %929 = vst.msk [vmem:[%s199 + $0x70] sm:$0xff] %vm914, %v864
      %930 = vst.msk [vmem:[%s199 + $0x78] sm:$0xff] %vm914, %v865
      %931 = vst.msk [vmem:[%s199 + $0x80] sm:$0xff] %vm914, %v866
      %932 = vst.msk [vmem:[%s199 + $0x88] sm:$0xff] %vm914, %v867
      %933 = vst.msk [vmem:[%s199 + $0x90] sm:$0xff] %vm914, %v868
      %934 = vst.msk [vmem:[%s199 + $0x98] sm:$0xff] %vm914, %v869
      %935 = vst.msk [vmem:[%s199 + $0xa0] sm:$0xff] %vm914, %v870
      %936 = vst.msk [vmem:[%s199 + $0xa8] sm:$0xff] %vm914, %v871
      %937 = vst.msk [vmem:[%s199 + $0xb0] sm:$0xff] %vm914, %v872
      %938 = vst.msk [vmem:[%s199 + $0xb8] sm:$0xff] %vm914, %v873
      %939 = vst.msk [vmem:[%s199 + $0xc0] sm:$0xff] %vm914, %v874
      %940 = vst.msk [vmem:[%s199 + $0xc8] sm:$0xff] %vm914, %v875
      %941 = vst.msk [vmem:[%s199 + $0xd0] sm:$0xff] %vm914, %v876
      %942 = vst.msk [vmem:[%s199 + $0xd8] sm:$0xff] %vm914, %v877
      %943 = vst.msk [vmem:[%s199 + $0xe0] sm:$0xff] %vm914, %v878
      %944 = vst.msk [vmem:[%s199 + $0xe8] sm:$0xff] %vm914, %v879
      %945 = vst.msk [vmem:[%s199 + $0xf0] sm:$0xff] %vm914, %v880
      %946 = vst.msk [vmem:[%s199 + $0xf8] sm:$0xff] %vm914, %v881
      %947 = vst.msk [vmem:[%s199 + $0x100] sm:$0xff] %vm914, %v882
      %948 = vst.msk [vmem:[%s199 + $0x108] sm:$0xff] %vm914, %v883
      %949 = vst.msk [vmem:[%s199 + $0x110] sm:$0xff] %vm914, %v884
      %950 = vst.msk [vmem:[%s199 + $0x118] sm:$0xff] %vm914, %v885
      %951 = vst.msk [vmem:[%s199 + $0x120] sm:$0xff] %vm914, %v886
      %952 = vst.msk [vmem:[%s199 + $0x128] sm:$0xff] %vm914, %v887
      %953 = vst.msk [vmem:[%s199 + $0x130] sm:$0xff] %vm914, %v888
      %954 = vst.msk [vmem:[%s199 + $0x138] sm:$0xff] %vm914, %v889
      %955 = vst.msk [vmem:[%s199 + $0x140] sm:$0xff] %vm914, %v890
      %956 = vst.msk [vmem:[%s199 + $0x148] sm:$0xff] %vm914, %v891
      %957 = vst.msk [vmem:[%s199 + $0x150] sm:$0xff] %vm914, %v892
      %958 = vst.msk [vmem:[%s199 + $0x158] sm:$0xff] %vm914, %v893
      %959 = vst.msk [vmem:[%s199 + $0x160] sm:$0xff] %vm914, %v894
      %960 = vst.msk [vmem:[%s199 + $0x168] sm:$0xff] %vm914, %v895
      %961 = vst.msk [vmem:[%s199 + $0x170] sm:$0xff] %vm914, %v896
      %962 = vst.msk [vmem:[%s199 + $0x178] sm:$0xff] %vm914, %v897
      %963 = vst.msk [vmem:[%s199 + $0x180] sm:$0xff] %vm914, %v898
      %964 = vst.msk [vmem:[%s199 + $0x188] sm:$0xff] %vm914, %v899
      %965 = vst.msk [vmem:[%s199 + $0x190] sm:$0xff] %vm914, %v900
      %966 = vst.msk [vmem:[%s199 + $0x198] sm:$0xff] %vm914, %v901
      %967 = vst.msk [vmem:[%s199 + $0x1a0] sm:$0xff] %vm914, %v902
      %968 = vst.msk [vmem:[%s199 + $0x1a8] sm:$0xff] %vm914, %v903
      %969 = vst.msk [vmem:[%s199 + $0x1b0] sm:$0xff] %vm914, %v904
      %970 = vst.msk [vmem:[%s199 + $0x1b8] sm:$0xff] %vm914, %v905
      %971 = vst.msk [vmem:[%s199 + $0x1c0] sm:$0xff] %vm914, %v906
      %972 = vst.msk [vmem:[%s199 + $0x1c8] sm:$0xff] %vm914, %v907
      %973 = vst.msk [vmem:[%s199 + $0x1d0] sm:$0xff] %vm914, %v908
      %974 = vst.msk [vmem:[%s199 + $0x1d8] sm:$0xff] %vm914, %v909
      %975 = vst.msk [vmem:[%s199 + $0x1e0] sm:$0xff] %vm914, %v910
      %976 = vst.msk [vmem:[%s199 + $0x1e8] sm:$0xff] %vm914, %v911
      %977 = vst.msk [vmem:[%s199 + $0x1f0] sm:$0xff] %vm914, %v912
      %978 = vst.msk [vmem:[%s199 + $0x1f8] sm:$0xff] %vm914, %v913
      %s979 = smul.u32 64, %s15
      %p980 = scmp.lt.s32.totalorder %s979, 383
      %s981 = scalar_select %p980, %s979, 383
      %s982 = smul.addr %s981, 8
      %s983 = scalar_lea.vmem %s4, %s982
      // Predicated region
      $region37: #{_lambda_.8} parent=35 // pred_check
        %p984 = pneg %p122
      $region38: #{_lambda_.8} parent=35 // pred_check_branch
        %986 = sbr.rel (%p984) target = $region40
      $region39: #{_lambda_.8} parent=35 // pred_region
        %s987 = smul.u32 64, %s15
      $region40: #{_lambda_.8} parent=35 // pred_fallthru
        _
    $region36: #{_lambda_.8} parent=5 // pred_fallthru
      _
    %p988 = scmp.le.s32.totalorder 2, %s10
    // Predicated region
    $region41: #{_lambda_.8} parent=5 // pred_check
      %p989 = pneg %p988
    $region42: #{_lambda_.8} parent=5 // pred_check_branch
      %991 = sbr.rel (%p989) target = $region44
    $region43: #{_lambda_.8} parent=5 // pred_region
      %s992 = ssub.s32 %s10, 2
      // Predicated region
      $region45: #{_lambda_.8} parent=43 // pred_check
        %p993 = pneg %p128
      $region46: #{_lambda_.8} parent=43 // pred_check_branch
        %995 = sbr.rel (%p993) target = $region48
      $region47: #{_lambda_.8} parent=43 // pred_region
        %s996 = smul.u32 64, %s16
        %p997 = scmp.lt.s32.totalorder %s996, 383
        %s998 = scalar_select %p997, %s996, 383
        %s999 = smul.addr %s998, 8
        %s1000 = scalar_lea.vmem %s4, %s999
      $region48: #{_lambda_.8} parent=43 // pred_fallthru
        _
    $region44: #{_lambda_.8} parent=5 // pred_fallthru
      _
  $region6: #{_lambda_.8} parent=0 // loop_footer
    %s14 = sadd.s32 1, %s10
  $region7: #{_lambda_.8} parent=0 // loop_footer_branch
    %9 = sbr.rel target = $region3
  $region8: #{_lambda_.8} parent=0 // loop_exit
    _

// kernel: _lambda_.9
$region0: #{_lambda_.9}
  #allocation0 [shape = 'u32[]', space=smem, size = 0x4, offset = 0x4, fixed_abs, tag = 'smem constant byte address 0x4 - core index']
  #allocation1 [shape = 'u32[72,128]{1,0:T(1,128)}', space=vmem, size = 0x9000, scoped, tag = 'internal scratch']
  %s0 = inlined_call_operand.vmem [shape: bf16[480,384], index: 0, kind: input, shape index: {}]
  %s1 = inlined_call_operand.vmem [shape: bf16[384,32], index: 1, kind: input, shape index: {}]
  %s2 = inlined_call_operand.vmem [shape: f32[1,32], index: 2, kind: input, shape index: {}]
  %s3 = inlined_call_operand.vmem [shape: f32[1,32], index: 3, kind: input, shape index: {}]
  %s4 = inlined_call_operand.vmem [shape: f32[480,32], index: 4, kind: output, shape index: {}]
  %s5 = sld [smem:[#allocation0]]
  $region26: #{_lambda_.9} parent=0
    _
  %s7 = ssub.s32 1, %s5
  %s8 = scalar_select 0, %s7, %s5
  // Predicated region
  $region2: #{_lambda_.9} parent=0 // pred_check
    _
  $region3: #{_lambda_.9} parent=0 // pred_check_branch
    %10 = sbr.rel (0) target = $region5
  $region4: #{_lambda_.9} parent=0 // pred_region
    _
  $region5: #{_lambda_.9} parent=0 // pred_fallthru
    _
  // Predicated region
  $region6: #{_lambda_.9} parent=0 // pred_check
    _
  $region7: #{_lambda_.9} parent=0 // pred_check_branch
    %12 = sbr.rel (0) target = $region9
  $region8: #{_lambda_.9} parent=0 // pred_region
    _
  $region9: #{_lambda_.9} parent=0 // pred_fallthru
    _
  // Predicated region
  $region10: #{_lambda_.9} parent=0 // pred_check
    _
  $region11: #{_lambda_.9} parent=0 // pred_check_branch
    %14 = sbr.rel (0) target = $region13
  $region12: #{_lambda_.9} parent=0 // pred_region
    _
  $region13: #{_lambda_.9} parent=0 // pred_fallthru
    _
  // Predicated region
  $region14: #{_lambda_.9} parent=0 // pred_check
    _
  $region15: #{_lambda_.9} parent=0 // pred_check_branch
    %16 = sbr.rel (0) target = $region17
  $region16: #{_lambda_.9} parent=0 // pred_region
    _
  $region17: #{_lambda_.9} parent=0 // pred_fallthru
    _
  %v17 = vld [vmem:[%s0] sm:$0xff]
  %v18 = vld [vmem:[%s0 + $0x8] sm:$0xf]
  %v19 = vld [vmem:[%s0 + $0xc] sm:$0xff]
  %v20 = vld [vmem:[%s0 + $0x14] sm:$0xf]
  %v21 = vld [vmem:[%s0 + $0x18] sm:$0xff]
  %v22 = vld [vmem:[%s0 + $0x20] sm:$0xf]
  %v23 = vld [vmem:[%s0 + $0x24] sm:$0xff]
  %v24 = vld [vmem:[%s0 + $0x2c] sm:$0xf]
  %v25 = vld [vmem:[%s0 + $0x30] sm:$0xff]
  %v26 = vld [vmem:[%s0 + $0x38] sm:$0xf]
  %v27 = vld [vmem:[%s0 + $0x3c] sm:$0xff]
  %v28 = vld [vmem:[%s0 + $0x44] sm:$0xf]
  %v29 = vld [vmem:[%s0 + $0x48] sm:$0xff]
  %v30 = vld [vmem:[%s0 + $0x50] sm:$0xf]
  %v31 = vld [vmem:[%s0 + $0x54] sm:$0xff]
  %v32 = vld [vmem:[%s0 + $0x5c] sm:$0xf]
  %v33 = vld [vmem:[%s0 + $0x60] sm:$0xff]
  %v34 = vld [vmem:[%s0 + $0x68] sm:$0xf]
  %v35 = vld [vmem:[%s0 + $0x6c] sm:$0xff]
  %v36 = vld [vmem:[%s0 + $0x74] sm:$0xf]
  %v37 = vld [vmem:[%s0 + $0x78] sm:$0xff]
  %v38 = vld [vmem:[%s0 + $0x80] sm:$0xf]
  %v39 = vld [vmem:[%s0 + $0x84] sm:$0xff]
  %v40 = vld [vmem:[%s0 + $0x8c] sm:$0xf]
  %v41 = vld [vmem:[%s0 + $0x90] sm:$0xff]
  %v42 = vld [vmem:[%s0 + $0x98] sm:$0xf]
  %v43 = vld [vmem:[%s0 + $0x9c] sm:$0xff]
  %v44 = vld [vmem:[%s0 + $0xa4] sm:$0xf]
  %v45 = vld [vmem:[%s0 + $0xa8] sm:$0xff]
  %v46 = vld [vmem:[%s0 + $0xb0] sm:$0xf]
  %v47 = vld [vmem:[%s0 + $0xb4] sm:$0xff]
  %v48 = vld [vmem:[%s0 + $0xbc] sm:$0xf]
  %v49 = vld [vmem:[%s0 + $0xc0] sm:$0xff]
  %v50 = vld [vmem:[%s0 + $0xc8] sm:$0xf]
  %v51 = vld [vmem:[%s0 + $0xcc] sm:$0xff]
  %v52 = vld [vmem:[%s0 + $0xd4] sm:$0xf]
  %v53 = vld [vmem:[%s0 + $0xd8] sm:$0xff]
  %v54 = vld [vmem:[%s0 + $0xe0] sm:$0xf]
  %v55 = vld [vmem:[%s0 + $0xe4] sm:$0xff]
  %v56 = vld [vmem:[%s0 + $0xec] sm:$0xf]
  %v57 = vld [vmem:[%s0 + $0xf0] sm:$0xff]
  %v58 = vld [vmem:[%s0 + $0xf8] sm:$0xf]
  %v59 = vld [vmem:[%s0 + $0xfc] sm:$0xff]
  %v60 = vld [vmem:[%s0 + $0x104] sm:$0xf]
  %v61 = vld [vmem:[%s0 + $0x108] sm:$0xff]
  %v62 = vld [vmem:[%s0 + $0x110] sm:$0xf]
  %v63 = vld [vmem:[%s0 + $0x114] sm:$0xff]
  %v64 = vld [vmem:[%s0 + $0x11c] sm:$0xf]
  %v65 = vld [vmem:[%s0 + $0x120] sm:$0xff]
  %v66 = vld [vmem:[%s0 + $0x128] sm:$0xf]
  %v67 = vld [vmem:[%s0 + $0x12c] sm:$0xff]
  %v68 = vld [vmem:[%s0 + $0x134] sm:$0xf]
  %v69 = vld [vmem:[%s0 + $0x138] sm:$0xff]
  %v70 = vld [vmem:[%s0 + $0x140] sm:$0xf]
  %v71 = vld [vmem:[%s0 + $0x144] sm:$0xff]
  %v72 = vld [vmem:[%s0 + $0x14c] sm:$0xf]
  %v73 = vld [vmem:[%s0 + $0x150] sm:$0xff]
  %v74 = vld [vmem:[%s0 + $0x158] sm:$0xf]
  %v75 = vld [vmem:[%s0 + $0x15c] sm:$0xff]
  %v76 = vld [vmem:[%s0 + $0x164] sm:$0xf]
  %v77 = vld [vmem:[%s0 + $0x168] sm:$0xff]
  %v78 = vld [vmem:[%s0 + $0x170] sm:$0xf]
  %v79 = vld [vmem:[%s0 + $0x174] sm:$0xff]
  %v80 = vld [vmem:[%s0 + $0x17c] sm:$0xf]
  %v81 = vld [vmem:[%s0 + $0x180] sm:$0xff]
  %v82 = vld [vmem:[%s0 + $0x188] sm:$0xf]
  %v83 = vld [vmem:[%s0 + $0x18c] sm:$0xff]
  %v84 = vld [vmem:[%s0 + $0x194] sm:$0xf]
  %v85 = vld [vmem:[%s0 + $0x198] sm:$0xff]
  %v86 = vld [vmem:[%s0 + $0x1a0] sm:$0xf]
  %v87 = vld [vmem:[%s0 + $0x1a4] sm:$0xff]
  %v88 = vld [vmem:[%s0 + $0x1ac] sm:$0xf]
  %v89 = vld [vmem:[%s0 + $0x1b0] sm:$0xff]
  %v90 = vld [vmem:[%s0 + $0x1b8] sm:$0xf]
  %v91 = vld [vmem:[%s0 + $0x1bc] sm:$0xff]
  %v92 = vld [vmem:[%s0 + $0x1c4] sm:$0xf]
  %v93 = vld [vmem:[%s0 + $0x1c8] sm:$0xff]
  %v94 = vld [vmem:[%s0 + $0x1d0] sm:$0xf]
  %v95 = vld [vmem:[%s0 + $0x1d4] sm:$0xff]
  %v96 = vld [vmem:[%s0 + $0x1dc] sm:$0xf]
  %v97 = vld [vmem:[%s0 + $0x1e0] sm:$0xff]
  %v98 = vld [vmem:[%s0 + $0x1e8] sm:$0xf]
  %v99 = vld [vmem:[%s0 + $0x1ec] sm:$0xff]
  %v100 = vld [vmem:[%s0 + $0x1f4] sm:$0xf]
  %v101 = vld [vmem:[%s0 + $0x1f8] sm:$0xff]
  %v102 = vld [vmem:[%s0 + $0x200] sm:$0xf]
  %v103 = vld [vmem:[%s0 + $0x204] sm:$0xff]
  %v104 = vld [vmem:[%s0 + $0x20c] sm:$0xf]
  %v105 = vld [vmem:[%s0 + $0x210] sm:$0xff]
  %v106 = vld [vmem:[%s0 + $0x218] sm:$0xf]
  %v107 = vld [vmem:[%s0 + $0x21c] sm:$0xff]
  %v108 = vld [vmem:[%s0 + $0x224] sm:$0xf]
  %v109 = vld [vmem:[%s0 + $0x228] sm:$0xff]
  %v110 = vld [vmem:[%s0 + $0x230] sm:$0xf]
  %v111 = vld [vmem:[%s0 + $0x234] sm:$0xff]
  %v112 = vld [vmem:[%s0 + $0x23c] sm:$0xf]
  %v113 = vld [vmem:[%s0 + $0x240] sm:$0xff]
  %v114 = vld [vmem:[%s0 + $0x248] sm:$0xf]
  %v115 = vld [vmem:[%s0 + $0x24c] sm:$0xff]
  %v116 = vld [vmem:[%s0 + $0x254] sm:$0xf]
  %v117 = vld [vmem:[%s0 + $0x258] sm:$0xff]
  %v118 = vld [vmem:[%s0 + $0x260] sm:$0xf]
  %v119 = vld [vmem:[%s0 + $0x264] sm:$0xff]
  %v120 = vld [vmem:[%s0 + $0x26c] sm:$0xf]
  %v121 = vld [vmem:[%s0 + $0x270] sm:$0xff]
  %v122 = vld [vmem:[%s0 + $0x278] sm:$0xf]
  %v123 = vld [vmem:[%s0 + $0x27c] sm:$0xff]
  %v124 = vld [vmem:[%s0 + $0x284] sm:$0xf]
  %v125 = vld [vmem:[%s0 + $0x288] sm:$0xff]
  %v126 = vld [vmem:[%s0 + $0x290] sm:$0xf]
  %v127 = vld [vmem:[%s0 + $0x294] sm:$0xff]
  %v128 = vld [vmem:[%s0 + $0x29c] sm:$0xf]
  %v129 = vld [vmem:[%s0 + $0x2a0] sm:$0xff]
  %v130 = vld [vmem:[%s0 + $0x2a8] sm:$0xf]
  %v131 = vld [vmem:[%s0 + $0x2ac] sm:$0xff]
  %v132 = vld [vmem:[%s0 + $0x2b4] sm:$0xf]
  %v133 = vld [vmem:[%s0 + $0x2b8] sm:$0xff]
  %v134 = vld [vmem:[%s0 + $0x2c0] sm:$0xf]
  %v135 = vld [vmem:[%s0 + $0x2c4] sm:$0xff]
  %v136 = vld [vmem:[%s0 + $0x2cc] sm:$0xf]
  %v137 = vld [vmem:[%s1] sm:$0xf]
  %v138 = vld [vmem:[%s1 + $0x4] sm:$0xf]
  %v139 = vld [vmem:[%s1 + $0x8] sm:$0xf]
  %v140 = vld [vmem:[%s1 + $0xc] sm:$0xf]
  %v141 = vld [vmem:[%s1 + $0x10] sm:$0xf]
  %v142 = vld [vmem:[%s1 + $0x14] sm:$0xf]
  %v143 = vld [vmem:[%s1 + $0x18] sm:$0xf]
  %v144 = vld [vmem:[%s1 + $0x1c] sm:$0xf]
  %v145 = vld [vmem:[%s1 + $0x20] sm:$0xf]
  %v146 = vld [vmem:[%s1 + $0x24] sm:$0xf]
  %v147 = vld [vmem:[%s1 + $0x28] sm:$0xf]
  %v148 = vld [vmem:[%s1 + $0x2c] sm:$0xf]
  %v149 = vld [vmem:[%s1 + $0x30] sm:$0xf]
  %v150 = vld [vmem:[%s1 + $0x34] sm:$0xf]
  %v151 = vld [vmem:[%s1 + $0x38] sm:$0xf]
  %v152 = vld [vmem:[%s1 + $0x3c] sm:$0xf]
  %v153 = vld [vmem:[%s1 + $0x40] sm:$0xf]
  %v154 = vld [vmem:[%s1 + $0x44] sm:$0xf]
  %v155 = vld [vmem:[%s1 + $0x48] sm:$0xf]
  %v156 = vld [vmem:[%s1 + $0x4c] sm:$0xf]
  %v157 = vld [vmem:[%s1 + $0x50] sm:$0xf]
  %v158 = vld [vmem:[%s1 + $0x54] sm:$0xf]
  %v159 = vld [vmem:[%s1 + $0x58] sm:$0xf]
  %v160 = vld [vmem:[%s1 + $0x5c] sm:$0xf]
  %v161 = vld [vmem:[%s1 + $0x60] sm:$0xf]
  %v162 = vld [vmem:[%s1 + $0x64] sm:$0xf]
  %v163 = vld [vmem:[%s1 + $0x68] sm:$0xf]
  %v164 = vld [vmem:[%s1 + $0x6c] sm:$0xf]
  %v165 = vld [vmem:[%s1 + $0x70] sm:$0xf]
  %v166 = vld [vmem:[%s1 + $0x74] sm:$0xf]
  %v167 = vld [vmem:[%s1 + $0x78] sm:$0xf]
  %v168 = vld [vmem:[%s1 + $0x7c] sm:$0xf]
  %v169 = vld [vmem:[%s1 + $0x80] sm:$0xf]
  %v170 = vld [vmem:[%s1 + $0x84] sm:$0xf]
  %v171 = vld [vmem:[%s1 + $0x88] sm:$0xf]
  %v172 = vld [vmem:[%s1 + $0x8c] sm:$0xf]
  %v173 = vld [vmem:[%s1 + $0x90] sm:$0xf]
  %v174 = vld [vmem:[%s1 + $0x94] sm:$0xf]
  %v175 = vld [vmem:[%s1 + $0x98] sm:$0xf]
  %v176 = vld [vmem:[%s1 + $0x9c] sm:$0xf]
  %v177 = vld [vmem:[%s1 + $0xa0] sm:$0xf]
  %v178 = vld [vmem:[%s1 + $0xa4] sm:$0xf]
  %v179 = vld [vmem:[%s1 + $0xa8] sm:$0xf]
  %v180 = vld [vmem:[%s1 + $0xac] sm:$0xf]
  %v181 = vld [vmem:[%s1 + $0xb0] sm:$0xf]
  %v182 = vld [vmem:[%s1 + $0xb4] sm:$0xf]
  %v183 = vld [vmem:[%s1 + $0xb8] sm:$0xf]
  %v184 = vld [vmem:[%s1 + $0xbc] sm:$0xf]
  %v305 = vunpack.c.l.b16 %v17
  %v306 = vunpack.c.h.b16 %v17
  %v307 = vunpack.c.l.b16 %v18
  %v308 = vunpack.c.l.b16 %v19
  %v309 = vunpack.c.h.b16 %v19
  %v310 = vunpack.c.l.b16 %v20
  %v311 = vunpack.c.l.b16 %v21
  %v312 = vunpack.c.h.b16 %v21
  %v313 = vunpack.c.l.b16 %v22
  %v314 = vunpack.c.l.b16 %v23
  %v315 = vunpack.c.h.b16 %v23
  %v316 = vunpack.c.l.b16 %v24
  %v317 = vunpack.c.l.b16 %v25
  %v318 = vunpack.c.h.b16 %v25
  %v319 = vunpack.c.l.b16 %v26
  %v320 = vunpack.c.l.b16 %v27
  %v321 = vunpack.c.h.b16 %v27
  %v322 = vunpack.c.l.b16 %v28
  %v323 = vunpack.c.l.b16 %v29
  %v324 = vunpack.c.h.b16 %v29
  %v325 = vunpack.c.l.b16 %v30
  %v326 = vunpack.c.l.b16 %v31
  %v327 = vunpack.c.h.b16 %v31
  %v328 = vunpack.c.l.b16 %v32
  %v329 = vunpack.c.l.b16 %v33
  %v330 = vunpack.c.h.b16 %v33
  %v331 = vunpack.c.l.b16 %v34
  %v332 = vunpack.c.l.b16 %v35
  %v333 = vunpack.c.h.b16 %v35
  %v334 = vunpack.c.l.b16 %v36
  %v335 = vunpack.c.l.b16 %v37
  %v336 = vunpack.c.h.b16 %v37
  %v337 = vunpack.c.l.b16 %v38
  %v338 = vunpack.c.l.b16 %v39
  %v339 = vunpack.c.h.b16 %v39
  %v340 = vunpack.c.l.b16 %v40
  %v341 = vunpack.c.l.b16 %v41
  %v342 = vunpack.c.h.b16 %v41
  %v343 = vunpack.c.l.b16 %v42
  %v344 = vunpack.c.l.b16 %v43
  %v345 = vunpack.c.h.b16 %v43
  %v346 = vunpack.c.l.b16 %v44
  %v347 = vunpack.c.l.b16 %v45
  %v348 = vunpack.c.h.b16 %v45
  %v349 = vunpack.c.l.b16 %v46
  %v350 = vunpack.c.l.b16 %v47
  %v351 = vunpack.c.h.b16 %v47
  %v352 = vunpack.c.l.b16 %v48
  %v353 = vunpack.c.l.b16 %v49
  %v354 = vunpack.c.h.b16 %v49
  %v355 = vunpack.c.l.b16 %v50
  %v356 = vunpack.c.l.b16 %v51
  %v357 = vunpack.c.h.b16 %v51
  %v358 = vunpack.c.l.b16 %v52
  %v359 = vunpack.c.l.b16 %v53
  %v360 = vunpack.c.h.b16 %v53
  %v361 = vunpack.c.l.b16 %v54
  %v362 = vunpack.c.l.b16 %v55
  %v363 = vunpack.c.h.b16 %v55
  %v364 = vunpack.c.l.b16 %v56
  %v365 = vunpack.c.l.b16 %v57
  %v366 = vunpack.c.h.b16 %v57
  %v367 = vunpack.c.l.b16 %v58
  %v368 = vunpack.c.l.b16 %v59
  %v369 = vunpack.c.h.b16 %v59
  %v370 = vunpack.c.l.b16 %v60
  %v371 = vunpack.c.l.b16 %v61
  %v372 = vunpack.c.h.b16 %v61
  %v373 = vunpack.c.l.b16 %v62
  %v374 = vunpack.c.l.b16 %v63
  %v375 = vunpack.c.h.b16 %v63
  %v376 = vunpack.c.l.b16 %v64
  %v377 = vunpack.c.l.b16 %v65
  %v378 = vunpack.c.h.b16 %v65
  %v379 = vunpack.c.l.b16 %v66
  %v380 = vunpack.c.l.b16 %v67
  %v381 = vunpack.c.h.b16 %v67
  %v382 = vunpack.c.l.b16 %v68
  %v383 = vunpack.c.l.b16 %v69
  %v384 = vunpack.c.h.b16 %v69
  %v385 = vunpack.c.l.b16 %v70
  %v386 = vunpack.c.l.b16 %v71
  %v387 = vunpack.c.h.b16 %v71
  %v388 = vunpack.c.l.b16 %v72
  %v389 = vunpack.c.l.b16 %v73
  %v390 = vunpack.c.h.b16 %v73
  %v391 = vunpack.c.l.b16 %v74
  %v392 = vunpack.c.l.b16 %v75
  %v393 = vunpack.c.h.b16 %v75
  %v394 = vunpack.c.l.b16 %v76
  %v395 = vunpack.c.l.b16 %v77
  %v396 = vunpack.c.h.b16 %v77
  %v397 = vunpack.c.l.b16 %v78
  %v398 = vunpack.c.l.b16 %v79
  %v399 = vunpack.c.h.b16 %v79
  %v400 = vunpack.c.l.b16 %v80
  %v401 = vunpack.c.l.b16 %v81
  %v402 = vunpack.c.h.b16 %v81
  %v403 = vunpack.c.l.b16 %v82
  %v404 = vunpack.c.l.b16 %v83
  %v405 = vunpack.c.h.b16 %v83
  %v406 = vunpack.c.l.b16 %v84
  %v407 = vunpack.c.l.b16 %v85
  %v408 = vunpack.c.h.b16 %v85
  %v409 = vunpack.c.l.b16 %v86
  %v410 = vunpack.c.l.b16 %v87
  %v411 = vunpack.c.h.b16 %v87
  %v412 = vunpack.c.l.b16 %v88
  %v413 = vunpack.c.l.b16 %v89
  %v414 = vunpack.c.h.b16 %v89
  %v415 = vunpack.c.l.b16 %v90
  %v416 = vunpack.c.l.b16 %v91
  %v417 = vunpack.c.h.b16 %v91
  %v418 = vunpack.c.l.b16 %v92
  %v419 = vunpack.c.l.b16 %v93
  %v420 = vunpack.c.h.b16 %v93
  %v421 = vunpack.c.l.b16 %v94
  %v422 = vunpack.c.l.b16 %v95
  %v423 = vunpack.c.h.b16 %v95
  %v424 = vunpack.c.l.b16 %v96
  %v425 = vunpack.c.l.b16 %v97
  %v426 = vunpack.c.h.b16 %v97
  %v427 = vunpack.c.l.b16 %v98
  %v428 = vunpack.c.l.b16 %v99
  %v429 = vunpack.c.h.b16 %v99
  %v430 = vunpack.c.l.b16 %v100
  %v431 = vunpack.c.l.b16 %v101
  %v432 = vunpack.c.h.b16 %v101
  %v433 = vunpack.c.l.b16 %v102
  %v434 = vunpack.c.l.b16 %v103
  %v435 = vunpack.c.h.b16 %v103
  %v436 = vunpack.c.l.b16 %v104
  %v437 = vunpack.c.l.b16 %v105
  %v438 = vunpack.c.h.b16 %v105
  %v439 = vunpack.c.l.b16 %v106
  %v440 = vunpack.c.l.b16 %v107
  %v441 = vunpack.c.h.b16 %v107
  %v442 = vunpack.c.l.b16 %v108
  %v443 = vunpack.c.l.b16 %v109
  %v444 = vunpack.c.h.b16 %v109
  %v445 = vunpack.c.l.b16 %v110
  %v446 = vunpack.c.l.b16 %v111
  %v447 = vunpack.c.h.b16 %v111
  %v448 = vunpack.c.l.b16 %v112
  %v449 = vunpack.c.l.b16 %v113
  %v450 = vunpack.c.h.b16 %v113
  %v451 = vunpack.c.l.b16 %v114
  %v452 = vunpack.c.l.b16 %v115
  %v453 = vunpack.c.h.b16 %v115
  %v454 = vunpack.c.l.b16 %v116
  %v455 = vunpack.c.l.b16 %v117
  %v456 = vunpack.c.h.b16 %v117
  %v457 = vunpack.c.l.b16 %v118
  %v458 = vunpack.c.l.b16 %v119
  %v459 = vunpack.c.h.b16 %v119
  %v460 = vunpack.c.l.b16 %v120
  %v461 = vunpack.c.l.b16 %v121
  %v462 = vunpack.c.h.b16 %v121
  %v463 = vunpack.c.l.b16 %v122
  %v464 = vunpack.c.l.b16 %v123
  %v465 = vunpack.c.h.b16 %v123
  %v466 = vunpack.c.l.b16 %v124
  %v467 = vunpack.c.l.b16 %v125
  %v468 = vunpack.c.h.b16 %v125
  %v469 = vunpack.c.l.b16 %v126
  %v470 = vunpack.c.l.b16 %v127
  %v471 = vunpack.c.h.b16 %v127
  %v472 = vunpack.c.l.b16 %v128
  %v473 = vunpack.c.l.b16 %v129
  %v474 = vunpack.c.h.b16 %v129
  %v475 = vunpack.c.l.b16 %v130
  %v476 = vunpack.c.l.b16 %v131
  %v477 = vunpack.c.h.b16 %v131
  %v478 = vunpack.c.l.b16 %v132
  %v479 = vunpack.c.l.b16 %v133
  %v480 = vunpack.c.h.b16 %v133
  %v481 = vunpack.c.l.b16 %v134
  %v482 = vunpack.c.l.b16 %v135
  %v483 = vunpack.c.h.b16 %v135
  %v484 = vunpack.c.l.b16 %v136
  %v485 = vpack.c.b16 %v308, %v305
  %v486 = vpack.c.b16 %v309, %v306
  %v487 = vpack.c.b16 %v310, %v307
  %v488 = vpack.c.b16 %v314, %v311
  %v489 = vpack.c.b16 %v315, %v312
  %v490 = vpack.c.b16 %v316, %v313
  %v491 = vpack.c.b16 %v320, %v317
  %v492 = vpack.c.b16 %v321, %v318
  %v493 = vpack.c.b16 %v322, %v319
  %v494 = vpack.c.b16 %v326, %v323
  %v495 = vpack.c.b16 %v327, %v324
  %v496 = vpack.c.b16 %v328, %v325
  %v497 = vpack.c.b16 %v332, %v329
  %v498 = vpack.c.b16 %v333, %v330
  %v499 = vpack.c.b16 %v334, %v331
  %v500 = vpack.c.b16 %v338, %v335
  %v501 = vpack.c.b16 %v339, %v336
  %v502 = vpack.c.b16 %v340, %v337
  %v503 = vpack.c.b16 %v344, %v341
  %v504 = vpack.c.b16 %v345, %v342
  %v505 = vpack.c.b16 %v346, %v343
  %v506 = vpack.c.b16 %v350, %v347
  %v507 = vpack.c.b16 %v351, %v348
  %v508 = vpack.c.b16 %v352, %v349
  %v509 = vpack.c.b16 %v356, %v353
  %v510 = vpack.c.b16 %v357, %v354
  %v511 = vpack.c.b16 %v358, %v355
  %v512 = vpack.c.b16 %v362, %v359
  %v513 = vpack.c.b16 %v363, %v360
  %v514 = vpack.c.b16 %v364, %v361
  %v515 = vpack.c.b16 %v368, %v365
  %v516 = vpack.c.b16 %v369, %v366
  %v517 = vpack.c.b16 %v370, %v367
  %v518 = vpack.c.b16 %v374, %v371
  %v519 = vpack.c.b16 %v375, %v372
  %v520 = vpack.c.b16 %v376, %v373
  %v521 = vpack.c.b16 %v380, %v377
  %v522 = vpack.c.b16 %v381, %v378
  %v523 = vpack.c.b16 %v382, %v379
  %v524 = vpack.c.b16 %v386, %v383
  %v525 = vpack.c.b16 %v387, %v384
  %v526 = vpack.c.b16 %v388, %v385
  %v527 = vpack.c.b16 %v392, %v389
  %v528 = vpack.c.b16 %v393, %v390
  %v529 = vpack.c.b16 %v394, %v391
  %v530 = vpack.c.b16 %v398, %v395
  %v531 = vpack.c.b16 %v399, %v396
  %v532 = vpack.c.b16 %v400, %v397
  %v533 = vpack.c.b16 %v404, %v401
  %v534 = vpack.c.b16 %v405, %v402
  %v535 = vpack.c.b16 %v406, %v403
  %v536 = vpack.c.b16 %v410, %v407
  %v537 = vpack.c.b16 %v411, %v408
  %v538 = vpack.c.b16 %v412, %v409
  %v539 = vpack.c.b16 %v416, %v413
  %v540 = vpack.c.b16 %v417, %v414
  %v541 = vpack.c.b16 %v418, %v415
  %v542 = vpack.c.b16 %v422, %v419
  %v543 = vpack.c.b16 %v423, %v420
  %v544 = vpack.c.b16 %v424, %v421
  %v545 = vpack.c.b16 %v428, %v425
  %v546 = vpack.c.b16 %v429, %v426
  %v547 = vpack.c.b16 %v430, %v427
  %v548 = vpack.c.b16 %v434, %v431
  %v549 = vpack.c.b16 %v435, %v432
  %v550 = vpack.c.b16 %v436, %v433
  %v551 = vpack.c.b16 %v440, %v437
  %v552 = vpack.c.b16 %v441, %v438
  %v553 = vpack.c.b16 %v442, %v439
  %v554 = vpack.c.b16 %v446, %v443
  %v555 = vpack.c.b16 %v447, %v444
  %v556 = vpack.c.b16 %v448, %v445
  %v557 = vpack.c.b16 %v452, %v449
  %v558 = vpack.c.b16 %v453, %v450
  %v559 = vpack.c.b16 %v454, %v451
  %v560 = vpack.c.b16 %v458, %v455
  %v561 = vpack.c.b16 %v459, %v456
  %v562 = vpack.c.b16 %v460, %v457
  %v563 = vpack.c.b16 %v464, %v461
  %v564 = vpack.c.b16 %v465, %v462
  %v565 = vpack.c.b16 %v466, %v463
  %v566 = vpack.c.b16 %v470, %v467
  %v567 = vpack.c.b16 %v471, %v468
  %v568 = vpack.c.b16 %v472, %v469
  %v569 = vpack.c.b16 %v476, %v473
  %v570 = vpack.c.b16 %v477, %v474
  %v571 = vpack.c.b16 %v478, %v475
  %v572 = vpack.c.b16 %v482, %v479
  %v573 = vpack.c.b16 %v483, %v480
  %v574 = vpack.c.b16 %v484, %v481
  %v713 = vunpack.c.l.b16 %v137
  %v714 = vunpack.c.l.b16 %v138
  %v715 = vunpack.c.l.b16 %v139
  %v716 = vunpack.c.l.b16 %v140
  %v717 = vunpack.c.l.b16 %v141
  %v718 = vunpack.c.l.b16 %v142
  %v719 = vunpack.c.l.b16 %v143
  %v720 = vunpack.c.l.b16 %v144
  %v721 = vunpack.c.l.b16 %v145
  %v722 = vunpack.c.l.b16 %v146
  %v723 = vunpack.c.l.b16 %v147
  %v724 = vunpack.c.l.b16 %v148
  %v725 = vunpack.c.l.b16 %v149
  %v726 = vunpack.c.l.b16 %v150
  %v727 = vunpack.c.l.b16 %v151
  %v728 = vunpack.c.l.b16 %v152
  %v729 = vunpack.c.l.b16 %v153
  %v730 = vunpack.c.l.b16 %v154
  %v731 = vunpack.c.l.b16 %v155
  %v732 = vunpack.c.l.b16 %v156
  %v733 = vunpack.c.l.b16 %v157
  %v734 = vunpack.c.l.b16 %v158
  %v735 = vunpack.c.l.b16 %v159
  %v736 = vunpack.c.l.b16 %v160
  %v737 = vunpack.c.l.b16 %v161
  %v738 = vunpack.c.l.b16 %v162
  %v739 = vunpack.c.l.b16 %v163
  %v740 = vunpack.c.l.b16 %v164
  %v741 = vunpack.c.l.b16 %v165
  %v742 = vunpack.c.l.b16 %v166
  %v743 = vunpack.c.l.b16 %v167
  %v744 = vunpack.c.l.b16 %v168
  %v745 = vunpack.c.l.b16 %v169
  %v746 = vunpack.c.l.b16 %v170
  %v747 = vunpack.c.l.b16 %v171
  %v748 = vunpack.c.l.b16 %v172
  %v749 = vunpack.c.l.b16 %v173
  %v750 = vunpack.c.l.b16 %v174
  %v751 = vunpack.c.l.b16 %v175
  %v752 = vunpack.c.l.b16 %v176
  %v753 = vunpack.c.l.b16 %v177
  %v754 = vunpack.c.l.b16 %v178
  %v755 = vunpack.c.l.b16 %v179
  %v756 = vunpack.c.l.b16 %v180
  %v757 = vunpack.c.l.b16 %v181
  %v758 = vunpack.c.l.b16 %v182
  %v759 = vunpack.c.l.b16 %v183
  %v760 = vunpack.c.l.b16 %v184
  %v761 = vpack.c.b16 %v714, %v713
  %v762 = vpack.c.b16 %v716, %v715
  %v763 = vpack.c.b16 %v718, %v717
  %v764 = vpack.c.b16 %v720, %v719
  %v765 = vpack.c.b16 %v722, %v721
  %v766 = vpack.c.b16 %v724, %v723
  %v767 = vpack.c.b16 %v726, %v725
  %v768 = vpack.c.b16 %v728, %v727
  %v769 = vpack.c.b16 %v730, %v729
  %v770 = vpack.c.b16 %v732, %v731
  %v771 = vpack.c.b16 %v734, %v733
  %v772 = vpack.c.b16 %v736, %v735
  %v773 = vpack.c.b16 %v738, %v737
  %v774 = vpack.c.b16 %v740, %v739
  %v775 = vpack.c.b16 %v742, %v741
  %v776 = vpack.c.b16 %v744, %v743
  %v777 = vpack.c.b16 %v746, %v745
  %v778 = vpack.c.b16 %v748, %v747
  %v779 = vpack.c.b16 %v750, %v749
  %v780 = vpack.c.b16 %v752, %v751
  %v781 = vpack.c.b16 %v754, %v753
  %v782 = vpack.c.b16 %v756, %v755
  %v783 = vpack.c.b16 %v758, %v757
  %v784 = vpack.c.b16 %v760, %v759
  %809 = vmatpush.bf16.msra.mxu0 %v768
  %810 = vmatpush.bf16.msra.mxu0 %v767
  %811 = vmatpush.bf16.msra.mxu0 %v766
  %812 = vmatpush.bf16.msra.mxu0 %v765
  %813 = vmatpush.bf16.msra.mxu0 %v764
  %814 = vmatpush.bf16.msra.mxu0 %v763
  %815 = vmatpush.bf16.msra.mxu0 %v762
  %816 = vmatpush.bf16.msra.mxu0 %v761
  %817 = vmatmul.bf16.gmra.mxu0 %v485
  %v818 = vpop.f32.mrf.mxu0
  %v819 = vadd.f32 0.0, %v818
  %v820 = vpop.f32.mrf.mxu0
  %v821 = vadd.f32 0.0, %v820
  %822 = vmatmul.bf16.gmra.mxu0 %v488
  %v823 = vpop.f32.mrf.mxu0
  %v824 = vadd.f32 0.0, %v823
  %v825 = vpop.f32.mrf.mxu0
  %v826 = vadd.f32 0.0, %v825
  %827 = vmatmul.bf16.gmra.mxu0 %v491
  %v828 = vpop.f32.mrf.mxu0
  %v829 = vadd.f32 0.0, %v828
  %v830 = vpop.f32.mrf.mxu0
  %v831 = vadd.f32 0.0, %v830
  %832 = vmatmul.bf16.gmra.mxu0 %v494
  %v833 = vpop.f32.mrf.mxu0
  %v834 = vadd.f32 0.0, %v833
  %v835 = vpop.f32.mrf.mxu0
  %v836 = vadd.f32 0.0, %v835
  %837 = vmatmul.bf16.gmra.mxu0 %v497
  %v838 = vpop.f32.mrf.mxu0
  %v839 = vadd.f32 0.0, %v838
  %v840 = vpop.f32.mrf.mxu0
  %v841 = vadd.f32 0.0, %v840
  %842 = vmatmul.bf16.gmra.mxu0 %v500
  %v843 = vpop.f32.mrf.mxu0
  %v844 = vadd.f32 0.0, %v843
  %v845 = vpop.f32.mrf.mxu0
  %v846 = vadd.f32 0.0, %v845
  %847 = vmatmul.bf16.gmra.mxu0 %v503
  %v848 = vpop.f32.mrf.mxu0
  %v849 = vadd.f32 0.0, %v848
  %v850 = vpop.f32.mrf.mxu0
  %v851 = vadd.f32 0.0, %v850
  %852 = vmatmul.bf16.gmra.mxu0 %v506
  %v853 = vpop.f32.mrf.mxu0
  %v854 = vadd.f32 0.0, %v853
  %v855 = vpop.f32.mrf.mxu0
  %v856 = vadd.f32 0.0, %v855
  %857 = vmatmul.bf16.gmra.mxu0 %v509
  %v858 = vpop.f32.mrf.mxu0
  %v859 = vadd.f32 0.0, %v858
  %v860 = vpop.f32.mrf.mxu0
  %v861 = vadd.f32 0.0, %v860
  %862 = vmatmul.bf16.gmra.mxu0 %v512
  %v863 = vpop.f32.mrf.mxu0
  %v864 = vadd.f32 0.0, %v863
  %v865 = vpop.f32.mrf.mxu0
  %v866 = vadd.f32 0.0, %v865
  %867 = vmatmul.bf16.gmra.mxu0 %v515
  %v868 = vpop.f32.mrf.mxu0
  %v869 = vadd.f32 0.0, %v868
  %v870 = vpop.f32.mrf.mxu0
  %v871 = vadd.f32 0.0, %v870
  %872 = vmatmul.bf16.gmra.mxu0 %v518
  %v873 = vpop.f32.mrf.mxu0
  %v874 = vadd.f32 0.0, %v873
  %v875 = vpop.f32.mrf.mxu0
  %v876 = vadd.f32 0.0, %v875
  %877 = vmatmul.bf16.gmra.mxu0 %v521
  %v878 = vpop.f32.mrf.mxu0
  %v879 = vadd.f32 0.0, %v878
  %v880 = vpop.f32.mrf.mxu0
  %v881 = vadd.f32 0.0, %v880
  %882 = vmatmul.bf16.gmra.mxu0 %v524
  %v883 = vpop.f32.mrf.mxu0
  %v884 = vadd.f32 0.0, %v883
  %v885 = vpop.f32.mrf.mxu0
  %v886 = vadd.f32 0.0, %v885
  %887 = vmatmul.bf16.gmra.mxu0 %v527
  %v888 = vpop.f32.mrf.mxu0
  %v889 = vadd.f32 0.0, %v888
  %v890 = vpop.f32.mrf.mxu0
  %v891 = vadd.f32 0.0, %v890
  %892 = vmatmul.bf16.gmra.mxu0 %v530
  %v893 = vpop.f32.mrf.mxu0
  %v894 = vadd.f32 0.0, %v893
  %v895 = vpop.f32.mrf.mxu0
  %v896 = vadd.f32 0.0, %v895
  %897 = vmatmul.bf16.gmra.mxu0 %v533
  %v898 = vpop.f32.mrf.mxu0
  %v899 = vadd.f32 0.0, %v898
  %v900 = vpop.f32.mrf.mxu0
  %v901 = vadd.f32 0.0, %v900
  %902 = vmatmul.bf16.gmra.mxu0 %v536
  %v903 = vpop.f32.mrf.mxu0
  %v904 = vadd.f32 0.0, %v903
  %v905 = vpop.f32.mrf.mxu0
  %v906 = vadd.f32 0.0, %v905
  %907 = vmatmul.bf16.gmra.mxu0 %v539
  %v908 = vpop.f32.mrf.mxu0
  %v909 = vadd.f32 0.0, %v908
  %v910 = vpop.f32.mrf.mxu0
  %v911 = vadd.f32 0.0, %v910
  %912 = vmatmul.bf16.gmra.mxu0 %v542
  %v913 = vpop.f32.mrf.mxu0
  %v914 = vadd.f32 0.0, %v913
  %v915 = vpop.f32.mrf.mxu0
  %v916 = vadd.f32 0.0, %v915
  %917 = vmatmul.bf16.gmra.mxu0 %v545
  %v918 = vpop.f32.mrf.mxu0
  %v919 = vadd.f32 0.0, %v918
  %v920 = vpop.f32.mrf.mxu0
  %v921 = vadd.f32 0.0, %v920
  %922 = vmatmul.bf16.gmra.mxu0 %v548
  %v923 = vpop.f32.mrf.mxu0
  %v924 = vadd.f32 0.0, %v923
  %v925 = vpop.f32.mrf.mxu0
  %v926 = vadd.f32 0.0, %v925
  %927 = vmatmul.bf16.gmra.mxu0 %v551
  %v928 = vpop.f32.mrf.mxu0
  %v929 = vadd.f32 0.0, %v928
  %v930 = vpop.f32.mrf.mxu0
  %v931 = vadd.f32 0.0, %v930
  %932 = vmatmul.bf16.gmra.mxu0 %v554
  %v933 = vpop.f32.mrf.mxu0
  %v934 = vadd.f32 0.0, %v933
  %v935 = vpop.f32.mrf.mxu0
  %v936 = vadd.f32 0.0, %v935
  %937 = vmatmul.bf16.gmra.mxu0 %v557
  %v938 = vpop.f32.mrf.mxu0
  %v939 = vadd.f32 0.0, %v938
  %v940 = vpop.f32.mrf.mxu0
  %v941 = vadd.f32 0.0, %v940
  %942 = vmatmul.bf16.gmra.mxu0 %v560
  %v943 = vpop.f32.mrf.mxu0
  %v944 = vadd.f32 0.0, %v943
  %v945 = vpop.f32.mrf.mxu0
  %v946 = vadd.f32 0.0, %v945
  %947 = vmatmul.bf16.gmra.mxu0 %v563
  %v948 = vpop.f32.mrf.mxu0
  %v949 = vadd.f32 0.0, %v948
  %v950 = vpop.f32.mrf.mxu0
  %v951 = vadd.f32 0.0, %v950
  %952 = vmatmul.bf16.gmra.mxu0 %v566
  %v953 = vpop.f32.mrf.mxu0
  %v954 = vadd.f32 0.0, %v953
  %v955 = vpop.f32.mrf.mxu0
  %v956 = vadd.f32 0.0, %v955
  %957 = vmatmul.bf16.gmra.mxu0 %v569
  %v958 = vpop.f32.mrf.mxu0
  %v959 = vadd.f32 0.0, %v958
  %v960 = vpop.f32.mrf.mxu0
  %v961 = vadd.f32 0.0, %v960
  %962 = vmatmul.bf16.gmra.mxu0 %v572
  %v963 = vpop.f32.mrf.mxu0
  %v964 = vadd.f32 0.0, %v963
  %v965 = vpop.f32.mrf.mxu0
  %v966 = vadd.f32 0.0, %v965
  %967 = vdwg.mxu0
  %968 = vmatpush.bf16.msra.mxu0 %v776
  %969 = vmatpush.bf16.msra.mxu0 %v775
  %970 = vmatpush.bf16.msra.mxu0 %v774
  %971 = vmatpush.bf16.msra.mxu0 %v773
  %972 = vmatpush.bf16.msra.mxu0 %v772
  %973 = vmatpush.bf16.msra.mxu0 %v771
  %974 = vmatpush.bf16.msra.mxu0 %v770
  %975 = vmatpush.bf16.msra.mxu0 %v769
  %976 = vmatmul.bf16.gmra.mxu0 %v486
  %v977 = vpop.f32.mrf.mxu0
  %v978 = vadd.f32 %v819, %v977
  %v979 = vpop.f32.mrf.mxu0
  %v980 = vadd.f32 %v821, %v979
  %981 = vmatmul.bf16.gmra.mxu0 %v489
  %v982 = vpop.f32.mrf.mxu0
  %v983 = vadd.f32 %v824, %v982
  %v984 = vpop.f32.mrf.mxu0
  %v985 = vadd.f32 %v826, %v984
  %986 = vmatmul.bf16.gmra.mxu0 %v492
  %v987 = vpop.f32.mrf.mxu0
  %v988 = vadd.f32 %v829, %v987
  %v989 = vpop.f32.mrf.mxu0
  %v990 = vadd.f32 %v831, %v989
  %991 = vmatmul.bf16.gmra.mxu0 %v495
  %v992 = vpop.f32.mrf.mxu0
  %v993 = vadd.f32 %v834, %v992
  %v994 = vpop.f32.mrf.mxu0
  %v995 = vadd.f32 %v836, %v994
  %996 = vmatmul.bf16.gmra.mxu0 %v498
  %v997 = vpop.f32.mrf.mxu0
  %v998 = vadd.f32 %v839, %v997
  %v999 = vpop.f32.mrf.mxu0
  %v1000 = vadd.f32 %v841, %v999
  %1001 = vmatmul.bf16.gmra.mxu0 %v501
  %v1002 = vpop.f32.mrf.mxu0
  %v1003 = vadd.f32 %v844, %v1002
  %v1004 = vpop.f32.mrf.mxu0
  %v1005 = vadd.f32 %v846, %v1004
  %1006 = vmatmul.bf16.gmra.mxu0 %v504
  %v1007 = vpop.f32.mrf.mxu0
  %v1008 = vadd.f32 %v849, %v1007
  %v1009 = vpop.f32.mrf.mxu0
  %v1010 = vadd.f32 %v851, %v1009
  %1011 = vmatmul.bf16.gmra.mxu0 %v507
  %v1012 = vpop.f32.mrf.mxu0
  %v1013 = vadd.f32 %v854, %v1012
  %v1014 = vpop.f32.mrf.mxu0
  %v1015 = vadd.f32 %v856, %v1014
  %1016 = vmatmul.bf16.gmra.mxu0 %v510
  %v1017 = vpop.f32.mrf.mxu0
  %v1018 = vadd.f32 %v859, %v1017
  %v1019 = vpop.f32.mrf.mxu0
  %v1020 = vadd.f32 %v861, %v1019
  %1021 = vmatmul.bf16.gmra.mxu0 %v513
  %v1022 = vpop.f32.mrf.mxu0
  %v1023 = vadd.f32 %v864, %v1022
  %v1024 = vpop.f32.mrf.mxu0
  %v1025 = vadd.f32 %v866, %v1024
  %1026 = vmatmul.bf16.gmra.mxu0 %v516
  %v1027 = vpop.f32.mrf.mxu0
  %v1028 = vadd.f32 %v869, %v1027
  %v1029 = vpop.f32.mrf.mxu0
  %v1030 = vadd.f32 %v871, %v1029
  %1031 = vmatmul.bf16.gmra.mxu0 %v519
  %v1032 = vpop.f32.mrf.mxu0
  %v1033 = vadd.f32 %v874, %v1032
  %v1034 = vpop.f32.mrf.mxu0
  %v1035 = vadd.f32 %v876, %v1034
  %1036 = vmatmul.bf16.gmra.mxu0 %v522
  %v1037 = vpop.f32.mrf.mxu0
  %v1038 = vadd.f32 %v879, %v1037
  %v1039 = vpop.f32.mrf.mxu0
  %v1040 = vadd.f32 %v881, %v1039
  %1041 = vmatmul.bf16.gmra.mxu0 %v525
  %v1042 = vpop.f32.mrf.mxu0
  %v1043 = vadd.f32 %v884, %v1042
  %v1044 = vpop.f32.mrf.mxu0
  %v1045 = vadd.f32 %v886, %v1044
  %1046 = vmatmul.bf16.gmra.mxu0 %v528
  %v1047 = vpop.f32.mrf.mxu0
  %v1048 = vadd.f32 %v889, %v1047
  %v1049 = vpop.f32.mrf.mxu0
  %v1050 = vadd.f32 %v891, %v1049
  %1051 = vmatmul.bf16.gmra.mxu0 %v531
  %v1052 = vpop.f32.mrf.mxu0
  %v1053 = vadd.f32 %v894, %v1052
  %v1054 = vpop.f32.mrf.mxu0
  %v1055 = vadd.f32 %v896, %v1054
  %1056 = vmatmul.bf16.gmra.mxu0 %v534
  %v1057 = vpop.f32.mrf.mxu0
  %v1058 = vadd.f32 %v899, %v1057
  %v1059 = vpop.f32.mrf.mxu0
  %v1060 = vadd.f32 %v901, %v1059
  %1061 = vmatmul.bf16.gmra.mxu0 %v537
  %v1062 = vpop.f32.mrf.mxu0
  %v1063 = vadd.f32 %v904, %v1062
  %v1064 = vpop.f32.mrf.mxu0
  %v1065 = vadd.f32 %v906, %v1064
  %1066 = vmatmul.bf16.gmra.mxu0 %v540
  %v1067 = vpop.f32.mrf.mxu0
  %v1068 = vadd.f32 %v909, %v1067
  %v1069 = vpop.f32.mrf.mxu0
  %v1070 = vadd.f32 %v911, %v1069
  %1071 = vmatmul.bf16.gmra.mxu0 %v543
  %v1072 = vpop.f32.mrf.mxu0
  %v1073 = vadd.f32 %v914, %v1072
  %v1074 = vpop.f32.mrf.mxu0
  %v1075 = vadd.f32 %v916, %v1074
  %1076 = vmatmul.bf16.gmra.mxu0 %v546
  %v1077 = vpop.f32.mrf.mxu0
  %v1078 = vadd.f32 %v919, %v1077
  %v1079 = vpop.f32.mrf.mxu0
  %v1080 = vadd.f32 %v921, %v1079
  %1081 = vmatmul.bf16.gmra.mxu0 %v549
  %v1082 = vpop.f32.mrf.mxu0
  %v1083 = vadd.f32 %v924, %v1082
  %v1084 = vpop.f32.mrf.mxu0
  %v1085 = vadd.f32 %v926, %v1084
  %1086 = vmatmul.bf16.gmra.mxu0 %v552
  %v1087 = vpop.f32.mrf.mxu0
  %v1088 = vadd.f32 %v929, %v1087
  %v1089 = vpop.f32.mrf.mxu0
  %v1090 = vadd.f32 %v931, %v1089
  %1091 = vmatmul.bf16.gmra.mxu0 %v555
  %v1092 = vpop.f32.mrf.mxu0
  %v1093 = vadd.f32 %v934, %v1092
  %v1094 = vpop.f32.mrf.mxu0
  %v1095 = vadd.f32 %v936, %v1094
  %1096 = vmatmul.bf16.gmra.mxu0 %v558
  %v1097 = vpop.f32.mrf.mxu0
  %v1098 = vadd.f32 %v939, %v1097
  %v1099 = vpop.f32.mrf.mxu0
  %v1100 = vadd.f32 %v941, %v1099
  %1101 = vmatmul.bf16.gmra.mxu0 %v561
  %v1102 = vpop.f32.mrf.mxu0
  %v1103 = vadd.f32 %v944, %v1102
  %v1104 = vpop.f32.mrf.mxu0
  %v1105 = vadd.f32 %v946, %v1104
  %1106 = vmatmul.bf16.gmra.mxu0 %v564
  %v1107 = vpop.f32.mrf.mxu0
  %v1108 = vadd.f32 %v949, %v1107
  %v1109 = vpop.f32.mrf.mxu0
  %v1110 = vadd.f32 %v951, %v1109
  %1111 = vmatmul.bf16.gmra.mxu0 %v567
  %v1112 = vpop.f32.mrf.mxu0
  %v1113 = vadd.f32 %v954, %v1112
  %v1114 = vpop.f32.mrf.mxu0
  %v1115 = vadd.f32 %v956, %v1114
  %1116 = vmatmul.bf16.gmra.mxu0 %v570
  %v1117 = vpop.f32.mrf.mxu0
  %v1118 = vadd.f32 %v959, %v1117
  %v1119 = vpop.f32.mrf.mxu0
  %v1120 = vadd.f32 %v961, %v1119
  %1121 = vmatmul.bf16.gmra.mxu0 %v573
  %v1122 = vpop.f32.mrf.mxu0
  %v1123 = vadd.f32 %v964, %v1122
  %v1124 = vpop.f32.mrf.mxu0
  %v1125 = vadd.f32 %v966, %v1124
  %1126 = vdwg.mxu0
  %1127 = vmatpush.bf16.msra.mxu0 %v784
  %1128 = vmatpush.bf16.msra.mxu0 %v783
  %1129 = vmatpush.bf16.msra.mxu0 %v782
  %1130 = vmatpush.bf16.msra.mxu0 %v781
  %1131 = vmatpush.bf16.msra.mxu0 %v780
  %1132 = vmatpush.bf16.msra.mxu0 %v779
  %1133 = vmatpush.bf16.msra.mxu0 %v778
  %1134 = vmatpush.bf16.msra.mxu0 %v777
  %1135 = vmatmul.bf16.gmra.mxu0 %v487
  %v1136 = vpop.f32.mrf.mxu0
  %v1137 = vadd.f32 %v978, %v1136
  %v1138 = vpop.f32.mrf.mxu0
  %v1139 = vadd.f32 %v980, %v1138
  %1140 = vmatmul.bf16.gmra.mxu0 %v490
  %v1141 = vpop.f32.mrf.mxu0
  %v1142 = vadd.f32 %v983, %v1141
  %v1143 = vpop.f32.mrf.mxu0
  %v1144 = vadd.f32 %v985, %v1143
  %1145 = vmatmul.bf16.gmra.mxu0 %v493
  %v1146 = vpop.f32.mrf.mxu0
  %v1147 = vadd.f32 %v988, %v1146
  %v1148 = vpop.f32.mrf.mxu0
  %v1149 = vadd.f32 %v990, %v1148
  %1150 = vmatmul.bf16.gmra.mxu0 %v496
  %v1151 = vpop.f32.mrf.mxu0
  %v1152 = vadd.f32 %v993, %v1151
  %v1153 = vpop.f32.mrf.mxu0
  %v1154 = vadd.f32 %v995, %v1153
  %1155 = vmatmul.bf16.gmra.mxu0 %v499
  %v1156 = vpop.f32.mrf.mxu0
  %v1157 = vadd.f32 %v998, %v1156
  %v1158 = vpop.f32.mrf.mxu0
  %v1159 = vadd.f32 %v1000, %v1158
  %1160 = vmatmul.bf16.gmra.mxu0 %v502
  %v1161 = vpop.f32.mrf.mxu0
  %v1162 = vadd.f32 %v1003, %v1161
  %v1163 = vpop.f32.mrf.mxu0
  %v1164 = vadd.f32 %v1005, %v1163
  %1165 = vmatmul.bf16.gmra.mxu0 %v505
  %v1166 = vpop.f32.mrf.mxu0
  %v1167 = vadd.f32 %v1008, %v1166
  %v1168 = vpop.f32.mrf.mxu0
  %v1169 = vadd.f32 %v1010, %v1168
  %1170 = vmatmul.bf16.gmra.mxu0 %v508
  %v1171 = vpop.f32.mrf.mxu0
  %v1172 = vadd.f32 %v1013, %v1171
  %v1173 = vpop.f32.mrf.mxu0
  %v1174 = vadd.f32 %v1015, %v1173
  %1175 = vmatmul.bf16.gmra.mxu0 %v511
  %v1176 = vpop.f32.mrf.mxu0
  %v1177 = vadd.f32 %v1018, %v1176
  %v1178 = vpop.f32.mrf.mxu0
  %v1179 = vadd.f32 %v1020, %v1178
  %1180 = vmatmul.bf16.gmra.mxu0 %v514
  %v1181 = vpop.f32.mrf.mxu0
  %v1182 = vadd.f32 %v1023, %v1181
  %v1183 = vpop.f32.mrf.mxu0
  %v1184 = vadd.f32 %v1025, %v1183
  %1185 = vmatmul.bf16.gmra.mxu0 %v517
  %v1186 = vpop.f32.mrf.mxu0
  %v1187 = vadd.f32 %v1028, %v1186
  %v1188 = vpop.f32.mrf.mxu0
  %v1189 = vadd.f32 %v1030, %v1188
  %1190 = vmatmul.bf16.gmra.mxu0 %v520
  %v1191 = vpop.f32.mrf.mxu0
  %v1192 = vadd.f32 %v1033, %v1191
  %v1193 = vpop.f32.mrf.mxu0
  %v1194 = vadd.f32 %v1035, %v1193
  %1195 = vmatmul.bf16.gmra.mxu0 %v523
  %v1196 = vpop.f32.mrf.mxu0
  %v1197 = vadd.f32 %v1038, %v1196
  %v1198 = vpop.f32.mrf.mxu0
  %v1199 = vadd.f32 %v1040, %v1198
  %1200 = vmatmul.bf16.gmra.mxu0 %v526
  %v1201 = vpop.f32.mrf.mxu0
  %v1202 = vadd.f32 %v1043, %v1201
  %v1203 = vpop.f32.mrf.mxu0
  %v1204 = vadd.f32 %v1045, %v1203
  %1205 = vmatmul.bf16.gmra.mxu0 %v529
  %v1206 = vpop.f32.mrf.mxu0
  %v1207 = vadd.f32 %v1048, %v1206
  %v1208 = vpop.f32.mrf.mxu0
  %v1209 = vadd.f32 %v1050, %v1208
  %1210 = vmatmul.bf16.gmra.mxu0 %v532
  %v1211 = vpop.f32.mrf.mxu0
  %v1212 = vadd.f32 %v1053, %v1211
  %v1213 = vpop.f32.mrf.mxu0
  %v1214 = vadd.f32 %v1055, %v1213
  %1215 = vmatmul.bf16.gmra.mxu0 %v535
  %v1216 = vpop.f32.mrf.mxu0
  %v1217 = vadd.f32 %v1058, %v1216
  %v1218 = vpop.f32.mrf.mxu0
  %v1219 = vadd.f32 %v1060, %v1218
  %1220 = vmatmul.bf16.gmra.mxu0 %v538
  %v1221 = vpop.f32.mrf.mxu0
  %v1222 = vadd.f32 %v1063, %v1221
  %v1223 = vpop.f32.mrf.mxu0
  %v1224 = vadd.f32 %v1065, %v1223
  %1225 = vmatmul.bf16.gmra.mxu0 %v541
  %v1226 = vpop.f32.mrf.mxu0
  %v1227 = vadd.f32 %v1068, %v1226
  %v1228 = vpop.f32.mrf.mxu0
  %v1229 = vadd.f32 %v1070, %v1228
  %1230 = vmatmul.bf16.gmra.mxu0 %v544
  %v1231 = vpop.f32.mrf.mxu0
  %v1232 = vadd.f32 %v1073, %v1231
  %v1233 = vpop.f32.mrf.mxu0
  %v1234 = vadd.f32 %v1075, %v1233
  %1235 = vmatmul.bf16.gmra.mxu0 %v547
  %v1236 = vpop.f32.mrf.mxu0
  %v1237 = vadd.f32 %v1078, %v1236
  %v1238 = vpop.f32.mrf.mxu0
  %v1239 = vadd.f32 %v1080, %v1238
  %1240 = vmatmul.bf16.gmra.mxu0 %v550
  %v1241 = vpop.f32.mrf.mxu0
  %v1242 = vadd.f32 %v1083, %v1241
  %v1243 = vpop.f32.mrf.mxu0
  %v1244 = vadd.f32 %v1085, %v1243
  %1245 = vmatmul.bf16.gmra.mxu0 %v553
  %v1246 = vpop.f32.mrf.mxu0
  %v1247 = vadd.f32 %v1088, %v1246
  %v1248 = vpop.f32.mrf.mxu0
  %v1249 = vadd.f32 %v1090, %v1248
  %1250 = vmatmul.bf16.gmra.mxu0 %v556
  %v1251 = vpop.f32.mrf.mxu0
  %v1252 = vadd.f32 %v1093, %v1251
  %v1253 = vpop.f32.mrf.mxu0
  %v1254 = vadd.f32 %v1095, %v1253
  %1255 = vmatmul.bf16.gmra.mxu0 %v559
  %v1256 = vpop.f32.mrf.mxu0
  %v1257 = vadd.f32 %v1098, %v1256
  %v1258 = vpop.f32.mrf.mxu0
  %v1259 = vadd.f32 %v1100, %v1258
  %1260 = vmatmul.bf16.gmra.mxu0 %v562
  %v1261 = vpop.f32.mrf.mxu0
  %v1262 = vadd.f32 %v1103, %v1261
  %v1263 = vpop.f32.mrf.mxu0
  %v1264 = vadd.f32 %v1105, %v1263
  %1265 = vmatmul.bf16.gmra.mxu0 %v565
  %v1266 = vpop.f32.mrf.mxu0
  %v1267 = vadd.f32 %v1108, %v1266
  %v1268 = vpop.f32.mrf.mxu0
  %v1269 = vadd.f32 %v1110, %v1268
  %1270 = vmatmul.bf16.gmra.mxu0 %v568
  %v1271 = vpop.f32.mrf.mxu0
  %v1272 = vadd.f32 %v1113, %v1271
  %v1273 = vpop.f32.mrf.mxu0
  %v1274 = vadd.f32 %v1115, %v1273
  %1275 = vmatmul.bf16.gmra.mxu0 %v571
  %v1276 = vpop.f32.mrf.mxu0
  %v1277 = vadd.f32 %v1118, %v1276
  %v1278 = vpop.f32.mrf.mxu0
  %v1279 = vadd.f32 %v1120, %v1278
  %1280 = vmatmul.bf16.gmra.mxu0 %v574
  %v1281 = vpop.f32.mrf.mxu0
  %v1282 = vadd.f32 %v1123, %v1281
  %v1283 = vpop.f32.mrf.mxu0
  %v1284 = vadd.f32 %v1125, %v1283
  %1285 = vdwg.mxu0
  %v1286 = vld [vmem:[%s2] sm:$0x1]
  %v1288 = vperm.slane %v1286, 0
  %v1290 = vmul.f32 %v1137, %v1288
  %v1291 = vmul.f32 %v1139, %v1288
  %v1292 = vmul.f32 %v1142, %v1288
  %v1293 = vmul.f32 %v1144, %v1288
  %v1294 = vmul.f32 %v1147, %v1288
  %v1295 = vmul.f32 %v1149, %v1288
  %v1296 = vmul.f32 %v1152, %v1288
  %v1297 = vmul.f32 %v1154, %v1288
  %v1298 = vmul.f32 %v1157, %v1288
  %v1299 = vmul.f32 %v1159, %v1288
  %v1300 = vmul.f32 %v1162, %v1288
  %v1301 = vmul.f32 %v1164, %v1288
  %v1302 = vmul.f32 %v1167, %v1288
  %v1303 = vmul.f32 %v1169, %v1288
  %v1304 = vmul.f32 %v1172, %v1288
  %v1305 = vmul.f32 %v1174, %v1288
  %v1306 = vmul.f32 %v1177, %v1288
  %v1307 = vmul.f32 %v1179, %v1288
  %v1308 = vmul.f32 %v1182, %v1288
  %v1309 = vmul.f32 %v1184, %v1288
  %v1310 = vmul.f32 %v1187, %v1288
  %v1311 = vmul.f32 %v1189, %v1288
  %v1312 = vmul.f32 %v1192, %v1288
  %v1313 = vmul.f32 %v1194, %v1288
  %v1314 = vmul.f32 %v1197, %v1288
  %v1315 = vmul.f32 %v1199, %v1288
  %v1316 = vmul.f32 %v1202, %v1288
  %v1317 = vmul.f32 %v1204, %v1288
  %v1318 = vmul.f32 %v1207, %v1288
  %v1319 = vmul.f32 %v1209, %v1288
  %v1320 = vmul.f32 %v1212, %v1288
  %v1321 = vmul.f32 %v1214, %v1288
  %v1322 = vmul.f32 %v1217, %v1288
  %v1323 = vmul.f32 %v1219, %v1288
  %v1324 = vmul.f32 %v1222, %v1288
  %v1325 = vmul.f32 %v1224, %v1288
  %v1326 = vmul.f32 %v1227, %v1288
  %v1327 = vmul.f32 %v1229, %v1288
  %v1328 = vmul.f32 %v1232, %v1288
  %v1329 = vmul.f32 %v1234, %v1288
  %v1330 = vmul.f32 %v1237, %v1288
  %v1331 = vmul.f32 %v1239, %v1288
  %v1332 = vmul.f32 %v1242, %v1288
  %v1333 = vmul.f32 %v1244, %v1288
  %v1334 = vmul.f32 %v1247, %v1288
  %v1335 = vmul.f32 %v1249, %v1288
  %v1336 = vmul.f32 %v1252, %v1288
  %v1337 = vmul.f32 %v1254, %v1288
  %v1338 = vmul.f32 %v1257, %v1288
  %v1339 = vmul.f32 %v1259, %v1288
  %v1340 = vmul.f32 %v1262, %v1288
  %v1341 = vmul.f32 %v1264, %v1288
  %v1342 = vmul.f32 %v1267, %v1288
  %v1343 = vmul.f32 %v1269, %v1288
  %v1344 = vmul.f32 %v1272, %v1288
  %v1345 = vmul.f32 %v1274, %v1288
  %v1346 = vmul.f32 %v1277, %v1288
  %v1347 = vmul.f32 %v1279, %v1288
  %v1348 = vmul.f32 %v1282, %v1288
  %v1349 = vmul.f32 %v1284, %v1288
  %v1350 = vld [vmem:[%s3] sm:$0x1]
  %v1352 = vperm.slane %v1350, 0
  %v1354 = vadd.f32 %v1290, %v1352
  %v1355 = vadd.f32 %v1291, %v1352
  %v1356 = vadd.f32 %v1292, %v1352
  %v1357 = vadd.f32 %v1293, %v1352
  %v1358 = vadd.f32 %v1294, %v1352
  %v1359 = vadd.f32 %v1295, %v1352
  %v1360 = vadd.f32 %v1296, %v1352
  %v1361 = vadd.f32 %v1297, %v1352
  %v1362 = vadd.f32 %v1298, %v1352
  %v1363 = vadd.f32 %v1299, %v1352
  %v1364 = vadd.f32 %v1300, %v1352
  %v1365 = vadd.f32 %v1301, %v1352
  %v1366 = vadd.f32 %v1302, %v1352
  %v1367 = vadd.f32 %v1303, %v1352
  %v1368 = vadd.f32 %v1304, %v1352
  %v1369 = vadd.f32 %v1305, %v1352
  %v1370 = vadd.f32 %v1306, %v1352
  %v1371 = vadd.f32 %v1307, %v1352
  %v1372 = vadd.f32 %v1308, %v1352
  %v1373 = vadd.f32 %v1309, %v1352
  %v1374 = vadd.f32 %v1310, %v1352
  %v1375 = vadd.f32 %v1311, %v1352
  %v1376 = vadd.f32 %v1312, %v1352
  %v1377 = vadd.f32 %v1313, %v1352
  %v1378 = vadd.f32 %v1314, %v1352
  %v1379 = vadd.f32 %v1315, %v1352
  %v1380 = vadd.f32 %v1316, %v1352
  %v1381 = vadd.f32 %v1317, %v1352
  %v1382 = vadd.f32 %v1318, %v1352
  %v1383 = vadd.f32 %v1319, %v1352
  %v1384 = vadd.f32 %v1320, %v1352
  %v1385 = vadd.f32 %v1321, %v1352
  %v1386 = vadd.f32 %v1322, %v1352
  %v1387 = vadd.f32 %v1323, %v1352
  %v1388 = vadd.f32 %v1324, %v1352
  %v1389 = vadd.f32 %v1325, %v1352
  %v1390 = vadd.f32 %v1326, %v1352
  %v1391 = vadd.f32 %v1327, %v1352
  %v1392 = vadd.f32 %v1328, %v1352
  %v1393 = vadd.f32 %v1329, %v1352
  %v1394 = vadd.f32 %v1330, %v1352
  %v1395 = vadd.f32 %v1331, %v1352
  %v1396 = vadd.f32 %v1332, %v1352
  %v1397 = vadd.f32 %v1333, %v1352
  %v1398 = vadd.f32 %v1334, %v1352
  %v1399 = vadd.f32 %v1335, %v1352
  %v1400 = vadd.f32 %v1336, %v1352
  %v1401 = vadd.f32 %v1337, %v1352
  %v1402 = vadd.f32 %v1338, %v1352
  %v1403 = vadd.f32 %v1339, %v1352
  %v1404 = vadd.f32 %v1340, %v1352
  %v1405 = vadd.f32 %v1341, %v1352
  %v1406 = vadd.f32 %v1342, %v1352
  %v1407 = vadd.f32 %v1343, %v1352
  %v1408 = vadd.f32 %v1344, %v1352
  %v1409 = vadd.f32 %v1345, %v1352
  %v1410 = vadd.f32 %v1346, %v1352
  %v1411 = vadd.f32 %v1347, %v1352
  %v1412 = vadd.f32 %v1348, %v1352
  %v1413 = vadd.f32 %v1349, %v1352
  %v1414 = vmax.f32 %v1354, 0.0
  %v1415 = vmax.f32 %v1355, 0.0
  %v1416 = vmax.f32 %v1356, 0.0
  %v1417 = vmax.f32 %v1357, 0.0
  %v1418 = vmax.f32 %v1358, 0.0
  %v1419 = vmax.f32 %v1359, 0.0
  %v1420 = vmax.f32 %v1360, 0.0
  %v1421 = vmax.f32 %v1361, 0.0
  %v1422 = vmax.f32 %v1362, 0.0
  %v1423 = vmax.f32 %v1363, 0.0
  %v1424 = vmax.f32 %v1364, 0.0
  %v1425 = vmax.f32 %v1365, 0.0
  %v1426 = vmax.f32 %v1366, 0.0
  %v1427 = vmax.f32 %v1367, 0.0
  %v1428 = vmax.f32 %v1368, 0.0
  %v1429 = vmax.f32 %v1369, 0.0
  %v1430 = vmax.f32 %v1370, 0.0
  %v1431 = vmax.f32 %v1371, 0.0
  %v1432 = vmax.f32 %v1372, 0.0
  %v1433 = vmax.f32 %v1373, 0.0
  %v1434 = vmax.f32 %v1374, 0.0
  %v1435 = vmax.f32 %v1375, 0.0
  %v1436 = vmax.f32 %v1376, 0.0
  %v1437 = vmax.f32 %v1377, 0.0
  %v1438 = vmax.f32 %v1378, 0.0
  %v1439 = vmax.f32 %v1379, 0.0
  %v1440 = vmax.f32 %v1380, 0.0
  %v1441 = vmax.f32 %v1381, 0.0
  %v1442 = vmax.f32 %v1382, 0.0
  %v1443 = vmax.f32 %v1383, 0.0
  %v1444 = vmax.f32 %v1384, 0.0
  %v1445 = vmax.f32 %v1385, 0.0
  %v1446 = vmax.f32 %v1386, 0.0
  %v1447 = vmax.f32 %v1387, 0.0
  %v1448 = vmax.f32 %v1388, 0.0
  %v1449 = vmax.f32 %v1389, 0.0
  %v1450 = vmax.f32 %v1390, 0.0
  %v1451 = vmax.f32 %v1391, 0.0
  %v1452 = vmax.f32 %v1392, 0.0
  %v1453 = vmax.f32 %v1393, 0.0
  %v1454 = vmax.f32 %v1394, 0.0
  %v1455 = vmax.f32 %v1395, 0.0
  %v1456 = vmax.f32 %v1396, 0.0
  %v1457 = vmax.f32 %v1397, 0.0
  %v1458 = vmax.f32 %v1398, 0.0
  %v1459 = vmax.f32 %v1399, 0.0
  %v1460 = vmax.f32 %v1400, 0.0
  %v1461 = vmax.f32 %v1401, 0.0
  %v1462 = vmax.f32 %v1402, 0.0
  %v1463 = vmax.f32 %v1403, 0.0
  %v1464 = vmax.f32 %v1404, 0.0
  %v1465 = vmax.f32 %v1405, 0.0
  %v1466 = vmax.f32 %v1406, 0.0
  %v1467 = vmax.f32 %v1407, 0.0
  %v1468 = vmax.f32 %v1408, 0.0
  %v1469 = vmax.f32 %v1409, 0.0
  %v1470 = vmax.f32 %v1410, 0.0
  %v1471 = vmax.f32 %v1411, 0.0
  %v1472 = vmax.f32 %v1412, 0.0
  %v1473 = vmax.f32 %v1413, 0.0
  %vm1474 = vcmask 261120
  %1475 = vst.msk [vmem:[%s4] sm:$0xff] %vm1474, %v1414
  %1476 = vst.msk [vmem:[%s4 + $0x8] sm:$0xff] %vm1474, %v1415
  %1477 = vst.msk [vmem:[%s4 + $0x10] sm:$0xff] %vm1474, %v1416
  %1478 = vst.msk [vmem:[%s4 + $0x18] sm:$0xff] %vm1474, %v1417
  %1479 = vst.msk [vmem:[%s4 + $0x20] sm:$0xff] %vm1474, %v1418
  %1480 = vst.msk [vmem:[%s4 + $0x28] sm:$0xff] %vm1474, %v1419
  %1481 = vst.msk [vmem:[%s4 + $0x30] sm:$0xff] %vm1474, %v1420
  %1482 = vst.msk [vmem:[%s4 + $0x38] sm:$0xff] %vm1474, %v1421
  %1483 = vst.msk [vmem:[%s4 + $0x40] sm:$0xff] %vm1474, %v1422
  %1484 = vst.msk [vmem:[%s4 + $0x48] sm:$0xff] %vm1474, %v1423
  %1485 = vst.msk [vmem:[%s4 + $0x50] sm:$0xff] %vm1474, %v1424
  %1486 = vst.msk [vmem:[%s4 + $0x58] sm:$0xff] %vm1474, %v1425
  %1487 = vst.msk [vmem:[%s4 + $0x60] sm:$0xff] %vm1474, %v1426
  %1488 = vst.msk [vmem:[%s4 + $0x68] sm:$0xff] %vm1474, %v1427
  %1489 = vst.msk [vmem:[%s4 + $0x70] sm:$0xff] %vm1474, %v1428
  %1490 = vst.msk [vmem:[%s4 + $0x78] sm:$0xff] %vm1474, %v1429
  %1491 = vst.msk [vmem:[%s4 + $0x80] sm:$0xff] %vm1474, %v1430
  %1492 = vst.msk [vmem:[%s4 + $0x88] sm:$0xff] %vm1474, %v1431
  %1493 = vst.msk [vmem:[%s4 + $0x90] sm:$0xff] %vm1474, %v1432
  %1494 = vst.msk [vmem:[%s4 + $0x98] sm:$0xff] %vm1474, %v1433
  %1495 = vst.msk [vmem:[%s4 + $0xa0] sm:$0xff] %vm1474, %v1434
  %1496 = vst.msk [vmem:[%s4 + $0xa8] sm:$0xff] %vm1474, %v1435
  %1497 = vst.msk [vmem:[%s4 + $0xb0] sm:$0xff] %vm1474, %v1436
  %1498 = vst.msk [vmem:[%s4 + $0xb8] sm:$0xff] %vm1474, %v1437
  %1499 = vst.msk [vmem:[%s4 + $0xc0] sm:$0xff] %vm1474, %v1438
  %1500 = vst.msk [vmem:[%s4 + $0xc8] sm:$0xff] %vm1474, %v1439
  %1501 = vst.msk [vmem:[%s4 + $0xd0] sm:$0xff] %vm1474, %v1440
  %1502 = vst.msk [vmem:[%s4 + $0xd8] sm:$0xff] %vm1474, %v1441
  %1503 = vst.msk [vmem:[%s4 + $0xe0] sm:$0xff] %vm1474, %v1442
  %1504 = vst.msk [vmem:[%s4 + $0xe8] sm:$0xff] %vm1474, %v1443
  %1505 = vst.msk [vmem:[%s4 + $0xf0] sm:$0xff] %vm1474, %v1444
  %1506 = vst.msk [vmem:[%s4 + $0xf8] sm:$0xff] %vm1474, %v1445
  %1507 = vst.msk [vmem:[%s4 + $0x100] sm:$0xff] %vm1474, %v1446
  %1508 = vst.msk [vmem:[%s4 + $0x108] sm:$0xff] %vm1474, %v1447
  %1509 = vst.msk [vmem:[%s4 + $0x110] sm:$0xff] %vm1474, %v1448
  %1510 = vst.msk [vmem:[%s4 + $0x118] sm:$0xff] %vm1474, %v1449
  %1511 = vst.msk [vmem:[%s4 + $0x120] sm:$0xff] %vm1474, %v1450
  %1512 = vst.msk [vmem:[%s4 + $0x128] sm:$0xff] %vm1474, %v1451
  %1513 = vst.msk [vmem:[%s4 + $0x130] sm:$0xff] %vm1474, %v1452
  %1514 = vst.msk [vmem:[%s4 + $0x138] sm:$0xff] %vm1474, %v1453
  %1515 = vst.msk [vmem:[%s4 + $0x140] sm:$0xff] %vm1474, %v1454
  %1516 = vst.msk [vmem:[%s4 + $0x148] sm:$0xff] %vm1474, %v1455
  %1517 = vst.msk [vmem:[%s4 + $0x150] sm:$0xff] %vm1474, %v1456
  %1518 = vst.msk [vmem:[%s4 + $0x158] sm:$0xff] %vm1474, %v1457
  %1519 = vst.msk [vmem:[%s4 + $0x160] sm:$0xff] %vm1474, %v1458
  %1520 = vst.msk [vmem:[%s4 + $0x168] sm:$0xff] %vm1474, %v1459
  %1521 = vst.msk [vmem:[%s4 + $0x170] sm:$0xff] %vm1474, %v1460
  %1522 = vst.msk [vmem:[%s4 + $0x178] sm:$0xff] %vm1474, %v1461
  %1523 = vst.msk [vmem:[%s4 + $0x180] sm:$0xff] %vm1474, %v1462
  %1524 = vst.msk [vmem:[%s4 + $0x188] sm:$0xff] %vm1474, %v1463
  %1525 = vst.msk [vmem:[%s4 + $0x190] sm:$0xff] %vm1474, %v1464
  %1526 = vst.msk [vmem:[%s4 + $0x198] sm:$0xff] %vm1474, %v1465
  %1527 = vst.msk [vmem:[%s4 + $0x1a0] sm:$0xff] %vm1474, %v1466
  %1528 = vst.msk [vmem:[%s4 + $0x1a8] sm:$0xff] %vm1474, %v1467
  %1529 = vst.msk [vmem:[%s4 + $0x1b0] sm:$0xff] %vm1474, %v1468
  %1530 = vst.msk [vmem:[%s4 + $0x1b8] sm:$0xff] %vm1474, %v1469
  %1531 = vst.msk [vmem:[%s4 + $0x1c0] sm:$0xff] %vm1474, %v1470
  %1532 = vst.msk [vmem:[%s4 + $0x1c8] sm:$0xff] %vm1474, %v1471
  %1533 = vst.msk [vmem:[%s4 + $0x1d0] sm:$0xff] %vm1474, %v1472
  %1534 = vst.msk [vmem:[%s4 + $0x1d8] sm:$0xff] %vm1474, %v1473
  // Predicated region
  $region18: #{_lambda_.9} parent=0 // pred_check
    _
  $region19: #{_lambda_.9} parent=0 // pred_check_branch
    %1536 = sbr.rel (0) target = $region21
  $region20: #{_lambda_.9} parent=0 // pred_region
    _
  $region21: #{_lambda_.9} parent=0 // pred_fallthru
    _
  // Predicated region
  $region22: #{_lambda_.9} parent=0 // pred_check
    _
  $region23: #{_lambda_.9} parent=0 // pred_check_branch
    %1538 = sbr.rel (0) target = $region25
  $region24: #{_lambda_.9} parent=0 // pred_region
    _
  $region25: #{_lambda_.9} parent=0 // pred_fallthru
    _

// kernel: _lambda_.10
$region0: #{_lambda_.10}
  #allocation0 [shape = 'u32[]', space=smem, size = 0x4, offset = 0x4, fixed_abs, tag = 'smem constant byte address 0x4 - core index']
  #allocation1 [shape = 'u32[72,128]{1,0:T(1,128)}', space=vmem, size = 0x9000, scoped, tag = 'internal scratch']
  %s0 = inlined_call_operand.vmem [shape: bf16[480,288], index: 0, kind: input, shape index: {}]
  %s1 = inlined_call_operand.vmem [shape: bf16[288,32], index: 1, kind: input, shape index: {}]
  %s2 = inlined_call_operand.vmem [shape: f32[1,32], index: 2, kind: input, shape index: {}]
  %s3 = inlined_call_operand.vmem [shape: f32[1,32], index: 3, kind: input, shape index: {}]
  %s4 = inlined_call_operand.vmem [shape: f32[480,32], index: 4, kind: output, shape index: {}]
  %s5 = sld [smem:[#allocation0]]
  $region26: #{_lambda_.10} parent=0
    _
  %s7 = ssub.s32 1, %s5
  %s8 = scalar_select 0, %s7, %s5
  // Predicated region
  $region2: #{_lambda_.10} parent=0 // pred_check
    _
  $region3: #{_lambda_.10} parent=0 // pred_check_branch
    %10 = sbr.rel (0) target = $region5
  $region4: #{_lambda_.10} parent=0 // pred_region
    _
  $region5: #{_lambda_.10} parent=0 // pred_fallthru
    _
  // Predicated region
  $region6: #{_lambda_.10} parent=0 // pred_check
    _
  $region7: #{_lambda_.10} parent=0 // pred_check_branch
    %12 = sbr.rel (0) target = $region9
  $region8: #{_lambda_.10} parent=0 // pred_region
    _
  $region9: #{_lambda_.10} parent=0 // pred_fallthru
    _
  // Predicated region
  $region10: #{_lambda_.10} parent=0 // pred_check
    _
  $region11: #{_lambda_.10} parent=0 // pred_check_branch
    %14 = sbr.rel (0) target = $region13
  $region12: #{_lambda_.10} parent=0 // pred_region
    _
  $region13: #{_lambda_.10} parent=0 // pred_fallthru
    _
  // Predicated region
  $region14: #{_lambda_.10} parent=0 // pred_check
    _
  $region15: #{_lambda_.10} parent=0 // pred_check_branch
    %16 = sbr.rel (0) target = $region17
  $region16: #{_lambda_.10} parent=0 // pred_region
    _
  $region17: #{_lambda_.10} parent=0 // pred_fallthru
    _
  %v18 = vld [vmem:[%s0] sm:$0xff]
  %v19 = vld [vmem:[%s0 + $0x8] sm:$0xf]
  %v20 = vld [vmem:[%s0 + $0xc] sm:$0xff]
  %v21 = vld [vmem:[%s0 + $0x14] sm:$0xf]
  %v22 = vld [vmem:[%s0 + $0x18] sm:$0xff]
  %v23 = vld [vmem:[%s0 + $0x20] sm:$0xf]
  %v24 = vld [vmem:[%s0 + $0x24] sm:$0xff]
  %v25 = vld [vmem:[%s0 + $0x2c] sm:$0xf]
  %v26 = vld [vmem:[%s0 + $0x30] sm:$0xff]
  %v27 = vld [vmem:[%s0 + $0x38] sm:$0xf]
  %v28 = vld [vmem:[%s0 + $0x3c] sm:$0xff]
  %v29 = vld [vmem:[%s0 + $0x44] sm:$0xf]
  %v30 = vld [vmem:[%s0 + $0x48] sm:$0xff]
  %v31 = vld [vmem:[%s0 + $0x50] sm:$0xf]
  %v32 = vld [vmem:[%s0 + $0x54] sm:$0xff]
  %v33 = vld [vmem:[%s0 + $0x5c] sm:$0xf]
  %v34 = vld [vmem:[%s0 + $0x60] sm:$0xff]
  %v35 = vld [vmem:[%s0 + $0x68] sm:$0xf]
  %v36 = vld [vmem:[%s0 + $0x6c] sm:$0xff]
  %v37 = vld [vmem:[%s0 + $0x74] sm:$0xf]
  %v38 = vld [vmem:[%s0 + $0x78] sm:$0xff]
  %v39 = vld [vmem:[%s0 + $0x80] sm:$0xf]
  %v40 = vld [vmem:[%s0 + $0x84] sm:$0xff]
  %v41 = vld [vmem:[%s0 + $0x8c] sm:$0xf]
  %v42 = vld [vmem:[%s0 + $0x90] sm:$0xff]
  %v43 = vld [vmem:[%s0 + $0x98] sm:$0xf]
  %v44 = vld [vmem:[%s0 + $0x9c] sm:$0xff]
  %v45 = vld [vmem:[%s0 + $0xa4] sm:$0xf]
  %v46 = vld [vmem:[%s0 + $0xa8] sm:$0xff]
  %v47 = vld [vmem:[%s0 + $0xb0] sm:$0xf]
  %v48 = vld [vmem:[%s0 + $0xb4] sm:$0xff]
  %v49 = vld [vmem:[%s0 + $0xbc] sm:$0xf]
  %v50 = vld [vmem:[%s0 + $0xc0] sm:$0xff]
  %v51 = vld [vmem:[%s0 + $0xc8] sm:$0xf]
  %v52 = vld [vmem:[%s0 + $0xcc] sm:$0xff]
  %v53 = vld [vmem:[%s0 + $0xd4] sm:$0xf]
  %v54 = vld [vmem:[%s0 + $0xd8] sm:$0xff]
  %v55 = vld [vmem:[%s0 + $0xe0] sm:$0xf]
  %v56 = vld [vmem:[%s0 + $0xe4] sm:$0xff]
  %v57 = vld [vmem:[%s0 + $0xec] sm:$0xf]
  %v58 = vld [vmem:[%s0 + $0xf0] sm:$0xff]
  %v59 = vld [vmem:[%s0 + $0xf8] sm:$0xf]
  %v60 = vld [vmem:[%s0 + $0xfc] sm:$0xff]
  %v61 = vld [vmem:[%s0 + $0x104] sm:$0xf]
  %v62 = vld [vmem:[%s0 + $0x108] sm:$0xff]
  %v63 = vld [vmem:[%s0 + $0x110] sm:$0xf]
  %v64 = vld [vmem:[%s0 + $0x114] sm:$0xff]
  %v65 = vld [vmem:[%s0 + $0x11c] sm:$0xf]
  %v66 = vld [vmem:[%s0 + $0x120] sm:$0xff]
  %v67 = vld [vmem:[%s0 + $0x128] sm:$0xf]
  %v68 = vld [vmem:[%s0 + $0x12c] sm:$0xff]
  %v69 = vld [vmem:[%s0 + $0x134] sm:$0xf]
  %v70 = vld [vmem:[%s0 + $0x138] sm:$0xff]
  %v71 = vld [vmem:[%s0 + $0x140] sm:$0xf]
  %v72 = vld [vmem:[%s0 + $0x144] sm:$0xff]
  %v73 = vld [vmem:[%s0 + $0x14c] sm:$0xf]
  %v74 = vld [vmem:[%s0 + $0x150] sm:$0xff]
  %v75 = vld [vmem:[%s0 + $0x158] sm:$0xf]
  %v76 = vld [vmem:[%s0 + $0x15c] sm:$0xff]
  %v77 = vld [vmem:[%s0 + $0x164] sm:$0xf]
  %v78 = vld [vmem:[%s0 + $0x168] sm:$0xff]
  %v79 = vld [vmem:[%s0 + $0x170] sm:$0xf]
  %v80 = vld [vmem:[%s0 + $0x174] sm:$0xff]
  %v81 = vld [vmem:[%s0 + $0x17c] sm:$0xf]
  %v82 = vld [vmem:[%s0 + $0x180] sm:$0xff]
  %v83 = vld [vmem:[%s0 + $0x188] sm:$0xf]
  %v84 = vld [vmem:[%s0 + $0x18c] sm:$0xff]
  %v85 = vld [vmem:[%s0 + $0x194] sm:$0xf]
  %v86 = vld [vmem:[%s0 + $0x198] sm:$0xff]
  %v87 = vld [vmem:[%s0 + $0x1a0] sm:$0xf]
  %v88 = vld [vmem:[%s0 + $0x1a4] sm:$0xff]
  %v89 = vld [vmem:[%s0 + $0x1ac] sm:$0xf]
  %v90 = vld [vmem:[%s0 + $0x1b0] sm:$0xff]
  %v91 = vld [vmem:[%s0 + $0x1b8] sm:$0xf]
  %v92 = vld [vmem:[%s0 + $0x1bc] sm:$0xff]
  %v93 = vld [vmem:[%s0 + $0x1c4] sm:$0xf]
  %v94 = vld [vmem:[%s0 + $0x1c8] sm:$0xff]
  %v95 = vld [vmem:[%s0 + $0x1d0] sm:$0xf]
  %v96 = vld [vmem:[%s0 + $0x1d4] sm:$0xff]
  %v97 = vld [vmem:[%s0 + $0x1dc] sm:$0xf]
  %v98 = vld [vmem:[%s0 + $0x1e0] sm:$0xff]
  %v99 = vld [vmem:[%s0 + $0x1e8] sm:$0xf]
  %v100 = vld [vmem:[%s0 + $0x1ec] sm:$0xff]
  %v101 = vld [vmem:[%s0 + $0x1f4] sm:$0xf]
  %v102 = vld [vmem:[%s0 + $0x1f8] sm:$0xff]
  %v103 = vld [vmem:[%s0 + $0x200] sm:$0xf]
  %v104 = vld [vmem:[%s0 + $0x204] sm:$0xff]
  %v105 = vld [vmem:[%s0 + $0x20c] sm:$0xf]
  %v106 = vld [vmem:[%s0 + $0x210] sm:$0xff]
  %v107 = vld [vmem:[%s0 + $0x218] sm:$0xf]
  %v108 = vld [vmem:[%s0 + $0x21c] sm:$0xff]
  %v109 = vld [vmem:[%s0 + $0x224] sm:$0xf]
  %v110 = vld [vmem:[%s0 + $0x228] sm:$0xff]
  %v111 = vld [vmem:[%s0 + $0x230] sm:$0xf]
  %v112 = vld [vmem:[%s0 + $0x234] sm:$0xff]
  %v113 = vld [vmem:[%s0 + $0x23c] sm:$0xf]
  %v114 = vld [vmem:[%s0 + $0x240] sm:$0xff]
  %v115 = vld [vmem:[%s0 + $0x248] sm:$0xf]
  %v116 = vld [vmem:[%s0 + $0x24c] sm:$0xff]
  %v117 = vld [vmem:[%s0 + $0x254] sm:$0xf]
  %v118 = vld [vmem:[%s0 + $0x258] sm:$0xff]
  %v119 = vld [vmem:[%s0 + $0x260] sm:$0xf]
  %v120 = vld [vmem:[%s0 + $0x264] sm:$0xff]
  %v121 = vld [vmem:[%s0 + $0x26c] sm:$0xf]
  %v122 = vld [vmem:[%s0 + $0x270] sm:$0xff]
  %v123 = vld [vmem:[%s0 + $0x278] sm:$0xf]
  %v124 = vld [vmem:[%s0 + $0x27c] sm:$0xff]
  %v125 = vld [vmem:[%s0 + $0x284] sm:$0xf]
  %v126 = vld [vmem:[%s0 + $0x288] sm:$0xff]
  %v127 = vld [vmem:[%s0 + $0x290] sm:$0xf]
  %v128 = vld [vmem:[%s0 + $0x294] sm:$0xff]
  %v129 = vld [vmem:[%s0 + $0x29c] sm:$0xf]
  %v130 = vld [vmem:[%s0 + $0x2a0] sm:$0xff]
  %v131 = vld [vmem:[%s0 + $0x2a8] sm:$0xf]
  %v132 = vld [vmem:[%s0 + $0x2ac] sm:$0xff]
  %v133 = vld [vmem:[%s0 + $0x2b4] sm:$0xf]
  %v134 = vld [vmem:[%s0 + $0x2b8] sm:$0xff]
  %v135 = vld [vmem:[%s0 + $0x2c0] sm:$0xf]
  %v136 = vld [vmem:[%s0 + $0x2c4] sm:$0xff]
  %v137 = vld [vmem:[%s0 + $0x2cc] sm:$0xf]
  %v138 = vld [vmem:[%s1] sm:$0xf]
  %v139 = vld [vmem:[%s1 + $0x4] sm:$0xf]
  %v140 = vld [vmem:[%s1 + $0x8] sm:$0xf]
  %v141 = vld [vmem:[%s1 + $0xc] sm:$0xf]
  %v142 = vld [vmem:[%s1 + $0x10] sm:$0xf]
  %v143 = vld [vmem:[%s1 + $0x14] sm:$0xf]
  %v144 = vld [vmem:[%s1 + $0x18] sm:$0xf]
  %v145 = vld [vmem:[%s1 + $0x1c] sm:$0xf]
  %v146 = vld [vmem:[%s1 + $0x20] sm:$0xf]
  %v147 = vld [vmem:[%s1 + $0x24] sm:$0xf]
  %v148 = vld [vmem:[%s1 + $0x28] sm:$0xf]
  %v149 = vld [vmem:[%s1 + $0x2c] sm:$0xf]
  %v150 = vld [vmem:[%s1 + $0x30] sm:$0xf]
  %v151 = vld [vmem:[%s1 + $0x34] sm:$0xf]
  %v152 = vld [vmem:[%s1 + $0x38] sm:$0xf]
  %v153 = vld [vmem:[%s1 + $0x3c] sm:$0xf]
  %v154 = vld [vmem:[%s1 + $0x40] sm:$0xf]
  %v155 = vld [vmem:[%s1 + $0x44] sm:$0xf]
  %v156 = vld [vmem:[%s1 + $0x48] sm:$0xf]
  %v157 = vld [vmem:[%s1 + $0x4c] sm:$0xf]
  %v158 = vld [vmem:[%s1 + $0x50] sm:$0xf]
  %v159 = vld [vmem:[%s1 + $0x54] sm:$0xf]
  %v160 = vld [vmem:[%s1 + $0x58] sm:$0xf]
  %v161 = vld [vmem:[%s1 + $0x5c] sm:$0xf]
  %v162 = vld [vmem:[%s1 + $0x60] sm:$0xf]
  %v163 = vld [vmem:[%s1 + $0x64] sm:$0xf]
  %v164 = vld [vmem:[%s1 + $0x68] sm:$0xf]
  %v165 = vld [vmem:[%s1 + $0x6c] sm:$0xf]
  %v166 = vld [vmem:[%s1 + $0x70] sm:$0xf]
  %v167 = vld [vmem:[%s1 + $0x74] sm:$0xf]
  %v168 = vld [vmem:[%s1 + $0x78] sm:$0xf]
  %v169 = vld [vmem:[%s1 + $0x7c] sm:$0xf]
  %v170 = vld [vmem:[%s1 + $0x80] sm:$0xf]
  %v171 = vld [vmem:[%s1 + $0x84] sm:$0xf]
  %v172 = vld [vmem:[%s1 + $0x88] sm:$0xf]
  %v173 = vld [vmem:[%s1 + $0x8c] sm:$0xf]
  %v294 = vunpack.c.l.b16 %v18
  %v295 = vunpack.c.h.b16 %v18
  %v296 = vunpack.c.l.b16 %v19
  %v297 = vunpack.c.l.b16 %v20
  %v298 = vunpack.c.h.b16 %v20
  %v299 = vunpack.c.l.b16 %v21
  %v300 = vunpack.c.l.b16 %v22
  %v301 = vunpack.c.h.b16 %v22
  %v302 = vunpack.c.l.b16 %v23
  %v303 = vunpack.c.l.b16 %v24
  %v304 = vunpack.c.h.b16 %v24
  %v305 = vunpack.c.l.b16 %v25
  %v306 = vunpack.c.l.b16 %v26
  %v307 = vunpack.c.h.b16 %v26
  %v308 = vunpack.c.l.b16 %v27
  %v309 = vunpack.c.l.b16 %v28
  %v310 = vunpack.c.h.b16 %v28
  %v311 = vunpack.c.l.b16 %v29
  %v312 = vunpack.c.l.b16 %v30
  %v313 = vunpack.c.h.b16 %v30
  %v314 = vunpack.c.l.b16 %v31
  %v315 = vunpack.c.l.b16 %v32
  %v316 = vunpack.c.h.b16 %v32
  %v317 = vunpack.c.l.b16 %v33
  %v318 = vunpack.c.l.b16 %v34
  %v319 = vunpack.c.h.b16 %v34
  %v320 = vunpack.c.l.b16 %v35
  %v321 = vunpack.c.l.b16 %v36
  %v322 = vunpack.c.h.b16 %v36
  %v323 = vunpack.c.l.b16 %v37
  %v324 = vunpack.c.l.b16 %v38
  %v325 = vunpack.c.h.b16 %v38
  %v326 = vunpack.c.l.b16 %v39
  %v327 = vunpack.c.l.b16 %v40
  %v328 = vunpack.c.h.b16 %v40
  %v329 = vunpack.c.l.b16 %v41
  %v330 = vunpack.c.l.b16 %v42
  %v331 = vunpack.c.h.b16 %v42
  %v332 = vunpack.c.l.b16 %v43
  %v333 = vunpack.c.l.b16 %v44
  %v334 = vunpack.c.h.b16 %v44
  %v335 = vunpack.c.l.b16 %v45
  %v336 = vunpack.c.l.b16 %v46
  %v337 = vunpack.c.h.b16 %v46
  %v338 = vunpack.c.l.b16 %v47
  %v339 = vunpack.c.l.b16 %v48
  %v340 = vunpack.c.h.b16 %v48
  %v341 = vunpack.c.l.b16 %v49
  %v342 = vunpack.c.l.b16 %v50
  %v343 = vunpack.c.h.b16 %v50
  %v344 = vunpack.c.l.b16 %v51
  %v345 = vunpack.c.l.b16 %v52
  %v346 = vunpack.c.h.b16 %v52
  %v347 = vunpack.c.l.b16 %v53
  %v348 = vunpack.c.l.b16 %v54
  %v349 = vunpack.c.h.b16 %v54
  %v350 = vunpack.c.l.b16 %v55
  %v351 = vunpack.c.l.b16 %v56
  %v352 = vunpack.c.h.b16 %v56
  %v353 = vunpack.c.l.b16 %v57
  %v354 = vunpack.c.l.b16 %v58
  %v355 = vunpack.c.h.b16 %v58
  %v356 = vunpack.c.l.b16 %v59
  %v357 = vunpack.c.l.b16 %v60
  %v358 = vunpack.c.h.b16 %v60
  %v359 = vunpack.c.l.b16 %v61
  %v360 = vunpack.c.l.b16 %v62
  %v361 = vunpack.c.h.b16 %v62
  %v362 = vunpack.c.l.b16 %v63
  %v363 = vunpack.c.l.b16 %v64
  %v364 = vunpack.c.h.b16 %v64
  %v365 = vunpack.c.l.b16 %v65
  %v366 = vunpack.c.l.b16 %v66
  %v367 = vunpack.c.h.b16 %v66
  %v368 = vunpack.c.l.b16 %v67
  %v369 = vunpack.c.l.b16 %v68
  %v370 = vunpack.c.h.b16 %v68
  %v371 = vunpack.c.l.b16 %v69
  %v372 = vunpack.c.l.b16 %v70
  %v373 = vunpack.c.h.b16 %v70
  %v374 = vunpack.c.l.b16 %v71
  %v375 = vunpack.c.l.b16 %v72
  %v376 = vunpack.c.h.b16 %v72
  %v377 = vunpack.c.l.b16 %v73
  %v378 = vunpack.c.l.b16 %v74
  %v379 = vunpack.c.h.b16 %v74
  %v380 = vunpack.c.l.b16 %v75
  %v381 = vunpack.c.l.b16 %v76
  %v382 = vunpack.c.h.b16 %v76
  %v383 = vunpack.c.l.b16 %v77
  %v384 = vunpack.c.l.b16 %v78
  %v385 = vunpack.c.h.b16 %v78
  %v386 = vunpack.c.l.b16 %v79
  %v387 = vunpack.c.l.b16 %v80
  %v388 = vunpack.c.h.b16 %v80
  %v389 = vunpack.c.l.b16 %v81
  %v390 = vunpack.c.l.b16 %v82
  %v391 = vunpack.c.h.b16 %v82
  %v392 = vunpack.c.l.b16 %v83
  %v393 = vunpack.c.l.b16 %v84
  %v394 = vunpack.c.h.b16 %v84
  %v395 = vunpack.c.l.b16 %v85
  %v396 = vunpack.c.l.b16 %v86
  %v397 = vunpack.c.h.b16 %v86
  %v398 = vunpack.c.l.b16 %v87
  %v399 = vunpack.c.l.b16 %v88
  %v400 = vunpack.c.h.b16 %v88
  %v401 = vunpack.c.l.b16 %v89
  %v402 = vunpack.c.l.b16 %v90
  %v403 = vunpack.c.h.b16 %v90
  %v404 = vunpack.c.l.b16 %v91
  %v405 = vunpack.c.l.b16 %v92
  %v406 = vunpack.c.h.b16 %v92
  %v407 = vunpack.c.l.b16 %v93
  %v408 = vunpack.c.l.b16 %v94
  %v409 = vunpack.c.h.b16 %v94
  %v410 = vunpack.c.l.b16 %v95
  %v411 = vunpack.c.l.b16 %v96
  %v412 = vunpack.c.h.b16 %v96
  %v413 = vunpack.c.l.b16 %v97
  %v414 = vunpack.c.l.b16 %v98
  %v415 = vunpack.c.h.b16 %v98
  %v416 = vunpack.c.l.b16 %v99
  %v417 = vunpack.c.l.b16 %v100
  %v418 = vunpack.c.h.b16 %v100
  %v419 = vunpack.c.l.b16 %v101
  %v420 = vunpack.c.l.b16 %v102
  %v421 = vunpack.c.h.b16 %v102
  %v422 = vunpack.c.l.b16 %v103
  %v423 = vunpack.c.l.b16 %v104
  %v424 = vunpack.c.h.b16 %v104
  %v425 = vunpack.c.l.b16 %v105
  %v426 = vunpack.c.l.b16 %v106
  %v427 = vunpack.c.h.b16 %v106
  %v428 = vunpack.c.l.b16 %v107
  %v429 = vunpack.c.l.b16 %v108
  %v430 = vunpack.c.h.b16 %v108
  %v431 = vunpack.c.l.b16 %v109
  %v432 = vunpack.c.l.b16 %v110
  %v433 = vunpack.c.h.b16 %v110
  %v434 = vunpack.c.l.b16 %v111
  %v435 = vunpack.c.l.b16 %v112
  %v436 = vunpack.c.h.b16 %v112
  %v437 = vunpack.c.l.b16 %v113
  %v438 = vunpack.c.l.b16 %v114
  %v439 = vunpack.c.h.b16 %v114
  %v440 = vunpack.c.l.b16 %v115
  %v441 = vunpack.c.l.b16 %v116
  %v442 = vunpack.c.h.b16 %v116
  %v443 = vunpack.c.l.b16 %v117
  %v444 = vunpack.c.l.b16 %v118
  %v445 = vunpack.c.h.b16 %v118
  %v446 = vunpack.c.l.b16 %v119
  %v447 = vunpack.c.l.b16 %v120
  %v448 = vunpack.c.h.b16 %v120
  %v449 = vunpack.c.l.b16 %v121
  %v450 = vunpack.c.l.b16 %v122
  %v451 = vunpack.c.h.b16 %v122
  %v452 = vunpack.c.l.b16 %v123
  %v453 = vunpack.c.l.b16 %v124
  %v454 = vunpack.c.h.b16 %v124
  %v455 = vunpack.c.l.b16 %v125
  %v456 = vunpack.c.l.b16 %v126
  %v457 = vunpack.c.h.b16 %v126
  %v458 = vunpack.c.l.b16 %v127
  %v459 = vunpack.c.l.b16 %v128
  %v460 = vunpack.c.h.b16 %v128
  %v461 = vunpack.c.l.b16 %v129
  %v462 = vunpack.c.l.b16 %v130
  %v463 = vunpack.c.h.b16 %v130
  %v464 = vunpack.c.l.b16 %v131
  %v465 = vunpack.c.l.b16 %v132
  %v466 = vunpack.c.h.b16 %v132
  %v467 = vunpack.c.l.b16 %v133
  %v468 = vunpack.c.l.b16 %v134
  %v469 = vunpack.c.h.b16 %v134
  %v470 = vunpack.c.l.b16 %v135
  %v471 = vunpack.c.l.b16 %v136
  %v472 = vunpack.c.h.b16 %v136
  %v473 = vunpack.c.l.b16 %v137
  %v474 = vpack.c.b16 %v297, %v294
  %v475 = vpack.c.b16 %v298, %v295
  %v476 = vpack.c.b16 %v299, %v296
  %v477 = vpack.c.b16 %v303, %v300
  %v478 = vpack.c.b16 %v304, %v301
  %v479 = vpack.c.b16 %v305, %v302
  %v480 = vpack.c.b16 %v309, %v306
  %v481 = vpack.c.b16 %v310, %v307
  %v482 = vpack.c.b16 %v311, %v308
  %v483 = vpack.c.b16 %v315, %v312
  %v484 = vpack.c.b16 %v316, %v313
  %v485 = vpack.c.b16 %v317, %v314
  %v486 = vpack.c.b16 %v321, %v318
  %v487 = vpack.c.b16 %v322, %v319
  %v488 = vpack.c.b16 %v323, %v320
  %v489 = vpack.c.b16 %v327, %v324
  %v490 = vpack.c.b16 %v328, %v325
  %v491 = vpack.c.b16 %v329, %v326
  %v492 = vpack.c.b16 %v333, %v330
  %v493 = vpack.c.b16 %v334, %v331
  %v494 = vpack.c.b16 %v335, %v332
  %v495 = vpack.c.b16 %v339, %v336
  %v496 = vpack.c.b16 %v340, %v337
  %v497 = vpack.c.b16 %v341, %v338
  %v498 = vpack.c.b16 %v345, %v342
  %v499 = vpack.c.b16 %v346, %v343
  %v500 = vpack.c.b16 %v347, %v344
  %v501 = vpack.c.b16 %v351, %v348
  %v502 = vpack.c.b16 %v352, %v349
  %v503 = vpack.c.b16 %v353, %v350
  %v504 = vpack.c.b16 %v357, %v354
  %v505 = vpack.c.b16 %v358, %v355
  %v506 = vpack.c.b16 %v359, %v356
  %v507 = vpack.c.b16 %v363, %v360
  %v508 = vpack.c.b16 %v364, %v361
  %v509 = vpack.c.b16 %v365, %v362
  %v510 = vpack.c.b16 %v369, %v366
  %v511 = vpack.c.b16 %v370, %v367
  %v512 = vpack.c.b16 %v371, %v368
  %v513 = vpack.c.b16 %v375, %v372
  %v514 = vpack.c.b16 %v376, %v373
  %v515 = vpack.c.b16 %v377, %v374
  %v516 = vpack.c.b16 %v381, %v378
  %v517 = vpack.c.b16 %v382, %v379
  %v518 = vpack.c.b16 %v383, %v380
  %v519 = vpack.c.b16 %v387, %v384
  %v520 = vpack.c.b16 %v388, %v385
  %v521 = vpack.c.b16 %v389, %v386
  %v522 = vpack.c.b16 %v393, %v390
  %v523 = vpack.c.b16 %v394, %v391
  %v524 = vpack.c.b16 %v395, %v392
  %v525 = vpack.c.b16 %v399, %v396
  %v526 = vpack.c.b16 %v400, %v397
  %v527 = vpack.c.b16 %v401, %v398
  %v528 = vpack.c.b16 %v405, %v402
  %v529 = vpack.c.b16 %v406, %v403
  %v530 = vpack.c.b16 %v407, %v404
  %v531 = vpack.c.b16 %v411, %v408
  %v532 = vpack.c.b16 %v412, %v409
  %v533 = vpack.c.b16 %v413, %v410
  %v534 = vpack.c.b16 %v417, %v414
  %v535 = vpack.c.b16 %v418, %v415
  %v536 = vpack.c.b16 %v419, %v416
  %v537 = vpack.c.b16 %v423, %v420
  %v538 = vpack.c.b16 %v424, %v421
  %v539 = vpack.c.b16 %v425, %v422
  %v540 = vpack.c.b16 %v429, %v426
  %v541 = vpack.c.b16 %v430, %v427
  %v542 = vpack.c.b16 %v431, %v428
  %v543 = vpack.c.b16 %v435, %v432
  %v544 = vpack.c.b16 %v436, %v433
  %v545 = vpack.c.b16 %v437, %v434
  %v546 = vpack.c.b16 %v441, %v438
  %v547 = vpack.c.b16 %v442, %v439
  %v548 = vpack.c.b16 %v443, %v440
  %v549 = vpack.c.b16 %v447, %v444
  %v550 = vpack.c.b16 %v448, %v445
  %v551 = vpack.c.b16 %v449, %v446
  %v552 = vpack.c.b16 %v453, %v450
  %v553 = vpack.c.b16 %v454, %v451
  %v554 = vpack.c.b16 %v455, %v452
  %v555 = vpack.c.b16 %v459, %v456
  %v556 = vpack.c.b16 %v460, %v457
  %v557 = vpack.c.b16 %v461, %v458
  %v558 = vpack.c.b16 %v465, %v462
  %v559 = vpack.c.b16 %v466, %v463
  %v560 = vpack.c.b16 %v467, %v464
  %v561 = vpack.c.b16 %v471, %v468
  %v562 = vpack.c.b16 %v472, %v469
  %v563 = vpack.c.b16 %v473, %v470
  %v660 = vunpack.c.l.b16 %v138
  %v661 = vunpack.c.l.b16 %v139
  %v662 = vunpack.c.l.b16 %v140
  %v663 = vunpack.c.l.b16 %v141
  %v664 = vunpack.c.l.b16 %v142
  %v665 = vunpack.c.l.b16 %v143
  %v666 = vunpack.c.l.b16 %v144
  %v667 = vunpack.c.l.b16 %v145
  %v668 = vunpack.c.l.b16 %v146
  %v669 = vunpack.c.l.b16 %v147
  %v670 = vunpack.c.l.b16 %v148
  %v671 = vunpack.c.l.b16 %v149
  %v672 = vunpack.c.l.b16 %v150
  %v673 = vunpack.c.l.b16 %v151
  %v674 = vunpack.c.l.b16 %v152
  %v675 = vunpack.c.l.b16 %v153
  %v676 = vunpack.c.l.b16 %v154
  %v677 = vunpack.c.l.b16 %v155
  %v678 = vunpack.c.l.b16 %v156
  %v679 = vunpack.c.l.b16 %v157
  %v680 = vunpack.c.l.b16 %v158
  %v681 = vunpack.c.l.b16 %v159
  %v682 = vunpack.c.l.b16 %v160
  %v683 = vunpack.c.l.b16 %v161
  %v684 = vunpack.c.l.b16 %v162
  %v685 = vunpack.c.l.b16 %v163
  %v686 = vunpack.c.l.b16 %v164
  %v687 = vunpack.c.l.b16 %v165
  %v688 = vunpack.c.l.b16 %v166
  %v689 = vunpack.c.l.b16 %v167
  %v690 = vunpack.c.l.b16 %v168
  %v691 = vunpack.c.l.b16 %v169
  %v692 = vunpack.c.l.b16 %v170
  %v693 = vunpack.c.l.b16 %v171
  %v694 = vunpack.c.l.b16 %v172
  %v695 = vunpack.c.l.b16 %v173
  %v696 = vpack.c.b16 %v661, %v660
  %v697 = vpack.c.b16 %v663, %v662
  %v698 = vpack.c.b16 %v665, %v664
  %v699 = vpack.c.b16 %v667, %v666
  %v700 = vpack.c.b16 %v669, %v668
  %v701 = vpack.c.b16 %v671, %v670
  %v702 = vpack.c.b16 %v673, %v672
  %v703 = vpack.c.b16 %v675, %v674
  %v704 = vpack.c.b16 %v677, %v676
  %v705 = vpack.c.b16 %v679, %v678
  %v706 = vpack.c.b16 %v681, %v680
  %v707 = vpack.c.b16 %v683, %v682
  %v708 = vpack.c.b16 %v685, %v684
  %v709 = vpack.c.b16 %v687, %v686
  %v710 = vpack.c.b16 %v689, %v688
  %v711 = vpack.c.b16 %v691, %v690
  %v712 = vpack.c.b16 %v693, %v692
  %v713 = vpack.c.b16 %v695, %v694
  %vm732 = vcmask 261120
  %v734 = vsel %vm732, %v476, 0
  %v737 = vsel %vm732, %v479, 0
  %v740 = vsel %vm732, %v482, 0
  %v743 = vsel %vm732, %v485, 0
  %v746 = vsel %vm732, %v488, 0
  %v749 = vsel %vm732, %v491, 0
  %v752 = vsel %vm732, %v494, 0
  %v755 = vsel %vm732, %v497, 0
  %v758 = vsel %vm732, %v500, 0
  %v761 = vsel %vm732, %v503, 0
  %v764 = vsel %vm732, %v506, 0
  %v767 = vsel %vm732, %v509, 0
  %v770 = vsel %vm732, %v512, 0
  %v773 = vsel %vm732, %v515, 0
  %v776 = vsel %vm732, %v518, 0
  %v779 = vsel %vm732, %v521, 0
  %v782 = vsel %vm732, %v524, 0
  %v785 = vsel %vm732, %v527, 0
  %v788 = vsel %vm732, %v530, 0
  %v791 = vsel %vm732, %v533, 0
  %v794 = vsel %vm732, %v536, 0
  %v797 = vsel %vm732, %v539, 0
  %v800 = vsel %vm732, %v542, 0
  %v803 = vsel %vm732, %v545, 0
  %v806 = vsel %vm732, %v548, 0
  %v809 = vsel %vm732, %v551, 0
  %v812 = vsel %vm732, %v554, 0
  %v815 = vsel %vm732, %v557, 0
  %v818 = vsel %vm732, %v560, 0
  %v821 = vsel %vm732, %v563, 0
  %823 = vmatpush.bf16.msra.mxu0 %v703
  %824 = vmatpush.bf16.msra.mxu0 %v702
  %825 = vmatpush.bf16.msra.mxu0 %v701
  %826 = vmatpush.bf16.msra.mxu0 %v700
  %827 = vmatpush.bf16.msra.mxu0 %v699
  %828 = vmatpush.bf16.msra.mxu0 %v698
  %829 = vmatpush.bf16.msra.mxu0 %v697
  %830 = vmatpush.bf16.msra.mxu0 %v696
  %831 = vmatmul.bf16.gmra.mxu0 %v474
  %v832 = vpop.f32.mrf.mxu0
  %v833 = vadd.f32 0.0, %v832
  %v834 = vpop.f32.mrf.mxu0
  %v835 = vadd.f32 0.0, %v834
  %836 = vmatmul.bf16.gmra.mxu0 %v477
  %v837 = vpop.f32.mrf.mxu0
  %v838 = vadd.f32 0.0, %v837
  %v839 = vpop.f32.mrf.mxu0
  %v840 = vadd.f32 0.0, %v839
  %841 = vmatmul.bf16.gmra.mxu0 %v480
  %v842 = vpop.f32.mrf.mxu0
  %v843 = vadd.f32 0.0, %v842
  %v844 = vpop.f32.mrf.mxu0
  %v845 = vadd.f32 0.0, %v844
  %846 = vmatmul.bf16.gmra.mxu0 %v483
  %v847 = vpop.f32.mrf.mxu0
  %v848 = vadd.f32 0.0, %v847
  %v849 = vpop.f32.mrf.mxu0
  %v850 = vadd.f32 0.0, %v849
  %851 = vmatmul.bf16.gmra.mxu0 %v486
  %v852 = vpop.f32.mrf.mxu0
  %v853 = vadd.f32 0.0, %v852
  %v854 = vpop.f32.mrf.mxu0
  %v855 = vadd.f32 0.0, %v854
  %856 = vmatmul.bf16.gmra.mxu0 %v489
  %v857 = vpop.f32.mrf.mxu0
  %v858 = vadd.f32 0.0, %v857
  %v859 = vpop.f32.mrf.mxu0
  %v860 = vadd.f32 0.0, %v859
  %861 = vmatmul.bf16.gmra.mxu0 %v492
  %v862 = vpop.f32.mrf.mxu0
  %v863 = vadd.f32 0.0, %v862
  %v864 = vpop.f32.mrf.mxu0
  %v865 = vadd.f32 0.0, %v864
  %866 = vmatmul.bf16.gmra.mxu0 %v495
  %v867 = vpop.f32.mrf.mxu0
  %v868 = vadd.f32 0.0, %v867
  %v869 = vpop.f32.mrf.mxu0
  %v870 = vadd.f32 0.0, %v869
  %871 = vmatmul.bf16.gmra.mxu0 %v498
  %v872 = vpop.f32.mrf.mxu0
  %v873 = vadd.f32 0.0, %v872
  %v874 = vpop.f32.mrf.mxu0
  %v875 = vadd.f32 0.0, %v874
  %876 = vmatmul.bf16.gmra.mxu0 %v501
  %v877 = vpop.f32.mrf.mxu0
  %v878 = vadd.f32 0.0, %v877
  %v879 = vpop.f32.mrf.mxu0
  %v880 = vadd.f32 0.0, %v879
  %881 = vmatmul.bf16.gmra.mxu0 %v504
  %v882 = vpop.f32.mrf.mxu0
  %v883 = vadd.f32 0.0, %v882
  %v884 = vpop.f32.mrf.mxu0
  %v885 = vadd.f32 0.0, %v884
  %886 = vmatmul.bf16.gmra.mxu0 %v507
  %v887 = vpop.f32.mrf.mxu0
  %v888 = vadd.f32 0.0, %v887
  %v889 = vpop.f32.mrf.mxu0
  %v890 = vadd.f32 0.0, %v889
  %891 = vmatmul.bf16.gmra.mxu0 %v510
  %v892 = vpop.f32.mrf.mxu0
  %v893 = vadd.f32 0.0, %v892
  %v894 = vpop.f32.mrf.mxu0
  %v895 = vadd.f32 0.0, %v894
  %896 = vmatmul.bf16.gmra.mxu0 %v513
  %v897 = vpop.f32.mrf.mxu0
  %v898 = vadd.f32 0.0, %v897
  %v899 = vpop.f32.mrf.mxu0
  %v900 = vadd.f32 0.0, %v899
  %901 = vmatmul.bf16.gmra.mxu0 %v516
  %v902 = vpop.f32.mrf.mxu0
  %v903 = vadd.f32 0.0, %v902
  %v904 = vpop.f32.mrf.mxu0
  %v905 = vadd.f32 0.0, %v904
  %906 = vmatmul.bf16.gmra.mxu0 %v519
  %v907 = vpop.f32.mrf.mxu0
  %v908 = vadd.f32 0.0, %v907
  %v909 = vpop.f32.mrf.mxu0
  %v910 = vadd.f32 0.0, %v909
  %911 = vmatmul.bf16.gmra.mxu0 %v522
  %v912 = vpop.f32.mrf.mxu0
  %v913 = vadd.f32 0.0, %v912
  %v914 = vpop.f32.mrf.mxu0
  %v915 = vadd.f32 0.0, %v914
  %916 = vmatmul.bf16.gmra.mxu0 %v525
  %v917 = vpop.f32.mrf.mxu0
  %v918 = vadd.f32 0.0, %v917
  %v919 = vpop.f32.mrf.mxu0
  %v920 = vadd.f32 0.0, %v919
  %921 = vmatmul.bf16.gmra.mxu0 %v528
  %v922 = vpop.f32.mrf.mxu0
  %v923 = vadd.f32 0.0, %v922
  %v924 = vpop.f32.mrf.mxu0
  %v925 = vadd.f32 0.0, %v924
  %926 = vmatmul.bf16.gmra.mxu0 %v531
  %v927 = vpop.f32.mrf.mxu0
  %v928 = vadd.f32 0.0, %v927
  %v929 = vpop.f32.mrf.mxu0
  %v930 = vadd.f32 0.0, %v929
  %931 = vmatmul.bf16.gmra.mxu0 %v534
  %v932 = vpop.f32.mrf.mxu0
  %v933 = vadd.f32 0.0, %v932
  %v934 = vpop.f32.mrf.mxu0
  %v935 = vadd.f32 0.0, %v934
  %936 = vmatmul.bf16.gmra.mxu0 %v537
  %v937 = vpop.f32.mrf.mxu0
  %v938 = vadd.f32 0.0, %v937
  %v939 = vpop.f32.mrf.mxu0
  %v940 = vadd.f32 0.0, %v939
  %941 = vmatmul.bf16.gmra.mxu0 %v540
  %v942 = vpop.f32.mrf.mxu0
  %v943 = vadd.f32 0.0, %v942
  %v944 = vpop.f32.mrf.mxu0
  %v945 = vadd.f32 0.0, %v944
  %946 = vmatmul.bf16.gmra.mxu0 %v543
  %v947 = vpop.f32.mrf.mxu0
  %v948 = vadd.f32 0.0, %v947
  %v949 = vpop.f32.mrf.mxu0
  %v950 = vadd.f32 0.0, %v949
  %951 = vmatmul.bf16.gmra.mxu0 %v546
  %v952 = vpop.f32.mrf.mxu0
  %v953 = vadd.f32 0.0, %v952
  %v954 = vpop.f32.mrf.mxu0
  %v955 = vadd.f32 0.0, %v954
  %956 = vmatmul.bf16.gmra.mxu0 %v549
  %v957 = vpop.f32.mrf.mxu0
  %v958 = vadd.f32 0.0, %v957
  %v959 = vpop.f32.mrf.mxu0
  %v960 = vadd.f32 0.0, %v959
  %961 = vmatmul.bf16.gmra.mxu0 %v552
  %v962 = vpop.f32.mrf.mxu0
  %v963 = vadd.f32 0.0, %v962
  %v964 = vpop.f32.mrf.mxu0
  %v965 = vadd.f32 0.0, %v964
  %966 = vmatmul.bf16.gmra.mxu0 %v555
  %v967 = vpop.f32.mrf.mxu0
  %v968 = vadd.f32 0.0, %v967
  %v969 = vpop.f32.mrf.mxu0
  %v970 = vadd.f32 0.0, %v969
  %971 = vmatmul.bf16.gmra.mxu0 %v558
  %v972 = vpop.f32.mrf.mxu0
  %v973 = vadd.f32 0.0, %v972
  %v974 = vpop.f32.mrf.mxu0
  %v975 = vadd.f32 0.0, %v974
  %976 = vmatmul.bf16.gmra.mxu0 %v561
  %v977 = vpop.f32.mrf.mxu0
  %v978 = vadd.f32 0.0, %v977
  %v979 = vpop.f32.mrf.mxu0
  %v980 = vadd.f32 0.0, %v979
  %981 = vdwg.mxu0
  %982 = vmatpush.bf16.msra.mxu0 %v711
  %983 = vmatpush.bf16.msra.mxu0 %v710
  %984 = vmatpush.bf16.msra.mxu0 %v709
  %985 = vmatpush.bf16.msra.mxu0 %v708
  %986 = vmatpush.bf16.msra.mxu0 %v707
  %987 = vmatpush.bf16.msra.mxu0 %v706
  %988 = vmatpush.bf16.msra.mxu0 %v705
  %989 = vmatpush.bf16.msra.mxu0 %v704
  %990 = vmatmul.bf16.gmra.mxu0 %v475
  %v991 = vpop.f32.mrf.mxu0
  %v992 = vadd.f32 %v833, %v991
  %v993 = vpop.f32.mrf.mxu0
  %v994 = vadd.f32 %v835, %v993
  %995 = vmatmul.bf16.gmra.mxu0 %v478
  %v996 = vpop.f32.mrf.mxu0
  %v997 = vadd.f32 %v838, %v996
  %v998 = vpop.f32.mrf.mxu0
  %v999 = vadd.f32 %v840, %v998
  %1000 = vmatmul.bf16.gmra.mxu0 %v481
  %v1001 = vpop.f32.mrf.mxu0
  %v1002 = vadd.f32 %v843, %v1001
  %v1003 = vpop.f32.mrf.mxu0
  %v1004 = vadd.f32 %v845, %v1003
  %1005 = vmatmul.bf16.gmra.mxu0 %v484
  %v1006 = vpop.f32.mrf.mxu0
  %v1007 = vadd.f32 %v848, %v1006
  %v1008 = vpop.f32.mrf.mxu0
  %v1009 = vadd.f32 %v850, %v1008
  %1010 = vmatmul.bf16.gmra.mxu0 %v487
  %v1011 = vpop.f32.mrf.mxu0
  %v1012 = vadd.f32 %v853, %v1011
  %v1013 = vpop.f32.mrf.mxu0
  %v1014 = vadd.f32 %v855, %v1013
  %1015 = vmatmul.bf16.gmra.mxu0 %v490
  %v1016 = vpop.f32.mrf.mxu0
  %v1017 = vadd.f32 %v858, %v1016
  %v1018 = vpop.f32.mrf.mxu0
  %v1019 = vadd.f32 %v860, %v1018
  %1020 = vmatmul.bf16.gmra.mxu0 %v493
  %v1021 = vpop.f32.mrf.mxu0
  %v1022 = vadd.f32 %v863, %v1021
  %v1023 = vpop.f32.mrf.mxu0
  %v1024 = vadd.f32 %v865, %v1023
  %1025 = vmatmul.bf16.gmra.mxu0 %v496
  %v1026 = vpop.f32.mrf.mxu0
  %v1027 = vadd.f32 %v868, %v1026
  %v1028 = vpop.f32.mrf.mxu0
  %v1029 = vadd.f32 %v870, %v1028
  %1030 = vmatmul.bf16.gmra.mxu0 %v499
  %v1031 = vpop.f32.mrf.mxu0
  %v1032 = vadd.f32 %v873, %v1031
  %v1033 = vpop.f32.mrf.mxu0
  %v1034 = vadd.f32 %v875, %v1033
  %1035 = vmatmul.bf16.gmra.mxu0 %v502
  %v1036 = vpop.f32.mrf.mxu0
  %v1037 = vadd.f32 %v878, %v1036
  %v1038 = vpop.f32.mrf.mxu0
  %v1039 = vadd.f32 %v880, %v1038
  %1040 = vmatmul.bf16.gmra.mxu0 %v505
  %v1041 = vpop.f32.mrf.mxu0
  %v1042 = vadd.f32 %v883, %v1041
  %v1043 = vpop.f32.mrf.mxu0
  %v1044 = vadd.f32 %v885, %v1043
  %1045 = vmatmul.bf16.gmra.mxu0 %v508
  %v1046 = vpop.f32.mrf.mxu0
  %v1047 = vadd.f32 %v888, %v1046
  %v1048 = vpop.f32.mrf.mxu0
  %v1049 = vadd.f32 %v890, %v1048
  %1050 = vmatmul.bf16.gmra.mxu0 %v511
  %v1051 = vpop.f32.mrf.mxu0
  %v1052 = vadd.f32 %v893, %v1051
  %v1053 = vpop.f32.mrf.mxu0
  %v1054 = vadd.f32 %v895, %v1053
  %1055 = vmatmul.bf16.gmra.mxu0 %v514
  %v1056 = vpop.f32.mrf.mxu0
  %v1057 = vadd.f32 %v898, %v1056
  %v1058 = vpop.f32.mrf.mxu0
  %v1059 = vadd.f32 %v900, %v1058
  %1060 = vmatmul.bf16.gmra.mxu0 %v517
  %v1061 = vpop.f32.mrf.mxu0
  %v1062 = vadd.f32 %v903, %v1061
  %v1063 = vpop.f32.mrf.mxu0
  %v1064 = vadd.f32 %v905, %v1063
  %1065 = vmatmul.bf16.gmra.mxu0 %v520
  %v1066 = vpop.f32.mrf.mxu0
  %v1067 = vadd.f32 %v908, %v1066
  %v1068 = vpop.f32.mrf.mxu0
  %v1069 = vadd.f32 %v910, %v1068
  %1070 = vmatmul.bf16.gmra.mxu0 %v523
  %v1071 = vpop.f32.mrf.mxu0
  %v1072 = vadd.f32 %v913, %v1071
  %v1073 = vpop.f32.mrf.mxu0
  %v1074 = vadd.f32 %v915, %v1073
  %1075 = vmatmul.bf16.gmra.mxu0 %v526
  %v1076 = vpop.f32.mrf.mxu0
  %v1077 = vadd.f32 %v918, %v1076
  %v1078 = vpop.f32.mrf.mxu0
  %v1079 = vadd.f32 %v920, %v1078
  %1080 = vmatmul.bf16.gmra.mxu0 %v529
  %v1081 = vpop.f32.mrf.mxu0
  %v1082 = vadd.f32 %v923, %v1081
  %v1083 = vpop.f32.mrf.mxu0
  %v1084 = vadd.f32 %v925, %v1083
  %1085 = vmatmul.bf16.gmra.mxu0 %v532
  %v1086 = vpop.f32.mrf.mxu0
  %v1087 = vadd.f32 %v928, %v1086
  %v1088 = vpop.f32.mrf.mxu0
  %v1089 = vadd.f32 %v930, %v1088
  %1090 = vmatmul.bf16.gmra.mxu0 %v535
  %v1091 = vpop.f32.mrf.mxu0
  %v1092 = vadd.f32 %v933, %v1091
  %v1093 = vpop.f32.mrf.mxu0
  %v1094 = vadd.f32 %v935, %v1093
  %1095 = vmatmul.bf16.gmra.mxu0 %v538
  %v1096 = vpop.f32.mrf.mxu0
  %v1097 = vadd.f32 %v938, %v1096
  %v1098 = vpop.f32.mrf.mxu0
  %v1099 = vadd.f32 %v940, %v1098
  %1100 = vmatmul.bf16.gmra.mxu0 %v541
  %v1101 = vpop.f32.mrf.mxu0
  %v1102 = vadd.f32 %v943, %v1101
  %v1103 = vpop.f32.mrf.mxu0
  %v1104 = vadd.f32 %v945, %v1103
  %1105 = vmatmul.bf16.gmra.mxu0 %v544
  %v1106 = vpop.f32.mrf.mxu0
  %v1107 = vadd.f32 %v948, %v1106
  %v1108 = vpop.f32.mrf.mxu0
  %v1109 = vadd.f32 %v950, %v1108
  %1110 = vmatmul.bf16.gmra.mxu0 %v547
  %v1111 = vpop.f32.mrf.mxu0
  %v1112 = vadd.f32 %v953, %v1111
  %v1113 = vpop.f32.mrf.mxu0
  %v1114 = vadd.f32 %v955, %v1113
  %1115 = vmatmul.bf16.gmra.mxu0 %v550
  %v1116 = vpop.f32.mrf.mxu0
  %v1117 = vadd.f32 %v958, %v1116
  %v1118 = vpop.f32.mrf.mxu0
  %v1119 = vadd.f32 %v960, %v1118
  %1120 = vmatmul.bf16.gmra.mxu0 %v553
  %v1121 = vpop.f32.mrf.mxu0
  %v1122 = vadd.f32 %v963, %v1121
  %v1123 = vpop.f32.mrf.mxu0
  %v1124 = vadd.f32 %v965, %v1123
  %1125 = vmatmul.bf16.gmra.mxu0 %v556
  %v1126 = vpop.f32.mrf.mxu0
  %v1127 = vadd.f32 %v968, %v1126
  %v1128 = vpop.f32.mrf.mxu0
  %v1129 = vadd.f32 %v970, %v1128
  %1130 = vmatmul.bf16.gmra.mxu0 %v559
  %v1131 = vpop.f32.mrf.mxu0
  %v1132 = vadd.f32 %v973, %v1131
  %v1133 = vpop.f32.mrf.mxu0
  %v1134 = vadd.f32 %v975, %v1133
  %1135 = vmatmul.bf16.gmra.mxu0 %v562
  %v1136 = vpop.f32.mrf.mxu0
  %v1137 = vadd.f32 %v978, %v1136
  %v1138 = vpop.f32.mrf.mxu0
  %v1139 = vadd.f32 %v980, %v1138
  %1140 = vdwg.mxu0
  %1141 = vmatpush.bf16.msra.mxu0 0
  %1142 = vmatpush.bf16.msra.mxu0 0
  %1143 = vmatpush.bf16.msra.mxu0 0
  %1144 = vmatpush.bf16.msra.mxu0 0
  %1145 = vmatpush.bf16.msra.mxu0 0
  %1146 = vmatpush.bf16.msra.mxu0 0
  %1147 = vmatpush.bf16.msra.mxu0 %v713
  %1148 = vmatpush.bf16.msra.mxu0 %v712
  %1149 = vmatmul.bf16.gmra.mxu0 %v734
  %v1150 = vpop.f32.mrf.mxu0
  %v1151 = vadd.f32 %v992, %v1150
  %v1152 = vpop.f32.mrf.mxu0
  %v1153 = vadd.f32 %v994, %v1152
  %1154 = vmatmul.bf16.gmra.mxu0 %v737
  %v1155 = vpop.f32.mrf.mxu0
  %v1156 = vadd.f32 %v997, %v1155
  %v1157 = vpop.f32.mrf.mxu0
  %v1158 = vadd.f32 %v999, %v1157
  %1159 = vmatmul.bf16.gmra.mxu0 %v740
  %v1160 = vpop.f32.mrf.mxu0
  %v1161 = vadd.f32 %v1002, %v1160
  %v1162 = vpop.f32.mrf.mxu0
  %v1163 = vadd.f32 %v1004, %v1162
  %1164 = vmatmul.bf16.gmra.mxu0 %v743
  %v1165 = vpop.f32.mrf.mxu0
  %v1166 = vadd.f32 %v1007, %v1165
  %v1167 = vpop.f32.mrf.mxu0
  %v1168 = vadd.f32 %v1009, %v1167
  %1169 = vmatmul.bf16.gmra.mxu0 %v746
  %v1170 = vpop.f32.mrf.mxu0
  %v1171 = vadd.f32 %v1012, %v1170
  %v1172 = vpop.f32.mrf.mxu0
  %v1173 = vadd.f32 %v1014, %v1172
  %1174 = vmatmul.bf16.gmra.mxu0 %v749
  %v1175 = vpop.f32.mrf.mxu0
  %v1176 = vadd.f32 %v1017, %v1175
  %v1177 = vpop.f32.mrf.mxu0
  %v1178 = vadd.f32 %v1019, %v1177
  %1179 = vmatmul.bf16.gmra.mxu0 %v752
  %v1180 = vpop.f32.mrf.mxu0
  %v1181 = vadd.f32 %v1022, %v1180
  %v1182 = vpop.f32.mrf.mxu0
  %v1183 = vadd.f32 %v1024, %v1182
  %1184 = vmatmul.bf16.gmra.mxu0 %v755
  %v1185 = vpop.f32.mrf.mxu0
  %v1186 = vadd.f32 %v1027, %v1185
  %v1187 = vpop.f32.mrf.mxu0
  %v1188 = vadd.f32 %v1029, %v1187
  %1189 = vmatmul.bf16.gmra.mxu0 %v758
  %v1190 = vpop.f32.mrf.mxu0
  %v1191 = vadd.f32 %v1032, %v1190
  %v1192 = vpop.f32.mrf.mxu0
  %v1193 = vadd.f32 %v1034, %v1192
  %1194 = vmatmul.bf16.gmra.mxu0 %v761
  %v1195 = vpop.f32.mrf.mxu0
  %v1196 = vadd.f32 %v1037, %v1195
  %v1197 = vpop.f32.mrf.mxu0
  %v1198 = vadd.f32 %v1039, %v1197
  %1199 = vmatmul.bf16.gmra.mxu0 %v764
  %v1200 = vpop.f32.mrf.mxu0
  %v1201 = vadd.f32 %v1042, %v1200
  %v1202 = vpop.f32.mrf.mxu0
  %v1203 = vadd.f32 %v1044, %v1202
  %1204 = vmatmul.bf16.gmra.mxu0 %v767
  %v1205 = vpop.f32.mrf.mxu0
  %v1206 = vadd.f32 %v1047, %v1205
  %v1207 = vpop.f32.mrf.mxu0
  %v1208 = vadd.f32 %v1049, %v1207
  %1209 = vmatmul.bf16.gmra.mxu0 %v770
  %v1210 = vpop.f32.mrf.mxu0
  %v1211 = vadd.f32 %v1052, %v1210
  %v1212 = vpop.f32.mrf.mxu0
  %v1213 = vadd.f32 %v1054, %v1212
  %1214 = vmatmul.bf16.gmra.mxu0 %v773
  %v1215 = vpop.f32.mrf.mxu0
  %v1216 = vadd.f32 %v1057, %v1215
  %v1217 = vpop.f32.mrf.mxu0
  %v1218 = vadd.f32 %v1059, %v1217
  %1219 = vmatmul.bf16.gmra.mxu0 %v776
  %v1220 = vpop.f32.mrf.mxu0
  %v1221 = vadd.f32 %v1062, %v1220
  %v1222 = vpop.f32.mrf.mxu0
  %v1223 = vadd.f32 %v1064, %v1222
  %1224 = vmatmul.bf16.gmra.mxu0 %v779
  %v1225 = vpop.f32.mrf.mxu0
  %v1226 = vadd.f32 %v1067, %v1225
  %v1227 = vpop.f32.mrf.mxu0
  %v1228 = vadd.f32 %v1069, %v1227
  %1229 = vmatmul.bf16.gmra.mxu0 %v782
  %v1230 = vpop.f32.mrf.mxu0
  %v1231 = vadd.f32 %v1072, %v1230
  %v1232 = vpop.f32.mrf.mxu0
  %v1233 = vadd.f32 %v1074, %v1232
  %1234 = vmatmul.bf16.gmra.mxu0 %v785
  %v1235 = vpop.f32.mrf.mxu0
  %v1236 = vadd.f32 %v1077, %v1235
  %v1237 = vpop.f32.mrf.mxu0
  %v1238 = vadd.f32 %v1079, %v1237
  %1239 = vmatmul.bf16.gmra.mxu0 %v788
  %v1240 = vpop.f32.mrf.mxu0
  %v1241 = vadd.f32 %v1082, %v1240
  %v1242 = vpop.f32.mrf.mxu0
  %v1243 = vadd.f32 %v1084, %v1242
  %1244 = vmatmul.bf16.gmra.mxu0 %v791
  %v1245 = vpop.f32.mrf.mxu0
  %v1246 = vadd.f32 %v1087, %v1245
  %v1247 = vpop.f32.mrf.mxu0
  %v1248 = vadd.f32 %v1089, %v1247
  %1249 = vmatmul.bf16.gmra.mxu0 %v794
  %v1250 = vpop.f32.mrf.mxu0
  %v1251 = vadd.f32 %v1092, %v1250
  %v1252 = vpop.f32.mrf.mxu0
  %v1253 = vadd.f32 %v1094, %v1252
  %1254 = vmatmul.bf16.gmra.mxu0 %v797
  %v1255 = vpop.f32.mrf.mxu0
  %v1256 = vadd.f32 %v1097, %v1255
  %v1257 = vpop.f32.mrf.mxu0
  %v1258 = vadd.f32 %v1099, %v1257
  %1259 = vmatmul.bf16.gmra.mxu0 %v800
  %v1260 = vpop.f32.mrf.mxu0
  %v1261 = vadd.f32 %v1102, %v1260
  %v1262 = vpop.f32.mrf.mxu0
  %v1263 = vadd.f32 %v1104, %v1262
  %1264 = vmatmul.bf16.gmra.mxu0 %v803
  %v1265 = vpop.f32.mrf.mxu0
  %v1266 = vadd.f32 %v1107, %v1265
  %v1267 = vpop.f32.mrf.mxu0
  %v1268 = vadd.f32 %v1109, %v1267
  %1269 = vmatmul.bf16.gmra.mxu0 %v806
  %v1270 = vpop.f32.mrf.mxu0
  %v1271 = vadd.f32 %v1112, %v1270
  %v1272 = vpop.f32.mrf.mxu0
  %v1273 = vadd.f32 %v1114, %v1272
  %1274 = vmatmul.bf16.gmra.mxu0 %v809
  %v1275 = vpop.f32.mrf.mxu0
  %v1276 = vadd.f32 %v1117, %v1275
  %v1277 = vpop.f32.mrf.mxu0
  %v1278 = vadd.f32 %v1119, %v1277
  %1279 = vmatmul.bf16.gmra.mxu0 %v812
  %v1280 = vpop.f32.mrf.mxu0
  %v1281 = vadd.f32 %v1122, %v1280
  %v1282 = vpop.f32.mrf.mxu0
  %v1283 = vadd.f32 %v1124, %v1282
  %1284 = vmatmul.bf16.gmra.mxu0 %v815
  %v1285 = vpop.f32.mrf.mxu0
  %v1286 = vadd.f32 %v1127, %v1285
  %v1287 = vpop.f32.mrf.mxu0
  %v1288 = vadd.f32 %v1129, %v1287
  %1289 = vmatmul.bf16.gmra.mxu0 %v818
  %v1290 = vpop.f32.mrf.mxu0
  %v1291 = vadd.f32 %v1132, %v1290
  %v1292 = vpop.f32.mrf.mxu0
  %v1293 = vadd.f32 %v1134, %v1292
  %1294 = vmatmul.bf16.gmra.mxu0 %v821
  %v1295 = vpop.f32.mrf.mxu0
  %v1296 = vadd.f32 %v1137, %v1295
  %v1297 = vpop.f32.mrf.mxu0
  %v1298 = vadd.f32 %v1139, %v1297
  %1299 = vdwg.mxu0
  %v1300 = vld [vmem:[%s2] sm:$0x1]
  %v1302 = vperm.slane %v1300, 0
  %v1304 = vmul.f32 %v1151, %v1302
  %v1305 = vmul.f32 %v1153, %v1302
  %v1306 = vmul.f32 %v1156, %v1302
  %v1307 = vmul.f32 %v1158, %v1302
  %v1308 = vmul.f32 %v1161, %v1302
  %v1309 = vmul.f32 %v1163, %v1302
  %v1310 = vmul.f32 %v1166, %v1302
  %v1311 = vmul.f32 %v1168, %v1302
  %v1312 = vmul.f32 %v1171, %v1302
  %v1313 = vmul.f32 %v1173, %v1302
  %v1314 = vmul.f32 %v1176, %v1302
  %v1315 = vmul.f32 %v1178, %v1302
  %v1316 = vmul.f32 %v1181, %v1302
  %v1317 = vmul.f32 %v1183, %v1302
  %v1318 = vmul.f32 %v1186, %v1302
  %v1319 = vmul.f32 %v1188, %v1302
  %v1320 = vmul.f32 %v1191, %v1302
  %v1321 = vmul.f32 %v1193, %v1302
  %v1322 = vmul.f32 %v1196, %v1302
  %v1323 = vmul.f32 %v1198, %v1302
  %v1324 = vmul.f32 %v1201, %v1302
  %v1325 = vmul.f32 %v1203, %v1302
  %v1326 = vmul.f32 %v1206, %v1302
  %v1327 = vmul.f32 %v1208, %v1302
  %v1328 = vmul.f32 %v1211, %v1302
  %v1329 = vmul.f32 %v1213, %v1302
  %v1330 = vmul.f32 %v1216, %v1302
  %v1331 = vmul.f32 %v1218, %v1302
  %v1332 = vmul.f32 %v1221, %v1302
  %v1333 = vmul.f32 %v1223, %v1302
  %v1334 = vmul.f32 %v1226, %v1302
  %v1335 = vmul.f32 %v1228, %v1302
  %v1336 = vmul.f32 %v1231, %v1302
  %v1337 = vmul.f32 %v1233, %v1302
  %v1338 = vmul.f32 %v1236, %v1302
  %v1339 = vmul.f32 %v1238, %v1302
  %v1340 = vmul.f32 %v1241, %v1302
  %v1341 = vmul.f32 %v1243, %v1302
  %v1342 = vmul.f32 %v1246, %v1302
  %v1343 = vmul.f32 %v1248, %v1302
  %v1344 = vmul.f32 %v1251, %v1302
  %v1345 = vmul.f32 %v1253, %v1302
  %v1346 = vmul.f32 %v1256, %v1302
  %v1347 = vmul.f32 %v1258, %v1302
  %v1348 = vmul.f32 %v1261, %v1302
  %v1349 = vmul.f32 %v1263, %v1302
  %v1350 = vmul.f32 %v1266, %v1302
  %v1351 = vmul.f32 %v1268, %v1302
  %v1352 = vmul.f32 %v1271, %v1302
  %v1353 = vmul.f32 %v1273, %v1302
  %v1354 = vmul.f32 %v1276, %v1302
  %v1355 = vmul.f32 %v1278, %v1302
  %v1356 = vmul.f32 %v1281, %v1302
  %v1357 = vmul.f32 %v1283, %v1302
  %v1358 = vmul.f32 %v1286, %v1302
  %v1359 = vmul.f32 %v1288, %v1302
  %v1360 = vmul.f32 %v1291, %v1302
  %v1361 = vmul.f32 %v1293, %v1302
  %v1362 = vmul.f32 %v1296, %v1302
  %v1363 = vmul.f32 %v1298, %v1302
  %v1364 = vld [vmem:[%s3] sm:$0x1]
  %v1366 = vperm.slane %v1364, 0
  %v1368 = vadd.f32 %v1304, %v1366
  %v1369 = vadd.f32 %v1305, %v1366
  %v1370 = vadd.f32 %v1306, %v1366
  %v1371 = vadd.f32 %v1307, %v1366
  %v1372 = vadd.f32 %v1308, %v1366
  %v1373 = vadd.f32 %v1309, %v1366
  %v1374 = vadd.f32 %v1310, %v1366
  %v1375 = vadd.f32 %v1311, %v1366
  %v1376 = vadd.f32 %v1312, %v1366
  %v1377 = vadd.f32 %v1313, %v1366
  %v1378 = vadd.f32 %v1314, %v1366
  %v1379 = vadd.f32 %v1315, %v1366
  %v1380 = vadd.f32 %v1316, %v1366
  %v1381 = vadd.f32 %v1317, %v1366
  %v1382 = vadd.f32 %v1318, %v1366
  %v1383 = vadd.f32 %v1319, %v1366
  %v1384 = vadd.f32 %v1320, %v1366
  %v1385 = vadd.f32 %v1321, %v1366
  %v1386 = vadd.f32 %v1322, %v1366
  %v1387 = vadd.f32 %v1323, %v1366
  %v1388 = vadd.f32 %v1324, %v1366
  %v1389 = vadd.f32 %v1325, %v1366
  %v1390 = vadd.f32 %v1326, %v1366
  %v1391 = vadd.f32 %v1327, %v1366
  %v1392 = vadd.f32 %v1328, %v1366
  %v1393 = vadd.f32 %v1329, %v1366
  %v1394 = vadd.f32 %v1330, %v1366
  %v1395 = vadd.f32 %v1331, %v1366
  %v1396 = vadd.f32 %v1332, %v1366
  %v1397 = vadd.f32 %v1333, %v1366
  %v1398 = vadd.f32 %v1334, %v1366
  %v1399 = vadd.f32 %v1335, %v1366
  %v1400 = vadd.f32 %v1336, %v1366
  %v1401 = vadd.f32 %v1337, %v1366
  %v1402 = vadd.f32 %v1338, %v1366
  %v1403 = vadd.f32 %v1339, %v1366
  %v1404 = vadd.f32 %v1340, %v1366
  %v1405 = vadd.f32 %v1341, %v1366
  %v1406 = vadd.f32 %v1342, %v1366
  %v1407 = vadd.f32 %v1343, %v1366
  %v1408 = vadd.f32 %v1344, %v1366
  %v1409 = vadd.f32 %v1345, %v1366
  %v1410 = vadd.f32 %v1346, %v1366
  %v1411 = vadd.f32 %v1347, %v1366
  %v1412 = vadd.f32 %v1348, %v1366
  %v1413 = vadd.f32 %v1349, %v1366
  %v1414 = vadd.f32 %v1350, %v1366
  %v1415 = vadd.f32 %v1351, %v1366
  %v1416 = vadd.f32 %v1352, %v1366
  %v1417 = vadd.f32 %v1353, %v1366
  %v1418 = vadd.f32 %v1354, %v1366
  %v1419 = vadd.f32 %v1355, %v1366
  %v1420 = vadd.f32 %v1356, %v1366
  %v1421 = vadd.f32 %v1357, %v1366
  %v1422 = vadd.f32 %v1358, %v1366
  %v1423 = vadd.f32 %v1359, %v1366
  %v1424 = vadd.f32 %v1360, %v1366
  %v1425 = vadd.f32 %v1361, %v1366
  %v1426 = vadd.f32 %v1362, %v1366
  %v1427 = vadd.f32 %v1363, %v1366
  %v1428 = vmax.f32 %v1368, 0.0
  %v1429 = vmax.f32 %v1369, 0.0
  %v1430 = vmax.f32 %v1370, 0.0
  %v1431 = vmax.f32 %v1371, 0.0
  %v1432 = vmax.f32 %v1372, 0.0
  %v1433 = vmax.f32 %v1373, 0.0
  %v1434 = vmax.f32 %v1374, 0.0
  %v1435 = vmax.f32 %v1375, 0.0
  %v1436 = vmax.f32 %v1376, 0.0
  %v1437 = vmax.f32 %v1377, 0.0
  %v1438 = vmax.f32 %v1378, 0.0
  %v1439 = vmax.f32 %v1379, 0.0
  %v1440 = vmax.f32 %v1380, 0.0
  %v1441 = vmax.f32 %v1381, 0.0
  %v1442 = vmax.f32 %v1382, 0.0
  %v1443 = vmax.f32 %v1383, 0.0
  %v1444 = vmax.f32 %v1384, 0.0
  %v1445 = vmax.f32 %v1385, 0.0
  %v1446 = vmax.f32 %v1386, 0.0
  %v1447 = vmax.f32 %v1387, 0.0
  %v1448 = vmax.f32 %v1388, 0.0
  %v1449 = vmax.f32 %v1389, 0.0
  %v1450 = vmax.f32 %v1390, 0.0
  %v1451 = vmax.f32 %v1391, 0.0
  %v1452 = vmax.f32 %v1392, 0.0
  %v1453 = vmax.f32 %v1393, 0.0
  %v1454 = vmax.f32 %v1394, 0.0
  %v1455 = vmax.f32 %v1395, 0.0
  %v1456 = vmax.f32 %v1396, 0.0
  %v1457 = vmax.f32 %v1397, 0.0
  %v1458 = vmax.f32 %v1398, 0.0
  %v1459 = vmax.f32 %v1399, 0.0
  %v1460 = vmax.f32 %v1400, 0.0
  %v1461 = vmax.f32 %v1401, 0.0
  %v1462 = vmax.f32 %v1402, 0.0
  %v1463 = vmax.f32 %v1403, 0.0
  %v1464 = vmax.f32 %v1404, 0.0
  %v1465 = vmax.f32 %v1405, 0.0
  %v1466 = vmax.f32 %v1406, 0.0
  %v1467 = vmax.f32 %v1407, 0.0
  %v1468 = vmax.f32 %v1408, 0.0
  %v1469 = vmax.f32 %v1409, 0.0
  %v1470 = vmax.f32 %v1410, 0.0
  %v1471 = vmax.f32 %v1411, 0.0
  %v1472 = vmax.f32 %v1412, 0.0
  %v1473 = vmax.f32 %v1413, 0.0
  %v1474 = vmax.f32 %v1414, 0.0
  %v1475 = vmax.f32 %v1415, 0.0
  %v1476 = vmax.f32 %v1416, 0.0
  %v1477 = vmax.f32 %v1417, 0.0
  %v1478 = vmax.f32 %v1418, 0.0
  %v1479 = vmax.f32 %v1419, 0.0
  %v1480 = vmax.f32 %v1420, 0.0
  %v1481 = vmax.f32 %v1421, 0.0
  %v1482 = vmax.f32 %v1422, 0.0
  %v1483 = vmax.f32 %v1423, 0.0
  %v1484 = vmax.f32 %v1424, 0.0
  %v1485 = vmax.f32 %v1425, 0.0
  %v1486 = vmax.f32 %v1426, 0.0
  %v1487 = vmax.f32 %v1427, 0.0
  %1488 = vst.msk [vmem:[%s4] sm:$0xff] %vm732, %v1428
  %1489 = vst.msk [vmem:[%s4 + $0x8] sm:$0xff] %vm732, %v1429
  %1490 = vst.msk [vmem:[%s4 + $0x10] sm:$0xff] %vm732, %v1430
  %1491 = vst.msk [vmem:[%s4 + $0x18] sm:$0xff] %vm732, %v1431
  %1492 = vst.msk [vmem:[%s4 + $0x20] sm:$0xff] %vm732, %v1432
  %1493 = vst.msk [vmem:[%s4 + $0x28] sm:$0xff] %vm732, %v1433
  %1494 = vst.msk [vmem:[%s4 + $0x30] sm:$0xff] %vm732, %v1434
  %1495 = vst.msk [vmem:[%s4 + $0x38] sm:$0xff] %vm732, %v1435
  %1496 = vst.msk [vmem:[%s4 + $0x40] sm:$0xff] %vm732, %v1436
  %1497 = vst.msk [vmem:[%s4 + $0x48] sm:$0xff] %vm732, %v1437
  %1498 = vst.msk [vmem:[%s4 + $0x50] sm:$0xff] %vm732, %v1438
  %1499 = vst.msk [vmem:[%s4 + $0x58] sm:$0xff] %vm732, %v1439
  %1500 = vst.msk [vmem:[%s4 + $0x60] sm:$0xff] %vm732, %v1440
  %1501 = vst.msk [vmem:[%s4 + $0x68] sm:$0xff] %vm732, %v1441
  %1502 = vst.msk [vmem:[%s4 + $0x70] sm:$0xff] %vm732, %v1442
  %1503 = vst.msk [vmem:[%s4 + $0x78] sm:$0xff] %vm732, %v1443
  %1504 = vst.msk [vmem:[%s4 + $0x80] sm:$0xff] %vm732, %v1444
  %1505 = vst.msk [vmem:[%s4 + $0x88] sm:$0xff] %vm732, %v1445
  %1506 = vst.msk [vmem:[%s4 + $0x90] sm:$0xff] %vm732, %v1446
  %1507 = vst.msk [vmem:[%s4 + $0x98] sm:$0xff] %vm732, %v1447
  %1508 = vst.msk [vmem:[%s4 + $0xa0] sm:$0xff] %vm732, %v1448
  %1509 = vst.msk [vmem:[%s4 + $0xa8] sm:$0xff] %vm732, %v1449
  %1510 = vst.msk [vmem:[%s4 + $0xb0] sm:$0xff] %vm732, %v1450
  %1511 = vst.msk [vmem:[%s4 + $0xb8] sm:$0xff] %vm732, %v1451
  %1512 = vst.msk [vmem:[%s4 + $0xc0] sm:$0xff] %vm732, %v1452
  %1513 = vst.msk [vmem:[%s4 + $0xc8] sm:$0xff] %vm732, %v1453
  %1514 = vst.msk [vmem:[%s4 + $0xd0] sm:$0xff] %vm732, %v1454
  %1515 = vst.msk [vmem:[%s4 + $0xd8] sm:$0xff] %vm732, %v1455
  %1516 = vst.msk [vmem:[%s4 + $0xe0] sm:$0xff] %vm732, %v1456
  %1517 = vst.msk [vmem:[%s4 + $0xe8] sm:$0xff] %vm732, %v1457
  %1518 = vst.msk [vmem:[%s4 + $0xf0] sm:$0xff] %vm732, %v1458
  %1519 = vst.msk [vmem:[%s4 + $0xf8] sm:$0xff] %vm732, %v1459
  %1520 = vst.msk [vmem:[%s4 + $0x100] sm:$0xff] %vm732, %v1460
  %1521 = vst.msk [vmem:[%s4 + $0x108] sm:$0xff] %vm732, %v1461
  %1522 = vst.msk [vmem:[%s4 + $0x110] sm:$0xff] %vm732, %v1462
  %1523 = vst.msk [vmem:[%s4 + $0x118] sm:$0xff] %vm732, %v1463
  %1524 = vst.msk [vmem:[%s4 + $0x120] sm:$0xff] %vm732, %v1464
  %1525 = vst.msk [vmem:[%s4 + $0x128] sm:$0xff] %vm732, %v1465
  %1526 = vst.msk [vmem:[%s4 + $0x130] sm:$0xff] %vm732, %v1466
  %1527 = vst.msk [vmem:[%s4 + $0x138] sm:$0xff] %vm732, %v1467
  %1528 = vst.msk [vmem:[%s4 + $0x140] sm:$0xff] %vm732, %v1468
  %1529 = vst.msk [vmem:[%s4 + $0x148] sm:$0xff] %vm732, %v1469
  %1530 = vst.msk [vmem:[%s4 + $0x150] sm:$0xff] %vm732, %v1470
  %1531 = vst.msk [vmem:[%s4 + $0x158] sm:$0xff] %vm732, %v1471
  %1532 = vst.msk [vmem:[%s4 + $0x160] sm:$0xff] %vm732, %v1472
  %1533 = vst.msk [vmem:[%s4 + $0x168] sm:$0xff] %vm732, %v1473
  %1534 = vst.msk [vmem:[%s4 + $0x170] sm:$0xff] %vm732, %v1474
  %1535 = vst.msk [vmem:[%s4 + $0x178] sm:$0xff] %vm732, %v1475
  %1536 = vst.msk [vmem:[%s4 + $0x180] sm:$0xff] %vm732, %v1476
  %1537 = vst.msk [vmem:[%s4 + $0x188] sm:$0xff] %vm732, %v1477
  %1538 = vst.msk [vmem:[%s4 + $0x190] sm:$0xff] %vm732, %v1478
  %1539 = vst.msk [vmem:[%s4 + $0x198] sm:$0xff] %vm732, %v1479
  %1540 = vst.msk [vmem:[%s4 + $0x1a0] sm:$0xff] %vm732, %v1480
  %1541 = vst.msk [vmem:[%s4 + $0x1a8] sm:$0xff] %vm732, %v1481
  %1542 = vst.msk [vmem:[%s4 + $0x1b0] sm:$0xff] %vm732, %v1482
  %1543 = vst.msk [vmem:[%s4 + $0x1b8] sm:$0xff] %vm732, %v1483
  %1544 = vst.msk [vmem:[%s4 + $0x1c0] sm:$0xff] %vm732, %v1484
  %1545 = vst.msk [vmem:[%s4 + $0x1c8] sm:$0xff] %vm732, %v1485
  %1546 = vst.msk [vmem:[%s4 + $0x1d0] sm:$0xff] %vm732, %v1486
  %1547 = vst.msk [vmem:[%s4 + $0x1d8] sm:$0xff] %vm732, %v1487
  // Predicated region
  $region18: #{_lambda_.10} parent=0 // pred_check
    _
  $region19: #{_lambda_.10} parent=0 // pred_check_branch
    %1549 = sbr.rel (0) target = $region21
  $region20: #{_lambda_.10} parent=0 // pred_region
    _
  $region21: #{_lambda_.10} parent=0 // pred_fallthru
    _
  // Predicated region
  $region22: #{_lambda_.10} parent=0 // pred_check
    _
  $region23: #{_lambda_.10} parent=0 // pred_check_branch
    %1551 = sbr.rel (0) target = $region25
  $region24: #{_lambda_.10} parent=0 // pred_region
    _
  $region25: #{_lambda_.10} parent=0 // pred_fallthru
    _

// kernel: _lambda_.11
$region0: #{_lambda_.11}
  #allocation0 [shape = 'u32[]', space=smem, size = 0x4, offset = 0x4, fixed_abs, tag = 'smem constant byte address 0x4 - core index']
  #allocation1 [shape = 'u32[72,128]{1,0:T(1,128)}', space=vmem, size = 0x9000, scoped, tag = 'internal scratch']
  %s0 = inlined_call_operand.vmem [shape: bf16[64,384], index: 0, kind: input, shape index: {}]
  %s1 = inlined_call_operand.vmem [shape: bf16[384,32], index: 1, kind: input, shape index: {}]
  %s2 = inlined_call_operand.vmem [shape: f32[1,32], index: 2, kind: input, shape index: {}]
  %s3 = inlined_call_operand.vmem [shape: f32[1,32], index: 3, kind: input, shape index: {}]
  %s4 = inlined_call_operand.vmem [shape: f32[64,32], index: 4, kind: output, shape index: {}]
  %s5 = sld [smem:[#allocation0]]
  $region26: #{_lambda_.11} parent=0
    _
  %s7 = ssub.s32 1, %s5
  %s8 = scalar_select 0, %s7, %s5
  // Predicated region
  $region2: #{_lambda_.11} parent=0 // pred_check
    _
  $region3: #{_lambda_.11} parent=0 // pred_check_branch
    %10 = sbr.rel (0) target = $region5
  $region4: #{_lambda_.11} parent=0 // pred_region
    _
  $region5: #{_lambda_.11} parent=0 // pred_fallthru
    _
  // Predicated region
  $region6: #{_lambda_.11} parent=0 // pred_check
    _
  $region7: #{_lambda_.11} parent=0 // pred_check_branch
    %12 = sbr.rel (0) target = $region9
  $region8: #{_lambda_.11} parent=0 // pred_region
    _
  $region9: #{_lambda_.11} parent=0 // pred_fallthru
    _
  // Predicated region
  $region10: #{_lambda_.11} parent=0 // pred_check
    _
  $region11: #{_lambda_.11} parent=0 // pred_check_branch
    %14 = sbr.rel (0) target = $region13
  $region12: #{_lambda_.11} parent=0 // pred_region
    _
  $region13: #{_lambda_.11} parent=0 // pred_fallthru
    _
  // Predicated region
  $region14: #{_lambda_.11} parent=0 // pred_check
    _
  $region15: #{_lambda_.11} parent=0 // pred_check_branch
    %16 = sbr.rel (0) target = $region17
  $region16: #{_lambda_.11} parent=0 // pred_region
    _
  $region17: #{_lambda_.11} parent=0 // pred_fallthru
    _
  %v17 = vld [vmem:[%s0] sm:$0xff]
  %v18 = vld [vmem:[%s0 + $0x8] sm:$0xf]
  %v19 = vld [vmem:[%s0 + $0xc] sm:$0xff]
  %v20 = vld [vmem:[%s0 + $0x14] sm:$0xf]
  %v21 = vld [vmem:[%s0 + $0x18] sm:$0xff]
  %v22 = vld [vmem:[%s0 + $0x20] sm:$0xf]
  %v23 = vld [vmem:[%s0 + $0x24] sm:$0xff]
  %v24 = vld [vmem:[%s0 + $0x2c] sm:$0xf]
  %v25 = vld [vmem:[%s0 + $0x30] sm:$0xff]
  %v26 = vld [vmem:[%s0 + $0x38] sm:$0xf]
  %v27 = vld [vmem:[%s0 + $0x3c] sm:$0xff]
  %v28 = vld [vmem:[%s0 + $0x44] sm:$0xf]
  %v29 = vld [vmem:[%s0 + $0x48] sm:$0xff]
  %v30 = vld [vmem:[%s0 + $0x50] sm:$0xf]
  %v31 = vld [vmem:[%s0 + $0x54] sm:$0xff]
  %v32 = vld [vmem:[%s0 + $0x5c] sm:$0xf]
  %v33 = vld [vmem:[%s1] sm:$0xf]
  %v34 = vld [vmem:[%s1 + $0x4] sm:$0xf]
  %v35 = vld [vmem:[%s1 + $0x8] sm:$0xf]
  %v36 = vld [vmem:[%s1 + $0xc] sm:$0xf]
  %v37 = vld [vmem:[%s1 + $0x10] sm:$0xf]
  %v38 = vld [vmem:[%s1 + $0x14] sm:$0xf]
  %v39 = vld [vmem:[%s1 + $0x18] sm:$0xf]
  %v40 = vld [vmem:[%s1 + $0x1c] sm:$0xf]
  %v41 = vld [vmem:[%s1 + $0x20] sm:$0xf]
  %v42 = vld [vmem:[%s1 + $0x24] sm:$0xf]
  %v43 = vld [vmem:[%s1 + $0x28] sm:$0xf]
  %v44 = vld [vmem:[%s1 + $0x2c] sm:$0xf]
  %v45 = vld [vmem:[%s1 + $0x30] sm:$0xf]
  %v46 = vld [vmem:[%s1 + $0x34] sm:$0xf]
  %v47 = vld [vmem:[%s1 + $0x38] sm:$0xf]
  %v48 = vld [vmem:[%s1 + $0x3c] sm:$0xf]
  %v49 = vld [vmem:[%s1 + $0x40] sm:$0xf]
  %v50 = vld [vmem:[%s1 + $0x44] sm:$0xf]
  %v51 = vld [vmem:[%s1 + $0x48] sm:$0xf]
  %v52 = vld [vmem:[%s1 + $0x4c] sm:$0xf]
  %v53 = vld [vmem:[%s1 + $0x50] sm:$0xf]
  %v54 = vld [vmem:[%s1 + $0x54] sm:$0xf]
  %v55 = vld [vmem:[%s1 + $0x58] sm:$0xf]
  %v56 = vld [vmem:[%s1 + $0x5c] sm:$0xf]
  %v57 = vld [vmem:[%s1 + $0x60] sm:$0xf]
  %v58 = vld [vmem:[%s1 + $0x64] sm:$0xf]
  %v59 = vld [vmem:[%s1 + $0x68] sm:$0xf]
  %v60 = vld [vmem:[%s1 + $0x6c] sm:$0xf]
  %v61 = vld [vmem:[%s1 + $0x70] sm:$0xf]
  %v62 = vld [vmem:[%s1 + $0x74] sm:$0xf]
  %v63 = vld [vmem:[%s1 + $0x78] sm:$0xf]
  %v64 = vld [vmem:[%s1 + $0x7c] sm:$0xf]
  %v65 = vld [vmem:[%s1 + $0x80] sm:$0xf]
  %v66 = vld [vmem:[%s1 + $0x84] sm:$0xf]
  %v67 = vld [vmem:[%s1 + $0x88] sm:$0xf]
  %v68 = vld [vmem:[%s1 + $0x8c] sm:$0xf]
  %v69 = vld [vmem:[%s1 + $0x90] sm:$0xf]
  %v70 = vld [vmem:[%s1 + $0x94] sm:$0xf]
  %v71 = vld [vmem:[%s1 + $0x98] sm:$0xf]
  %v72 = vld [vmem:[%s1 + $0x9c] sm:$0xf]
  %v73 = vld [vmem:[%s1 + $0xa0] sm:$0xf]
  %v74 = vld [vmem:[%s1 + $0xa4] sm:$0xf]
  %v75 = vld [vmem:[%s1 + $0xa8] sm:$0xf]
  %v76 = vld [vmem:[%s1 + $0xac] sm:$0xf]
  %v77 = vld [vmem:[%s1 + $0xb0] sm:$0xf]
  %v78 = vld [vmem:[%s1 + $0xb4] sm:$0xf]
  %v79 = vld [vmem:[%s1 + $0xb8] sm:$0xf]
  %v80 = vld [vmem:[%s1 + $0xbc] sm:$0xf]
  %v97 = vunpack.c.l.b16 %v17
  %v98 = vunpack.c.h.b16 %v17
  %v99 = vunpack.c.l.b16 %v18
  %v100 = vunpack.c.l.b16 %v19
  %v101 = vunpack.c.h.b16 %v19
  %v102 = vunpack.c.l.b16 %v20
  %v103 = vunpack.c.l.b16 %v21
  %v104 = vunpack.c.h.b16 %v21
  %v105 = vunpack.c.l.b16 %v22
  %v106 = vunpack.c.l.b16 %v23
  %v107 = vunpack.c.h.b16 %v23
  %v108 = vunpack.c.l.b16 %v24
  %v109 = vunpack.c.l.b16 %v25
  %v110 = vunpack.c.h.b16 %v25
  %v111 = vunpack.c.l.b16 %v26
  %v112 = vunpack.c.l.b16 %v27
  %v113 = vunpack.c.h.b16 %v27
  %v114 = vunpack.c.l.b16 %v28
  %v115 = vunpack.c.l.b16 %v29
  %v116 = vunpack.c.h.b16 %v29
  %v117 = vunpack.c.l.b16 %v30
  %v118 = vunpack.c.l.b16 %v31
  %v119 = vunpack.c.h.b16 %v31
  %v120 = vunpack.c.l.b16 %v32
  %v121 = vpack.c.b16 %v100, %v97
  %v122 = vpack.c.b16 %v101, %v98
  %v123 = vpack.c.b16 %v102, %v99
  %v124 = vpack.c.b16 %v106, %v103
  %v125 = vpack.c.b16 %v107, %v104
  %v126 = vpack.c.b16 %v108, %v105
  %v127 = vpack.c.b16 %v112, %v109
  %v128 = vpack.c.b16 %v113, %v110
  %v129 = vpack.c.b16 %v114, %v111
  %v130 = vpack.c.b16 %v118, %v115
  %v131 = vpack.c.b16 %v119, %v116
  %v132 = vpack.c.b16 %v120, %v117
  %v193 = vunpack.c.l.b16 %v33
  %v194 = vunpack.c.l.b16 %v34
  %v195 = vunpack.c.l.b16 %v35
  %v196 = vunpack.c.l.b16 %v36
  %v197 = vunpack.c.l.b16 %v37
  %v198 = vunpack.c.l.b16 %v38
  %v199 = vunpack.c.l.b16 %v39
  %v200 = vunpack.c.l.b16 %v40
  %v201 = vunpack.c.l.b16 %v41
  %v202 = vunpack.c.l.b16 %v42
  %v203 = vunpack.c.l.b16 %v43
  %v204 = vunpack.c.l.b16 %v44
  %v205 = vunpack.c.l.b16 %v45
  %v206 = vunpack.c.l.b16 %v46
  %v207 = vunpack.c.l.b16 %v47
  %v208 = vunpack.c.l.b16 %v48
  %v209 = vunpack.c.l.b16 %v49
  %v210 = vunpack.c.l.b16 %v50
  %v211 = vunpack.c.l.b16 %v51
  %v212 = vunpack.c.l.b16 %v52
  %v213 = vunpack.c.l.b16 %v53
  %v214 = vunpack.c.l.b16 %v54
  %v215 = vunpack.c.l.b16 %v55
  %v216 = vunpack.c.l.b16 %v56
  %v217 = vunpack.c.l.b16 %v57
  %v218 = vunpack.c.l.b16 %v58
  %v219 = vunpack.c.l.b16 %v59
  %v220 = vunpack.c.l.b16 %v60
  %v221 = vunpack.c.l.b16 %v61
  %v222 = vunpack.c.l.b16 %v62
  %v223 = vunpack.c.l.b16 %v63
  %v224 = vunpack.c.l.b16 %v64
  %v225 = vunpack.c.l.b16 %v65
  %v226 = vunpack.c.l.b16 %v66
  %v227 = vunpack.c.l.b16 %v67
  %v228 = vunpack.c.l.b16 %v68
  %v229 = vunpack.c.l.b16 %v69
  %v230 = vunpack.c.l.b16 %v70
  %v231 = vunpack.c.l.b16 %v71
  %v232 = vunpack.c.l.b16 %v72
  %v233 = vunpack.c.l.b16 %v73
  %v234 = vunpack.c.l.b16 %v74
  %v235 = vunpack.c.l.b16 %v75
  %v236 = vunpack.c.l.b16 %v76
  %v237 = vunpack.c.l.b16 %v77
  %v238 = vunpack.c.l.b16 %v78
  %v239 = vunpack.c.l.b16 %v79
  %v240 = vunpack.c.l.b16 %v80
  %v241 = vpack.c.b16 %v194, %v193
  %v242 = vpack.c.b16 %v196, %v195
  %v243 = vpack.c.b16 %v198, %v197
  %v244 = vpack.c.b16 %v200, %v199
  %v245 = vpack.c.b16 %v202, %v201
  %v246 = vpack.c.b16 %v204, %v203
  %v247 = vpack.c.b16 %v206, %v205
  %v248 = vpack.c.b16 %v208, %v207
  %v249 = vpack.c.b16 %v210, %v209
  %v250 = vpack.c.b16 %v212, %v211
  %v251 = vpack.c.b16 %v214, %v213
  %v252 = vpack.c.b16 %v216, %v215
  %v253 = vpack.c.b16 %v218, %v217
  %v254 = vpack.c.b16 %v220, %v219
  %v255 = vpack.c.b16 %v222, %v221
  %v256 = vpack.c.b16 %v224, %v223
  %v257 = vpack.c.b16 %v226, %v225
  %v258 = vpack.c.b16 %v228, %v227
  %v259 = vpack.c.b16 %v230, %v229
  %v260 = vpack.c.b16 %v232, %v231
  %v261 = vpack.c.b16 %v234, %v233
  %v262 = vpack.c.b16 %v236, %v235
  %v263 = vpack.c.b16 %v238, %v237
  %v264 = vpack.c.b16 %v240, %v239
  %289 = vmatpush.bf16.msra.mxu0 %v248
  %290 = vmatpush.bf16.msra.mxu0 %v247
  %291 = vmatpush.bf16.msra.mxu0 %v246
  %292 = vmatpush.bf16.msra.mxu0 %v245
  %293 = vmatpush.bf16.msra.mxu0 %v244
  %294 = vmatpush.bf16.msra.mxu0 %v243
  %295 = vmatpush.bf16.msra.mxu0 %v242
  %296 = vmatpush.bf16.msra.mxu0 %v241
  %297 = vmatmul.bf16.gmra.mxu0 %v121
  %v298 = vpop.f32.mrf.mxu0
  %v299 = vadd.f32 0.0, %v298
  %v300 = vpop.f32.mrf.mxu0
  %v301 = vadd.f32 0.0, %v300
  %302 = vmatmul.bf16.gmra.mxu0 %v124
  %v303 = vpop.f32.mrf.mxu0
  %v304 = vadd.f32 0.0, %v303
  %v305 = vpop.f32.mrf.mxu0
  %v306 = vadd.f32 0.0, %v305
  %307 = vmatmul.bf16.gmra.mxu0 %v127
  %v308 = vpop.f32.mrf.mxu0
  %v309 = vadd.f32 0.0, %v308
  %v310 = vpop.f32.mrf.mxu0
  %v311 = vadd.f32 0.0, %v310
  %312 = vmatmul.bf16.gmra.mxu0 %v130
  %v313 = vpop.f32.mrf.mxu0
  %v314 = vadd.f32 0.0, %v313
  %v315 = vpop.f32.mrf.mxu0
  %v316 = vadd.f32 0.0, %v315
  %317 = vdwg.mxu0
  %318 = vmatpush.bf16.msra.mxu0 %v256
  %319 = vmatpush.bf16.msra.mxu0 %v255
  %320 = vmatpush.bf16.msra.mxu0 %v254
  %321 = vmatpush.bf16.msra.mxu0 %v253
  %322 = vmatpush.bf16.msra.mxu0 %v252
  %323 = vmatpush.bf16.msra.mxu0 %v251
  %324 = vmatpush.bf16.msra.mxu0 %v250
  %325 = vmatpush.bf16.msra.mxu0 %v249
  %326 = vmatmul.bf16.gmra.mxu0 %v122
  %v327 = vpop.f32.mrf.mxu0
  %v328 = vadd.f32 %v299, %v327
  %v329 = vpop.f32.mrf.mxu0
  %v330 = vadd.f32 %v301, %v329
  %331 = vmatmul.bf16.gmra.mxu0 %v125
  %v332 = vpop.f32.mrf.mxu0
  %v333 = vadd.f32 %v304, %v332
  %v334 = vpop.f32.mrf.mxu0
  %v335 = vadd.f32 %v306, %v334
  %336 = vmatmul.bf16.gmra.mxu0 %v128
  %v337 = vpop.f32.mrf.mxu0
  %v338 = vadd.f32 %v309, %v337
  %v339 = vpop.f32.mrf.mxu0
  %v340 = vadd.f32 %v311, %v339
  %341 = vmatmul.bf16.gmra.mxu0 %v131
  %v342 = vpop.f32.mrf.mxu0
  %v343 = vadd.f32 %v314, %v342
  %v344 = vpop.f32.mrf.mxu0
  %v345 = vadd.f32 %v316, %v344
  %346 = vdwg.mxu0
  %347 = vmatpush.bf16.msra.mxu0 %v264
  %348 = vmatpush.bf16.msra.mxu0 %v263
  %349 = vmatpush.bf16.msra.mxu0 %v262
  %350 = vmatpush.bf16.msra.mxu0 %v261
  %351 = vmatpush.bf16.msra.mxu0 %v260
  %352 = vmatpush.bf16.msra.mxu0 %v259
  %353 = vmatpush.bf16.msra.mxu0 %v258
  %354 = vmatpush.bf16.msra.mxu0 %v257
  %355 = vmatmul.bf16.gmra.mxu0 %v123
  %v356 = vpop.f32.mrf.mxu0
  %v357 = vadd.f32 %v328, %v356
  %v358 = vpop.f32.mrf.mxu0
  %v359 = vadd.f32 %v330, %v358
  %360 = vmatmul.bf16.gmra.mxu0 %v126
  %v361 = vpop.f32.mrf.mxu0
  %v362 = vadd.f32 %v333, %v361
  %v363 = vpop.f32.mrf.mxu0
  %v364 = vadd.f32 %v335, %v363
  %365 = vmatmul.bf16.gmra.mxu0 %v129
  %v366 = vpop.f32.mrf.mxu0
  %v367 = vadd.f32 %v338, %v366
  %v368 = vpop.f32.mrf.mxu0
  %v369 = vadd.f32 %v340, %v368
  %370 = vmatmul.bf16.gmra.mxu0 %v132
  %v371 = vpop.f32.mrf.mxu0
  %v372 = vadd.f32 %v343, %v371
  %v373 = vpop.f32.mrf.mxu0
  %v374 = vadd.f32 %v345, %v373
  %375 = vdwg.mxu0
  %v376 = vld [vmem:[%s2] sm:$0x1]
  %v378 = vperm.slane %v376, 0
  %v380 = vmul.f32 %v357, %v378
  %v381 = vmul.f32 %v359, %v378
  %v382 = vmul.f32 %v362, %v378
  %v383 = vmul.f32 %v364, %v378
  %v384 = vmul.f32 %v367, %v378
  %v385 = vmul.f32 %v369, %v378
  %v386 = vmul.f32 %v372, %v378
  %v387 = vmul.f32 %v374, %v378
  %v388 = vld [vmem:[%s3] sm:$0x1]
  %v390 = vperm.slane %v388, 0
  %v392 = vadd.f32 %v380, %v390
  %v393 = vadd.f32 %v381, %v390
  %v394 = vadd.f32 %v382, %v390
  %v395 = vadd.f32 %v383, %v390
  %v396 = vadd.f32 %v384, %v390
  %v397 = vadd.f32 %v385, %v390
  %v398 = vadd.f32 %v386, %v390
  %v399 = vadd.f32 %v387, %v390
  %v400 = vmax.f32 %v392, 0.0
  %v401 = vmax.f32 %v393, 0.0
  %v402 = vmax.f32 %v394, 0.0
  %v403 = vmax.f32 %v395, 0.0
  %v404 = vmax.f32 %v396, 0.0
  %v405 = vmax.f32 %v397, 0.0
  %v406 = vmax.f32 %v398, 0.0
  %v407 = vmax.f32 %v399, 0.0
  %vm408 = vcmask 261120
  %409 = vst.msk [vmem:[%s4] sm:$0xff] %vm408, %v400
  %410 = vst.msk [vmem:[%s4 + $0x8] sm:$0xff] %vm408, %v401
  %411 = vst.msk [vmem:[%s4 + $0x10] sm:$0xff] %vm408, %v402
  %412 = vst.msk [vmem:[%s4 + $0x18] sm:$0xff] %vm408, %v403
  %413 = vst.msk [vmem:[%s4 + $0x20] sm:$0xff] %vm408, %v404
  %414 = vst.msk [vmem:[%s4 + $0x28] sm:$0xff] %vm408, %v405
  %415 = vst.msk [vmem:[%s4 + $0x30] sm:$0xff] %vm408, %v406
  %416 = vst.msk [vmem:[%s4 + $0x38] sm:$0xff] %vm408, %v407
  // Predicated region
  $region18: #{_lambda_.11} parent=0 // pred_check
    _
  $region19: #{_lambda_.11} parent=0 // pred_check_branch
    %418 = sbr.rel (0) target = $region21
  $region20: #{_lambda_.11} parent=0 // pred_region
    _
  $region21: #{_lambda_.11} parent=0 // pred_fallthru
    _
  // Predicated region
  $region22: #{_lambda_.11} parent=0 // pred_check
    _
  $region23: #{_lambda_.11} parent=0 // pred_check_branch
    %420 = sbr.rel (0) target = $region25
  $region24: #{_lambda_.11} parent=0 // pred_region
    _
  $region25: #{_lambda_.11} parent=0 // pred_fallthru
    _

// kernel: _lambda_.12
$region0: #{_lambda_.12}
  #allocation0 [shape = 'u32[]', space=smem, size = 0x4, offset = 0x4, fixed_abs, tag = 'smem constant byte address 0x4 - core index']
  #allocation1 [shape = 'u32[72,128]{1,0:T(1,128)}', space=vmem, size = 0x9000, scoped, tag = 'internal scratch']
  %s0 = inlined_call_operand.vmem [shape: bf16[64,288], index: 0, kind: input, shape index: {}]
  %s1 = inlined_call_operand.vmem [shape: bf16[288,32], index: 1, kind: input, shape index: {}]
  %s2 = inlined_call_operand.vmem [shape: f32[1,32], index: 2, kind: input, shape index: {}]
  %s3 = inlined_call_operand.vmem [shape: f32[1,32], index: 3, kind: input, shape index: {}]
  %s4 = inlined_call_operand.vmem [shape: f32[64,32], index: 4, kind: output, shape index: {}]
  %s5 = sld [smem:[#allocation0]]
  $region26: #{_lambda_.12} parent=0
    _
  %s7 = ssub.s32 1, %s5
  %s8 = scalar_select 0, %s7, %s5
  // Predicated region
  $region2: #{_lambda_.12} parent=0 // pred_check
    _
  $region3: #{_lambda_.12} parent=0 // pred_check_branch
    %10 = sbr.rel (0) target = $region5
  $region4: #{_lambda_.12} parent=0 // pred_region
    _
  $region5: #{_lambda_.12} parent=0 // pred_fallthru
    _
  // Predicated region
  $region6: #{_lambda_.12} parent=0 // pred_check
    _
  $region7: #{_lambda_.12} parent=0 // pred_check_branch
    %12 = sbr.rel (0) target = $region9
  $region8: #{_lambda_.12} parent=0 // pred_region
    _
  $region9: #{_lambda_.12} parent=0 // pred_fallthru
    _
  // Predicated region
  $region10: #{_lambda_.12} parent=0 // pred_check
    _
  $region11: #{_lambda_.12} parent=0 // pred_check_branch
    %14 = sbr.rel (0) target = $region13
  $region12: #{_lambda_.12} parent=0 // pred_region
    _
  $region13: #{_lambda_.12} parent=0 // pred_fallthru
    _
  // Predicated region
  $region14: #{_lambda_.12} parent=0 // pred_check
    _
  $region15: #{_lambda_.12} parent=0 // pred_check_branch
    %16 = sbr.rel (0) target = $region17
  $region16: #{_lambda_.12} parent=0 // pred_region
    _
  $region17: #{_lambda_.12} parent=0 // pred_fallthru
    _
  %v18 = vld [vmem:[%s0] sm:$0xff]
  %v19 = vld [vmem:[%s0 + $0x8] sm:$0xf]
  %v20 = vld [vmem:[%s0 + $0xc] sm:$0xff]
  %v21 = vld [vmem:[%s0 + $0x14] sm:$0xf]
  %v22 = vld [vmem:[%s0 + $0x18] sm:$0xff]
  %v23 = vld [vmem:[%s0 + $0x20] sm:$0xf]
  %v24 = vld [vmem:[%s0 + $0x24] sm:$0xff]
  %v25 = vld [vmem:[%s0 + $0x2c] sm:$0xf]
  %v26 = vld [vmem:[%s0 + $0x30] sm:$0xff]
  %v27 = vld [vmem:[%s0 + $0x38] sm:$0xf]
  %v28 = vld [vmem:[%s0 + $0x3c] sm:$0xff]
  %v29 = vld [vmem:[%s0 + $0x44] sm:$0xf]
  %v30 = vld [vmem:[%s0 + $0x48] sm:$0xff]
  %v31 = vld [vmem:[%s0 + $0x50] sm:$0xf]
  %v32 = vld [vmem:[%s0 + $0x54] sm:$0xff]
  %v33 = vld [vmem:[%s0 + $0x5c] sm:$0xf]
  %v34 = vld [vmem:[%s1] sm:$0xf]
  %v35 = vld [vmem:[%s1 + $0x4] sm:$0xf]
  %v36 = vld [vmem:[%s1 + $0x8] sm:$0xf]
  %v37 = vld [vmem:[%s1 + $0xc] sm:$0xf]
  %v38 = vld [vmem:[%s1 + $0x10] sm:$0xf]
  %v39 = vld [vmem:[%s1 + $0x14] sm:$0xf]
  %v40 = vld [vmem:[%s1 + $0x18] sm:$0xf]
  %v41 = vld [vmem:[%s1 + $0x1c] sm:$0xf]
  %v42 = vld [vmem:[%s1 + $0x20] sm:$0xf]
  %v43 = vld [vmem:[%s1 + $0x24] sm:$0xf]
  %v44 = vld [vmem:[%s1 + $0x28] sm:$0xf]
  %v45 = vld [vmem:[%s1 + $0x2c] sm:$0xf]
  %v46 = vld [vmem:[%s1 + $0x30] sm:$0xf]
  %v47 = vld [vmem:[%s1 + $0x34] sm:$0xf]
  %v48 = vld [vmem:[%s1 + $0x38] sm:$0xf]
  %v49 = vld [vmem:[%s1 + $0x3c] sm:$0xf]
  %v50 = vld [vmem:[%s1 + $0x40] sm:$0xf]
  %v51 = vld [vmem:[%s1 + $0x44] sm:$0xf]
  %v52 = vld [vmem:[%s1 + $0x48] sm:$0xf]
  %v53 = vld [vmem:[%s1 + $0x4c] sm:$0xf]
  %v54 = vld [vmem:[%s1 + $0x50] sm:$0xf]
  %v55 = vld [vmem:[%s1 + $0x54] sm:$0xf]
  %v56 = vld [vmem:[%s1 + $0x58] sm:$0xf]
  %v57 = vld [vmem:[%s1 + $0x5c] sm:$0xf]
  %v58 = vld [vmem:[%s1 + $0x60] sm:$0xf]
  %v59 = vld [vmem:[%s1 + $0x64] sm:$0xf]
  %v60 = vld [vmem:[%s1 + $0x68] sm:$0xf]
  %v61 = vld [vmem:[%s1 + $0x6c] sm:$0xf]
  %v62 = vld [vmem:[%s1 + $0x70] sm:$0xf]
  %v63 = vld [vmem:[%s1 + $0x74] sm:$0xf]
  %v64 = vld [vmem:[%s1 + $0x78] sm:$0xf]
  %v65 = vld [vmem:[%s1 + $0x7c] sm:$0xf]
  %v66 = vld [vmem:[%s1 + $0x80] sm:$0xf]
  %v67 = vld [vmem:[%s1 + $0x84] sm:$0xf]
  %v68 = vld [vmem:[%s1 + $0x88] sm:$0xf]
  %v69 = vld [vmem:[%s1 + $0x8c] sm:$0xf]
  %v86 = vunpack.c.l.b16 %v18
  %v87 = vunpack.c.h.b16 %v18
  %v88 = vunpack.c.l.b16 %v19
  %v89 = vunpack.c.l.b16 %v20
  %v90 = vunpack.c.h.b16 %v20
  %v91 = vunpack.c.l.b16 %v21
  %v92 = vunpack.c.l.b16 %v22
  %v93 = vunpack.c.h.b16 %v22
  %v94 = vunpack.c.l.b16 %v23
  %v95 = vunpack.c.l.b16 %v24
  %v96 = vunpack.c.h.b16 %v24
  %v97 = vunpack.c.l.b16 %v25
  %v98 = vunpack.c.l.b16 %v26
  %v99 = vunpack.c.h.b16 %v26
  %v100 = vunpack.c.l.b16 %v27
  %v101 = vunpack.c.l.b16 %v28
  %v102 = vunpack.c.h.b16 %v28
  %v103 = vunpack.c.l.b16 %v29
  %v104 = vunpack.c.l.b16 %v30
  %v105 = vunpack.c.h.b16 %v30
  %v106 = vunpack.c.l.b16 %v31
  %v107 = vunpack.c.l.b16 %v32
  %v108 = vunpack.c.h.b16 %v32
  %v109 = vunpack.c.l.b16 %v33
  %v110 = vpack.c.b16 %v89, %v86
  %v111 = vpack.c.b16 %v90, %v87
  %v112 = vpack.c.b16 %v91, %v88
  %v113 = vpack.c.b16 %v95, %v92
  %v114 = vpack.c.b16 %v96, %v93
  %v115 = vpack.c.b16 %v97, %v94
  %v116 = vpack.c.b16 %v101, %v98
  %v117 = vpack.c.b16 %v102, %v99
  %v118 = vpack.c.b16 %v103, %v100
  %v119 = vpack.c.b16 %v107, %v104
  %v120 = vpack.c.b16 %v108, %v105
  %v121 = vpack.c.b16 %v109, %v106
  %v166 = vunpack.c.l.b16 %v34
  %v167 = vunpack.c.l.b16 %v35
  %v168 = vunpack.c.l.b16 %v36
  %v169 = vunpack.c.l.b16 %v37
  %v170 = vunpack.c.l.b16 %v38
  %v171 = vunpack.c.l.b16 %v39
  %v172 = vunpack.c.l.b16 %v40
  %v173 = vunpack.c.l.b16 %v41
  %v174 = vunpack.c.l.b16 %v42
  %v175 = vunpack.c.l.b16 %v43
  %v176 = vunpack.c.l.b16 %v44
  %v177 = vunpack.c.l.b16 %v45
  %v178 = vunpack.c.l.b16 %v46
  %v179 = vunpack.c.l.b16 %v47
  %v180 = vunpack.c.l.b16 %v48
  %v181 = vunpack.c.l.b16 %v49
  %v182 = vunpack.c.l.b16 %v50
  %v183 = vunpack.c.l.b16 %v51
  %v184 = vunpack.c.l.b16 %v52
  %v185 = vunpack.c.l.b16 %v53
  %v186 = vunpack.c.l.b16 %v54
  %v187 = vunpack.c.l.b16 %v55
  %v188 = vunpack.c.l.b16 %v56
  %v189 = vunpack.c.l.b16 %v57
  %v190 = vunpack.c.l.b16 %v58
  %v191 = vunpack.c.l.b16 %v59
  %v192 = vunpack.c.l.b16 %v60
  %v193 = vunpack.c.l.b16 %v61
  %v194 = vunpack.c.l.b16 %v62
  %v195 = vunpack.c.l.b16 %v63
  %v196 = vunpack.c.l.b16 %v64
  %v197 = vunpack.c.l.b16 %v65
  %v198 = vunpack.c.l.b16 %v66
  %v199 = vunpack.c.l.b16 %v67
  %v200 = vunpack.c.l.b16 %v68
  %v201 = vunpack.c.l.b16 %v69
  %v202 = vpack.c.b16 %v167, %v166
  %v203 = vpack.c.b16 %v169, %v168
  %v204 = vpack.c.b16 %v171, %v170
  %v205 = vpack.c.b16 %v173, %v172
  %v206 = vpack.c.b16 %v175, %v174
  %v207 = vpack.c.b16 %v177, %v176
  %v208 = vpack.c.b16 %v179, %v178
  %v209 = vpack.c.b16 %v181, %v180
  %v210 = vpack.c.b16 %v183, %v182
  %v211 = vpack.c.b16 %v185, %v184
  %v212 = vpack.c.b16 %v187, %v186
  %v213 = vpack.c.b16 %v189, %v188
  %v214 = vpack.c.b16 %v191, %v190
  %v215 = vpack.c.b16 %v193, %v192
  %v216 = vpack.c.b16 %v195, %v194
  %v217 = vpack.c.b16 %v197, %v196
  %v218 = vpack.c.b16 %v199, %v198
  %v219 = vpack.c.b16 %v201, %v200
  %vm238 = vcmask 261120
  %v240 = vsel %vm238, %v112, 0
  %v243 = vsel %vm238, %v115, 0
  %v246 = vsel %vm238, %v118, 0
  %v249 = vsel %vm238, %v121, 0
  %251 = vmatpush.bf16.msra.mxu0 %v209
  %252 = vmatpush.bf16.msra.mxu0 %v208
  %253 = vmatpush.bf16.msra.mxu0 %v207
  %254 = vmatpush.bf16.msra.mxu0 %v206
  %255 = vmatpush.bf16.msra.mxu0 %v205
  %256 = vmatpush.bf16.msra.mxu0 %v204
  %257 = vmatpush.bf16.msra.mxu0 %v203
  %258 = vmatpush.bf16.msra.mxu0 %v202
  %259 = vmatmul.bf16.gmra.mxu0 %v110
  %v260 = vpop.f32.mrf.mxu0
  %v261 = vadd.f32 0.0, %v260
  %v262 = vpop.f32.mrf.mxu0
  %v263 = vadd.f32 0.0, %v262
  %264 = vmatmul.bf16.gmra.mxu0 %v113
  %v265 = vpop.f32.mrf.mxu0
  %v266 = vadd.f32 0.0, %v265
  %v267 = vpop.f32.mrf.mxu0
  %v268 = vadd.f32 0.0, %v267
  %269 = vmatmul.bf16.gmra.mxu0 %v116
  %v270 = vpop.f32.mrf.mxu0
  %v271 = vadd.f32 0.0, %v270
  %v272 = vpop.f32.mrf.mxu0
  %v273 = vadd.f32 0.0, %v272
  %274 = vmatmul.bf16.gmra.mxu0 %v119
  %v275 = vpop.f32.mrf.mxu0
  %v276 = vadd.f32 0.0, %v275
  %v277 = vpop.f32.mrf.mxu0
  %v278 = vadd.f32 0.0, %v277
  %279 = vdwg.mxu0
  %280 = vmatpush.bf16.msra.mxu0 %v217
  %281 = vmatpush.bf16.msra.mxu0 %v216
  %282 = vmatpush.bf16.msra.mxu0 %v215
  %283 = vmatpush.bf16.msra.mxu0 %v214
  %284 = vmatpush.bf16.msra.mxu0 %v213
  %285 = vmatpush.bf16.msra.mxu0 %v212
  %286 = vmatpush.bf16.msra.mxu0 %v211
  %287 = vmatpush.bf16.msra.mxu0 %v210
  %288 = vmatmul.bf16.gmra.mxu0 %v111
  %v289 = vpop.f32.mrf.mxu0
  %v290 = vadd.f32 %v261, %v289
  %v291 = vpop.f32.mrf.mxu0
  %v292 = vadd.f32 %v263, %v291
  %293 = vmatmul.bf16.gmra.mxu0 %v114
  %v294 = vpop.f32.mrf.mxu0
  %v295 = vadd.f32 %v266, %v294
  %v296 = vpop.f32.mrf.mxu0
  %v297 = vadd.f32 %v268, %v296
  %298 = vmatmul.bf16.gmra.mxu0 %v117
  %v299 = vpop.f32.mrf.mxu0
  %v300 = vadd.f32 %v271, %v299
  %v301 = vpop.f32.mrf.mxu0
  %v302 = vadd.f32 %v273, %v301
  %303 = vmatmul.bf16.gmra.mxu0 %v120
  %v304 = vpop.f32.mrf.mxu0
  %v305 = vadd.f32 %v276, %v304
  %v306 = vpop.f32.mrf.mxu0
  %v307 = vadd.f32 %v278, %v306
  %308 = vdwg.mxu0
  %309 = vmatpush.bf16.msra.mxu0 0
  %310 = vmatpush.bf16.msra.mxu0 0
  %311 = vmatpush.bf16.msra.mxu0 0
  %312 = vmatpush.bf16.msra.mxu0 0
  %313 = vmatpush.bf16.msra.mxu0 0
  %314 = vmatpush.bf16.msra.mxu0 0
  %315 = vmatpush.bf16.msra.mxu0 %v219
  %316 = vmatpush.bf16.msra.mxu0 %v218
  %317 = vmatmul.bf16.gmra.mxu0 %v240
  %v318 = vpop.f32.mrf.mxu0
  %v319 = vadd.f32 %v290, %v318
  %v320 = vpop.f32.mrf.mxu0
  %v321 = vadd.f32 %v292, %v320
  %322 = vmatmul.bf16.gmra.mxu0 %v243
  %v323 = vpop.f32.mrf.mxu0
  %v324 = vadd.f32 %v295, %v323
  %v325 = vpop.f32.mrf.mxu0
  %v326 = vadd.f32 %v297, %v325
  %327 = vmatmul.bf16.gmra.mxu0 %v246
  %v328 = vpop.f32.mrf.mxu0
  %v329 = vadd.f32 %v300, %v328
  %v330 = vpop.f32.mrf.mxu0
  %v331 = vadd.f32 %v302, %v330
  %332 = vmatmul.bf16.gmra.mxu0 %v249
  %v333 = vpop.f32.mrf.mxu0
  %v334 = vadd.f32 %v305, %v333
  %v335 = vpop.f32.mrf.mxu0
  %v336 = vadd.f32 %v307, %v335
  %337 = vdwg.mxu0
  %v338 = vld [vmem:[%s2] sm:$0x1]
  %v340 = vperm.slane %v338, 0
  %v342 = vmul.f32 %v319, %v340
  %v343 = vmul.f32 %v321, %v340
  %v344 = vmul.f32 %v324, %v340
  %v345 = vmul.f32 %v326, %v340
  %v346 = vmul.f32 %v329, %v340
  %v347 = vmul.f32 %v331, %v340
  %v348 = vmul.f32 %v334, %v340
  %v349 = vmul.f32 %v336, %v340
  %v350 = vld [vmem:[%s3] sm:$0x1]
  %v352 = vperm.slane %v350, 0
  %v354 = vadd.f32 %v342, %v352
  %v355 = vadd.f32 %v343, %v352
  %v356 = vadd.f32 %v344, %v352
  %v357 = vadd.f32 %v345, %v352
  %v358 = vadd.f32 %v346, %v352
  %v359 = vadd.f32 %v347, %v352
  %v360 = vadd.f32 %v348, %v352
  %v361 = vadd.f32 %v349, %v352
  %v362 = vmax.f32 %v354, 0.0
  %v363 = vmax.f32 %v355, 0.0
  %v364 = vmax.f32 %v356, 0.0
  %v365 = vmax.f32 %v357, 0.0
  %v366 = vmax.f32 %v358, 0.0
  %v367 = vmax.f32 %v359, 0.0
  %v368 = vmax.f32 %v360, 0.0
  %v369 = vmax.f32 %v361, 0.0
  %370 = vst.msk [vmem:[%s4] sm:$0xff] %vm238, %v362
  %371 = vst.msk [vmem:[%s4 + $0x8] sm:$0xff] %vm238, %v363
  %372 = vst.msk [vmem:[%s4 + $0x10] sm:$0xff] %vm238, %v364
  %373 = vst.msk [vmem:[%s4 + $0x18] sm:$0xff] %vm238, %v365
  %374 = vst.msk [vmem:[%s4 + $0x20] sm:$0xff] %vm238, %v366
  %375 = vst.msk [vmem:[%s4 + $0x28] sm:$0xff] %vm238, %v367
  %376 = vst.msk [vmem:[%s4 + $0x30] sm:$0xff] %vm238, %v368
  %377 = vst.msk [vmem:[%s4 + $0x38] sm:$0xff] %vm238, %v369
  // Predicated region
  $region18: #{_lambda_.12} parent=0 // pred_check
    _
  $region19: #{_lambda_.12} parent=0 // pred_check_branch
    %379 = sbr.rel (0) target = $region21
  $region20: #{_lambda_.12} parent=0 // pred_region
    _
  $region21: #{_lambda_.12} parent=0 // pred_fallthru
    _
  // Predicated region
  $region22: #{_lambda_.12} parent=0 // pred_check
    _
  $region23: #{_lambda_.12} parent=0 // pred_check_branch
    %381 = sbr.rel (0) target = $region25
  $region24: #{_lambda_.12} parent=0 // pred_region
    _
  $region25: #{_lambda_.12} parent=0 // pred_fallthru
    _

// kernel: _lambda_.13
$region0: #{_lambda_.13}
  #allocation0 [shape = 'u32[]', space=smem, size = 0x4, offset = 0x4, fixed_abs, tag = 'smem constant byte address 0x4 - core index']
  #allocation1 [shape = 'u32[72,128]{1,0:T(1,128)}', space=vmem, size = 0x9000, scoped, tag = 'internal scratch']
  %s0 = inlined_call_operand.vmem [shape: bf16[16,256], index: 0, kind: input, shape index: {}]
  %s1 = inlined_call_operand.vmem [shape: bf16[256,32], index: 1, kind: input, shape index: {}]
  %s2 = inlined_call_operand.vmem [shape: f32[1,32], index: 2, kind: input, shape index: {}]
  %s3 = inlined_call_operand.vmem [shape: f32[1,32], index: 3, kind: input, shape index: {}]
  %s4 = inlined_call_operand.vmem [shape: f32[16,32], index: 4, kind: output, shape index: {}]
  %s5 = sld [smem:[#allocation0]]
  $region26: #{_lambda_.13} parent=0
    _
  %s7 = ssub.s32 1, %s5
  %s8 = scalar_select 0, %s7, %s5
  // Predicated region
  $region2: #{_lambda_.13} parent=0 // pred_check
    _
  $region3: #{_lambda_.13} parent=0 // pred_check_branch
    %10 = sbr.rel (0) target = $region5
  $region4: #{_lambda_.13} parent=0 // pred_region
    _
  $region5: #{_lambda_.13} parent=0 // pred_fallthru
    _
  // Predicated region
  $region6: #{_lambda_.13} parent=0 // pred_check
    _
  $region7: #{_lambda_.13} parent=0 // pred_check_branch
    %12 = sbr.rel (0) target = $region9
  $region8: #{_lambda_.13} parent=0 // pred_region
    _
  $region9: #{_lambda_.13} parent=0 // pred_fallthru
    _
  // Predicated region
  $region10: #{_lambda_.13} parent=0 // pred_check
    _
  $region11: #{_lambda_.13} parent=0 // pred_check_branch
    %14 = sbr.rel (0) target = $region13
  $region12: #{_lambda_.13} parent=0 // pred_region
    _
  $region13: #{_lambda_.13} parent=0 // pred_fallthru
    _
  // Predicated region
  $region14: #{_lambda_.13} parent=0 // pred_check
    _
  $region15: #{_lambda_.13} parent=0 // pred_check_branch
    %16 = sbr.rel (0) target = $region17
  $region16: #{_lambda_.13} parent=0 // pred_region
    _
  $region17: #{_lambda_.13} parent=0 // pred_fallthru
    _
  %v17 = vld [vmem:[%s0] sm:$0xff]
  %v18 = vld [vmem:[%s0 + $0x8] sm:$0xff]
  %v19 = vld [vmem:[%s1] sm:$0xf]
  %v20 = vld [vmem:[%s1 + $0x4] sm:$0xf]
  %v21 = vld [vmem:[%s1 + $0x8] sm:$0xf]
  %v22 = vld [vmem:[%s1 + $0xc] sm:$0xf]
  %v23 = vld [vmem:[%s1 + $0x10] sm:$0xf]
  %v24 = vld [vmem:[%s1 + $0x14] sm:$0xf]
  %v25 = vld [vmem:[%s1 + $0x18] sm:$0xf]
  %v26 = vld [vmem:[%s1 + $0x1c] sm:$0xf]
  %v27 = vld [vmem:[%s1 + $0x20] sm:$0xf]
  %v28 = vld [vmem:[%s1 + $0x24] sm:$0xf]
  %v29 = vld [vmem:[%s1 + $0x28] sm:$0xf]
  %v30 = vld [vmem:[%s1 + $0x2c] sm:$0xf]
  %v31 = vld [vmem:[%s1 + $0x30] sm:$0xf]
  %v32 = vld [vmem:[%s1 + $0x34] sm:$0xf]
  %v33 = vld [vmem:[%s1 + $0x38] sm:$0xf]
  %v34 = vld [vmem:[%s1 + $0x3c] sm:$0xf]
  %v35 = vld [vmem:[%s1 + $0x40] sm:$0xf]
  %v36 = vld [vmem:[%s1 + $0x44] sm:$0xf]
  %v37 = vld [vmem:[%s1 + $0x48] sm:$0xf]
  %v38 = vld [vmem:[%s1 + $0x4c] sm:$0xf]
  %v39 = vld [vmem:[%s1 + $0x50] sm:$0xf]
  %v40 = vld [vmem:[%s1 + $0x54] sm:$0xf]
  %v41 = vld [vmem:[%s1 + $0x58] sm:$0xf]
  %v42 = vld [vmem:[%s1 + $0x5c] sm:$0xf]
  %v43 = vld [vmem:[%s1 + $0x60] sm:$0xf]
  %v44 = vld [vmem:[%s1 + $0x64] sm:$0xf]
  %v45 = vld [vmem:[%s1 + $0x68] sm:$0xf]
  %v46 = vld [vmem:[%s1 + $0x6c] sm:$0xf]
  %v47 = vld [vmem:[%s1 + $0x70] sm:$0xf]
  %v48 = vld [vmem:[%s1 + $0x74] sm:$0xf]
  %v49 = vld [vmem:[%s1 + $0x78] sm:$0xf]
  %v50 = vld [vmem:[%s1 + $0x7c] sm:$0xf]
  %v53 = vunpack.c.l.b16 %v17
  %v54 = vunpack.c.h.b16 %v17
  %v55 = vunpack.c.l.b16 %v18
  %v56 = vunpack.c.h.b16 %v18
  %v57 = vpack.c.b16 %v55, %v53
  %v58 = vpack.c.b16 %v56, %v54
  %v93 = vunpack.c.l.b16 %v19
  %v94 = vunpack.c.l.b16 %v20
  %v95 = vunpack.c.l.b16 %v21
  %v96 = vunpack.c.l.b16 %v22
  %v97 = vunpack.c.l.b16 %v23
  %v98 = vunpack.c.l.b16 %v24
  %v99 = vunpack.c.l.b16 %v25
  %v100 = vunpack.c.l.b16 %v26
  %v101 = vunpack.c.l.b16 %v27
  %v102 = vunpack.c.l.b16 %v28
  %v103 = vunpack.c.l.b16 %v29
  %v104 = vunpack.c.l.b16 %v30
  %v105 = vunpack.c.l.b16 %v31
  %v106 = vunpack.c.l.b16 %v32
  %v107 = vunpack.c.l.b16 %v33
  %v108 = vunpack.c.l.b16 %v34
  %v109 = vunpack.c.l.b16 %v35
  %v110 = vunpack.c.l.b16 %v36
  %v111 = vunpack.c.l.b16 %v37
  %v112 = vunpack.c.l.b16 %v38
  %v113 = vunpack.c.l.b16 %v39
  %v114 = vunpack.c.l.b16 %v40
  %v115 = vunpack.c.l.b16 %v41
  %v116 = vunpack.c.l.b16 %v42
  %v117 = vunpack.c.l.b16 %v43
  %v118 = vunpack.c.l.b16 %v44
  %v119 = vunpack.c.l.b16 %v45
  %v120 = vunpack.c.l.b16 %v46
  %v121 = vunpack.c.l.b16 %v47
  %v122 = vunpack.c.l.b16 %v48
  %v123 = vunpack.c.l.b16 %v49
  %v124 = vunpack.c.l.b16 %v50
  %v125 = vpack.c.b16 %v94, %v93
  %v126 = vpack.c.b16 %v96, %v95
  %v127 = vpack.c.b16 %v98, %v97
  %v128 = vpack.c.b16 %v100, %v99
  %v129 = vpack.c.b16 %v102, %v101
  %v130 = vpack.c.b16 %v104, %v103
  %v131 = vpack.c.b16 %v106, %v105
  %v132 = vpack.c.b16 %v108, %v107
  %v133 = vpack.c.b16 %v110, %v109
  %v134 = vpack.c.b16 %v112, %v111
  %v135 = vpack.c.b16 %v114, %v113
  %v136 = vpack.c.b16 %v116, %v115
  %v137 = vpack.c.b16 %v118, %v117
  %v138 = vpack.c.b16 %v120, %v119
  %v139 = vpack.c.b16 %v122, %v121
  %v140 = vpack.c.b16 %v124, %v123
  %157 = vmatpush.bf16.msra.mxu0 %v132
  %158 = vmatpush.bf16.msra.mxu0 %v131
  %159 = vmatpush.bf16.msra.mxu0 %v130
  %160 = vmatpush.bf16.msra.mxu0 %v129
  %161 = vmatpush.bf16.msra.mxu0 %v128
  %162 = vmatpush.bf16.msra.mxu0 %v127
  %163 = vmatpush.bf16.msra.mxu0 %v126
  %164 = vmatpush.bf16.msra.mxu0 %v125
  %165 = vmatmul.bf16.gmra.mxu0 %v57
  %v166 = vpop.f32.mrf.mxu0
  %v167 = vadd.f32 0.0, %v166
  %v168 = vpop.f32.mrf.mxu0
  %v169 = vadd.f32 0.0, %v168
  %170 = vdwg.mxu0
  %171 = vmatpush.bf16.msra.mxu0 %v140
  %172 = vmatpush.bf16.msra.mxu0 %v139
  %173 = vmatpush.bf16.msra.mxu0 %v138
  %174 = vmatpush.bf16.msra.mxu0 %v137
  %175 = vmatpush.bf16.msra.mxu0 %v136
  %176 = vmatpush.bf16.msra.mxu0 %v135
  %177 = vmatpush.bf16.msra.mxu0 %v134
  %178 = vmatpush.bf16.msra.mxu0 %v133
  %179 = vmatmul.bf16.gmra.mxu0 %v58
  %v180 = vpop.f32.mrf.mxu0
  %v181 = vadd.f32 %v167, %v180
  %v182 = vpop.f32.mrf.mxu0
  %v183 = vadd.f32 %v169, %v182
  %184 = vdwg.mxu0
  %v185 = vld [vmem:[%s2] sm:$0x1]
  %v187 = vperm.slane %v185, 0
  %v189 = vmul.f32 %v181, %v187
  %v190 = vmul.f32 %v183, %v187
  %v191 = vld [vmem:[%s3] sm:$0x1]
  %v193 = vperm.slane %v191, 0
  %v195 = vadd.f32 %v189, %v193
  %v196 = vadd.f32 %v190, %v193
  %v197 = vmax.f32 %v195, 0.0
  %v198 = vmax.f32 %v196, 0.0
  %vm199 = vcmask 261120
  %200 = vst.msk [vmem:[%s4] sm:$0xff] %vm199, %v197
  %201 = vst.msk [vmem:[%s4 + $0x8] sm:$0xff] %vm199, %v198
  // Predicated region
  $region18: #{_lambda_.13} parent=0 // pred_check
    _
  $region19: #{_lambda_.13} parent=0 // pred_check_branch
    %203 = sbr.rel (0) target = $region21
  $region20: #{_lambda_.13} parent=0 // pred_region
    _
  $region21: #{_lambda_.13} parent=0 // pred_fallthru
    _
  // Predicated region
  $region22: #{_lambda_.13} parent=0 // pred_check
    _
  $region23: #{_lambda_.13} parent=0 // pred_check_branch
    %205 = sbr.rel (0) target = $region25
  $region24: #{_lambda_.13} parent=0 // pred_region
    _
  $region25: #{_lambda_.13} parent=0 // pred_fallthru
    _

// kernel: _lambda_.14
$region0: #{_lambda_.14}
  #allocation0 [shape = 'u32[]', space=smem, size = 0x4, offset = 0x4, fixed_abs, tag = 'smem constant byte address 0x4 - core index']
  #allocation1 [shape = 'u32[72,128]{1,0:T(1,128)}', space=vmem, size = 0x9000, scoped, tag = 'internal scratch']
  %s0 = inlined_call_operand.vmem [shape: bf16[16,32], index: 0, kind: input, shape index: {}]
  %s1 = inlined_call_operand.vmem [shape: bf16[32,768], index: 1, kind: input, shape index: {}]
  %s2 = inlined_call_operand.vmem [shape: f32[1,768], index: 2, kind: input, shape index: {}]
  %s3 = inlined_call_operand.vmem [shape: f32[1,768], index: 3, kind: input, shape index: {}]
  %s4 = inlined_call_operand.vmem [shape: f32[16,768], index: 4, kind: output, shape index: {}]
  %s5 = sld [smem:[#allocation0]]
  $region26: #{_lambda_.14} parent=0
    _
  %s7 = ssub.s32 1, %s5
  %s8 = scalar_select 0, %s7, %s5
  // Predicated region
  $region2: #{_lambda_.14} parent=0 // pred_check
    _
  $region3: #{_lambda_.14} parent=0 // pred_check_branch
    %10 = sbr.rel (0) target = $region5
  $region4: #{_lambda_.14} parent=0 // pred_region
    _
  $region5: #{_lambda_.14} parent=0 // pred_fallthru
    _
  // Predicated region
  $region6: #{_lambda_.14} parent=0 // pred_check
    _
  $region7: #{_lambda_.14} parent=0 // pred_check_branch
    %12 = sbr.rel (0) target = $region9
  $region8: #{_lambda_.14} parent=0 // pred_region
    _
  $region9: #{_lambda_.14} parent=0 // pred_fallthru
    _
  // Predicated region
  $region10: #{_lambda_.14} parent=0 // pred_check
    _
  $region11: #{_lambda_.14} parent=0 // pred_check_branch
    %14 = sbr.rel (0) target = $region13
  $region12: #{_lambda_.14} parent=0 // pred_region
    _
  $region13: #{_lambda_.14} parent=0 // pred_fallthru
    _
  // Predicated region
  $region14: #{_lambda_.14} parent=0 // pred_check
    _
  $region15: #{_lambda_.14} parent=0 // pred_check_branch
    %16 = sbr.rel (0) target = $region17
  $region16: #{_lambda_.14} parent=0 // pred_region
    _
  $region17: #{_lambda_.14} parent=0 // pred_fallthru
    _
  %v18 = vld [vmem:[%s0] sm:$0xf]
  %v19 = vld [vmem:[%s0 + $0x4] sm:$0xf]
  %v20 = vld [vmem:[%s1] sm:$0xff]
  %v21 = vld [vmem:[%s1 + $0x8] sm:$0xff]
  %v22 = vld [vmem:[%s1 + $0x10] sm:$0xff]
  %v23 = vld [vmem:[%s1 + $0x18] sm:$0xff]
  %v24 = vld [vmem:[%s1 + $0x20] sm:$0xff]
  %v25 = vld [vmem:[%s1 + $0x28] sm:$0xff]
  %v26 = vld [vmem:[%s1 + $0x30] sm:$0xff]
  %v27 = vld [vmem:[%s1 + $0x38] sm:$0xff]
  %v28 = vld [vmem:[%s1 + $0x40] sm:$0xff]
  %v29 = vld [vmem:[%s1 + $0x48] sm:$0xff]
  %v30 = vld [vmem:[%s1 + $0x50] sm:$0xff]
  %v31 = vld [vmem:[%s1 + $0x58] sm:$0xff]
  %v34 = vunpack.c.l.b16 %v18
  %v35 = vunpack.c.l.b16 %v19
  %v36 = vpack.c.b16 %v35, %v34
  %v49 = vunpack.c.l.b16 %v20
  %v50 = vunpack.c.h.b16 %v20
  %v51 = vunpack.c.l.b16 %v21
  %v52 = vunpack.c.h.b16 %v21
  %v53 = vunpack.c.l.b16 %v22
  %v54 = vunpack.c.h.b16 %v22
  %v55 = vunpack.c.l.b16 %v23
  %v56 = vunpack.c.h.b16 %v23
  %v57 = vunpack.c.l.b16 %v24
  %v58 = vunpack.c.h.b16 %v24
  %v59 = vunpack.c.l.b16 %v25
  %v60 = vunpack.c.h.b16 %v25
  %v61 = vunpack.c.l.b16 %v26
  %v62 = vunpack.c.h.b16 %v26
  %v63 = vunpack.c.l.b16 %v27
  %v64 = vunpack.c.h.b16 %v27
  %v65 = vunpack.c.l.b16 %v28
  %v66 = vunpack.c.h.b16 %v28
  %v67 = vunpack.c.l.b16 %v29
  %v68 = vunpack.c.h.b16 %v29
  %v69 = vunpack.c.l.b16 %v30
  %v70 = vunpack.c.h.b16 %v30
  %v71 = vunpack.c.l.b16 %v31
  %v72 = vunpack.c.h.b16 %v31
  %v73 = vpack.c.b16 %v55, %v49
  %v74 = vpack.c.b16 %v56, %v50
  %v75 = vpack.c.b16 %v57, %v51
  %v76 = vpack.c.b16 %v58, %v52
  %v77 = vpack.c.b16 %v59, %v53
  %v78 = vpack.c.b16 %v60, %v54
  %v79 = vpack.c.b16 %v67, %v61
  %v80 = vpack.c.b16 %v68, %v62
  %v81 = vpack.c.b16 %v69, %v63
  %v82 = vpack.c.b16 %v70, %v64
  %v83 = vpack.c.b16 %v71, %v65
  %v84 = vpack.c.b16 %v72, %v66
  %vm97 = vcmask 261120
  %v99 = vsel %vm97, %v36, 0
  %101 = vmatpush.bf16.msra.mxu0 0
  %102 = vmatpush.bf16.msra.mxu0 0
  %103 = vmatpush.bf16.msra.mxu0 0
  %104 = vmatpush.bf16.msra.mxu0 0
  %105 = vmatpush.bf16.msra.mxu0 0
  %106 = vmatpush.bf16.msra.mxu0 0
  %107 = vmatpush.bf16.msra.mxu0 %v79
  %108 = vmatpush.bf16.msra.mxu0 %v73
  %109 = vmatmul.bf16.gmra.mxu0 %v99
  %v110 = vpop.f32.mrf.mxu0
  %v111 = vadd.f32 0.0, %v110
  %v112 = vpop.f32.mrf.mxu0
  %v113 = vadd.f32 0.0, %v112
  %114 = vdwg.mxu0
  %115 = vmatpush.bf16.msra.mxu0 0
  %116 = vmatpush.bf16.msra.mxu0 0
  %117 = vmatpush.bf16.msra.mxu0 0
  %118 = vmatpush.bf16.msra.mxu0 0
  %119 = vmatpush.bf16.msra.mxu0 0
  %120 = vmatpush.bf16.msra.mxu0 0
  %121 = vmatpush.bf16.msra.mxu0 %v80
  %122 = vmatpush.bf16.msra.mxu0 %v74
  %123 = vmatmul.bf16.gmra.mxu0 %v99
  %v124 = vpop.f32.mrf.mxu0
  %v125 = vadd.f32 0.0, %v124
  %v126 = vpop.f32.mrf.mxu0
  %v127 = vadd.f32 0.0, %v126
  %128 = vdwg.mxu0
  %129 = vmatpush.bf16.msra.mxu0 0
  %130 = vmatpush.bf16.msra.mxu0 0
  %131 = vmatpush.bf16.msra.mxu0 0
  %132 = vmatpush.bf16.msra.mxu0 0
  %133 = vmatpush.bf16.msra.mxu0 0
  %134 = vmatpush.bf16.msra.mxu0 0
  %135 = vmatpush.bf16.msra.mxu0 %v81
  %136 = vmatpush.bf16.msra.mxu0 %v75
  %137 = vmatmul.bf16.gmra.mxu0 %v99
  %v138 = vpop.f32.mrf.mxu0
  %v139 = vadd.f32 0.0, %v138
  %v140 = vpop.f32.mrf.mxu0
  %v141 = vadd.f32 0.0, %v140
  %142 = vdwg.mxu0
  %143 = vmatpush.bf16.msra.mxu0 0
  %144 = vmatpush.bf16.msra.mxu0 0
  %145 = vmatpush.bf16.msra.mxu0 0
  %146 = vmatpush.bf16.msra.mxu0 0
  %147 = vmatpush.bf16.msra.mxu0 0
  %148 = vmatpush.bf16.msra.mxu0 0
  %149 = vmatpush.bf16.msra.mxu0 %v82
  %150 = vmatpush.bf16.msra.mxu0 %v76
  %151 = vmatmul.bf16.gmra.mxu0 %v99
  %v152 = vpop.f32.mrf.mxu0
  %v153 = vadd.f32 0.0, %v152
  %v154 = vpop.f32.mrf.mxu0
  %v155 = vadd.f32 0.0, %v154
  %156 = vdwg.mxu0
  %157 = vmatpush.bf16.msra.mxu0 0
  %158 = vmatpush.bf16.msra.mxu0 0
  %159 = vmatpush.bf16.msra.mxu0 0
  %160 = vmatpush.bf16.msra.mxu0 0
  %161 = vmatpush.bf16.msra.mxu0 0
  %162 = vmatpush.bf16.msra.mxu0 0
  %163 = vmatpush.bf16.msra.mxu0 %v83
  %164 = vmatpush.bf16.msra.mxu0 %v77
  %165 = vmatmul.bf16.gmra.mxu0 %v99
  %v166 = vpop.f32.mrf.mxu0
  %v167 = vadd.f32 0.0, %v166
  %v168 = vpop.f32.mrf.mxu0
  %v169 = vadd.f32 0.0, %v168
  %170 = vdwg.mxu0
  %171 = vmatpush.bf16.msra.mxu0 0
  %172 = vmatpush.bf16.msra.mxu0 0
  %173 = vmatpush.bf16.msra.mxu0 0
  %174 = vmatpush.bf16.msra.mxu0 0
  %175 = vmatpush.bf16.msra.mxu0 0
  %176 = vmatpush.bf16.msra.mxu0 0
  %177 = vmatpush.bf16.msra.mxu0 %v84
  %178 = vmatpush.bf16.msra.mxu0 %v78
  %179 = vmatmul.bf16.gmra.mxu0 %v99
  %v180 = vpop.f32.mrf.mxu0
  %v181 = vadd.f32 0.0, %v180
  %v182 = vpop.f32.mrf.mxu0
  %v183 = vadd.f32 0.0, %v182
  %184 = vdwg.mxu0
  %v185 = vld [vmem:[%s2] sm:$0x3f]
  %v187 = vperm.slane %v185, 0
  %v188 = vperm.slane %v185, 1
  %v189 = vperm.slane %v185, 2
  %v190 = vperm.slane %v185, 3
  %v191 = vperm.slane %v185, 4
  %v192 = vperm.slane %v185, 5
  %v199 = vmul.f32 %v111, %v187
  %v200 = vmul.f32 %v125, %v188
  %v201 = vmul.f32 %v139, %v189
  %v202 = vmul.f32 %v153, %v190
  %v203 = vmul.f32 %v167, %v191
  %v204 = vmul.f32 %v181, %v192
  %v205 = vmul.f32 %v113, %v187
  %v206 = vmul.f32 %v127, %v188
  %v207 = vmul.f32 %v141, %v189
  %v208 = vmul.f32 %v155, %v190
  %v209 = vmul.f32 %v169, %v191
  %v210 = vmul.f32 %v183, %v192
  %v211 = vld [vmem:[%s3] sm:$0x3f]
  %v213 = vperm.slane %v211, 0
  %v214 = vperm.slane %v211, 1
  %v215 = vperm.slane %v211, 2
  %v216 = vperm.slane %v211, 3
  %v217 = vperm.slane %v211, 4
  %v218 = vperm.slane %v211, 5
  %v225 = vadd.f32 %v199, %v213
  %v226 = vadd.f32 %v200, %v214
  %v227 = vadd.f32 %v201, %v215
  %v228 = vadd.f32 %v202, %v216
  %v229 = vadd.f32 %v203, %v217
  %v230 = vadd.f32 %v204, %v218
  %v231 = vadd.f32 %v205, %v213
  %v232 = vadd.f32 %v206, %v214
  %v233 = vadd.f32 %v207, %v215
  %v234 = vadd.f32 %v208, %v216
  %v235 = vadd.f32 %v209, %v217
  %v236 = vadd.f32 %v210, %v218
  %237 = vst [vmem:[%s4] sm:$0xff] %v225
  %238 = vst [vmem:[%s4 + $0x8] sm:$0xff] %v226
  %239 = vst [vmem:[%s4 + $0x10] sm:$0xff] %v227
  %240 = vst [vmem:[%s4 + $0x18] sm:$0xff] %v228
  %241 = vst [vmem:[%s4 + $0x20] sm:$0xff] %v229
  %242 = vst [vmem:[%s4 + $0x28] sm:$0xff] %v230
  %243 = vst [vmem:[%s4 + $0x30] sm:$0xff] %v231
  %244 = vst [vmem:[%s4 + $0x38] sm:$0xff] %v232
  %245 = vst [vmem:[%s4 + $0x40] sm:$0xff] %v233
  %246 = vst [vmem:[%s4 + $0x48] sm:$0xff] %v234
  %247 = vst [vmem:[%s4 + $0x50] sm:$0xff] %v235
  %248 = vst [vmem:[%s4 + $0x58] sm:$0xff] %v236
  // Predicated region
  $region18: #{_lambda_.14} parent=0 // pred_check
    _
  $region19: #{_lambda_.14} parent=0 // pred_check_branch
    %250 = sbr.rel (0) target = $region21
  $region20: #{_lambda_.14} parent=0 // pred_region
    _
  $region21: #{_lambda_.14} parent=0 // pred_fallthru
    _
  // Predicated region
  $region22: #{_lambda_.14} parent=0 // pred_check
    _
  $region23: #{_lambda_.14} parent=0 // pred_check_branch
    %252 = sbr.rel (0) target = $region25
  $region24: #{_lambda_.14} parent=0 // pred_region
    _
  $region25: #{_lambda_.14} parent=0 // pred_fallthru
    _

// kernel: _lambda_.15
$region0: #{_lambda_.15}
  #allocation0 [shape = 'u32[]', space=smem, size = 0x4, offset = 0x4, fixed_abs, tag = 'smem constant byte address 0x4 - core index']
  #allocation1 [shape = 'u32[72,128]{1,0:T(1,128)}', space=vmem, size = 0x9000, scoped, tag = 'internal scratch']
  #allocation2 [shape = 'f32[2,256]{1,0:T(2,128)}', space=vmem, size = 0x800, scoped, tag = 'scratch operand']
  %s0 = inlined_call_operand.vmem [shape: f32[2,2,128], index: 0, kind: input, shape index: {}]
  %s1 = inlined_call_operand.vmem [shape: f32[6,2,768], index: 1, kind: input, shape index: {}, may-alias: {1,2}]
  %s2 = inlined_call_operand.vmem [shape: f32[6,2,768], index: 2, kind: input, shape index: {}, may-alias: {1,2}]
  %s3 = inlined_call_operand.vmem [shape: bf16[256,768], index: 3, kind: input, shape index: {}]
  %s4 = inlined_call_operand.vmem [shape: f32[1,768], index: 4, kind: input, shape index: {}]
  %s5 = inlined_call_operand.vmem [shape: bf16[256,128], index: 5, kind: input, shape index: {}]
  %s6 = inlined_call_operand.vmem [shape: f32[1,128], index: 6, kind: input, shape index: {}]
  %s7 = inlined_call_operand.vmem [shape: f32[6,2,128], index: 7, kind: output, shape index: {}]
  %s8 = sld [smem:[#allocation0]]
  $region65: #{_lambda_.15} parent=0
    _
  %s10 = ssub.s32 1, %s8
  %s11 = scalar_select 0, %s10, %s8
  loop: start=0, step=1, limit=8
  $region2: #{_lambda_.15} parent=0 // loop_pre_header
    _
  $region3: #{_lambda_.15} parent=0 // loop_header
    %s13 = sphi 0, %s17
    %p14 = scmp.ge.s32.totalorder %s13, 8
    %s21 = sphi 0, %s21
    %s23 = sphi 0, %s21
    %s24 = sphi 0, %s23
    %s38 = sphi 0, %s24
    %s44 = sphi 0, %s46
    %s47 = sphi 0, %s44
    %s48 = sphi 0, %s47
    %s64 = sphi 0, %s48
    %s72 = sphi 0, %s74
    %s75 = sphi 0, %s72
    %s76 = sphi 0, %s75
    %s92 = sphi 0, %s76
    %s96 = sphi 0, %s96
    %s98 = sphi 0, %s96
    %s99 = sphi 0, %s98
    %s113 = sphi 0, %s99
    %s117 = sphi 0, %s117
    %s119 = sphi 0, %s117
    %s120 = sphi 0, %s119
    %s134 = sphi 0, %s120
    %s138 = sphi 0, %s138
    %s140 = sphi 0, %s138
    %s141 = sphi 0, %s140
    %s155 = sphi 0, %s141
    %s159 = sphi 0, %s159
    %s161 = sphi 0, %s159
    %s162 = sphi 0, %s161
    %s176 = sphi 0, %s162
    %s180 = sphi 0, %s180
    %s182 = sphi 0, %s180
    %s183 = sphi 0, %s182
    %s197 = sphi 0, %s183
  $region4: #{_lambda_.15} parent=0 // loop_header_branch
    %16 = sbr.rel (%p14) target = $region8
  $region5: #{_lambda_.15} parent=0 // loop_body
    %s18 = ssub.s32 %s13, 1
    %s19 = ssub.s32 %s13, 2
    %s20 = sadd.s32 %s13, 1
    %s22 = sadd.s32 %s21, 1
    %p25 = scmp.eq.s32.totalorder %s13, 5
    %p26 = scmp.ne.s32.totalorder %s21, %s23
    %p27 = scmp.eq.s32.totalorder %s13, 0
    %p28 = por %p26, %p27
    %p29 = scmp.ne.s32.totalorder %s21, %s23
    %p30 = scmp.eq.s32.totalorder %s18, 5
    %p31 = por %p29, %p30
    %p32 = scmp.ne.s32.totalorder %s23, %s24
    %p33 = scmp.eq.s32.totalorder %s18, 0
    %p34 = por %p32, %p33
    %p35 = scmp.ne.s32.totalorder %s23, %s24
    %p36 = scmp.eq.s32.totalorder %s19, 5
    %p37 = por %p35, %p36
    %p39 = scmp.ne.s32.totalorder %s24, %s38
    %p40 = scmp.eq.s32.totalorder %s19, 0
    %p41 = por %p39, %p40
    %s42 = ssub.s32 %s13, %s20
    %p43 = scmp.eq.s32.totalorder %s42, 0
    %s45 = sadd.s32 %s44, 1
    %s46 = scalar_select %p43, %s44, %s45
    %p49 = pneg %p43
    %p50 = scmp.eq.s32.totalorder %s13, 5
    %p51 = por %p49, %p50
    %p52 = scmp.ne.s32.totalorder %s44, %s47
    %p53 = scmp.eq.s32.totalorder %s13, 0
    %p54 = por %p52, %p53
    %p55 = scmp.ne.s32.totalorder %s44, %s47
    %p56 = scmp.eq.s32.totalorder %s18, 5
    %p57 = por %p55, %p56
    %p58 = scmp.ne.s32.totalorder %s47, %s48
    %p59 = scmp.eq.s32.totalorder %s18, 0
    %p60 = por %p58, %p59
    %p61 = scmp.ne.s32.totalorder %s47, %s48
    %p62 = scmp.eq.s32.totalorder %s19, 5
    %p63 = por %p61, %p62
    %p65 = scmp.ne.s32.totalorder %s48, %s64
    %p66 = scmp.eq.s32.totalorder %s19, 0
    %p67 = por %p65, %p66
    %s68 = ssub.s32 5, %s13
    %s69 = ssub.s32 5, %s20
    %s70 = ssub.s32 %s68, %s69
    %p71 = scmp.eq.s32.totalorder %s70, 0
    %s73 = sadd.s32 %s72, 1
    %s74 = scalar_select %p71, %s72, %s73
    %p77 = pneg %p71
    %p78 = scmp.eq.s32.totalorder %s13, 5
    %p79 = por %p77, %p78
    %p80 = scmp.ne.s32.totalorder %s72, %s75
    %p81 = scmp.eq.s32.totalorder %s13, 0
    %p82 = por %p80, %p81
    %p83 = scmp.ne.s32.totalorder %s72, %s75
    %p84 = scmp.eq.s32.totalorder %s18, 5
    %p85 = por %p83, %p84
    %p86 = scmp.ne.s32.totalorder %s75, %s76
    %p87 = scmp.eq.s32.totalorder %s18, 0
    %p88 = por %p86, %p87
    %p89 = scmp.ne.s32.totalorder %s75, %s76
    %p90 = scmp.eq.s32.totalorder %s19, 5
    %p91 = por %p89, %p90
    %p93 = scmp.ne.s32.totalorder %s76, %s92
    %p94 = scmp.eq.s32.totalorder %s19, 0
    %p95 = por %p93, %p94
    %s97 = sadd.s32 %s96, 1
    %p100 = scmp.eq.s32.totalorder %s13, 5
    %p101 = scmp.ne.s32.totalorder %s96, %s98
    %p102 = scmp.eq.s32.totalorder %s13, 0
    %p103 = por %p101, %p102
    %p104 = scmp.ne.s32.totalorder %s96, %s98
    %p105 = scmp.eq.s32.totalorder %s18, 5
    %p106 = por %p104, %p105
    %p107 = scmp.ne.s32.totalorder %s98, %s99
    %p108 = scmp.eq.s32.totalorder %s18, 0
    %p109 = por %p107, %p108
    %p110 = scmp.ne.s32.totalorder %s98, %s99
    %p111 = scmp.eq.s32.totalorder %s19, 5
    %p112 = por %p110, %p111
    %p114 = scmp.ne.s32.totalorder %s99, %s113
    %p115 = scmp.eq.s32.totalorder %s19, 0
    %p116 = por %p114, %p115
    %s118 = sadd.s32 %s117, 1
    %p121 = scmp.eq.s32.totalorder %s13, 5
    %p122 = scmp.ne.s32.totalorder %s117, %s119
    %p123 = scmp.eq.s32.totalorder %s13, 0
    %p124 = por %p122, %p123
    %p125 = scmp.ne.s32.totalorder %s117, %s119
    %p126 = scmp.eq.s32.totalorder %s18, 5
    %p127 = por %p125, %p126
    %p128 = scmp.ne.s32.totalorder %s119, %s120
    %p129 = scmp.eq.s32.totalorder %s18, 0
    %p130 = por %p128, %p129
    %p131 = scmp.ne.s32.totalorder %s119, %s120
    %p132 = scmp.eq.s32.totalorder %s19, 5
    %p133 = por %p131, %p132
    %p135 = scmp.ne.s32.totalorder %s120, %s134
    %p136 = scmp.eq.s32.totalorder %s19, 0
    %p137 = por %p135, %p136
    %s139 = sadd.s32 %s138, 1
    %p142 = scmp.eq.s32.totalorder %s13, 5
    %p143 = scmp.ne.s32.totalorder %s138, %s140
    %p144 = scmp.eq.s32.totalorder %s13, 0
    %p145 = por %p143, %p144
    %p146 = scmp.ne.s32.totalorder %s138, %s140
    %p147 = scmp.eq.s32.totalorder %s18, 5
    %p148 = por %p146, %p147
    %p149 = scmp.ne.s32.totalorder %s140, %s141
    %p150 = scmp.eq.s32.totalorder %s18, 0
    %p151 = por %p149, %p150
    %p152 = scmp.ne.s32.totalorder %s140, %s141
    %p153 = scmp.eq.s32.totalorder %s19, 5
    %p154 = por %p152, %p153
    %p156 = scmp.ne.s32.totalorder %s141, %s155
    %p157 = scmp.eq.s32.totalorder %s19, 0
    %p158 = por %p156, %p157
    %s160 = sadd.s32 %s159, 1
    %p163 = scmp.eq.s32.totalorder %s13, 5
    %p164 = scmp.ne.s32.totalorder %s159, %s161
    %p165 = scmp.eq.s32.totalorder %s13, 0
    %p166 = por %p164, %p165
    %p167 = scmp.ne.s32.totalorder %s159, %s161
    %p168 = scmp.eq.s32.totalorder %s18, 5
    %p169 = por %p167, %p168
    %p170 = scmp.ne.s32.totalorder %s161, %s162
    %p171 = scmp.eq.s32.totalorder %s18, 0
    %p172 = por %p170, %p171
    %p173 = scmp.ne.s32.totalorder %s161, %s162
    %p174 = scmp.eq.s32.totalorder %s19, 5
    %p175 = por %p173, %p174
    %p177 = scmp.ne.s32.totalorder %s162, %s176
    %p178 = scmp.eq.s32.totalorder %s19, 0
    %p179 = por %p177, %p178
    %s181 = sadd.s32 %s180, 1
    %p184 = scmp.eq.s32.totalorder %s13, 5
    %p185 = scmp.ne.s32.totalorder %s180, %s182
    %p186 = scmp.eq.s32.totalorder %s13, 0
    %p187 = por %p185, %p186
    %p188 = scmp.ne.s32.totalorder %s180, %s182
    %p189 = scmp.eq.s32.totalorder %s18, 5
    %p190 = por %p188, %p189
    %p191 = scmp.ne.s32.totalorder %s182, %s183
    %p192 = scmp.eq.s32.totalorder %s18, 0
    %p193 = por %p191, %p192
    %p194 = scmp.ne.s32.totalorder %s182, %s183
    %p195 = scmp.eq.s32.totalorder %s19, 5
    %p196 = por %p194, %p195
    %p198 = scmp.ne.s32.totalorder %s183, %s197
    %p199 = scmp.eq.s32.totalorder %s19, 0
    %p200 = por %p198, %p199
    %p201 = scmp.le.s32.totalorder 1, %s13
    %p202 = scmp.lt.s32.totalorder %s13, 7
    %p203 = pnand %p201, %p202
    %p204 = pneg %p203
    // Predicated region
    $region9: #{_lambda_.15} parent=5 // pred_check
      _
    $region10: #{_lambda_.15} parent=5 // pred_check_branch
      %206 = sbr.rel (%p203) target = $region12
    $region11: #{_lambda_.15} parent=5 // pred_region
      %s207 = ssub.s32 %s13, 1
      // Predicated region
      $region13: #{_lambda_.15} parent=11 // pred_check
        %p208 = pneg %p34
      $region14: #{_lambda_.15} parent=11 // pred_check_branch
        %210 = sbr.rel (%p208) target = $region16
      $region15: #{_lambda_.15} parent=11 // pred_region
        _
      $region16: #{_lambda_.15} parent=11 // pred_fallthru
        _
      // Predicated region
      $region17: #{_lambda_.15} parent=11 // pred_check
        %p211 = pneg %p109
      $region18: #{_lambda_.15} parent=11 // pred_check_branch
        %213 = sbr.rel (%p211) target = $region20
      $region19: #{_lambda_.15} parent=11 // pred_region
        _
      $region20: #{_lambda_.15} parent=11 // pred_fallthru
        _
      // Predicated region
      $region21: #{_lambda_.15} parent=11 // pred_check
        %p214 = pneg %p130
      $region22: #{_lambda_.15} parent=11 // pred_check_branch
        %216 = sbr.rel (%p214) target = $region24
      $region23: #{_lambda_.15} parent=11 // pred_region
        _
      $region24: #{_lambda_.15} parent=11 // pred_fallthru
        _
      // Predicated region
      $region25: #{_lambda_.15} parent=11 // pred_check
        %p217 = pneg %p151
      $region26: #{_lambda_.15} parent=11 // pred_check_branch
        %219 = sbr.rel (%p217) target = $region28
      $region27: #{_lambda_.15} parent=11 // pred_region
        _
      $region28: #{_lambda_.15} parent=11 // pred_fallthru
        _
      // Predicated region
      $region29: #{_lambda_.15} parent=11 // pred_check
        %p220 = pneg %p172
      $region30: #{_lambda_.15} parent=11 // pred_check_branch
        %222 = sbr.rel (%p220) target = $region32
      $region31: #{_lambda_.15} parent=11 // pred_region
        _
      $region32: #{_lambda_.15} parent=11 // pred_fallthru
        _
    $region12: #{_lambda_.15} parent=5 // pred_fallthru
      _
    %p223 = scmp.lt.s32.totalorder %s13, 6
    // Predicated region
    $region33: #{_lambda_.15} parent=5 // pred_check
      %p224 = pneg %p223
    $region34: #{_lambda_.15} parent=5 // pred_check_branch
      %226 = sbr.rel (%p224) target = $region36
    $region35: #{_lambda_.15} parent=5 // pred_region
      // Predicated region
      $region37: #{_lambda_.15} parent=35 // pred_check
        %p227 = pneg %p54
      $region38: #{_lambda_.15} parent=35 // pred_check_branch
        %229 = sbr.rel (%p227) target = $region40
      $region39: #{_lambda_.15} parent=35 // pred_region
        %p230 = scmp.lt.s32.totalorder %s13, 5
        %s231 = scalar_select %p230, %s13, 5
        %s232 = smul.addr %s231, 6
        %s233 = smul.addr %s232, 2
        %s234 = scalar_lea.vmem %s1, %s233
      $region40: #{_lambda_.15} parent=35 // pred_fallthru
        _
      // Predicated region
      $region41: #{_lambda_.15} parent=35 // pred_check
        %p235 = pneg %p82
      $region42: #{_lambda_.15} parent=35 // pred_check_branch
        %237 = sbr.rel (%p235) target = $region44
      $region43: #{_lambda_.15} parent=35 // pred_region
        %s238 = ssub.s32 5, %s13
        %p239 = scmp.lt.s32.totalorder %s238, 5
        %s240 = scalar_select %p239, %s238, 5
        %s241 = smul.addr %s240, 6
        %s242 = sadd.s32 3, %s241
        %s243 = smul.addr %s242, 2
        %s244 = scalar_lea.vmem %s2, %s243
        %s245 = ssub.s32 5, %s13
      $region44: #{_lambda_.15} parent=35 // pred_fallthru
        _
    $region36: #{_lambda_.15} parent=5 // pred_fallthru
      _
    %p246 = scmp.le.s32.totalorder 1, %s13
    %p247 = scmp.lt.s32.totalorder %s13, 7
    %p248 = pnand %p246, %p247
    %p249 = pneg %p248
    // Predicated region
    $region45: #{_lambda_.15} parent=5 // pred_check
      _
    $region46: #{_lambda_.15} parent=5 // pred_check_branch
      %251 = sbr.rel (%p248) target = $region48
    $region47: #{_lambda_.15} parent=5 // pred_region
      %s252 = ssub.s32 %s13, 1
      %p253 = pneg %p34
      %p254 = pneg %p31
      %p255 = scmp.lt.s32.totalorder %s18, 5
      %s256 = scalar_select %p255, %s18, 5
      %s257 = smul.addr %s256, 6
      %s258 = smul.addr %s257, 2
      %s259 = scalar_lea.vmem %s1, %s258
      %p260 = pneg %p60
      %p261 = pneg %p57
      %s262 = ssub.s32 5, %s18
      %p263 = scmp.lt.s32.totalorder %s262, 5
      %s264 = scalar_select %p263, %s262, 5
      %s265 = smul.addr %s264, 6
      %s266 = sadd.s32 3, %s265
      %s267 = smul.addr %s266, 2
      %s268 = scalar_lea.vmem %s2, %s267
      %p269 = pneg %p88
      %p270 = pneg %p85
      %p271 = pneg %p109
      %p272 = pneg %p106
      %p273 = pneg %p130
      %p274 = pneg %p127
      %p275 = pneg %p151
      %p276 = pneg %p148
      %p277 = pneg %p172
      %p278 = pneg %p169
      %p279 = pneg %p193
      %p280 = pneg %p190
      %p281 = scmp.lt.s32.totalorder %s18, 5
      %s282 = scalar_select %p281, %s18, 5
      %s283 = smul.addr %s282, 6
      %s284 = smul.addr %s283, 2
      %s285 = scalar_lea.vmem %s1, %s284
      %s286 = ssub.s32 5, %s18
      %p287 = scmp.lt.s32.totalorder %s286, 5
      %s288 = scalar_select %p287, %s286, 5
      %s289 = smul.addr %s288, 6
      %s290 = sadd.s32 3, %s289
      %s291 = smul.addr %s290, 2
      %s292 = scalar_lea.vmem %s2, %s291
      %s293 = ssub.s32 5, %s18
      %p294 = scmp.eq.s32.totalorder %s18, 0
      // Predicated region
      $region49: #{_lambda_.15} parent=47 // pred_check
        %p295 = pneg %p294
      $region50: #{_lambda_.15} parent=47 // pred_check_branch
        %297 = sbr.rel (%p295) target = $region52
      $region51: #{_lambda_.15} parent=47 // pred_region
        %v298 = vld [vmem:[%s0] sm:$0x3]
        %299 = vst [vmem:[#allocation2] sm:$0x3] %v298
        %s300 = scalar_lea.vmem %s0, 2
        %v301 = vld [vmem:[%s300] sm:$0x3]
        %302 = vst [vmem:[#allocation2 + $0x2] sm:$0x3] %v301
        %303 = vst [vmem:[%s7] sm:$0x3] 0.0
        %304 = vst [vmem:[%s7 + $0x2] sm:$0x3] 0.0
        %305 = vst [vmem:[%s7 + $0x4] sm:$0x3] 0.0
        %306 = vst [vmem:[%s7 + $0x6] sm:$0x3] 0.0
        %307 = vst [vmem:[%s7 + $0x8] sm:$0x3] 0.0
        %308 = vst [vmem:[%s7 + $0xa] sm:$0x3] 0.0
      $region52: #{_lambda_.15} parent=47 // pred_fallthru
        _
      %v309 = vld [vmem:[#allocation2] sm:$0xf]
      %311 = vst [vmem:[#allocation1] ss:$4 sm:$0xff] %v309
      %v312 = vld.sshfl [vmem:[#allocation1] sm:$0xff pattern:$0x73625140]
      %v313 = vld.sshfl [vmem:[#allocation1 + $0x8] sm:$0xff pattern:$0x73625140]
      %v316 = vpack.c.bf16 %v312, %v312
      %v317 = vpack.c.bf16 %v313, %v313
      %v318 = vld [vmem:[%s3] sm:$0xff]
      %v319 = vld [vmem:[%s3 + $0x8] sm:$0xff]
      %v320 = vld [vmem:[%s3 + $0x10] sm:$0xff]
      %v321 = vld [vmem:[%s3 + $0x18] sm:$0xff]
      %v322 = vld [vmem:[%s3 + $0x20] sm:$0xff]
      %v323 = vld [vmem:[%s3 + $0x28] sm:$0xff]
      %v324 = vld [vmem:[%s3 + $0x30] sm:$0xff]
      %v325 = vld [vmem:[%s3 + $0x38] sm:$0xff]
      %v326 = vld [vmem:[%s3 + $0x40] sm:$0xff]
      %v327 = vld [vmem:[%s3 + $0x48] sm:$0xff]
      %v328 = vld [vmem:[%s3 + $0x50] sm:$0xff]
      %v329 = vld [vmem:[%s3 + $0x58] sm:$0xff]
      %v330 = vld [vmem:[%s3 + $0x60] sm:$0xff]
      %v331 = vld [vmem:[%s3 + $0x68] sm:$0xff]
      %v332 = vld [vmem:[%s3 + $0x70] sm:$0xff]
      %v333 = vld [vmem:[%s3 + $0x78] sm:$0xff]
      %v334 = vld [vmem:[%s3 + $0x80] sm:$0xff]
      %v335 = vld [vmem:[%s3 + $0x88] sm:$0xff]
      %v336 = vld [vmem:[%s3 + $0x90] sm:$0xff]
      %v337 = vld [vmem:[%s3 + $0x98] sm:$0xff]
      %v338 = vld [vmem:[%s3 + $0xa0] sm:$0xff]
      %v339 = vld [vmem:[%s3 + $0xa8] sm:$0xff]
      %v340 = vld [vmem:[%s3 + $0xb0] sm:$0xff]
      %v341 = vld [vmem:[%s3 + $0xb8] sm:$0xff]
      %v342 = vld [vmem:[%s3 + $0xc0] sm:$0xff]
      %v343 = vld [vmem:[%s3 + $0xc8] sm:$0xff]
      %v344 = vld [vmem:[%s3 + $0xd0] sm:$0xff]
      %v345 = vld [vmem:[%s3 + $0xd8] sm:$0xff]
      %v346 = vld [vmem:[%s3 + $0xe0] sm:$0xff]
      %v347 = vld [vmem:[%s3 + $0xe8] sm:$0xff]
      %v348 = vld [vmem:[%s3 + $0xf0] sm:$0xff]
      %v349 = vld [vmem:[%s3 + $0xf8] sm:$0xff]
      %v350 = vld [vmem:[%s3 + $0x100] sm:$0xff]
      %v351 = vld [vmem:[%s3 + $0x108] sm:$0xff]
      %v352 = vld [vmem:[%s3 + $0x110] sm:$0xff]
      %v353 = vld [vmem:[%s3 + $0x118] sm:$0xff]
      %v354 = vld [vmem:[%s3 + $0x120] sm:$0xff]
      %v355 = vld [vmem:[%s3 + $0x128] sm:$0xff]
      %v356 = vld [vmem:[%s3 + $0x130] sm:$0xff]
      %v357 = vld [vmem:[%s3 + $0x138] sm:$0xff]
      %v358 = vld [vmem:[%s3 + $0x140] sm:$0xff]
      %v359 = vld [vmem:[%s3 + $0x148] sm:$0xff]
      %v360 = vld [vmem:[%s3 + $0x150] sm:$0xff]
      %v361 = vld [vmem:[%s3 + $0x158] sm:$0xff]
      %v362 = vld [vmem:[%s3 + $0x160] sm:$0xff]
      %v363 = vld [vmem:[%s3 + $0x168] sm:$0xff]
      %v364 = vld [vmem:[%s3 + $0x170] sm:$0xff]
      %v365 = vld [vmem:[%s3 + $0x178] sm:$0xff]
      %v366 = vld [vmem:[%s3 + $0x180] sm:$0xff]
      %v367 = vld [vmem:[%s3 + $0x188] sm:$0xff]
      %v368 = vld [vmem:[%s3 + $0x190] sm:$0xff]
      %v369 = vld [vmem:[%s3 + $0x198] sm:$0xff]
      %v370 = vld [vmem:[%s3 + $0x1a0] sm:$0xff]
      %v371 = vld [vmem:[%s3 + $0x1a8] sm:$0xff]
      %v372 = vld [vmem:[%s3 + $0x1b0] sm:$0xff]
      %v373 = vld [vmem:[%s3 + $0x1b8] sm:$0xff]
      %v374 = vld [vmem:[%s3 + $0x1c0] sm:$0xff]
      %v375 = vld [vmem:[%s3 + $0x1c8] sm:$0xff]
      %v376 = vld [vmem:[%s3 + $0x1d0] sm:$0xff]
      %v377 = vld [vmem:[%s3 + $0x1d8] sm:$0xff]
      %v378 = vld [vmem:[%s3 + $0x1e0] sm:$0xff]
      %v379 = vld [vmem:[%s3 + $0x1e8] sm:$0xff]
      %v380 = vld [vmem:[%s3 + $0x1f0] sm:$0xff]
      %v381 = vld [vmem:[%s3 + $0x1f8] sm:$0xff]
      %v382 = vld [vmem:[%s3 + $0x200] sm:$0xff]
      %v383 = vld [vmem:[%s3 + $0x208] sm:$0xff]
      %v384 = vld [vmem:[%s3 + $0x210] sm:$0xff]
      %v385 = vld [vmem:[%s3 + $0x218] sm:$0xff]
      %v386 = vld [vmem:[%s3 + $0x220] sm:$0xff]
      %v387 = vld [vmem:[%s3 + $0x228] sm:$0xff]
      %v388 = vld [vmem:[%s3 + $0x230] sm:$0xff]
      %v389 = vld [vmem:[%s3 + $0x238] sm:$0xff]
      %v390 = vld [vmem:[%s3 + $0x240] sm:$0xff]
      %v391 = vld [vmem:[%s3 + $0x248] sm:$0xff]
      %v392 = vld [vmem:[%s3 + $0x250] sm:$0xff]
      %v393 = vld [vmem:[%s3 + $0x258] sm:$0xff]
      %v394 = vld [vmem:[%s3 + $0x260] sm:$0xff]
      %v395 = vld [vmem:[%s3 + $0x268] sm:$0xff]
      %v396 = vld [vmem:[%s3 + $0x270] sm:$0xff]
      %v397 = vld [vmem:[%s3 + $0x278] sm:$0xff]
      %v398 = vld [vmem:[%s3 + $0x280] sm:$0xff]
      %v399 = vld [vmem:[%s3 + $0x288] sm:$0xff]
      %v400 = vld [vmem:[%s3 + $0x290] sm:$0xff]
      %v401 = vld [vmem:[%s3 + $0x298] sm:$0xff]
      %v402 = vld [vmem:[%s3 + $0x2a0] sm:$0xff]
      %v403 = vld [vmem:[%s3 + $0x2a8] sm:$0xff]
      %v404 = vld [vmem:[%s3 + $0x2b0] sm:$0xff]
      %v405 = vld [vmem:[%s3 + $0x2b8] sm:$0xff]
      %v406 = vld [vmem:[%s3 + $0x2c0] sm:$0xff]
      %v407 = vld [vmem:[%s3 + $0x2c8] sm:$0xff]
      %v408 = vld [vmem:[%s3 + $0x2d0] sm:$0xff]
      %v409 = vld [vmem:[%s3 + $0x2d8] sm:$0xff]
      %v410 = vld [vmem:[%s3 + $0x2e0] sm:$0xff]
      %v411 = vld [vmem:[%s3 + $0x2e8] sm:$0xff]
      %v412 = vld [vmem:[%s3 + $0x2f0] sm:$0xff]
      %v413 = vld [vmem:[%s3 + $0x2f8] sm:$0xff]
      %v414 = vld [vmem:[%s4] sm:$0x3f]
      %v416 = vperm.slane %v414, 0
      %v417 = vperm.slane %v414, 1
      %v418 = vperm.slane %v414, 2
      %v419 = vperm.slane %v414, 3
      %v420 = vperm.slane %v414, 4
      %v421 = vperm.slane %v414, 5
      %v524 = vunpack.c.l.b16 %v318
      %v525 = vunpack.c.h.b16 %v318
      %v526 = vunpack.c.l.b16 %v319
      %v527 = vunpack.c.h.b16 %v319
      %v528 = vunpack.c.l.b16 %v320
      %v529 = vunpack.c.h.b16 %v320
      %v530 = vunpack.c.l.b16 %v321
      %v531 = vunpack.c.h.b16 %v321
      %v532 = vunpack.c.l.b16 %v322
      %v533 = vunpack.c.h.b16 %v322
      %v534 = vunpack.c.l.b16 %v323
      %v535 = vunpack.c.h.b16 %v323
      %v536 = vunpack.c.l.b16 %v324
      %v537 = vunpack.c.h.b16 %v324
      %v538 = vunpack.c.l.b16 %v325
      %v539 = vunpack.c.h.b16 %v325
      %v540 = vunpack.c.l.b16 %v326
      %v541 = vunpack.c.h.b16 %v326
      %v542 = vunpack.c.l.b16 %v327
      %v543 = vunpack.c.h.b16 %v327
      %v544 = vunpack.c.l.b16 %v328
      %v545 = vunpack.c.h.b16 %v328
      %v546 = vunpack.c.l.b16 %v329
      %v547 = vunpack.c.h.b16 %v329
      %v548 = vunpack.c.l.b16 %v330
      %v549 = vunpack.c.h.b16 %v330
      %v550 = vunpack.c.l.b16 %v331
      %v551 = vunpack.c.h.b16 %v331
      %v552 = vunpack.c.l.b16 %v332
      %v553 = vunpack.c.h.b16 %v332
      %v554 = vunpack.c.l.b16 %v333
      %v555 = vunpack.c.h.b16 %v333
      %v556 = vunpack.c.l.b16 %v334
      %v557 = vunpack.c.h.b16 %v334
      %v558 = vunpack.c.l.b16 %v335
      %v559 = vunpack.c.h.b16 %v335
      %v560 = vunpack.c.l.b16 %v336
      %v561 = vunpack.c.h.b16 %v336
      %v562 = vunpack.c.l.b16 %v337
      %v563 = vunpack.c.h.b16 %v337
      %v564 = vunpack.c.l.b16 %v338
      %v565 = vunpack.c.h.b16 %v338
      %v566 = vunpack.c.l.b16 %v339
      %v567 = vunpack.c.h.b16 %v339
      %v568 = vunpack.c.l.b16 %v340
      %v569 = vunpack.c.h.b16 %v340
      %v570 = vunpack.c.l.b16 %v341
      %v571 = vunpack.c.h.b16 %v341
      %v572 = vunpack.c.l.b16 %v342
      %v573 = vunpack.c.h.b16 %v342
      %v574 = vunpack.c.l.b16 %v343
      %v575 = vunpack.c.h.b16 %v343
      %v576 = vunpack.c.l.b16 %v344
      %v577 = vunpack.c.h.b16 %v344
      %v578 = vunpack.c.l.b16 %v345
      %v579 = vunpack.c.h.b16 %v345
      %v580 = vunpack.c.l.b16 %v346
      %v581 = vunpack.c.h.b16 %v346
      %v582 = vunpack.c.l.b16 %v347
      %v583 = vunpack.c.h.b16 %v347
      %v584 = vunpack.c.l.b16 %v348
      %v585 = vunpack.c.h.b16 %v348
      %v586 = vunpack.c.l.b16 %v349
      %v587 = vunpack.c.h.b16 %v349
      %v588 = vunpack.c.l.b16 %v350
      %v589 = vunpack.c.h.b16 %v350
      %v590 = vunpack.c.l.b16 %v351
      %v591 = vunpack.c.h.b16 %v351
      %v592 = vunpack.c.l.b16 %v352
      %v593 = vunpack.c.h.b16 %v352
      %v594 = vunpack.c.l.b16 %v353
      %v595 = vunpack.c.h.b16 %v353
      %v596 = vunpack.c.l.b16 %v354
      %v597 = vunpack.c.h.b16 %v354
      %v598 = vunpack.c.l.b16 %v355
      %v599 = vunpack.c.h.b16 %v355
      %v600 = vunpack.c.l.b16 %v356
      %v601 = vunpack.c.h.b16 %v356
      %v602 = vunpack.c.l.b16 %v357
      %v603 = vunpack.c.h.b16 %v357
      %v604 = vunpack.c.l.b16 %v358
      %v605 = vunpack.c.h.b16 %v358
      %v606 = vunpack.c.l.b16 %v359
      %v607 = vunpack.c.h.b16 %v359
      %v608 = vunpack.c.l.b16 %v360
      %v609 = vunpack.c.h.b16 %v360
      %v610 = vunpack.c.l.b16 %v361
      %v611 = vunpack.c.h.b16 %v361
      %v612 = vunpack.c.l.b16 %v362
      %v613 = vunpack.c.h.b16 %v362
      %v614 = vunpack.c.l.b16 %v363
      %v615 = vunpack.c.h.b16 %v363
      %v616 = vunpack.c.l.b16 %v364
      %v617 = vunpack.c.h.b16 %v364
      %v618 = vunpack.c.l.b16 %v365
      %v619 = vunpack.c.h.b16 %v365
      %v620 = vunpack.c.l.b16 %v366
      %v621 = vunpack.c.h.b16 %v366
      %v622 = vunpack.c.l.b16 %v367
      %v623 = vunpack.c.h.b16 %v367
      %v624 = vunpack.c.l.b16 %v368
      %v625 = vunpack.c.h.b16 %v368
      %v626 = vunpack.c.l.b16 %v369
      %v627 = vunpack.c.h.b16 %v369
      %v628 = vunpack.c.l.b16 %v370
      %v629 = vunpack.c.h.b16 %v370
      %v630 = vunpack.c.l.b16 %v371
      %v631 = vunpack.c.h.b16 %v371
      %v632 = vunpack.c.l.b16 %v372
      %v633 = vunpack.c.h.b16 %v372
      %v634 = vunpack.c.l.b16 %v373
      %v635 = vunpack.c.h.b16 %v373
      %v636 = vunpack.c.l.b16 %v374
      %v637 = vunpack.c.h.b16 %v374
      %v638 = vunpack.c.l.b16 %v375
      %v639 = vunpack.c.h.b16 %v375
      %v640 = vunpack.c.l.b16 %v376
      %v641 = vunpack.c.h.b16 %v376
      %v642 = vunpack.c.l.b16 %v377
      %v643 = vunpack.c.h.b16 %v377
      %v644 = vunpack.c.l.b16 %v378
      %v645 = vunpack.c.h.b16 %v378
      %v646 = vunpack.c.l.b16 %v379
      %v647 = vunpack.c.h.b16 %v379
      %v648 = vunpack.c.l.b16 %v380
      %v649 = vunpack.c.h.b16 %v380
      %v650 = vunpack.c.l.b16 %v381
      %v651 = vunpack.c.h.b16 %v381
      %v652 = vunpack.c.l.b16 %v382
      %v653 = vunpack.c.h.b16 %v382
      %v654 = vunpack.c.l.b16 %v383
      %v655 = vunpack.c.h.b16 %v383
      %v656 = vunpack.c.l.b16 %v384
      %v657 = vunpack.c.h.b16 %v384
      %v658 = vunpack.c.l.b16 %v385
      %v659 = vunpack.c.h.b16 %v385
      %v660 = vunpack.c.l.b16 %v386
      %v661 = vunpack.c.h.b16 %v386
      %v662 = vunpack.c.l.b16 %v387
      %v663 = vunpack.c.h.b16 %v387
      %v664 = vunpack.c.l.b16 %v388
      %v665 = vunpack.c.h.b16 %v388
      %v666 = vunpack.c.l.b16 %v389
      %v667 = vunpack.c.h.b16 %v389
      %v668 = vunpack.c.l.b16 %v390
      %v669 = vunpack.c.h.b16 %v390
      %v670 = vunpack.c.l.b16 %v391
      %v671 = vunpack.c.h.b16 %v391
      %v672 = vunpack.c.l.b16 %v392
      %v673 = vunpack.c.h.b16 %v392
      %v674 = vunpack.c.l.b16 %v393
      %v675 = vunpack.c.h.b16 %v393
      %v676 = vunpack.c.l.b16 %v394
      %v677 = vunpack.c.h.b16 %v394
      %v678 = vunpack.c.l.b16 %v395
      %v679 = vunpack.c.h.b16 %v395
      %v680 = vunpack.c.l.b16 %v396
      %v681 = vunpack.c.h.b16 %v396
      %v682 = vunpack.c.l.b16 %v397
      %v683 = vunpack.c.h.b16 %v397
      %v684 = vunpack.c.l.b16 %v398
      %v685 = vunpack.c.h.b16 %v398
      %v686 = vunpack.c.l.b16 %v399
      %v687 = vunpack.c.h.b16 %v399
      %v688 = vunpack.c.l.b16 %v400
      %v689 = vunpack.c.h.b16 %v400
      %v690 = vunpack.c.l.b16 %v401
      %v691 = vunpack.c.h.b16 %v401
      %v692 = vunpack.c.l.b16 %v402
      %v693 = vunpack.c.h.b16 %v402
      %v694 = vunpack.c.l.b16 %v403
      %v695 = vunpack.c.h.b16 %v403
      %v696 = vunpack.c.l.b16 %v404
      %v697 = vunpack.c.h.b16 %v404
      %v698 = vunpack.c.l.b16 %v405
      %v699 = vunpack.c.h.b16 %v405
      %v700 = vunpack.c.l.b16 %v406
      %v701 = vunpack.c.h.b16 %v406
      %v702 = vunpack.c.l.b16 %v407
      %v703 = vunpack.c.h.b16 %v407
      %v704 = vunpack.c.l.b16 %v408
      %v705 = vunpack.c.h.b16 %v408
      %v706 = vunpack.c.l.b16 %v409
      %v707 = vunpack.c.h.b16 %v409
      %v708 = vunpack.c.l.b16 %v410
      %v709 = vunpack.c.h.b16 %v410
      %v710 = vunpack.c.l.b16 %v411
      %v711 = vunpack.c.h.b16 %v411
      %v712 = vunpack.c.l.b16 %v412
      %v713 = vunpack.c.h.b16 %v412
      %v714 = vunpack.c.l.b16 %v413
      %v715 = vunpack.c.h.b16 %v413
      %v716 = vpack.c.b16 %v530, %v524
      %v717 = vpack.c.b16 %v531, %v525
      %v718 = vpack.c.b16 %v532, %v526
      %v719 = vpack.c.b16 %v533, %v527
      %v720 = vpack.c.b16 %v534, %v528
      %v721 = vpack.c.b16 %v535, %v529
      %v722 = vpack.c.b16 %v542, %v536
      %v723 = vpack.c.b16 %v543, %v537
      %v724 = vpack.c.b16 %v544, %v538
      %v725 = vpack.c.b16 %v545, %v539
      %v726 = vpack.c.b16 %v546, %v540
      %v727 = vpack.c.b16 %v547, %v541
      %v728 = vpack.c.b16 %v554, %v548
      %v729 = vpack.c.b16 %v555, %v549
      %v730 = vpack.c.b16 %v556, %v550
      %v731 = vpack.c.b16 %v557, %v551
      %v732 = vpack.c.b16 %v558, %v552
      %v733 = vpack.c.b16 %v559, %v553
      %v734 = vpack.c.b16 %v566, %v560
      %v735 = vpack.c.b16 %v567, %v561
      %v736 = vpack.c.b16 %v568, %v562
      %v737 = vpack.c.b16 %v569, %v563
      %v738 = vpack.c.b16 %v570, %v564
      %v739 = vpack.c.b16 %v571, %v565
      %v740 = vpack.c.b16 %v578, %v572
      %v741 = vpack.c.b16 %v579, %v573
      %v742 = vpack.c.b16 %v580, %v574
      %v743 = vpack.c.b16 %v581, %v575
      %v744 = vpack.c.b16 %v582, %v576
      %v745 = vpack.c.b16 %v583, %v577
      %v746 = vpack.c.b16 %v590, %v584
      %v747 = vpack.c.b16 %v591, %v585
      %v748 = vpack.c.b16 %v592, %v586
      %v749 = vpack.c.b16 %v593, %v587
      %v750 = vpack.c.b16 %v594, %v588
      %v751 = vpack.c.b16 %v595, %v589
      %v752 = vpack.c.b16 %v602, %v596
      %v753 = vpack.c.b16 %v603, %v597
      %v754 = vpack.c.b16 %v604, %v598
      %v755 = vpack.c.b16 %v605, %v599
      %v756 = vpack.c.b16 %v606, %v600
      %v757 = vpack.c.b16 %v607, %v601
      %v758 = vpack.c.b16 %v614, %v608
      %v759 = vpack.c.b16 %v615, %v609
      %v760 = vpack.c.b16 %v616, %v610
      %v761 = vpack.c.b16 %v617, %v611
      %v762 = vpack.c.b16 %v618, %v612
      %v763 = vpack.c.b16 %v619, %v613
      %v764 = vpack.c.b16 %v626, %v620
      %v765 = vpack.c.b16 %v627, %v621
      %v766 = vpack.c.b16 %v628, %v622
      %v767 = vpack.c.b16 %v629, %v623
      %v768 = vpack.c.b16 %v630, %v624
      %v769 = vpack.c.b16 %v631, %v625
      %v770 = vpack.c.b16 %v638, %v632
      %v771 = vpack.c.b16 %v639, %v633
      %v772 = vpack.c.b16 %v640, %v634
      %v773 = vpack.c.b16 %v641, %v635
      %v774 = vpack.c.b16 %v642, %v636
      %v775 = vpack.c.b16 %v643, %v637
      %v776 = vpack.c.b16 %v650, %v644
      %v777 = vpack.c.b16 %v651, %v645
      %v778 = vpack.c.b16 %v652, %v646
      %v779 = vpack.c.b16 %v653, %v647
      %v780 = vpack.c.b16 %v654, %v648
      %v781 = vpack.c.b16 %v655, %v649
      %v782 = vpack.c.b16 %v662, %v656
      %v783 = vpack.c.b16 %v663, %v657
      %v784 = vpack.c.b16 %v664, %v658
      %v785 = vpack.c.b16 %v665, %v659
      %v786 = vpack.c.b16 %v666, %v660
      %v787 = vpack.c.b16 %v667, %v661
      %v788 = vpack.c.b16 %v674, %v668
      %v789 = vpack.c.b16 %v675, %v669
      %v790 = vpack.c.b16 %v676, %v670
      %v791 = vpack.c.b16 %v677, %v671
      %v792 = vpack.c.b16 %v678, %v672
      %v793 = vpack.c.b16 %v679, %v673
      %v794 = vpack.c.b16 %v686, %v680
      %v795 = vpack.c.b16 %v687, %v681
      %v796 = vpack.c.b16 %v688, %v682
      %v797 = vpack.c.b16 %v689, %v683
      %v798 = vpack.c.b16 %v690, %v684
      %v799 = vpack.c.b16 %v691, %v685
      %v800 = vpack.c.b16 %v698, %v692
      %v801 = vpack.c.b16 %v699, %v693
      %v802 = vpack.c.b16 %v700, %v694
      %v803 = vpack.c.b16 %v701, %v695
      %v804 = vpack.c.b16 %v702, %v696
      %v805 = vpack.c.b16 %v703, %v697
      %v806 = vpack.c.b16 %v710, %v704
      %v807 = vpack.c.b16 %v711, %v705
      %v808 = vpack.c.b16 %v712, %v706
      %v809 = vpack.c.b16 %v713, %v707
      %v810 = vpack.c.b16 %v714, %v708
      %v811 = vpack.c.b16 %v715, %v709
      %908 = vmatpush.bf16.msra.mxu0 %v758
      %909 = vmatpush.bf16.msra.mxu0 %v752
      %910 = vmatpush.bf16.msra.mxu0 %v746
      %911 = vmatpush.bf16.msra.mxu0 %v740
      %912 = vmatpush.bf16.msra.mxu0 %v734
      %913 = vmatpush.bf16.msra.mxu0 %v728
      %914 = vmatpush.bf16.msra.mxu0 %v722
      %915 = vmatpush.bf16.msra.mxu0 %v716
      %916 = vmatmul.bf16.gmra.mxu0 %v316
      %v917 = vpop.f32.mrf.mxu0
      %v918 = vadd.f32 %v416, %v917
      %v919 = vpop.f32.mrf.mxu0
      %920 = vdwg.mxu0
      %921 = vmatpush.bf16.msra.mxu0 %v806
      %922 = vmatpush.bf16.msra.mxu0 %v800
      %923 = vmatpush.bf16.msra.mxu0 %v794
      %924 = vmatpush.bf16.msra.mxu0 %v788
      %925 = vmatpush.bf16.msra.mxu0 %v782
      %926 = vmatpush.bf16.msra.mxu0 %v776
      %927 = vmatpush.bf16.msra.mxu0 %v770
      %928 = vmatpush.bf16.msra.mxu0 %v764
      %929 = vmatmul.bf16.gmra.mxu0 %v317
      %v930 = vpop.f32.mrf.mxu0
      %v931 = vadd.f32 %v918, %v930
      %v932 = vpop.f32.mrf.mxu0
      %933 = vdwg.mxu0
      %934 = vmatpush.bf16.msra.mxu0 %v759
      %935 = vmatpush.bf16.msra.mxu0 %v753
      %936 = vmatpush.bf16.msra.mxu0 %v747
      %937 = vmatpush.bf16.msra.mxu0 %v741
      %938 = vmatpush.bf16.msra.mxu0 %v735
      %939 = vmatpush.bf16.msra.mxu0 %v729
      %940 = vmatpush.bf16.msra.mxu0 %v723
      %941 = vmatpush.bf16.msra.mxu0 %v717
      %942 = vmatmul.bf16.gmra.mxu0 %v316
      %v943 = vpop.f32.mrf.mxu0
      %v944 = vadd.f32 %v417, %v943
      %v945 = vpop.f32.mrf.mxu0
      %946 = vdwg.mxu0
      %947 = vmatpush.bf16.msra.mxu0 %v807
      %948 = vmatpush.bf16.msra.mxu0 %v801
      %949 = vmatpush.bf16.msra.mxu0 %v795
      %950 = vmatpush.bf16.msra.mxu0 %v789
      %951 = vmatpush.bf16.msra.mxu0 %v783
      %952 = vmatpush.bf16.msra.mxu0 %v777
      %953 = vmatpush.bf16.msra.mxu0 %v771
      %954 = vmatpush.bf16.msra.mxu0 %v765
      %955 = vmatmul.bf16.gmra.mxu0 %v317
      %v956 = vpop.f32.mrf.mxu0
      %v957 = vadd.f32 %v944, %v956
      %v958 = vpop.f32.mrf.mxu0
      %959 = vdwg.mxu0
      %960 = vmatpush.bf16.msra.mxu0 %v760
      %961 = vmatpush.bf16.msra.mxu0 %v754
      %962 = vmatpush.bf16.msra.mxu0 %v748
      %963 = vmatpush.bf16.msra.mxu0 %v742
      %964 = vmatpush.bf16.msra.mxu0 %v736
      %965 = vmatpush.bf16.msra.mxu0 %v730
      %966 = vmatpush.bf16.msra.mxu0 %v724
      %967 = vmatpush.bf16.msra.mxu0 %v718
      %968 = vmatmul.bf16.gmra.mxu0 %v316
      %v969 = vpop.f32.mrf.mxu0
      %v970 = vadd.f32 %v418, %v969
      %v971 = vpop.f32.mrf.mxu0
      %972 = vdwg.mxu0
      %973 = vmatpush.bf16.msra.mxu0 %v808
      %974 = vmatpush.bf16.msra.mxu0 %v802
      %975 = vmatpush.bf16.msra.mxu0 %v796
      %976 = vmatpush.bf16.msra.mxu0 %v790
      %977 = vmatpush.bf16.msra.mxu0 %v784
      %978 = vmatpush.bf16.msra.mxu0 %v778
      %979 = vmatpush.bf16.msra.mxu0 %v772
      %980 = vmatpush.bf16.msra.mxu0 %v766
      %981 = vmatmul.bf16.gmra.mxu0 %v317
      %v982 = vpop.f32.mrf.mxu0
      %v983 = vadd.f32 %v970, %v982
      %v984 = vpop.f32.mrf.mxu0
      %985 = vdwg.mxu0
      %986 = vmatpush.bf16.msra.mxu0 %v761
      %987 = vmatpush.bf16.msra.mxu0 %v755
      %988 = vmatpush.bf16.msra.mxu0 %v749
      %989 = vmatpush.bf16.msra.mxu0 %v743
      %990 = vmatpush.bf16.msra.mxu0 %v737
      %991 = vmatpush.bf16.msra.mxu0 %v731
      %992 = vmatpush.bf16.msra.mxu0 %v725
      %993 = vmatpush.bf16.msra.mxu0 %v719
      %994 = vmatmul.bf16.gmra.mxu0 %v316
      %v995 = vpop.f32.mrf.mxu0
      %v996 = vadd.f32 %v419, %v995
      %v997 = vpop.f32.mrf.mxu0
      %998 = vdwg.mxu0
      %999 = vmatpush.bf16.msra.mxu0 %v809
      %1000 = vmatpush.bf16.msra.mxu0 %v803
      %1001 = vmatpush.bf16.msra.mxu0 %v797
      %1002 = vmatpush.bf16.msra.mxu0 %v791
      %1003 = vmatpush.bf16.msra.mxu0 %v785
      %1004 = vmatpush.bf16.msra.mxu0 %v779
      %1005 = vmatpush.bf16.msra.mxu0 %v773
      %1006 = vmatpush.bf16.msra.mxu0 %v767
      %1007 = vmatmul.bf16.gmra.mxu0 %v317
      %v1008 = vpop.f32.mrf.mxu0
      %v1009 = vadd.f32 %v996, %v1008
      %v1010 = vpop.f32.mrf.mxu0
      %1011 = vdwg.mxu0
      %1012 = vmatpush.bf16.msra.mxu0 %v762
      %1013 = vmatpush.bf16.msra.mxu0 %v756
      %1014 = vmatpush.bf16.msra.mxu0 %v750
      %1015 = vmatpush.bf16.msra.mxu0 %v744
      %1016 = vmatpush.bf16.msra.mxu0 %v738
      %1017 = vmatpush.bf16.msra.mxu0 %v732
      %1018 = vmatpush.bf16.msra.mxu0 %v726
      %1019 = vmatpush.bf16.msra.mxu0 %v720
      %1020 = vmatmul.bf16.gmra.mxu0 %v316
      %v1021 = vpop.f32.mrf.mxu0
      %v1022 = vadd.f32 %v420, %v1021
      %v1023 = vpop.f32.mrf.mxu0
      %1024 = vdwg.mxu0
      %1025 = vmatpush.bf16.msra.mxu0 %v810
      %1026 = vmatpush.bf16.msra.mxu0 %v804
      %1027 = vmatpush.bf16.msra.mxu0 %v798
      %1028 = vmatpush.bf16.msra.mxu0 %v792
      %1029 = vmatpush.bf16.msra.mxu0 %v786
      %1030 = vmatpush.bf16.msra.mxu0 %v780
      %1031 = vmatpush.bf16.msra.mxu0 %v774
      %1032 = vmatpush.bf16.msra.mxu0 %v768
      %1033 = vmatmul.bf16.gmra.mxu0 %v317
      %v1034 = vpop.f32.mrf.mxu0
      %v1035 = vadd.f32 %v1022, %v1034
      %v1036 = vpop.f32.mrf.mxu0
      %1037 = vdwg.mxu0
      %1038 = vmatpush.bf16.msra.mxu0 %v763
      %1039 = vmatpush.bf16.msra.mxu0 %v757
      %1040 = vmatpush.bf16.msra.mxu0 %v751
      %1041 = vmatpush.bf16.msra.mxu0 %v745
      %1042 = vmatpush.bf16.msra.mxu0 %v739
      %1043 = vmatpush.bf16.msra.mxu0 %v733
      %1044 = vmatpush.bf16.msra.mxu0 %v727
      %1045 = vmatpush.bf16.msra.mxu0 %v721
      %1046 = vmatmul.bf16.gmra.mxu0 %v316
      %v1047 = vpop.f32.mrf.mxu0
      %v1048 = vadd.f32 %v421, %v1047
      %v1049 = vpop.f32.mrf.mxu0
      %1050 = vdwg.mxu0
      %1051 = vmatpush.bf16.msra.mxu0 %v811
      %1052 = vmatpush.bf16.msra.mxu0 %v805
      %1053 = vmatpush.bf16.msra.mxu0 %v799
      %1054 = vmatpush.bf16.msra.mxu0 %v793
      %1055 = vmatpush.bf16.msra.mxu0 %v787
      %1056 = vmatpush.bf16.msra.mxu0 %v781
      %1057 = vmatpush.bf16.msra.mxu0 %v775
      %1058 = vmatpush.bf16.msra.mxu0 %v769
      %1059 = vmatmul.bf16.gmra.mxu0 %v317
      %v1060 = vpop.f32.mrf.mxu0
      %v1061 = vadd.f32 %v1048, %v1060
      %v1062 = vpop.f32.mrf.mxu0
      %1063 = vdwg.mxu0
      %v1064 = vld [vmem:[%s285] sm:$0x3f]
      %v1065 = vld [vmem:[%s292] sm:$0x3f]
      %v1066 = vadd.f32 %v1064, %v931
      %v1067 = vxor.u32 %v1066, 2147483648
      %v1068 = vmul.f32 %v1067, 1.442695
      %v1069 = vpow.pop %v1068
      %v1070 = vadd.f32 %v1069, 1.0
      %v1071 = vrcp.pop %v1070
      %v1072 = vmul.f32 %v1070, %v1071
      %v1073 = vsub.f32 1.0, %v1072
      %v1074 = vmul.f32 %v1071, %v1073
      %v1075 = vadd.f32 %v1071, %v1074
      %vm1076 = vweird.f32 %v1070
      %vm1077 = vweird.f32 %v1071
      %vm1078 = vmor %vm1076, %vm1077
      %v1079 = vsel %vm1078, %v1071, %v1075
      %v1080 = vand.u32 2147483647, %v1070
      %vm1081 = vcmp.eq.f32.partialorder %v1080, 8.507059e+37
      %v1082 = vand.u32 %v1070, 2147483648
      %v1083 = vor.u32 1.1754944e-38, %v1082
      %v1084 = vsel %vm1081, %v1083, %v1079
      %v1085 = vmul.f32 1.0, %v1084
      %v1087 = vrot.slane %v1064, 2
      %v1089 = vadd.f32 %v1087, %v957
      %v1090 = vxor.u32 %v1089, 2147483648
      %v1091 = vmul.f32 %v1090, 1.442695
      %v1092 = vpow.pop %v1091
      %v1093 = vadd.f32 %v1092, 1.0
      %v1094 = vrcp.pop %v1093
      %v1095 = vmul.f32 %v1093, %v1094
      %v1096 = vsub.f32 1.0, %v1095
      %v1097 = vmul.f32 %v1094, %v1096
      %v1098 = vadd.f32 %v1094, %v1097
      %vm1099 = vweird.f32 %v1093
      %vm1100 = vweird.f32 %v1094
      %vm1101 = vmor %vm1099, %vm1100
      %v1102 = vsel %vm1101, %v1094, %v1098
      %v1103 = vand.u32 2147483647, %v1093
      %vm1104 = vcmp.eq.f32.partialorder %v1103, 8.507059e+37
      %v1105 = vand.u32 %v1093, 2147483648
      %v1106 = vor.u32 1.1754944e-38, %v1105
      %v1107 = vsel %vm1104, %v1106, %v1102
      %v1108 = vmul.f32 1.0, %v1107
      %v1109 = vmul.f32 %v1085, %v983
      %v1110 = vrot.slane %v1064, 4
      %v1112 = vadd.f32 %v1110, %v1109
      %v1113 = vtanh.pop %v1112
      %v1114 = vsub.f32 1.0, %v1108
      %v1115 = vmul.f32 %v1114, %v1113
      %v1116 = vmul.f32 %v1108, %v309
      %v1117 = vadd.f32 %v1115, %v1116
      %v1118 = vadd.f32 %v1065, %v1009
      %v1119 = vxor.u32 %v1118, 2147483648
      %v1120 = vmul.f32 %v1119, 1.442695
      %v1121 = vpow.pop %v1120
      %v1122 = vadd.f32 %v1121, 1.0
      %v1123 = vrcp.pop %v1122
      %v1124 = vmul.f32 %v1122, %v1123
      %v1125 = vsub.f32 1.0, %v1124
      %v1126 = vmul.f32 %v1123, %v1125
      %v1127 = vadd.f32 %v1123, %v1126
      %vm1128 = vweird.f32 %v1122
      %vm1129 = vweird.f32 %v1123
      %vm1130 = vmor %vm1128, %vm1129
      %v1131 = vsel %vm1130, %v1123, %v1127
      %v1132 = vand.u32 2147483647, %v1122
      %vm1133 = vcmp.eq.f32.partialorder %v1132, 8.507059e+37
      %v1134 = vand.u32 %v1122, 2147483648
      %v1135 = vor.u32 1.1754944e-38, %v1134
      %v1136 = vsel %vm1133, %v1135, %v1131
      %v1137 = vmul.f32 1.0, %v1136
      %v1139 = vrot.slane %v1065, 2
      %v1141 = vadd.f32 %v1139, %v1035
      %v1142 = vxor.u32 %v1141, 2147483648
      %v1143 = vmul.f32 %v1142, 1.442695
      %v1144 = vpow.pop %v1143
      %v1145 = vadd.f32 %v1144, 1.0
      %v1146 = vrcp.pop %v1145
      %v1147 = vmul.f32 %v1145, %v1146
      %v1148 = vsub.f32 1.0, %v1147
      %v1149 = vmul.f32 %v1146, %v1148
      %v1150 = vadd.f32 %v1146, %v1149
      %vm1151 = vweird.f32 %v1145
      %vm1152 = vweird.f32 %v1146
      %vm1153 = vmor %vm1151, %vm1152
      %v1154 = vsel %vm1153, %v1146, %v1150
      %v1155 = vand.u32 2147483647, %v1145
      %vm1156 = vcmp.eq.f32.partialorder %v1155, 8.507059e+37
      %v1157 = vand.u32 %v1145, 2147483648
      %v1158 = vor.u32 1.1754944e-38, %v1157
      %v1159 = vsel %vm1156, %v1158, %v1154
      %v1160 = vmul.f32 1.0, %v1159
      %v1161 = vmul.f32 %v1137, %v1061
      %v1162 = vrot.slane %v1065, 4
      %v1164 = vadd.f32 %v1162, %v1161
      %v1165 = vtanh.pop %v1164
      %v1166 = vsub.f32 1.0, %v1160
      %v1167 = vmul.f32 %v1166, %v1165
      %v1168 = vrot.slane %v309, 2
      %v1170 = vmul.f32 %v1160, %v1168
      %v1171 = vadd.f32 %v1167, %v1170
      %1172 = vst [vmem:[#allocation2] sm:$0x3] %v1117
      %1173 = vst [vmem:[#allocation2 + $0x2] sm:$0x3] %v1171
      %v1174 = vld [vmem:[%s5] sm:$0xf]
      %v1175 = vld [vmem:[%s5 + $0x4] sm:$0xf]
      %v1176 = vld [vmem:[%s5 + $0x8] sm:$0xf]
      %v1177 = vld [vmem:[%s5 + $0xc] sm:$0xf]
      %v1178 = vld [vmem:[%s5 + $0x10] sm:$0xf]
      %v1179 = vld [vmem:[%s5 + $0x14] sm:$0xf]
      %v1180 = vld [vmem:[%s5 + $0x18] sm:$0xf]
      %v1181 = vld [vmem:[%s5 + $0x1c] sm:$0xf]
      %v1182 = vld [vmem:[%s5 + $0x20] sm:$0xf]
      %v1183 = vld [vmem:[%s5 + $0x24] sm:$0xf]
      %v1184 = vld [vmem:[%s5 + $0x28] sm:$0xf]
      %v1185 = vld [vmem:[%s5 + $0x2c] sm:$0xf]
      %v1186 = vld [vmem:[%s5 + $0x30] sm:$0xf]
      %v1187 = vld [vmem:[%s5 + $0x34] sm:$0xf]
      %v1188 = vld [vmem:[%s5 + $0x38] sm:$0xf]
      %v1189 = vld [vmem:[%s5 + $0x3c] sm:$0xf]
      %v1190 = vld [vmem:[%s5 + $0x40] sm:$0xf]
      %v1191 = vld [vmem:[%s5 + $0x44] sm:$0xf]
      %v1192 = vld [vmem:[%s5 + $0x48] sm:$0xf]
      %v1193 = vld [vmem:[%s5 + $0x4c] sm:$0xf]
      %v1194 = vld [vmem:[%s5 + $0x50] sm:$0xf]
      %v1195 = vld [vmem:[%s5 + $0x54] sm:$0xf]
      %v1196 = vld [vmem:[%s5 + $0x58] sm:$0xf]
      %v1197 = vld [vmem:[%s5 + $0x5c] sm:$0xf]
      %v1198 = vld [vmem:[%s5 + $0x60] sm:$0xf]
      %v1199 = vld [vmem:[%s5 + $0x64] sm:$0xf]
      %v1200 = vld [vmem:[%s5 + $0x68] sm:$0xf]
      %v1201 = vld [vmem:[%s5 + $0x6c] sm:$0xf]
      %v1202 = vld [vmem:[%s5 + $0x70] sm:$0xf]
      %v1203 = vld [vmem:[%s5 + $0x74] sm:$0xf]
      %v1204 = vld [vmem:[%s5 + $0x78] sm:$0xf]
      %v1205 = vld [vmem:[%s5 + $0x7c] sm:$0xf]
      %v1206 = vpack.c.bf16 %v1117, %v1117
      %v1223 = vunpack.c.l.b16 %v1174
      %v1224 = vunpack.c.l.b16 %v1175
      %v1225 = vunpack.c.l.b16 %v1176
      %v1226 = vunpack.c.l.b16 %v1177
      %v1227 = vunpack.c.l.b16 %v1178
      %v1228 = vunpack.c.l.b16 %v1179
      %v1229 = vunpack.c.l.b16 %v1180
      %v1230 = vunpack.c.l.b16 %v1181
      %v1231 = vunpack.c.l.b16 %v1182
      %v1232 = vunpack.c.l.b16 %v1183
      %v1233 = vunpack.c.l.b16 %v1184
      %v1234 = vunpack.c.l.b16 %v1185
      %v1235 = vunpack.c.l.b16 %v1186
      %v1236 = vunpack.c.l.b16 %v1187
      %v1237 = vunpack.c.l.b16 %v1188
      %v1238 = vunpack.c.l.b16 %v1189
      %v1239 = vpack.c.b16 %v1224, %v1223
      %v1240 = vpack.c.b16 %v1226, %v1225
      %v1241 = vpack.c.b16 %v1228, %v1227
      %v1242 = vpack.c.b16 %v1230, %v1229
      %v1243 = vpack.c.b16 %v1232, %v1231
      %v1244 = vpack.c.b16 %v1234, %v1233
      %v1245 = vpack.c.b16 %v1236, %v1235
      %v1246 = vpack.c.b16 %v1238, %v1237
      %1255 = vmatpush.bf16.msra.mxu0 %v1246
      %1256 = vmatpush.bf16.msra.mxu0 %v1245
      %1257 = vmatpush.bf16.msra.mxu0 %v1244
      %1258 = vmatpush.bf16.msra.mxu0 %v1243
      %1259 = vmatpush.bf16.msra.mxu0 %v1242
      %1260 = vmatpush.bf16.msra.mxu0 %v1241
      %1261 = vmatpush.bf16.msra.mxu0 %v1240
      %1262 = vmatpush.bf16.msra.mxu0 %v1239
      %1263 = vmatmul.bf16.gmra.mxu0 %v1206
      %v1264 = vpop.f32.mrf.mxu0
      %v1265 = vadd.f32 0.0, %v1264
      %v1266 = vpop.f32.mrf.mxu0
      %1267 = vdwg.mxu0
      %v1268 = vpack.c.bf16 %v1171, %v1171
      %v1285 = vunpack.c.l.b16 %v1190
      %v1286 = vunpack.c.l.b16 %v1191
      %v1287 = vunpack.c.l.b16 %v1192
      %v1288 = vunpack.c.l.b16 %v1193
      %v1289 = vunpack.c.l.b16 %v1194
      %v1290 = vunpack.c.l.b16 %v1195
      %v1291 = vunpack.c.l.b16 %v1196
      %v1292 = vunpack.c.l.b16 %v1197
      %v1293 = vunpack.c.l.b16 %v1198
      %v1294 = vunpack.c.l.b16 %v1199
      %v1295 = vunpack.c.l.b16 %v1200
      %v1296 = vunpack.c.l.b16 %v1201
      %v1297 = vunpack.c.l.b16 %v1202
      %v1298 = vunpack.c.l.b16 %v1203
      %v1299 = vunpack.c.l.b16 %v1204
      %v1300 = vunpack.c.l.b16 %v1205
      %v1301 = vpack.c.b16 %v1286, %v1285
      %v1302 = vpack.c.b16 %v1288, %v1287
      %v1303 = vpack.c.b16 %v1290, %v1289
      %v1304 = vpack.c.b16 %v1292, %v1291
      %v1305 = vpack.c.b16 %v1294, %v1293
      %v1306 = vpack.c.b16 %v1296, %v1295
      %v1307 = vpack.c.b16 %v1298, %v1297
      %v1308 = vpack.c.b16 %v1300, %v1299
      %1317 = vmatpush.bf16.msra.mxu0 %v1308
      %1318 = vmatpush.bf16.msra.mxu0 %v1307
      %1319 = vmatpush.bf16.msra.mxu0 %v1306
      %1320 = vmatpush.bf16.msra.mxu0 %v1305
      %1321 = vmatpush.bf16.msra.mxu0 %v1304
      %1322 = vmatpush.bf16.msra.mxu0 %v1303
      %1323 = vmatpush.bf16.msra.mxu0 %v1302
      %1324 = vmatpush.bf16.msra.mxu0 %v1301
      %1325 = vmatmul.bf16.gmra.mxu0 %v1268
      %v1326 = vpop.f32.mrf.mxu0
      %v1327 = vadd.f32 0.0, %v1326
      %v1328 = vpop.f32.mrf.mxu0
      %1329 = vdwg.mxu0
      %s1330 = smul.u32 %s18, 2
      %s1331 = scalar_lea.vmem %s7, %s1330
      %v1332 = vld [vmem:[%s1331] sm:$0x3]
      %v1333 = vadd.f32 %v1332, %v1265
      %v1334 = vld [vmem:[%s6] sm:$0x1]
      %v1336 = vperm.slane %v1334, 0
      %v1338 = vadd.f32 %v1333, %v1336
      %1339 = vst [vmem:[%s1331] sm:$0x3] %v1338
      %s1340 = ssub.s32 5, %s18
      %s1341 = smul.u32 %s1340, 2
      %s1342 = scalar_lea.vmem %s7, %s1341
      %v1343 = vld [vmem:[%s1342] sm:$0x3]
      %v1344 = vadd.f32 %v1343, %v1327
      %1345 = vst [vmem:[%s1342] sm:$0x3] %v1344
      // Predicated region
      $region53: #{_lambda_.15} parent=47 // pred_check
        %p1346 = pneg %p190
      $region54: #{_lambda_.15} parent=47 // pred_check_branch
        %1348 = sbr.rel (%p1346) target = $region56
      $region55: #{_lambda_.15} parent=47 // pred_region
        _
      $region56: #{_lambda_.15} parent=47 // pred_fallthru
        _
      // Predicated region
      $region57: #{_lambda_.15} parent=47 // pred_check
        %p1349 = pneg %p190
      $region58: #{_lambda_.15} parent=47 // pred_check_branch
        %1351 = sbr.rel (%p1349) target = $region60
      $region59: #{_lambda_.15} parent=47 // pred_region
        _
      $region60: #{_lambda_.15} parent=47 // pred_fallthru
        _
    $region48: #{_lambda_.15} parent=5 // pred_fallthru
      _
    %p1352 = scmp.le.s32.totalorder 2, %s13
    // Predicated region
    $region61: #{_lambda_.15} parent=5 // pred_check
      %p1353 = pneg %p1352
    $region62: #{_lambda_.15} parent=5 // pred_check_branch
      %1355 = sbr.rel (%p1353) target = $region64
    $region63: #{_lambda_.15} parent=5 // pred_region
      %s1356 = ssub.s32 %s13, 2
    $region64: #{_lambda_.15} parent=5 // pred_fallthru
      _
  $region6: #{_lambda_.15} parent=0 // loop_footer
    %s17 = sadd.s32 1, %s13
  $region7: #{_lambda_.15} parent=0 // loop_footer_branch
    %12 = sbr.rel target = $region3
  $region8: #{_lambda_.15} parent=0 // loop_exit
    _

</llo_original>
